<compile_context>
chip_gen: v7x
topology: tpu7x:2x2x1
jax: 0.10.0
libtpu: 0.0.40
codegen_flags: <defaults>
</compile_context>

<pallas_src>
import math

import jax
import jax.numpy as jnp
from jax.experimental import pallas as pl
from jax.experimental.pallas import tpu as pltpu


# ----------------------------------------------------------------------------
# Fused forward kernel (one batch element per grid step; everything in VMEM)
# ----------------------------------------------------------------------------
def _make_fused_kernel(treedef, n_params, n_up, nhead):
    slope = 0.2

    def shifts(x):
        # zero-padded time shifts: xp[t] = x[t-1], xn[t] = x[t+1]
        T = x.shape[0]
        t = jax.lax.broadcasted_iota(jnp.int32, (T, 1), 0)
        xp = jnp.where(t == 0, 0.0, pltpu.roll(x, shift=1, axis=0))
        xn = jnp.where(t == T - 1, 0.0, pltpu.roll(x, shift=T - 1, axis=0))
        return xp, xn

    def leaky_relu(y):
        return jnp.where(y >= 0, y, slope * y)

    def conv3(x, w_ref, b_ref, act=False, residual=None):
        # Conv1d(k=3, stride=1, pad=1) as three shifted MXU matmuls.
        xp, xn = shifts(x)
        y = (jnp.dot(xp, w_ref[0], preferred_element_type=jnp.float32)
             + jnp.dot(x, w_ref[1], preferred_element_type=jnp.float32)
             + jnp.dot(xn, w_ref[2], preferred_element_type=jnp.float32)
             + b_ref[...])
        if residual is not None:
            y = y + residual
        if act:
            y = leaky_relu(y)
        return y

    def layer_norm(x, w, b, eps=1e-5):
        mu = jnp.mean(x, axis=-1, keepdims=True)
        xc = x - mu
        var = jnp.mean(xc * xc, axis=-1, keepdims=True)
        return xc * jax.lax.rsqrt(var + eps) * w + b

    def gelu(x):  # tanh approximation
        c = math.sqrt(2.0 / math.pi)
        return 0.5 * x * (1.0 + jnp.tanh(c * (x + 0.044715 * x * x * x)))

    def kernel(*refs):
        x_ref = refs[0]
        p_refs = refs[1:1 + n_params]
        o_ref = refs[1 + n_params]
        scratch = refs[2 + n_params:]
        kp = jax.tree_util.tree_unflatten(treedef, list(p_refs))

        x = x_ref[0]                                   # (T_in, C_in) f32

        # 1) optional input conv
        if kp['in_conv'] is not None:
            w_in, b_in = kp['in_conv']
            x = conv3(x, w_in, b_in)

        # 2) resblocks: conv -> LeakyReLU(0.2) -> conv, + residual (fused,
        #    intermediate never leaves VMEM)
        for (w1, b1, w2, b2) in kp['resblocks']:
            hmid = conv3(x, w1, b1, act=True)
            x = conv3(hmid, w2, b2, residual=x)

        # 3) nearest x2 upsample + Conv1d + LeakyReLU, upsample folded into
        #    even/odd weight sums:
        #      y[2t]   = w0 x[t-1] + (w1+w2) x[t]
        #      y[2t+1] = (w0+w1) x[t] + w2 x[t+1]
        if n_up > 0:
            even_s, odd_s, up_s = scratch
        for (w_e0, w_e1, w_o0, w_o1, b_up) in kp['up_convs']:
            T = x.shape[0]
            xp, xn = shifts(x)
            y_even = (jnp.dot(xp, w_e0[...], preferred_element_type=jnp.float32)
                      + jnp.dot(x, w_e1[...], preferred_element_type=jnp.float32)
                      + b_up[...])
            y_odd = (jnp.dot(x, w_o0[...], preferred_element_type=jnp.float32)
                     + jnp.dot(xn, w_o1[...], preferred_element_type=jnp.float32)
                     + b_up[...])
            C = y_even.shape[-1]
            even_s[0:T, 0:C] = y_even
            odd_s[0:T, 0:C] = y_odd
            for t in range(T):                          # VMEM-only interleave
                up_s[2 * t:2 * t + 1, 0:C] = even_s[t:t + 1, 0:C]
                up_s[2 * t + 1:2 * t + 2, 0:C] = odd_s[t:t + 1, 0:C]
            x = leaky_relu(up_s[0:2 * T, 0:C])

        # 4) sinusoidal positional encoding (dropout = identity at inference)
        x = x + kp['pe'][...]

        # 5) transformer encoder layers (post-norm, GELU).  Heads are realized
        #    with lane masks so no sub-128-lane slicing/concat is needed.
        D = x.shape[-1]
        Dh = D // nhead
        scale = 1.0 / math.sqrt(Dh)
        lane = jax.lax.broadcasted_iota(jnp.int32, (1, D), 1)
        for lp in kp['layers']:
            q = jnp.dot(x, lp['wq'][...], preferred_element_type=jnp.float32) + lp['bq'][...]
            k = jnp.dot(x, lp['wk'][...], preferred_element_type=jnp.float32) + lp['bk'][...]
            v = jnp.dot(x, lp['wv'][...], preferred_element_type=jnp.float32) + lp['bv'][...]
            attn = None
            for hh in range(nhead):
                lo = hh * Dh
                m = jnp.where((lane >= lo) & (lane < lo + Dh), 1.0, 0.0)  # (1, D)
                s = jax.lax.dot_general(
                    q * m, k, (((1,), (1,)), ((), ())),
                    preferred_element_type=jnp.float32) * scale
                s = s - jnp.max(s, axis=-1, keepdims=True)
                p = jnp.exp(s)
                p = p / jnp.sum(p, axis=-1, keepdims=True)
                part = jnp.dot(p, v * m, preferred_element_type=jnp.float32)
                attn = part if attn is None else attn + part
            attn = jnp.dot(attn, lp['wo'][...],
                           preferred_element_type=jnp.float32) + lp['bo'][...]
            x = layer_norm(x + attn, lp['ln1_w'][...], lp['ln1_b'][...])
            h1 = gelu(jnp.dot(x, lp['w1'][...],
                              preferred_element_type=jnp.float32) + lp['b1'][...])
            ff = jnp.dot(h1, lp['w2'][...],
                         preferred_element_type=jnp.float32) + lp['b2'][...]
            x = layer_norm(x + ff, lp['ln2_w'][...], lp['ln2_b'][...])

        # 6) final linear projection
        wl, bl = kp['linear']
        y = jnp.dot(x, wl[...], preferred_element_type=jnp.float32) + bl[...]
        o_ref[0] = y.astype(o_ref.dtype)

    return kernel


# ----------------------------------------------------------------------------
# Wrapper
# ----------------------------------------------------------------------------
def _const_index_map(ndim):
    return lambda b: (0,) * ndim


def _sinusoidal_pe(T, D):
    pos = jnp.arange(T, dtype=jnp.float32)[:, None]
    div = jnp.exp(jnp.arange(0, D, 2, dtype=jnp.float32) * (-math.log(10000.0) / D))
    pe = jnp.zeros((T, D), jnp.float32)
    pe = pe.at[:, 0::2].set(jnp.sin(pos * div))
    pe = pe.at[:, 1::2].set(jnp.cos(pos * div))
    return pe


def _prepare_kernel_params(params, cfg, t_out):
    d_model = cfg['channels'][-2]
    kp = {
        'in_conv': params['in_conv'],
        'resblocks': params['resblocks'],
        'up_convs': [],
        'pe': _sinusoidal_pe(t_out, d_model),
        'layers': params['layers'],
        'linear': params['linear'],
    }
    for (w, b) in params['up_convs']:
        # fold nearest-x2 upsample into the conv taps (even/odd phases)
        kp['up_convs'].append((w[0], w[1] + w[2], w[0] + w[1], w[2], b))
    return kp


def vq_decoder_v2_forward(params, cfg, inputs):
    """inputs: (B, T, input_size) channels-last (the PyTorch forward's
    pre-permute layout). Returns (B, T * 2**n_up, channels[-1])."""
    B, t_in, c_in = inputs.shape
    n_up = cfg['n_up']
    channels = cfg['channels']
    t_out = t_in * (2 ** n_up)
    d_out = channels[-1]

    kparams = _prepare_kernel_params(params, cfg, t_out)
    flat, treedef = jax.tree_util.tree_flatten(kparams)
    n_params = len(flat)

    kernel = _make_fused_kernel(treedef, n_params, n_up, cfg['num_heads'])

    in_specs = [pl.BlockSpec((1, t_in, c_in), lambda b: (b, 0, 0))]
    in_specs += [pl.BlockSpec(arr.shape, _const_index_map(arr.ndim)) for arr in flat]

    scratch_shapes = []
    if n_up > 0:
        c_up = max(channels[i] for i in range(n_up))
        t_half = t_in * (2 ** (n_up - 1))
        scratch_shapes = [
            pltpu.VMEM((t_half, c_up), jnp.float32),       # even-phase rows
            pltpu.VMEM((t_half, c_up), jnp.float32),       # odd-phase rows
            pltpu.VMEM((2 * t_half, c_up), jnp.float32),   # interleaved result
        ]

    return pl.pallas_call(
        kernel,
        out_shape=jax.ShapeDtypeStruct((B, t_out, d_out), inputs.dtype),
        grid=(B,),
        in_specs=in_specs,
        out_specs=pl.BlockSpec((1, t_out, d_out), lambda b: (b, 0, 0)),
        scratch_shapes=scratch_shapes,
        compiler_params=pltpu.CompilerParams(
            dimension_semantics=("parallel",),
            vmem_limit_bytes=32 * 1024 * 1024,
        ),
    )(inputs, *flat)


# ----------------------------------------------------------------------------
# Parameter construction (xavier-normal-ish weights, zero biases, unit LN)
# ----------------------------------------------------------------------------
def init_params(key, cfg):
    input_size = cfg['input_size']
    channels = cfg['channels']
    n_resblk, n_up = cfg['n_resblk'], cfg['n_up']
    d_model, d_out = channels[-2], channels[-1]
    hidden, L = cfg['hidden_dims'], cfg['num_layers']

    keys = iter(jax.random.split(key, 64))

    def conv_init(k, cin, cout):
        std = (2.0 / (3 * cin + 3 * cout)) ** 0.5
        return (std * jax.random.normal(k, (3, cin, cout), jnp.float32),
                jnp.zeros((1, cout), jnp.float32))

    def linear_init(k, din, dout):
        std = (2.0 / (din + dout)) ** 0.5
        return (std * jax.random.normal(k, (din, dout), jnp.float32),
                jnp.zeros((1, dout), jnp.float32))

    params = {}
    params['in_conv'] = (None if input_size == channels[0]
                         else conv_init(next(keys), input_size, channels[0]))
    params['resblocks'] = []
    for _ in range(n_resblk):
        w1, b1 = conv_init(next(keys), channels[0], channels[0])
        w2, b2 = conv_init(next(keys), channels[0], channels[0])
        params['resblocks'].append((w1, b1, w2, b2))
    # nn.Conv1d(channels[i], channels[i], ...) exactly as in the PyTorch module
    params['up_convs'] = [conv_init(next(keys), channels[i], channels[i])
                          for i in range(n_up)]
    layers = []
    for _ in range(L):
        wq, bq = linear_init(next(keys), d_model, d_model)
        wk, bk = linear_init(next(keys), d_model, d_model)
        wv, bv = linear_init(next(keys), d_model, d_model)
        wo, bo = linear_init(next(keys), d_model, d_model)
        w1, b1 = linear_init(next(keys), d_model, hidden)
        w2, b2 = linear_init(next(keys), hidden, d_model)
        layers.append(dict(
            wq=wq, bq=bq, wk=wk, bk=bk, wv=wv, bv=bv, wo=wo, bo=bo,
            w1=w1, b1=b1, w2=w2, b2=b2,
            ln1_w=jnp.ones((1, d_model), jnp.float32),
            ln1_b=jnp.zeros((1, d_model), jnp.float32),
            ln2_w=jnp.ones((1, d_model), jnp.float32),
            ln2_b=jnp.zeros((1, d_model), jnp.float32)))
    params['layers'] = layers
    params['linear'] = linear_init(next(keys), d_model, d_out)
    return params


# ----------------------------------------------------------------------------
# Pure-JAX reference (for a correctness sanity check)
# ----------------------------------------------------------------------------
def reference_forward(params, cfg, inputs):
    nhead = cfg['num_heads']

    def conv3(x, w, b, slope=None, residual=None):
        xp = jnp.pad(x, ((0, 0), (1, 1), (0, 0)))
        y = (jnp.einsum('bti,io->bto', xp[:, :-2], w[0])
             + jnp.einsum('bti,io->bto', xp[:, 1:-1], w[1])
             + jnp.einsum('bti,io->bto', xp[:, 2:], w[2]) + b)
        if residual is not None:
            y = y + residual
        if slope is not None:
            y = jnp.where(y >= 0, y, slope * y)
        return y

    def layer_norm(x, w, b, eps=1e-5):
        mu = jnp.mean(x, axis=-1, keepdims=True)
        var = jnp.mean((x - mu) ** 2, axis=-1, keepdims=True)
        return (x - mu) * jax.lax.rsqrt(var + eps) * w + b

    def gelu(x):
        c = math.sqrt(2.0 / math.pi)
        return 0.5 * x * (1.0 + jnp.tanh(c * (x + 0.044715 * x ** 3)))

    x = inputs
    if params['in_conv'] is not None:
        w, b = params['in_conv']
        x = conv3(x, w, b)
    for (w1, b1, w2, b2) in params['resblocks']:
        h = conv3(x, w1, b1, slope=0.2)
        x = conv3(h, w2, b2, residual=x)
    for (w, b) in params['up_convs']:
        x = jnp.repeat(x, 2, axis=1)          # nn.Upsample(scale=2, 'nearest')
        x = conv3(x, w, b, slope=0.2)

    Bs, Ts, D = x.shape
    x = x + _sinusoidal_pe(Ts, D)[None]

    for lp in params['layers']:
        Dh = D // nhead
        q = (x @ lp['wq'] + lp['bq']).reshape(Bs, Ts, nhead, Dh)
        k = (x @ lp['wk'] + lp['bk']).reshape(Bs, Ts, nhead, Dh)
        v = (x @ lp['wv'] + lp['bv']).reshape(Bs, Ts, nhead, Dh)
        s = jnp.einsum('bthd,bshd->bhts', q, k) / math.sqrt(Dh)
        p = jax.nn.softmax(s, axis=-1)
        attn = jnp.einsum('bhts,bshd->bthd', p, v).reshape(Bs, Ts, D)
        attn = attn @ lp['wo'] + lp['bo']
        x = layer_norm(x + attn, lp['ln1_w'], lp['ln1_b'])
        ff = gelu(x @ lp['w1'] + lp['b1']) @ lp['w2'] + lp['b2']
        x = layer_norm(x + ff, lp['ln2_w'], lp['ln2_b'])

    wl, bl = params['linear']
    return x @ wl + bl


if __name__ == "__main__":
    key = jax.random.PRNGKey(0)
    k_in, k_p = jax.random.split(key)

    cfg = dict(input_size=32, channels=[128, 128], n_resblk=2, n_up=1,
               hidden_dims=256, num_layers=2, num_heads=4, dropout=0.1)

    B, T = 2, 8
    inputs = jax.random.normal(k_in, (B, T, cfg['input_size']), jnp.float32)
    params = init_params(k_p, cfg)

    out = vq_decoder_v2_forward(params, cfg, inputs)
    out = jax.block_until_ready(out)

    with jax.default_matmul_precision("highest"):
        ref = reference_forward(params, cfg, inputs)
    ref = jax.block_until_ready(ref)

    assert out.shape == (B, T * 2 ** cfg['n_up'], cfg['channels'][-1]), out.shape
    max_err = jnp.max(jnp.abs(out - ref))
    assert jnp.allclose(out, ref, atol=2e-3, rtol=2e-3), f"max abs err {max_err}"

    print("KERNEL_OK")
</pallas_src>

<mosaic_0001>
module attributes {stable_mosaic.version = 11 : i64} {
  func.func @kernel(%arg0: i32, %arg1: memref<1x8x32xf32, #tpu.memory_space<vmem>>, %arg2: memref<3x32x128xf32, #tpu.memory_space<vmem>>, %arg3: memref<1x128xf32, #tpu.memory_space<vmem>>, %arg4: memref<1x256xf32, #tpu.memory_space<vmem>>, %arg5: memref<1x128xf32, #tpu.memory_space<vmem>>, %arg6: memref<1x128xf32, #tpu.memory_space<vmem>>, %arg7: memref<1x128xf32, #tpu.memory_space<vmem>>, %arg8: memref<1x128xf32, #tpu.memory_space<vmem>>, %arg9: memref<1x128xf32, #tpu.memory_space<vmem>>, %arg10: memref<1x128xf32, #tpu.memory_space<vmem>>, %arg11: memref<1x128xf32, #tpu.memory_space<vmem>>, %arg12: memref<1x128xf32, #tpu.memory_space<vmem>>, %arg13: memref<1x128xf32, #tpu.memory_space<vmem>>, %arg14: memref<128x256xf32, #tpu.memory_space<vmem>>, %arg15: memref<256x128xf32, #tpu.memory_space<vmem>>, %arg16: memref<128x128xf32, #tpu.memory_space<vmem>>, %arg17: memref<128x128xf32, #tpu.memory_space<vmem>>, %arg18: memref<128x128xf32, #tpu.memory_space<vmem>>, %arg19: memref<128x128xf32, #tpu.memory_space<vmem>>, %arg20: memref<1x256xf32, #tpu.memory_space<vmem>>, %arg21: memref<1x128xf32, #tpu.memory_space<vmem>>, %arg22: memref<1x128xf32, #tpu.memory_space<vmem>>, %arg23: memref<1x128xf32, #tpu.memory_space<vmem>>, %arg24: memref<1x128xf32, #tpu.memory_space<vmem>>, %arg25: memref<1x128xf32, #tpu.memory_space<vmem>>, %arg26: memref<1x128xf32, #tpu.memory_space<vmem>>, %arg27: memref<1x128xf32, #tpu.memory_space<vmem>>, %arg28: memref<1x128xf32, #tpu.memory_space<vmem>>, %arg29: memref<1x128xf32, #tpu.memory_space<vmem>>, %arg30: memref<128x256xf32, #tpu.memory_space<vmem>>, %arg31: memref<256x128xf32, #tpu.memory_space<vmem>>, %arg32: memref<128x128xf32, #tpu.memory_space<vmem>>, %arg33: memref<128x128xf32, #tpu.memory_space<vmem>>, %arg34: memref<128x128xf32, #tpu.memory_space<vmem>>, %arg35: memref<128x128xf32, #tpu.memory_space<vmem>>, %arg36: memref<128x128xf32, #tpu.memory_space<vmem>>, %arg37: memref<1x128xf32, #tpu.memory_space<vmem>>, %arg38: memref<16x128xf32, #tpu.memory_space<vmem>>, %arg39: memref<3x128x128xf32, #tpu.memory_space<vmem>>, %arg40: memref<1x128xf32, #tpu.memory_space<vmem>>, %arg41: memref<3x128x128xf32, #tpu.memory_space<vmem>>, %arg42: memref<1x128xf32, #tpu.memory_space<vmem>>, %arg43: memref<3x128x128xf32, #tpu.memory_space<vmem>>, %arg44: memref<1x128xf32, #tpu.memory_space<vmem>>, %arg45: memref<3x128x128xf32, #tpu.memory_space<vmem>>, %arg46: memref<1x128xf32, #tpu.memory_space<vmem>>, %arg47: memref<128x128xf32, #tpu.memory_space<vmem>>, %arg48: memref<128x128xf32, #tpu.memory_space<vmem>>, %arg49: memref<128x128xf32, #tpu.memory_space<vmem>>, %arg50: memref<128x128xf32, #tpu.memory_space<vmem>>, %arg51: memref<1x128xf32, #tpu.memory_space<vmem>>, %arg52: memref<1x16x128xf32, #tpu.memory_space<vmem>>, %arg53: memref<8x128xf32, #tpu.memory_space<vmem>>, %arg54: memref<8x128xf32, #tpu.memory_space<vmem>>, %arg55: memref<16x128xf32, #tpu.memory_space<vmem>>) attributes {dimension_semantics = [#tpu.dimension_semantics<parallel>], iteration_bounds = array<i64: 2>, scalar_prefetch = 0 : i64, scratch_operands = 3 : i64, tpu.core_type = #tpu.core_type<tc>, window_params = [{transform_indices = @transform_0, window_bounds = array<i64: 1, 8, 32>}, {pipeline_mode = #tpu.pipeline_mode<synchronous>, transform_indices = @transform_1, window_bounds = array<i64: 3, 32, 128>}, {pipeline_mode = #tpu.pipeline_mode<synchronous>, transform_indices = @transform_2, window_bounds = array<i64: 1, 128>}, {pipeline_mode = #tpu.pipeline_mode<synchronous>, transform_indices = @transform_3, window_bounds = array<i64: 1, 256>}, {pipeline_mode = #tpu.pipeline_mode<synchronous>, transform_indices = @transform_4, window_bounds = array<i64: 1, 128>}, {pipeline_mode = #tpu.pipeline_mode<synchronous>, transform_indices = @transform_5, window_bounds = array<i64: 1, 128>}, {pipeline_mode = #tpu.pipeline_mode<synchronous>, transform_indices = @transform_6, window_bounds = array<i64: 1, 128>}, {pipeline_mode = #tpu.pipeline_mode<synchronous>, transform_indices = @transform_7, window_bounds = array<i64: 1, 128>}, {pipeline_mode = #tpu.pipeline_mode<synchronous>, transform_indices = @transform_8, window_bounds = array<i64: 1, 128>}, {pipeline_mode = #tpu.pipeline_mode<synchronous>, transform_indices = @transform_9, window_bounds = array<i64: 1, 128>}, {pipeline_mode = #tpu.pipeline_mode<synchronous>, transform_indices = @transform_10, window_bounds = array<i64: 1, 128>}, {pipeline_mode = #tpu.pipeline_mode<synchronous>, transform_indices = @transform_11, window_bounds = array<i64: 1, 128>}, {pipeline_mode = #tpu.pipeline_mode<synchronous>, transform_indices = @transform_12, window_bounds = array<i64: 1, 128>}, {pipeline_mode = #tpu.pipeline_mode<synchronous>, transform_indices = @transform_13, window_bounds = array<i64: 128, 256>}, {pipeline_mode = #tpu.pipeline_mode<synchronous>, transform_indices = @transform_14, window_bounds = array<i64: 256, 128>}, {pipeline_mode = #tpu.pipeline_mode<synchronous>, transform_indices = @transform_15, window_bounds = array<i64: 128, 128>}, {pipeline_mode = #tpu.pipeline_mode<synchronous>, transform_indices = @transform_16, window_bounds = array<i64: 128, 128>}, {pipeline_mode = #tpu.pipeline_mode<synchronous>, transform_indices = @transform_17, window_bounds = array<i64: 128, 128>}, {pipeline_mode = #tpu.pipeline_mode<synchronous>, transform_indices = @transform_18, window_bounds = array<i64: 128, 128>}, {pipeline_mode = #tpu.pipeline_mode<synchronous>, transform_indices = @transform_19, window_bounds = array<i64: 1, 256>}, {pipeline_mode = #tpu.pipeline_mode<synchronous>, transform_indices = @transform_20, window_bounds = array<i64: 1, 128>}, {pipeline_mode = #tpu.pipeline_mode<synchronous>, transform_indices = @transform_21, window_bounds = array<i64: 1, 128>}, {pipeline_mode = #tpu.pipeline_mode<synchronous>, transform_indices = @transform_22, window_bounds = array<i64: 1, 128>}, {pipeline_mode = #tpu.pipeline_mode<synchronous>, transform_indices = @transform_23, window_bounds = array<i64: 1, 128>}, {pipeline_mode = #tpu.pipeline_mode<synchronous>, transform_indices = @transform_24, window_bounds = array<i64: 1, 128>}, {pipeline_mode = #tpu.pipeline_mode<synchronous>, transform_indices = @transform_25, window_bounds = array<i64: 1, 128>}, {pipeline_mode = #tpu.pipeline_mode<synchronous>, transform_indices = @transform_26, window_bounds = array<i64: 1, 128>}, {pipeline_mode = #tpu.pipeline_mode<synchronous>, transform_indices = @transform_27, window_bounds = array<i64: 1, 128>}, {pipeline_mode = #tpu.pipeline_mode<synchronous>, transform_indices = @transform_28, window_bounds = array<i64: 1, 128>}, {pipeline_mode = #tpu.pipeline_mode<synchronous>, transform_indices = @transform_29, window_bounds = array<i64: 128, 256>}, {pipeline_mode = #tpu.pipeline_mode<synchronous>, transform_indices = @transform_30, window_bounds = array<i64: 256, 128>}, {pipeline_mode = #tpu.pipeline_mode<synchronous>, transform_indices = @transform_31, window_bounds = array<i64: 128, 128>}, {pipeline_mode = #tpu.pipeline_mode<synchronous>, transform_indices = @transform_32, window_bounds = array<i64: 128, 128>}, {pipeline_mode = #tpu.pipeline_mode<synchronous>, transform_indices = @transform_33, window_bounds = array<i64: 128, 128>}, {pipeline_mode = #tpu.pipeline_mode<synchronous>, transform_indices = @transform_34, window_bounds = array<i64: 128, 128>}, {pipeline_mode = #tpu.pipeline_mode<synchronous>, transform_indices = @transform_35, window_bounds = array<i64: 128, 128>}, {pipeline_mode = #tpu.pipeline_mode<synchronous>, transform_indices = @transform_36, window_bounds = array<i64: 1, 128>}, {pipeline_mode = #tpu.pipeline_mode<synchronous>, transform_indices = @transform_37, window_bounds = array<i64: 16, 128>}, {pipeline_mode = #tpu.pipeline_mode<synchronous>, transform_indices = @transform_38, window_bounds = array<i64: 3, 128, 128>}, {pipeline_mode = #tpu.pipeline_mode<synchronous>, transform_indices = @transform_39, window_bounds = array<i64: 1, 128>}, {pipeline_mode = #tpu.pipeline_mode<synchronous>, transform_indices = @transform_40, window_bounds = array<i64: 3, 128, 128>}, {pipeline_mode = #tpu.pipeline_mode<synchronous>, transform_indices = @transform_41, window_bounds = array<i64: 1, 128>}, {pipeline_mode = #tpu.pipeline_mode<synchronous>, transform_indices = @transform_42, window_bounds = array<i64: 3, 128, 128>}, {pipeline_mode = #tpu.pipeline_mode<synchronous>, transform_indices = @transform_43, window_bounds = array<i64: 1, 128>}, {pipeline_mode = #tpu.pipeline_mode<synchronous>, transform_indices = @transform_44, window_bounds = array<i64: 3, 128, 128>}, {pipeline_mode = #tpu.pipeline_mode<synchronous>, transform_indices = @transform_45, window_bounds = array<i64: 1, 128>}, {pipeline_mode = #tpu.pipeline_mode<synchronous>, transform_indices = @transform_46, window_bounds = array<i64: 128, 128>}, {pipeline_mode = #tpu.pipeline_mode<synchronous>, transform_indices = @transform_47, window_bounds = array<i64: 128, 128>}, {pipeline_mode = #tpu.pipeline_mode<synchronous>, transform_indices = @transform_48, window_bounds = array<i64: 128, 128>}, {pipeline_mode = #tpu.pipeline_mode<synchronous>, transform_indices = @transform_49, window_bounds = array<i64: 128, 128>}, {pipeline_mode = #tpu.pipeline_mode<synchronous>, transform_indices = @transform_50, window_bounds = array<i64: 1, 128>}, {transform_indices = @transform_51, window_bounds = array<i64: 1, 16, 128>}]} {
    %c0 = arith.constant 0 : index
    %c0_0 = arith.constant 0 : index
    %c0_1 = arith.constant 0 : index
    %0 = vector.load %arg1[%c0, %c0_0, %c0_1] : memref<1x8x32xf32, #tpu.memory_space<vmem>>, vector<1x8x32xf32>
    %1 = vector.shape_cast %0 : vector<1x8x32xf32> to vector<8x32xf32>
    %2 = tpu.iota {dimensions = array<i32: 0>} : vector<8x1xi32>
    %c0_i32 = arith.constant 0 : i32
    %3 = vector.broadcast %c0_i32 : i32 to vector<8x1xi32>
    %4 = arith.cmpi eq, %2, %3 : vector<8x1xi32>
    %c1_i32 = arith.constant 1 : i32
    %5 = tpu.dynamic_rotate %1 by %c1_i32 dim 0 : vector<8x32xf32>, i32 -> vector<8x32xf32>
    %cst = arith.constant 0.000000e+00 : f32
    %6 = vector.shape_cast %4 : vector<8x1xi1> to vector<8x1xi1>
    %7 = vector.broadcast %6 : vector<8x1xi1> to vector<8x32xi1>
    %8 = vector.broadcast %cst : f32 to vector<8x32xf32>
    %9 = arith.select %7, %8, %5 : vector<8x32xi1>, vector<8x32xf32>
    %c7_i32 = arith.constant 7 : i32
    %10 = vector.broadcast %c7_i32 : i32 to vector<8x1xi32>
    %11 = arith.cmpi eq, %2, %10 : vector<8x1xi32>
    %c7_i32_2 = arith.constant 7 : i32
    %12 = tpu.dynamic_rotate %1 by %c7_i32_2 dim 0 : vector<8x32xf32>, i32 -> vector<8x32xf32>
    %cst_3 = arith.constant 0.000000e+00 : f32
    %13 = vector.shape_cast %11 : vector<8x1xi1> to vector<8x1xi1>
    %14 = vector.broadcast %13 : vector<8x1xi1> to vector<8x32xi1>
    %15 = vector.broadcast %cst_3 : f32 to vector<8x32xf32>
    %16 = arith.select %14, %15, %12 : vector<8x32xi1>, vector<8x32xf32>
    %c0_4 = arith.constant 0 : index
    %c0_5 = arith.constant 0 : index
    %c0_6 = arith.constant 0 : index
    %17 = vector.load %arg2[%c0_4, %c0_5, %c0_6] : memref<3x32x128xf32, #tpu.memory_space<vmem>>, vector<1x32x128xf32>
    %18 = vector.shape_cast %17 : vector<1x32x128xf32> to vector<32x128xf32>
    %cst_7 = arith.constant dense<0.000000e+00> : vector<8x128xf32>
    %19 = tpu.matmul %9, %18, %cst_7 {dimension_numbers = #tpu.dot_dimension_numbers<[1], [0], [0], [1], [0, 0, 1, 1], [], []>} : vector<8x32xf32>, vector<32x128xf32>, vector<8x128xf32> -> vector<8x128xf32>
    %c1 = arith.constant 1 : index
    %c0_8 = arith.constant 0 : index
    %c0_9 = arith.constant 0 : index
    %20 = vector.load %arg2[%c1, %c0_8, %c0_9] : memref<3x32x128xf32, #tpu.memory_space<vmem>>, vector<1x32x128xf32>
    %21 = vector.shape_cast %20 : vector<1x32x128xf32> to vector<32x128xf32>
    %cst_10 = arith.constant dense<0.000000e+00> : vector<8x128xf32>
    %22 = tpu.matmul %1, %21, %cst_10 {dimension_numbers = #tpu.dot_dimension_numbers<[1], [0], [0], [1], [0, 0, 1, 1], [], []>} : vector<8x32xf32>, vector<32x128xf32>, vector<8x128xf32> -> vector<8x128xf32>
    %23 = arith.addf %19, %22 : vector<8x128xf32>
    %c2 = arith.constant 2 : index
    %c0_11 = arith.constant 0 : index
    %c0_12 = arith.constant 0 : index
    %24 = vector.load %arg2[%c2, %c0_11, %c0_12] : memref<3x32x128xf32, #tpu.memory_space<vmem>>, vector<1x32x128xf32>
    %25 = vector.shape_cast %24 : vector<1x32x128xf32> to vector<32x128xf32>
    %cst_13 = arith.constant dense<0.000000e+00> : vector<8x128xf32>
    %26 = tpu.matmul %16, %25, %cst_13 {dimension_numbers = #tpu.dot_dimension_numbers<[1], [0], [0], [1], [0, 0, 1, 1], [], []>} : vector<8x32xf32>, vector<32x128xf32>, vector<8x128xf32> -> vector<8x128xf32>
    %27 = arith.addf %23, %26 : vector<8x128xf32>
    %c0_14 = arith.constant 0 : index
    %c0_15 = arith.constant 0 : index
    %28 = vector.load %arg3[%c0_14, %c0_15] : memref<1x128xf32, #tpu.memory_space<vmem>>, vector<1x128xf32>
    %29 = vector.broadcast %28 : vector<1x128xf32> to vector<8x128xf32>
    %30 = arith.addf %27, %29 : vector<8x128xf32>
    %31 = tpu.iota {dimensions = array<i32: 0>} : vector<8x1xi32>
    %c0_i32_16 = arith.constant 0 : i32
    %32 = vector.broadcast %c0_i32_16 : i32 to vector<8x1xi32>
    %33 = arith.cmpi eq, %31, %32 : vector<8x1xi32>
    %c1_i32_17 = arith.constant 1 : i32
    %34 = tpu.dynamic_rotate %30 by %c1_i32_17 dim 0 : vector<8x128xf32>, i32 -> vector<8x128xf32>
    %cst_18 = arith.constant 0.000000e+00 : f32
    %35 = vector.shape_cast %33 : vector<8x1xi1> to vector<8x1xi1>
    %36 = vector.broadcast %35 : vector<8x1xi1> to vector<8x128xi1>
    %37 = vector.broadcast %cst_18 : f32 to vector<8x128xf32>
    %38 = arith.select %36, %37, %34 : vector<8x128xi1>, vector<8x128xf32>
    %c7_i32_19 = arith.constant 7 : i32
    %39 = vector.broadcast %c7_i32_19 : i32 to vector<8x1xi32>
    %40 = arith.cmpi eq, %31, %39 : vector<8x1xi32>
    %c7_i32_20 = arith.constant 7 : i32
    %41 = tpu.dynamic_rotate %30 by %c7_i32_20 dim 0 : vector<8x128xf32>, i32 -> vector<8x128xf32>
    %cst_21 = arith.constant 0.000000e+00 : f32
    %42 = vector.shape_cast %40 : vector<8x1xi1> to vector<8x1xi1>
    %43 = vector.broadcast %42 : vector<8x1xi1> to vector<8x128xi1>
    %44 = vector.broadcast %cst_21 : f32 to vector<8x128xf32>
    %45 = arith.select %43, %44, %41 : vector<8x128xi1>, vector<8x128xf32>
    %c0_22 = arith.constant 0 : index
    %c0_23 = arith.constant 0 : index
    %c0_24 = arith.constant 0 : index
    %46 = vector.load %arg39[%c0_22, %c0_23, %c0_24] : memref<3x128x128xf32, #tpu.memory_space<vmem>>, vector<1x128x128xf32>
    %47 = vector.shape_cast %46 : vector<1x128x128xf32> to vector<128x128xf32>
    %cst_25 = arith.constant dense<0.000000e+00> : vector<8x128xf32>
    %48 = tpu.matmul %38, %47, %cst_25 {dimension_numbers = #tpu.dot_dimension_numbers<[1], [0], [0], [1], [0, 0, 1, 1], [], []>} : vector<8x128xf32>, vector<128x128xf32>, vector<8x128xf32> -> vector<8x128xf32>
    %c1_26 = arith.constant 1 : index
    %c0_27 = arith.constant 0 : index
    %c0_28 = arith.constant 0 : index
    %49 = vector.load %arg39[%c1_26, %c0_27, %c0_28] : memref<3x128x128xf32, #tpu.memory_space<vmem>>, vector<1x128x128xf32>
    %50 = vector.shape_cast %49 : vector<1x128x128xf32> to vector<128x128xf32>
    %cst_29 = arith.constant dense<0.000000e+00> : vector<8x128xf32>
    %51 = tpu.matmul %30, %50, %cst_29 {dimension_numbers = #tpu.dot_dimension_numbers<[1], [0], [0], [1], [0, 0, 1, 1], [], []>} : vector<8x128xf32>, vector<128x128xf32>, vector<8x128xf32> -> vector<8x128xf32>
    %52 = arith.addf %48, %51 : vector<8x128xf32>
    %c2_30 = arith.constant 2 : index
    %c0_31 = arith.constant 0 : index
    %c0_32 = arith.constant 0 : index
    %53 = vector.load %arg39[%c2_30, %c0_31, %c0_32] : memref<3x128x128xf32, #tpu.memory_space<vmem>>, vector<1x128x128xf32>
    %54 = vector.shape_cast %53 : vector<1x128x128xf32> to vector<128x128xf32>
    %cst_33 = arith.constant dense<0.000000e+00> : vector<8x128xf32>
    %55 = tpu.matmul %45, %54, %cst_33 {dimension_numbers = #tpu.dot_dimension_numbers<[1], [0], [0], [1], [0, 0, 1, 1], [], []>} : vector<8x128xf32>, vector<128x128xf32>, vector<8x128xf32> -> vector<8x128xf32>
    %56 = arith.addf %52, %55 : vector<8x128xf32>
    %c0_34 = arith.constant 0 : index
    %c0_35 = arith.constant 0 : index
    %57 = vector.load %arg40[%c0_34, %c0_35] : memref<1x128xf32, #tpu.memory_space<vmem>>, vector<1x128xf32>
    %58 = vector.broadcast %57 : vector<1x128xf32> to vector<8x128xf32>
    %59 = arith.addf %56, %58 : vector<8x128xf32>
    %cst_36 = arith.constant 0.000000e+00 : f32
    %60 = vector.broadcast %cst_36 : f32 to vector<8x128xf32>
    %61 = arith.cmpf oge, %59, %60 : vector<8x128xf32>
    %cst_37 = arith.constant 2.000000e-01 : f32
    %62 = vector.broadcast %cst_37 : f32 to vector<8x128xf32>
    %63 = arith.mulf %62, %59 : vector<8x128xf32>
    %64 = arith.select %61, %59, %63 : vector<8x128xi1>, vector<8x128xf32>
    %65 = tpu.iota {dimensions = array<i32: 0>} : vector<8x1xi32>
    %c0_i32_38 = arith.constant 0 : i32
    %66 = vector.broadcast %c0_i32_38 : i32 to vector<8x1xi32>
    %67 = arith.cmpi eq, %65, %66 : vector<8x1xi32>
    %c1_i32_39 = arith.constant 1 : i32
    %68 = tpu.dynamic_rotate %64 by %c1_i32_39 dim 0 : vector<8x128xf32>, i32 -> vector<8x128xf32>
    %cst_40 = arith.constant 0.000000e+00 : f32
    %69 = vector.shape_cast %67 : vector<8x1xi1> to vector<8x1xi1>
    %70 = vector.broadcast %69 : vector<8x1xi1> to vector<8x128xi1>
    %71 = vector.broadcast %cst_40 : f32 to vector<8x128xf32>
    %72 = arith.select %70, %71, %68 : vector<8x128xi1>, vector<8x128xf32>
    %c7_i32_41 = arith.constant 7 : i32
    %73 = vector.broadcast %c7_i32_41 : i32 to vector<8x1xi32>
    %74 = arith.cmpi eq, %65, %73 : vector<8x1xi32>
    %c7_i32_42 = arith.constant 7 : i32
    %75 = tpu.dynamic_rotate %64 by %c7_i32_42 dim 0 : vector<8x128xf32>, i32 -> vector<8x128xf32>
    %cst_43 = arith.constant 0.000000e+00 : f32
    %76 = vector.shape_cast %74 : vector<8x1xi1> to vector<8x1xi1>
    %77 = vector.broadcast %76 : vector<8x1xi1> to vector<8x128xi1>
    %78 = vector.broadcast %cst_43 : f32 to vector<8x128xf32>
    %79 = arith.select %77, %78, %75 : vector<8x128xi1>, vector<8x128xf32>
    %c0_44 = arith.constant 0 : index
    %c0_45 = arith.constant 0 : index
    %c0_46 = arith.constant 0 : index
    %80 = vector.load %arg41[%c0_44, %c0_45, %c0_46] : memref<3x128x128xf32, #tpu.memory_space<vmem>>, vector<1x128x128xf32>
    %81 = vector.shape_cast %80 : vector<1x128x128xf32> to vector<128x128xf32>
    %cst_47 = arith.constant dense<0.000000e+00> : vector<8x128xf32>
    %82 = tpu.matmul %72, %81, %cst_47 {dimension_numbers = #tpu.dot_dimension_numbers<[1], [0], [0], [1], [0, 0, 1, 1], [], []>} : vector<8x128xf32>, vector<128x128xf32>, vector<8x128xf32> -> vector<8x128xf32>
    %c1_48 = arith.constant 1 : index
    %c0_49 = arith.constant 0 : index
    %c0_50 = arith.constant 0 : index
    %83 = vector.load %arg41[%c1_48, %c0_49, %c0_50] : memref<3x128x128xf32, #tpu.memory_space<vmem>>, vector<1x128x128xf32>
    %84 = vector.shape_cast %83 : vector<1x128x128xf32> to vector<128x128xf32>
    %cst_51 = arith.constant dense<0.000000e+00> : vector<8x128xf32>
    %85 = tpu.matmul %64, %84, %cst_51 {dimension_numbers = #tpu.dot_dimension_numbers<[1], [0], [0], [1], [0, 0, 1, 1], [], []>} : vector<8x128xf32>, vector<128x128xf32>, vector<8x128xf32> -> vector<8x128xf32>
    %86 = arith.addf %82, %85 : vector<8x128xf32>
    %c2_52 = arith.constant 2 : index
    %c0_53 = arith.constant 0 : index
    %c0_54 = arith.constant 0 : index
    %87 = vector.load %arg41[%c2_52, %c0_53, %c0_54] : memref<3x128x128xf32, #tpu.memory_space<vmem>>, vector<1x128x128xf32>
    %88 = vector.shape_cast %87 : vector<1x128x128xf32> to vector<128x128xf32>
    %cst_55 = arith.constant dense<0.000000e+00> : vector<8x128xf32>
    %89 = tpu.matmul %79, %88, %cst_55 {dimension_numbers = #tpu.dot_dimension_numbers<[1], [0], [0], [1], [0, 0, 1, 1], [], []>} : vector<8x128xf32>, vector<128x128xf32>, vector<8x128xf32> -> vector<8x128xf32>
    %90 = arith.addf %86, %89 : vector<8x128xf32>
    %c0_56 = arith.constant 0 : index
    %c0_57 = arith.constant 0 : index
    %91 = vector.load %arg42[%c0_56, %c0_57] : memref<1x128xf32, #tpu.memory_space<vmem>>, vector<1x128xf32>
    %92 = vector.broadcast %91 : vector<1x128xf32> to vector<8x128xf32>
    %93 = arith.addf %90, %92 : vector<8x128xf32>
    %94 = arith.addf %93, %30 : vector<8x128xf32>
    %95 = tpu.iota {dimensions = array<i32: 0>} : vector<8x1xi32>
    %c0_i32_58 = arith.constant 0 : i32
    %96 = vector.broadcast %c0_i32_58 : i32 to vector<8x1xi32>
    %97 = arith.cmpi eq, %95, %96 : vector<8x1xi32>
    %c1_i32_59 = arith.constant 1 : i32
    %98 = tpu.dynamic_rotate %94 by %c1_i32_59 dim 0 : vector<8x128xf32>, i32 -> vector<8x128xf32>
    %cst_60 = arith.constant 0.000000e+00 : f32
    %99 = vector.shape_cast %97 : vector<8x1xi1> to vector<8x1xi1>
    %100 = vector.broadcast %99 : vector<8x1xi1> to vector<8x128xi1>
    %101 = vector.broadcast %cst_60 : f32 to vector<8x128xf32>
    %102 = arith.select %100, %101, %98 : vector<8x128xi1>, vector<8x128xf32>
    %c7_i32_61 = arith.constant 7 : i32
    %103 = vector.broadcast %c7_i32_61 : i32 to vector<8x1xi32>
    %104 = arith.cmpi eq, %95, %103 : vector<8x1xi32>
    %c7_i32_62 = arith.constant 7 : i32
    %105 = tpu.dynamic_rotate %94 by %c7_i32_62 dim 0 : vector<8x128xf32>, i32 -> vector<8x128xf32>
    %cst_63 = arith.constant 0.000000e+00 : f32
    %106 = vector.shape_cast %104 : vector<8x1xi1> to vector<8x1xi1>
    %107 = vector.broadcast %106 : vector<8x1xi1> to vector<8x128xi1>
    %108 = vector.broadcast %cst_63 : f32 to vector<8x128xf32>
    %109 = arith.select %107, %108, %105 : vector<8x128xi1>, vector<8x128xf32>
    %c0_64 = arith.constant 0 : index
    %c0_65 = arith.constant 0 : index
    %c0_66 = arith.constant 0 : index
    %110 = vector.load %arg43[%c0_64, %c0_65, %c0_66] : memref<3x128x128xf32, #tpu.memory_space<vmem>>, vector<1x128x128xf32>
    %111 = vector.shape_cast %110 : vector<1x128x128xf32> to vector<128x128xf32>
    %cst_67 = arith.constant dense<0.000000e+00> : vector<8x128xf32>
    %112 = tpu.matmul %102, %111, %cst_67 {dimension_numbers = #tpu.dot_dimension_numbers<[1], [0], [0], [1], [0, 0, 1, 1], [], []>} : vector<8x128xf32>, vector<128x128xf32>, vector<8x128xf32> -> vector<8x128xf32>
    %c1_68 = arith.constant 1 : index
    %c0_69 = arith.constant 0 : index
    %c0_70 = arith.constant 0 : index
    %113 = vector.load %arg43[%c1_68, %c0_69, %c0_70] : memref<3x128x128xf32, #tpu.memory_space<vmem>>, vector<1x128x128xf32>
    %114 = vector.shape_cast %113 : vector<1x128x128xf32> to vector<128x128xf32>
    %cst_71 = arith.constant dense<0.000000e+00> : vector<8x128xf32>
    %115 = tpu.matmul %94, %114, %cst_71 {dimension_numbers = #tpu.dot_dimension_numbers<[1], [0], [0], [1], [0, 0, 1, 1], [], []>} : vector<8x128xf32>, vector<128x128xf32>, vector<8x128xf32> -> vector<8x128xf32>
    %116 = arith.addf %112, %115 : vector<8x128xf32>
    %c2_72 = arith.constant 2 : index
    %c0_73 = arith.constant 0 : index
    %c0_74 = arith.constant 0 : index
    %117 = vector.load %arg43[%c2_72, %c0_73, %c0_74] : memref<3x128x128xf32, #tpu.memory_space<vmem>>, vector<1x128x128xf32>
    %118 = vector.shape_cast %117 : vector<1x128x128xf32> to vector<128x128xf32>
    %cst_75 = arith.constant dense<0.000000e+00> : vector<8x128xf32>
    %119 = tpu.matmul %109, %118, %cst_75 {dimension_numbers = #tpu.dot_dimension_numbers<[1], [0], [0], [1], [0, 0, 1, 1], [], []>} : vector<8x128xf32>, vector<128x128xf32>, vector<8x128xf32> -> vector<8x128xf32>
    %120 = arith.addf %116, %119 : vector<8x128xf32>
    %c0_76 = arith.constant 0 : index
    %c0_77 = arith.constant 0 : index
    %121 = vector.load %arg44[%c0_76, %c0_77] : memref<1x128xf32, #tpu.memory_space<vmem>>, vector<1x128xf32>
    %122 = vector.broadcast %121 : vector<1x128xf32> to vector<8x128xf32>
    %123 = arith.addf %120, %122 : vector<8x128xf32>
    %cst_78 = arith.constant 0.000000e+00 : f32
    %124 = vector.broadcast %cst_78 : f32 to vector<8x128xf32>
    %125 = arith.cmpf oge, %123, %124 : vector<8x128xf32>
    %cst_79 = arith.constant 2.000000e-01 : f32
    %126 = vector.broadcast %cst_79 : f32 to vector<8x128xf32>
    %127 = arith.mulf %126, %123 : vector<8x128xf32>
    %128 = arith.select %125, %123, %127 : vector<8x128xi1>, vector<8x128xf32>
    %129 = tpu.iota {dimensions = array<i32: 0>} : vector<8x1xi32>
    %c0_i32_80 = arith.constant 0 : i32
    %130 = vector.broadcast %c0_i32_80 : i32 to vector<8x1xi32>
    %131 = arith.cmpi eq, %129, %130 : vector<8x1xi32>
    %c1_i32_81 = arith.constant 1 : i32
    %132 = tpu.dynamic_rotate %128 by %c1_i32_81 dim 0 : vector<8x128xf32>, i32 -> vector<8x128xf32>
    %cst_82 = arith.constant 0.000000e+00 : f32
    %133 = vector.shape_cast %131 : vector<8x1xi1> to vector<8x1xi1>
    %134 = vector.broadcast %133 : vector<8x1xi1> to vector<8x128xi1>
    %135 = vector.broadcast %cst_82 : f32 to vector<8x128xf32>
    %136 = arith.select %134, %135, %132 : vector<8x128xi1>, vector<8x128xf32>
    %c7_i32_83 = arith.constant 7 : i32
    %137 = vector.broadcast %c7_i32_83 : i32 to vector<8x1xi32>
    %138 = arith.cmpi eq, %129, %137 : vector<8x1xi32>
    %c7_i32_84 = arith.constant 7 : i32
    %139 = tpu.dynamic_rotate %128 by %c7_i32_84 dim 0 : vector<8x128xf32>, i32 -> vector<8x128xf32>
    %cst_85 = arith.constant 0.000000e+00 : f32
    %140 = vector.shape_cast %138 : vector<8x1xi1> to vector<8x1xi1>
    %141 = vector.broadcast %140 : vector<8x1xi1> to vector<8x128xi1>
    %142 = vector.broadcast %cst_85 : f32 to vector<8x128xf32>
    %143 = arith.select %141, %142, %139 : vector<8x128xi1>, vector<8x128xf32>
    %c0_86 = arith.constant 0 : index
    %c0_87 = arith.constant 0 : index
    %c0_88 = arith.constant 0 : index
    %144 = vector.load %arg45[%c0_86, %c0_87, %c0_88] : memref<3x128x128xf32, #tpu.memory_space<vmem>>, vector<1x128x128xf32>
    %145 = vector.shape_cast %144 : vector<1x128x128xf32> to vector<128x128xf32>
    %cst_89 = arith.constant dense<0.000000e+00> : vector<8x128xf32>
    %146 = tpu.matmul %136, %145, %cst_89 {dimension_numbers = #tpu.dot_dimension_numbers<[1], [0], [0], [1], [0, 0, 1, 1], [], []>} : vector<8x128xf32>, vector<128x128xf32>, vector<8x128xf32> -> vector<8x128xf32>
    %c1_90 = arith.constant 1 : index
    %c0_91 = arith.constant 0 : index
    %c0_92 = arith.constant 0 : index
    %147 = vector.load %arg45[%c1_90, %c0_91, %c0_92] : memref<3x128x128xf32, #tpu.memory_space<vmem>>, vector<1x128x128xf32>
    %148 = vector.shape_cast %147 : vector<1x128x128xf32> to vector<128x128xf32>
    %cst_93 = arith.constant dense<0.000000e+00> : vector<8x128xf32>
    %149 = tpu.matmul %128, %148, %cst_93 {dimension_numbers = #tpu.dot_dimension_numbers<[1], [0], [0], [1], [0, 0, 1, 1], [], []>} : vector<8x128xf32>, vector<128x128xf32>, vector<8x128xf32> -> vector<8x128xf32>
    %150 = arith.addf %146, %149 : vector<8x128xf32>
    %c2_94 = arith.constant 2 : index
    %c0_95 = arith.constant 0 : index
    %c0_96 = arith.constant 0 : index
    %151 = vector.load %arg45[%c2_94, %c0_95, %c0_96] : memref<3x128x128xf32, #tpu.memory_space<vmem>>, vector<1x128x128xf32>
    %152 = vector.shape_cast %151 : vector<1x128x128xf32> to vector<128x128xf32>
    %cst_97 = arith.constant dense<0.000000e+00> : vector<8x128xf32>
    %153 = tpu.matmul %143, %152, %cst_97 {dimension_numbers = #tpu.dot_dimension_numbers<[1], [0], [0], [1], [0, 0, 1, 1], [], []>} : vector<8x128xf32>, vector<128x128xf32>, vector<8x128xf32> -> vector<8x128xf32>
    %154 = arith.addf %150, %153 : vector<8x128xf32>
    %c0_98 = arith.constant 0 : index
    %c0_99 = arith.constant 0 : index
    %155 = vector.load %arg46[%c0_98, %c0_99] : memref<1x128xf32, #tpu.memory_space<vmem>>, vector<1x128xf32>
    %156 = vector.broadcast %155 : vector<1x128xf32> to vector<8x128xf32>
    %157 = arith.addf %154, %156 : vector<8x128xf32>
    %158 = arith.addf %157, %94 : vector<8x128xf32>
    %159 = tpu.iota {dimensions = array<i32: 0>} : vector<8x1xi32>
    %c0_i32_100 = arith.constant 0 : i32
    %160 = vector.broadcast %c0_i32_100 : i32 to vector<8x1xi32>
    %161 = arith.cmpi eq, %159, %160 : vector<8x1xi32>
    %c1_i32_101 = arith.constant 1 : i32
    %162 = tpu.dynamic_rotate %158 by %c1_i32_101 dim 0 : vector<8x128xf32>, i32 -> vector<8x128xf32>
    %cst_102 = arith.constant 0.000000e+00 : f32
    %163 = vector.shape_cast %161 : vector<8x1xi1> to vector<8x1xi1>
    %164 = vector.broadcast %163 : vector<8x1xi1> to vector<8x128xi1>
    %165 = vector.broadcast %cst_102 : f32 to vector<8x128xf32>
    %166 = arith.select %164, %165, %162 : vector<8x128xi1>, vector<8x128xf32>
    %c7_i32_103 = arith.constant 7 : i32
    %167 = vector.broadcast %c7_i32_103 : i32 to vector<8x1xi32>
    %168 = arith.cmpi eq, %159, %167 : vector<8x1xi32>
    %c7_i32_104 = arith.constant 7 : i32
    %169 = tpu.dynamic_rotate %158 by %c7_i32_104 dim 0 : vector<8x128xf32>, i32 -> vector<8x128xf32>
    %cst_105 = arith.constant 0.000000e+00 : f32
    %170 = vector.shape_cast %168 : vector<8x1xi1> to vector<8x1xi1>
    %171 = vector.broadcast %170 : vector<8x1xi1> to vector<8x128xi1>
    %172 = vector.broadcast %cst_105 : f32 to vector<8x128xf32>
    %173 = arith.select %171, %172, %169 : vector<8x128xi1>, vector<8x128xf32>
    %c0_106 = arith.constant 0 : index
    %c0_107 = arith.constant 0 : index
    %174 = vector.load %arg47[%c0_106, %c0_107] : memref<128x128xf32, #tpu.memory_space<vmem>>, vector<128x128xf32>
    %cst_108 = arith.constant dense<0.000000e+00> : vector<8x128xf32>
    %175 = tpu.matmul %166, %174, %cst_108 {dimension_numbers = #tpu.dot_dimension_numbers<[1], [0], [0], [1], [0, 0, 1, 1], [], []>} : vector<8x128xf32>, vector<128x128xf32>, vector<8x128xf32> -> vector<8x128xf32>
    %c0_109 = arith.constant 0 : index
    %c0_110 = arith.constant 0 : index
    %176 = vector.load %arg48[%c0_109, %c0_110] : memref<128x128xf32, #tpu.memory_space<vmem>>, vector<128x128xf32>
    %cst_111 = arith.constant dense<0.000000e+00> : vector<8x128xf32>
    %177 = tpu.matmul %158, %176, %cst_111 {dimension_numbers = #tpu.dot_dimension_numbers<[1], [0], [0], [1], [0, 0, 1, 1], [], []>} : vector<8x128xf32>, vector<128x128xf32>, vector<8x128xf32> -> vector<8x128xf32>
    %178 = arith.addf %175, %177 : vector<8x128xf32>
    %c0_112 = arith.constant 0 : index
    %c0_113 = arith.constant 0 : index
    %179 = vector.load %arg51[%c0_112, %c0_113] : memref<1x128xf32, #tpu.memory_space<vmem>>, vector<1x128xf32>
    %180 = vector.broadcast %179 : vector<1x128xf32> to vector<8x128xf32>
    %181 = arith.addf %178, %180 : vector<8x128xf32>
    %c0_114 = arith.constant 0 : index
    %c0_115 = arith.constant 0 : index
    %182 = vector.load %arg49[%c0_114, %c0_115] : memref<128x128xf32, #tpu.memory_space<vmem>>, vector<128x128xf32>
    %cst_116 = arith.constant dense<0.000000e+00> : vector<8x128xf32>
    %183 = tpu.matmul %158, %182, %cst_116 {dimension_numbers = #tpu.dot_dimension_numbers<[1], [0], [0], [1], [0, 0, 1, 1], [], []>} : vector<8x128xf32>, vector<128x128xf32>, vector<8x128xf32> -> vector<8x128xf32>
    %c0_117 = arith.constant 0 : index
    %c0_118 = arith.constant 0 : index
    %184 = vector.load %arg50[%c0_117, %c0_118] : memref<128x128xf32, #tpu.memory_space<vmem>>, vector<128x128xf32>
    %cst_119 = arith.constant dense<0.000000e+00> : vector<8x128xf32>
    %185 = tpu.matmul %173, %184, %cst_119 {dimension_numbers = #tpu.dot_dimension_numbers<[1], [0], [0], [1], [0, 0, 1, 1], [], []>} : vector<8x128xf32>, vector<128x128xf32>, vector<8x128xf32> -> vector<8x128xf32>
    %186 = arith.addf %183, %185 : vector<8x128xf32>
    %c0_120 = arith.constant 0 : index
    %c0_121 = arith.constant 0 : index
    %187 = vector.load %arg51[%c0_120, %c0_121] : memref<1x128xf32, #tpu.memory_space<vmem>>, vector<1x128xf32>
    %188 = vector.broadcast %187 : vector<1x128xf32> to vector<8x128xf32>
    %189 = arith.addf %186, %188 : vector<8x128xf32>
    %c0_122 = arith.constant 0 : index
    %c0_123 = arith.constant 0 : index
    %190 = vector.load %arg53[%c0_122, %c0_123] : memref<8x128xf32, #tpu.memory_space<vmem>>, vector<8x128xf32>
    tpu.vector_store %arg53[%c0_122, %c0_123], %181 {strides = array<i32>} : memref<8x128xf32, #tpu.memory_space<vmem>>, vector<8x128xf32>,
    %c0_124 = arith.constant 0 : index
    %c0_125 = arith.constant 0 : index
    %191 = vector.load %arg54[%c0_124, %c0_125] : memref<8x128xf32, #tpu.memory_space<vmem>>, vector<8x128xf32>
    tpu.vector_store %arg54[%c0_124, %c0_125], %189 {strides = array<i32>} : memref<8x128xf32, #tpu.memory_space<vmem>>, vector<8x128xf32>,
    %c0_126 = arith.constant 0 : index
    %c0_127 = arith.constant 0 : index
    %192 = vector.load %arg53[%c0_126, %c0_127] : memref<8x128xf32, #tpu.memory_space<vmem>>, vector<1x128xf32>
    %c0_128 = arith.constant 0 : index
    %c0_129 = arith.constant 0 : index
    %193 = vector.load %arg55[%c0_128, %c0_129] : memref<16x128xf32, #tpu.memory_space<vmem>>, vector<1x128xf32>
    tpu.vector_store %arg55[%c0_128, %c0_129], %192 {strides = array<i32>} : memref<16x128xf32, #tpu.memory_space<vmem>>, vector<1x128xf32>,
    %c0_130 = arith.constant 0 : index
    %c0_131 = arith.constant 0 : index
    %194 = vector.load %arg54[%c0_130, %c0_131] : memref<8x128xf32, #tpu.memory_space<vmem>>, vector<1x128xf32>
    %c1_132 = arith.constant 1 : index
    %c0_133 = arith.constant 0 : index
    %195 = vector.load %arg55[%c1_132, %c0_133] : memref<16x128xf32, #tpu.memory_space<vmem>>, vector<1x128xf32>
    tpu.vector_store %arg55[%c1_132, %c0_133], %194 {strides = array<i32>} : memref<16x128xf32, #tpu.memory_space<vmem>>, vector<1x128xf32>,
    %c1_134 = arith.constant 1 : index
    %c0_135 = arith.constant 0 : index
    %196 = vector.load %arg53[%c1_134, %c0_135] : memref<8x128xf32, #tpu.memory_space<vmem>>, vector<1x128xf32>
    %c2_136 = arith.constant 2 : index
    %c0_137 = arith.constant 0 : index
    %197 = vector.load %arg55[%c2_136, %c0_137] : memref<16x128xf32, #tpu.memory_space<vmem>>, vector<1x128xf32>
    tpu.vector_store %arg55[%c2_136, %c0_137], %196 {strides = array<i32>} : memref<16x128xf32, #tpu.memory_space<vmem>>, vector<1x128xf32>,
    %c1_138 = arith.constant 1 : index
    %c0_139 = arith.constant 0 : index
    %198 = vector.load %arg54[%c1_138, %c0_139] : memref<8x128xf32, #tpu.memory_space<vmem>>, vector<1x128xf32>
    %c3 = arith.constant 3 : index
    %c0_140 = arith.constant 0 : index
    %199 = vector.load %arg55[%c3, %c0_140] : memref<16x128xf32, #tpu.memory_space<vmem>>, vector<1x128xf32>
    tpu.vector_store %arg55[%c3, %c0_140], %198 {strides = array<i32>} : memref<16x128xf32, #tpu.memory_space<vmem>>, vector<1x128xf32>,
    %c2_141 = arith.constant 2 : index
    %c0_142 = arith.constant 0 : index
    %200 = vector.load %arg53[%c2_141, %c0_142] : memref<8x128xf32, #tpu.memory_space<vmem>>, vector<1x128xf32>
    %c4 = arith.constant 4 : index
    %c0_143 = arith.constant 0 : index
    %201 = vector.load %arg55[%c4, %c0_143] : memref<16x128xf32, #tpu.memory_space<vmem>>, vector<1x128xf32>
    tpu.vector_store %arg55[%c4, %c0_143], %200 {strides = array<i32>} : memref<16x128xf32, #tpu.memory_space<vmem>>, vector<1x128xf32>,
    %c2_144 = arith.constant 2 : index
    %c0_145 = arith.constant 0 : index
    %202 = vector.load %arg54[%c2_144, %c0_145] : memref<8x128xf32, #tpu.memory_space<vmem>>, vector<1x128xf32>
    %c5 = arith.constant 5 : index
    %c0_146 = arith.constant 0 : index
    %203 = vector.load %arg55[%c5, %c0_146] : memref<16x128xf32, #tpu.memory_space<vmem>>, vector<1x128xf32>
    tpu.vector_store %arg55[%c5, %c0_146], %202 {strides = array<i32>} : memref<16x128xf32, #tpu.memory_space<vmem>>, vector<1x128xf32>,
    %c3_147 = arith.constant 3 : index
    %c0_148 = arith.constant 0 : index
    %204 = vector.load %arg53[%c3_147, %c0_148] : memref<8x128xf32, #tpu.memory_space<vmem>>, vector<1x128xf32>
    %c6 = arith.constant 6 : index
    %c0_149 = arith.constant 0 : index
    %205 = vector.load %arg55[%c6, %c0_149] : memref<16x128xf32, #tpu.memory_space<vmem>>, vector<1x128xf32>
    tpu.vector_store %arg55[%c6, %c0_149], %204 {strides = array<i32>} : memref<16x128xf32, #tpu.memory_space<vmem>>, vector<1x128xf32>,
    %c3_150 = arith.constant 3 : index
    %c0_151 = arith.constant 0 : index
    %206 = vector.load %arg54[%c3_150, %c0_151] : memref<8x128xf32, #tpu.memory_space<vmem>>, vector<1x128xf32>
    %c7 = arith.constant 7 : index
    %c0_152 = arith.constant 0 : index
    %207 = vector.load %arg55[%c7, %c0_152] : memref<16x128xf32, #tpu.memory_space<vmem>>, vector<1x128xf32>
    tpu.vector_store %arg55[%c7, %c0_152], %206 {strides = array<i32>} : memref<16x128xf32, #tpu.memory_space<vmem>>, vector<1x128xf32>,
    %c4_153 = arith.constant 4 : index
    %c0_154 = arith.constant 0 : index
    %208 = vector.load %arg53[%c4_153, %c0_154] : memref<8x128xf32, #tpu.memory_space<vmem>>, vector<1x128xf32>
    %c8 = arith.constant 8 : index
    %c0_155 = arith.constant 0 : index
    %209 = vector.load %arg55[%c8, %c0_155] : memref<16x128xf32, #tpu.memory_space<vmem>>, vector<1x128xf32>
    tpu.vector_store %arg55[%c8, %c0_155], %208 {strides = array<i32>} : memref<16x128xf32, #tpu.memory_space<vmem>>, vector<1x128xf32>,
    %c4_156 = arith.constant 4 : index
    %c0_157 = arith.constant 0 : index
    %210 = vector.load %arg54[%c4_156, %c0_157] : memref<8x128xf32, #tpu.memory_space<vmem>>, vector<1x128xf32>
    %c9 = arith.constant 9 : index
    %c0_158 = arith.constant 0 : index
    %211 = vector.load %arg55[%c9, %c0_158] : memref<16x128xf32, #tpu.memory_space<vmem>>, vector<1x128xf32>
    tpu.vector_store %arg55[%c9, %c0_158], %210 {strides = array<i32>} : memref<16x128xf32, #tpu.memory_space<vmem>>, vector<1x128xf32>,
    %c5_159 = arith.constant 5 : index
    %c0_160 = arith.constant 0 : index
    %212 = vector.load %arg53[%c5_159, %c0_160] : memref<8x128xf32, #tpu.memory_space<vmem>>, vector<1x128xf32>
    %c10 = arith.constant 10 : index
    %c0_161 = arith.constant 0 : index
    %213 = vector.load %arg55[%c10, %c0_161] : memref<16x128xf32, #tpu.memory_space<vmem>>, vector<1x128xf32>
    tpu.vector_store %arg55[%c10, %c0_161], %212 {strides = array<i32>} : memref<16x128xf32, #tpu.memory_space<vmem>>, vector<1x128xf32>,
    %c5_162 = arith.constant 5 : index
    %c0_163 = arith.constant 0 : index
    %214 = vector.load %arg54[%c5_162, %c0_163] : memref<8x128xf32, #tpu.memory_space<vmem>>, vector<1x128xf32>
    %c11 = arith.constant 11 : index
    %c0_164 = arith.constant 0 : index
    %215 = vector.load %arg55[%c11, %c0_164] : memref<16x128xf32, #tpu.memory_space<vmem>>, vector<1x128xf32>
    tpu.vector_store %arg55[%c11, %c0_164], %214 {strides = array<i32>} : memref<16x128xf32, #tpu.memory_space<vmem>>, vector<1x128xf32>,
    %c6_165 = arith.constant 6 : index
    %c0_166 = arith.constant 0 : index
    %216 = vector.load %arg53[%c6_165, %c0_166] : memref<8x128xf32, #tpu.memory_space<vmem>>, vector<1x128xf32>
    %c12 = arith.constant 12 : index
    %c0_167 = arith.constant 0 : index
    %217 = vector.load %arg55[%c12, %c0_167] : memref<16x128xf32, #tpu.memory_space<vmem>>, vector<1x128xf32>
    tpu.vector_store %arg55[%c12, %c0_167], %216 {strides = array<i32>} : memref<16x128xf32, #tpu.memory_space<vmem>>, vector<1x128xf32>,
    %c6_168 = arith.constant 6 : index
    %c0_169 = arith.constant 0 : index
    %218 = vector.load %arg54[%c6_168, %c0_169] : memref<8x128xf32, #tpu.memory_space<vmem>>, vector<1x128xf32>
    %c13 = arith.constant 13 : index
    %c0_170 = arith.constant 0 : index
    %219 = vector.load %arg55[%c13, %c0_170] : memref<16x128xf32, #tpu.memory_space<vmem>>, vector<1x128xf32>
    tpu.vector_store %arg55[%c13, %c0_170], %218 {strides = array<i32>} : memref<16x128xf32, #tpu.memory_space<vmem>>, vector<1x128xf32>,
    %c7_171 = arith.constant 7 : index
    %c0_172 = arith.constant 0 : index
    %220 = vector.load %arg53[%c7_171, %c0_172] : memref<8x128xf32, #tpu.memory_space<vmem>>, vector<1x128xf32>
    %c14 = arith.constant 14 : index
    %c0_173 = arith.constant 0 : index
    %221 = vector.load %arg55[%c14, %c0_173] : memref<16x128xf32, #tpu.memory_space<vmem>>, vector<1x128xf32>
    tpu.vector_store %arg55[%c14, %c0_173], %220 {strides = array<i32>} : memref<16x128xf32, #tpu.memory_space<vmem>>, vector<1x128xf32>,
    %c7_174 = arith.constant 7 : index
    %c0_175 = arith.constant 0 : index
    %222 = vector.load %arg54[%c7_174, %c0_175] : memref<8x128xf32, #tpu.memory_space<vmem>>, vector<1x128xf32>
    %c15 = arith.constant 15 : index
    %c0_176 = arith.constant 0 : index
    %223 = vector.load %arg55[%c15, %c0_176] : memref<16x128xf32, #tpu.memory_space<vmem>>, vector<1x128xf32>
    tpu.vector_store %arg55[%c15, %c0_176], %222 {strides = array<i32>} : memref<16x128xf32, #tpu.memory_space<vmem>>, vector<1x128xf32>,
    %c0_177 = arith.constant 0 : index
    %c0_178 = arith.constant 0 : index
    %224 = vector.load %arg55[%c0_177, %c0_178] : memref<16x128xf32, #tpu.memory_space<vmem>>, vector<16x128xf32>
    %cst_179 = arith.constant 0.000000e+00 : f32
    %225 = vector.broadcast %cst_179 : f32 to vector<16x128xf32>
    %226 = arith.cmpf oge, %224, %225 : vector<16x128xf32>
    %cst_180 = arith.constant 2.000000e-01 : f32
    %227 = vector.broadcast %cst_180 : f32 to vector<16x128xf32>
    %228 = arith.mulf %227, %224 : vector<16x128xf32>
    %229 = arith.select %226, %224, %228 : vector<16x128xi1>, vector<16x128xf32>
    %c0_181 = arith.constant 0 : index
    %c0_182 = arith.constant 0 : index
    %230 = vector.load %arg38[%c0_181, %c0_182] : memref<16x128xf32, #tpu.memory_space<vmem>>, vector<16x128xf32>
    %231 = arith.addf %229, %230 : vector<16x128xf32>
    %232 = tpu.iota {dimensions = array<i32: 1>} : vector<1x128xi32>
    %c0_183 = arith.constant 0 : index
    %c0_184 = arith.constant 0 : index
    %233 = vector.load %arg18[%c0_183, %c0_184] : memref<128x128xf32, #tpu.memory_space<vmem>>, vector<128x128xf32>
    %cst_185 = arith.constant dense<0.000000e+00> : vector<16x128xf32>
    %234 = tpu.matmul %231, %233, %cst_185 {dimension_numbers = #tpu.dot_dimension_numbers<[1], [0], [0], [1], [0, 0, 1, 1], [], []>} : vector<16x128xf32>, vector<128x128xf32>, vector<16x128xf32> -> vector<16x128xf32>
    %c0_186 = arith.constant 0 : index
    %c0_187 = arith.constant 0 : index
    %235 = vector.load %arg8[%c0_186, %c0_187] : memref<1x128xf32, #tpu.memory_space<vmem>>, vector<1x128xf32>
    %236 = vector.broadcast %235 : vector<1x128xf32> to vector<16x128xf32>
    %237 = arith.addf %234, %236 : vector<16x128xf32>
    %c0_188 = arith.constant 0 : index
    %c0_189 = arith.constant 0 : index
    %238 = vector.load %arg16[%c0_188, %c0_189] : memref<128x128xf32, #tpu.memory_space<vmem>>, vector<128x128xf32>
    %cst_190 = arith.constant dense<0.000000e+00> : vector<16x128xf32>
    %239 = tpu.matmul %231, %238, %cst_190 {dimension_numbers = #tpu.dot_dimension_numbers<[1], [0], [0], [1], [0, 0, 1, 1], [], []>} : vector<16x128xf32>, vector<128x128xf32>, vector<16x128xf32> -> vector<16x128xf32>
    %c0_191 = arith.constant 0 : index
    %c0_192 = arith.constant 0 : index
    %240 = vector.load %arg6[%c0_191, %c0_192] : memref<1x128xf32, #tpu.memory_space<vmem>>, vector<1x128xf32>
    %241 = vector.broadcast %240 : vector<1x128xf32> to vector<16x128xf32>
    %242 = arith.addf %239, %241 : vector<16x128xf32>
    %c0_193 = arith.constant 0 : index
    %c0_194 = arith.constant 0 : index
    %243 = vector.load %arg19[%c0_193, %c0_194] : memref<128x128xf32, #tpu.memory_space<vmem>>, vector<128x128xf32>
    %cst_195 = arith.constant dense<0.000000e+00> : vector<16x128xf32>
    %244 = tpu.matmul %231, %243, %cst_195 {dimension_numbers = #tpu.dot_dimension_numbers<[1], [0], [0], [1], [0, 0, 1, 1], [], []>} : vector<16x128xf32>, vector<128x128xf32>, vector<16x128xf32> -> vector<16x128xf32>
    %c0_196 = arith.constant 0 : index
    %c0_197 = arith.constant 0 : index
    %245 = vector.load %arg9[%c0_196, %c0_197] : memref<1x128xf32, #tpu.memory_space<vmem>>, vector<1x128xf32>
    %246 = vector.broadcast %245 : vector<1x128xf32> to vector<16x128xf32>
    %247 = arith.addf %244, %246 : vector<16x128xf32>
    %c0_i32_198 = arith.constant 0 : i32
    %248 = vector.broadcast %c0_i32_198 : i32 to vector<1x128xi32>
    %249 = arith.cmpi sge, %232, %248 : vector<1x128xi32>
    %c32_i32 = arith.constant 32 : i32
    %250 = vector.broadcast %c32_i32 : i32 to vector<1x128xi32>
    %251 = arith.cmpi slt, %232, %250 : vector<1x128xi32>
    %252 = arith.andi %249, %251 : vector<1x128xi1>
    %cst_199 = arith.constant 1.000000e+00 : f32
    %cst_200 = arith.constant 0.000000e+00 : f32
    %253 = vector.broadcast %cst_199 : f32 to vector<1x128xf32>
    %254 = vector.broadcast %cst_200 : f32 to vector<1x128xf32>
    %255 = arith.select %252, %253, %254 : vector<1x128xi1>, vector<1x128xf32>
    %256 = vector.broadcast %255 : vector<1x128xf32> to vector<16x128xf32>
    %257 = arith.mulf %237, %256 : vector<16x128xf32>
    %cst_201 = arith.constant dense<0.000000e+00> : vector<16x16xf32>
    %258 = tpu.matmul %257, %242, %cst_201 {dimension_numbers = #tpu.dot_dimension_numbers<[1], [1], [0], [0], [0, 0, 1, 0], [], []>} : vector<16x128xf32>, vector<16x128xf32>, vector<16x16xf32> -> vector<16x16xf32>
    %cst_202 = arith.constant 0.176776692 : f32
    %259 = vector.broadcast %cst_202 : f32 to vector<16x16xf32>
    %260 = arith.mulf %258, %259 : vector<16x16xf32>
    %cst_203 = arith.constant dense<0xFF800000> : vector<16xf32>
    %261 = vector.multi_reduction <maximumf>, %260, %cst_203 [1] : vector<16x16xf32> to vector<16xf32>
    %262 = vector.shape_cast %261 : vector<16xf32> to vector<16x1xf32>
    %263 = vector.broadcast %262 : vector<16x1xf32> to vector<16x16xf32>
    %264 = arith.subf %260, %263 : vector<16x16xf32>
    %265 = math.exp %264 : vector<16x16xf32>
    %cst_204 = arith.constant dense<0.000000e+00> : vector<16xf32>
    %266 = vector.multi_reduction <add>, %265, %cst_204 [1] : vector<16x16xf32> to vector<16xf32>
    %267 = vector.shape_cast %266 : vector<16xf32> to vector<16x1xf32>
    %268 = vector.broadcast %267 : vector<16x1xf32> to vector<16x16xf32>
    %269 = arith.divf %265, %268 : vector<16x16xf32>
    %270 = vector.broadcast %255 : vector<1x128xf32> to vector<16x128xf32>
    %271 = arith.mulf %247, %270 : vector<16x128xf32>
    %cst_205 = arith.constant dense<0.000000e+00> : vector<16x128xf32>
    %272 = tpu.matmul %269, %271, %cst_205 {dimension_numbers = #tpu.dot_dimension_numbers<[1], [0], [0], [1], [0, 0, 1, 1], [], []>} : vector<16x16xf32>, vector<16x128xf32>, vector<16x128xf32> -> vector<16x128xf32>
    %c32_i32_206 = arith.constant 32 : i32
    %273 = vector.broadcast %c32_i32_206 : i32 to vector<1x128xi32>
    %274 = arith.cmpi sge, %232, %273 : vector<1x128xi32>
    %c64_i32 = arith.constant 64 : i32
    %275 = vector.broadcast %c64_i32 : i32 to vector<1x128xi32>
    %276 = arith.cmpi slt, %232, %275 : vector<1x128xi32>
    %277 = arith.andi %274, %276 : vector<1x128xi1>
    %cst_207 = arith.constant 1.000000e+00 : f32
    %cst_208 = arith.constant 0.000000e+00 : f32
    %278 = vector.broadcast %cst_207 : f32 to vector<1x128xf32>
    %279 = vector.broadcast %cst_208 : f32 to vector<1x128xf32>
    %280 = arith.select %277, %278, %279 : vector<1x128xi1>, vector<1x128xf32>
    %281 = vector.broadcast %280 : vector<1x128xf32> to vector<16x128xf32>
    %282 = arith.mulf %237, %281 : vector<16x128xf32>
    %cst_209 = arith.constant dense<0.000000e+00> : vector<16x16xf32>
    %283 = tpu.matmul %282, %242, %cst_209 {dimension_numbers = #tpu.dot_dimension_numbers<[1], [1], [0], [0], [0, 0, 1, 0], [], []>} : vector<16x128xf32>, vector<16x128xf32>, vector<16x16xf32> -> vector<16x16xf32>
    %cst_210 = arith.constant 0.176776692 : f32
    %284 = vector.broadcast %cst_210 : f32 to vector<16x16xf32>
    %285 = arith.mulf %283, %284 : vector<16x16xf32>
    %cst_211 = arith.constant dense<0xFF800000> : vector<16xf32>
    %286 = vector.multi_reduction <maximumf>, %285, %cst_211 [1] : vector<16x16xf32> to vector<16xf32>
    %287 = vector.shape_cast %286 : vector<16xf32> to vector<16x1xf32>
    %288 = vector.broadcast %287 : vector<16x1xf32> to vector<16x16xf32>
    %289 = arith.subf %285, %288 : vector<16x16xf32>
    %290 = math.exp %289 : vector<16x16xf32>
    %cst_212 = arith.constant dense<0.000000e+00> : vector<16xf32>
    %291 = vector.multi_reduction <add>, %290, %cst_212 [1] : vector<16x16xf32> to vector<16xf32>
    %292 = vector.shape_cast %291 : vector<16xf32> to vector<16x1xf32>
    %293 = vector.broadcast %292 : vector<16x1xf32> to vector<16x16xf32>
    %294 = arith.divf %290, %293 : vector<16x16xf32>
    %295 = vector.broadcast %280 : vector<1x128xf32> to vector<16x128xf32>
    %296 = arith.mulf %247, %295 : vector<16x128xf32>
    %cst_213 = arith.constant dense<0.000000e+00> : vector<16x128xf32>
    %297 = tpu.matmul %294, %296, %cst_213 {dimension_numbers = #tpu.dot_dimension_numbers<[1], [0], [0], [1], [0, 0, 1, 1], [], []>} : vector<16x16xf32>, vector<16x128xf32>, vector<16x128xf32> -> vector<16x128xf32>
    %298 = arith.addf %272, %297 : vector<16x128xf32>
    %c64_i32_214 = arith.constant 64 : i32
    %299 = vector.broadcast %c64_i32_214 : i32 to vector<1x128xi32>
    %300 = arith.cmpi sge, %232, %299 : vector<1x128xi32>
    %c96_i32 = arith.constant 96 : i32
    %301 = vector.broadcast %c96_i32 : i32 to vector<1x128xi32>
    %302 = arith.cmpi slt, %232, %301 : vector<1x128xi32>
    %303 = arith.andi %300, %302 : vector<1x128xi1>
    %cst_215 = arith.constant 1.000000e+00 : f32
    %cst_216 = arith.constant 0.000000e+00 : f32
    %304 = vector.broadcast %cst_215 : f32 to vector<1x128xf32>
    %305 = vector.broadcast %cst_216 : f32 to vector<1x128xf32>
    %306 = arith.select %303, %304, %305 : vector<1x128xi1>, vector<1x128xf32>
    %307 = vector.broadcast %306 : vector<1x128xf32> to vector<16x128xf32>
    %308 = arith.mulf %237, %307 : vector<16x128xf32>
    %cst_217 = arith.constant dense<0.000000e+00> : vector<16x16xf32>
    %309 = tpu.matmul %308, %242, %cst_217 {dimension_numbers = #tpu.dot_dimension_numbers<[1], [1], [0], [0], [0, 0, 1, 0], [], []>} : vector<16x128xf32>, vector<16x128xf32>, vector<16x16xf32> -> vector<16x16xf32>
    %cst_218 = arith.constant 0.176776692 : f32
    %310 = vector.broadcast %cst_218 : f32 to vector<16x16xf32>
    %311 = arith.mulf %309, %310 : vector<16x16xf32>
    %cst_219 = arith.constant dense<0xFF800000> : vector<16xf32>
    %312 = vector.multi_reduction <maximumf>, %311, %cst_219 [1] : vector<16x16xf32> to vector<16xf32>
    %313 = vector.shape_cast %312 : vector<16xf32> to vector<16x1xf32>
    %314 = vector.broadcast %313 : vector<16x1xf32> to vector<16x16xf32>
    %315 = arith.subf %311, %314 : vector<16x16xf32>
    %316 = math.exp %315 : vector<16x16xf32>
    %cst_220 = arith.constant dense<0.000000e+00> : vector<16xf32>
    %317 = vector.multi_reduction <add>, %316, %cst_220 [1] : vector<16x16xf32> to vector<16xf32>
    %318 = vector.shape_cast %317 : vector<16xf32> to vector<16x1xf32>
    %319 = vector.broadcast %318 : vector<16x1xf32> to vector<16x16xf32>
    %320 = arith.divf %316, %319 : vector<16x16xf32>
    %321 = vector.broadcast %306 : vector<1x128xf32> to vector<16x128xf32>
    %322 = arith.mulf %247, %321 : vector<16x128xf32>
    %cst_221 = arith.constant dense<0.000000e+00> : vector<16x128xf32>
    %323 = tpu.matmul %320, %322, %cst_221 {dimension_numbers = #tpu.dot_dimension_numbers<[1], [0], [0], [1], [0, 0, 1, 1], [], []>} : vector<16x16xf32>, vector<16x128xf32>, vector<16x128xf32> -> vector<16x128xf32>
    %324 = arith.addf %298, %323 : vector<16x128xf32>
    %c96_i32_222 = arith.constant 96 : i32
    %325 = vector.broadcast %c96_i32_222 : i32 to vector<1x128xi32>
    %326 = arith.cmpi sge, %232, %325 : vector<1x128xi32>
    %c128_i32 = arith.constant 128 : i32
    %327 = vector.broadcast %c128_i32 : i32 to vector<1x128xi32>
    %328 = arith.cmpi slt, %232, %327 : vector<1x128xi32>
    %329 = arith.andi %326, %328 : vector<1x128xi1>
    %cst_223 = arith.constant 1.000000e+00 : f32
    %cst_224 = arith.constant 0.000000e+00 : f32
    %330 = vector.broadcast %cst_223 : f32 to vector<1x128xf32>
    %331 = vector.broadcast %cst_224 : f32 to vector<1x128xf32>
    %332 = arith.select %329, %330, %331 : vector<1x128xi1>, vector<1x128xf32>
    %333 = vector.broadcast %332 : vector<1x128xf32> to vector<16x128xf32>
    %334 = arith.mulf %237, %333 : vector<16x128xf32>
    %cst_225 = arith.constant dense<0.000000e+00> : vector<16x16xf32>
    %335 = tpu.matmul %334, %242, %cst_225 {dimension_numbers = #tpu.dot_dimension_numbers<[1], [1], [0], [0], [0, 0, 1, 0], [], []>} : vector<16x128xf32>, vector<16x128xf32>, vector<16x16xf32> -> vector<16x16xf32>
    %cst_226 = arith.constant 0.176776692 : f32
    %336 = vector.broadcast %cst_226 : f32 to vector<16x16xf32>
    %337 = arith.mulf %335, %336 : vector<16x16xf32>
    %cst_227 = arith.constant dense<0xFF800000> : vector<16xf32>
    %338 = vector.multi_reduction <maximumf>, %337, %cst_227 [1] : vector<16x16xf32> to vector<16xf32>
    %339 = vector.shape_cast %338 : vector<16xf32> to vector<16x1xf32>
    %340 = vector.broadcast %339 : vector<16x1xf32> to vector<16x16xf32>
    %341 = arith.subf %337, %340 : vector<16x16xf32>
    %342 = math.exp %341 : vector<16x16xf32>
    %cst_228 = arith.constant dense<0.000000e+00> : vector<16xf32>
    %343 = vector.multi_reduction <add>, %342, %cst_228 [1] : vector<16x16xf32> to vector<16xf32>
    %344 = vector.shape_cast %343 : vector<16xf32> to vector<16x1xf32>
    %345 = vector.broadcast %344 : vector<16x1xf32> to vector<16x16xf32>
    %346 = arith.divf %342, %345 : vector<16x16xf32>
    %347 = vector.broadcast %332 : vector<1x128xf32> to vector<16x128xf32>
    %348 = arith.mulf %247, %347 : vector<16x128xf32>
    %cst_229 = arith.constant dense<0.000000e+00> : vector<16x128xf32>
    %349 = tpu.matmul %346, %348, %cst_229 {dimension_numbers = #tpu.dot_dimension_numbers<[1], [0], [0], [1], [0, 0, 1, 1], [], []>} : vector<16x16xf32>, vector<16x128xf32>, vector<16x128xf32> -> vector<16x128xf32>
    %350 = arith.addf %324, %349 : vector<16x128xf32>
    %c0_230 = arith.constant 0 : index
    %c0_231 = arith.constant 0 : index
    %351 = vector.load %arg17[%c0_230, %c0_231] : memref<128x128xf32, #tpu.memory_space<vmem>>, vector<128x128xf32>
    %cst_232 = arith.constant dense<0.000000e+00> : vector<16x128xf32>
    %352 = tpu.matmul %350, %351, %cst_232 {dimension_numbers = #tpu.dot_dimension_numbers<[1], [0], [0], [1], [0, 0, 1, 1], [], []>} : vector<16x128xf32>, vector<128x128xf32>, vector<16x128xf32> -> vector<16x128xf32>
    %c0_233 = arith.constant 0 : index
    %c0_234 = arith.constant 0 : index
    %353 = vector.load %arg7[%c0_233, %c0_234] : memref<1x128xf32, #tpu.memory_space<vmem>>, vector<1x128xf32>
    %354 = vector.broadcast %353 : vector<1x128xf32> to vector<16x128xf32>
    %355 = arith.addf %352, %354 : vector<16x128xf32>
    %356 = arith.addf %231, %355 : vector<16x128xf32>
    %c0_235 = arith.constant 0 : index
    %c0_236 = arith.constant 0 : index
    %357 = vector.load %arg11[%c0_235, %c0_236] : memref<1x128xf32, #tpu.memory_space<vmem>>, vector<1x128xf32>
    %c0_237 = arith.constant 0 : index
    %c0_238 = arith.constant 0 : index
    %358 = vector.load %arg10[%c0_237, %c0_238] : memref<1x128xf32, #tpu.memory_space<vmem>>, vector<1x128xf32>
    %cst_239 = arith.constant dense<0.000000e+00> : vector<16xf32>
    %359 = vector.multi_reduction <add>, %356, %cst_239 [1] : vector<16x128xf32> to vector<16xf32>
    %360 = vector.shape_cast %359 : vector<16xf32> to vector<16x1xf32>
    %cst_240 = arith.constant 1.280000e+02 : f32
    %361 = vector.broadcast %cst_240 : f32 to vector<16x1xf32>
    %362 = arith.divf %360, %361 : vector<16x1xf32>
    %363 = vector.broadcast %362 : vector<16x1xf32> to vector<16x128xf32>
    %364 = arith.subf %356, %363 : vector<16x128xf32>
    %365 = arith.mulf %364, %364 : vector<16x128xf32>
    %cst_241 = arith.constant dense<0.000000e+00> : vector<16xf32>
    %366 = vector.multi_reduction <add>, %365, %cst_241 [1] : vector<16x128xf32> to vector<16xf32>
    %367 = vector.shape_cast %366 : vector<16xf32> to vector<16x1xf32>
    %cst_242 = arith.constant 1.280000e+02 : f32
    %368 = vector.broadcast %cst_242 : f32 to vector<16x1xf32>
    %369 = arith.divf %367, %368 : vector<16x1xf32>
    %cst_243 = arith.constant 9.99999974E-6 : f32
    %370 = vector.broadcast %cst_243 : f32 to vector<16x1xf32>
    %371 = arith.addf %369, %370 : vector<16x1xf32>
    %372 = math.rsqrt %371 : vector<16x1xf32>
    %373 = vector.broadcast %372 : vector<16x1xf32> to vector<16x128xf32>
    %374 = arith.mulf %364, %373 : vector<16x128xf32>
    %375 = vector.broadcast %357 : vector<1x128xf32> to vector<16x128xf32>
    %376 = arith.mulf %374, %375 : vector<16x128xf32>
    %377 = vector.broadcast %358 : vector<1x128xf32> to vector<16x128xf32>
    %378 = arith.addf %376, %377 : vector<16x128xf32>
    %c0_244 = arith.constant 0 : index
    %c0_245 = arith.constant 0 : index
    %379 = vector.load %arg14[%c0_244, %c0_245] : memref<128x256xf32, #tpu.memory_space<vmem>>, vector<128x256xf32>
    %cst_246 = arith.constant dense<0.000000e+00> : vector<16x256xf32>
    %380 = tpu.matmul %378, %379, %cst_246 {dimension_numbers = #tpu.dot_dimension_numbers<[1], [0], [0], [1], [0, 0, 1, 1], [], []>} : vector<16x128xf32>, vector<128x256xf32>, vector<16x256xf32> -> vector<16x256xf32>
    %c0_247 = arith.constant 0 : index
    %c0_248 = arith.constant 0 : index
    %381 = vector.load %arg4[%c0_247, %c0_248] : memref<1x256xf32, #tpu.memory_space<vmem>>, vector<1x256xf32>
    %382 = vector.broadcast %381 : vector<1x256xf32> to vector<16x256xf32>
    %383 = arith.addf %380, %382 : vector<16x256xf32>
    %cst_249 = arith.constant 5.000000e-01 : f32
    %384 = vector.broadcast %cst_249 : f32 to vector<16x256xf32>
    %385 = arith.mulf %384, %383 : vector<16x256xf32>
    %cst_250 = arith.constant 4.471500e-02 : f32
    %386 = vector.broadcast %cst_250 : f32 to vector<16x256xf32>
    %387 = arith.mulf %386, %383 : vector<16x256xf32>
    %388 = arith.mulf %387, %383 : vector<16x256xf32>
    %389 = arith.mulf %388, %383 : vector<16x256xf32>
    %390 = arith.addf %383, %389 : vector<16x256xf32>
    %cst_251 = arith.constant 0.797884583 : f32
    %391 = vector.broadcast %cst_251 : f32 to vector<16x256xf32>
    %392 = arith.mulf %391, %390 : vector<16x256xf32>
    %393 = math.tanh %392 : vector<16x256xf32>
    %cst_252 = arith.constant 1.000000e+00 : f32
    %394 = vector.broadcast %cst_252 : f32 to vector<16x256xf32>
    %395 = arith.addf %394, %393 : vector<16x256xf32>
    %396 = arith.mulf %385, %395 : vector<16x256xf32>
    %c0_253 = arith.constant 0 : index
    %c0_254 = arith.constant 0 : index
    %397 = vector.load %arg15[%c0_253, %c0_254] : memref<256x128xf32, #tpu.memory_space<vmem>>, vector<256x128xf32>
    %cst_255 = arith.constant dense<0.000000e+00> : vector<16x128xf32>
    %398 = tpu.matmul %396, %397, %cst_255 {dimension_numbers = #tpu.dot_dimension_numbers<[1], [0], [0], [1], [0, 0, 1, 1], [], []>} : vector<16x256xf32>, vector<256x128xf32>, vector<16x128xf32> -> vector<16x128xf32>
    %c0_256 = arith.constant 0 : index
    %c0_257 = arith.constant 0 : index
    %399 = vector.load %arg5[%c0_256, %c0_257] : memref<1x128xf32, #tpu.memory_space<vmem>>, vector<1x128xf32>
    %400 = vector.broadcast %399 : vector<1x128xf32> to vector<16x128xf32>
    %401 = arith.addf %398, %400 : vector<16x128xf32>
    %402 = arith.addf %378, %401 : vector<16x128xf32>
    %c0_258 = arith.constant 0 : index
    %c0_259 = arith.constant 0 : index
    %403 = vector.load %arg13[%c0_258, %c0_259] : memref<1x128xf32, #tpu.memory_space<vmem>>, vector<1x128xf32>
    %c0_260 = arith.constant 0 : index
    %c0_261 = arith.constant 0 : index
    %404 = vector.load %arg12[%c0_260, %c0_261] : memref<1x128xf32, #tpu.memory_space<vmem>>, vector<1x128xf32>
    %cst_262 = arith.constant dense<0.000000e+00> : vector<16xf32>
    %405 = vector.multi_reduction <add>, %402, %cst_262 [1] : vector<16x128xf32> to vector<16xf32>
    %406 = vector.shape_cast %405 : vector<16xf32> to vector<16x1xf32>
    %cst_263 = arith.constant 1.280000e+02 : f32
    %407 = vector.broadcast %cst_263 : f32 to vector<16x1xf32>
    %408 = arith.divf %406, %407 : vector<16x1xf32>
    %409 = vector.broadcast %408 : vector<16x1xf32> to vector<16x128xf32>
    %410 = arith.subf %402, %409 : vector<16x128xf32>
    %411 = arith.mulf %410, %410 : vector<16x128xf32>
    %cst_264 = arith.constant dense<0.000000e+00> : vector<16xf32>
    %412 = vector.multi_reduction <add>, %411, %cst_264 [1] : vector<16x128xf32> to vector<16xf32>
    %413 = vector.shape_cast %412 : vector<16xf32> to vector<16x1xf32>
    %cst_265 = arith.constant 1.280000e+02 : f32
    %414 = vector.broadcast %cst_265 : f32 to vector<16x1xf32>
    %415 = arith.divf %413, %414 : vector<16x1xf32>
    %cst_266 = arith.constant 9.99999974E-6 : f32
    %416 = vector.broadcast %cst_266 : f32 to vector<16x1xf32>
    %417 = arith.addf %415, %416 : vector<16x1xf32>
    %418 = math.rsqrt %417 : vector<16x1xf32>
    %419 = vector.broadcast %418 : vector<16x1xf32> to vector<16x128xf32>
    %420 = arith.mulf %410, %419 : vector<16x128xf32>
    %421 = vector.broadcast %403 : vector<1x128xf32> to vector<16x128xf32>
    %422 = arith.mulf %420, %421 : vector<16x128xf32>
    %423 = vector.broadcast %404 : vector<1x128xf32> to vector<16x128xf32>
    %424 = arith.addf %422, %423 : vector<16x128xf32>
    %c0_267 = arith.constant 0 : index
    %c0_268 = arith.constant 0 : index
    %425 = vector.load %arg34[%c0_267, %c0_268] : memref<128x128xf32, #tpu.memory_space<vmem>>, vector<128x128xf32>
    %cst_269 = arith.constant dense<0.000000e+00> : vector<16x128xf32>
    %426 = tpu.matmul %424, %425, %cst_269 {dimension_numbers = #tpu.dot_dimension_numbers<[1], [0], [0], [1], [0, 0, 1, 1], [], []>} : vector<16x128xf32>, vector<128x128xf32>, vector<16x128xf32> -> vector<16x128xf32>
    %c0_270 = arith.constant 0 : index
    %c0_271 = arith.constant 0 : index
    %427 = vector.load %arg24[%c0_270, %c0_271] : memref<1x128xf32, #tpu.memory_space<vmem>>, vector<1x128xf32>
    %428 = vector.broadcast %427 : vector<1x128xf32> to vector<16x128xf32>
    %429 = arith.addf %426, %428 : vector<16x128xf32>
    %c0_272 = arith.constant 0 : index
    %c0_273 = arith.constant 0 : index
    %430 = vector.load %arg32[%c0_272, %c0_273] : memref<128x128xf32, #tpu.memory_space<vmem>>, vector<128x128xf32>
    %cst_274 = arith.constant dense<0.000000e+00> : vector<16x128xf32>
    %431 = tpu.matmul %424, %430, %cst_274 {dimension_numbers = #tpu.dot_dimension_numbers<[1], [0], [0], [1], [0, 0, 1, 1], [], []>} : vector<16x128xf32>, vector<128x128xf32>, vector<16x128xf32> -> vector<16x128xf32>
    %c0_275 = arith.constant 0 : index
    %c0_276 = arith.constant 0 : index
    %432 = vector.load %arg22[%c0_275, %c0_276] : memref<1x128xf32, #tpu.memory_space<vmem>>, vector<1x128xf32>
    %433 = vector.broadcast %432 : vector<1x128xf32> to vector<16x128xf32>
    %434 = arith.addf %431, %433 : vector<16x128xf32>
    %c0_277 = arith.constant 0 : index
    %c0_278 = arith.constant 0 : index
    %435 = vector.load %arg35[%c0_277, %c0_278] : memref<128x128xf32, #tpu.memory_space<vmem>>, vector<128x128xf32>
    %cst_279 = arith.constant dense<0.000000e+00> : vector<16x128xf32>
    %436 = tpu.matmul %424, %435, %cst_279 {dimension_numbers = #tpu.dot_dimension_numbers<[1], [0], [0], [1], [0, 0, 1, 1], [], []>} : vector<16x128xf32>, vector<128x128xf32>, vector<16x128xf32> -> vector<16x128xf32>
    %c0_280 = arith.constant 0 : index
    %c0_281 = arith.constant 0 : index
    %437 = vector.load %arg25[%c0_280, %c0_281] : memref<1x128xf32, #tpu.memory_space<vmem>>, vector<1x128xf32>
    %438 = vector.broadcast %437 : vector<1x128xf32> to vector<16x128xf32>
    %439 = arith.addf %436, %438 : vector<16x128xf32>
    %c0_i32_282 = arith.constant 0 : i32
    %440 = vector.broadcast %c0_i32_282 : i32 to vector<1x128xi32>
    %441 = arith.cmpi sge, %232, %440 : vector<1x128xi32>
    %c32_i32_283 = arith.constant 32 : i32
    %442 = vector.broadcast %c32_i32_283 : i32 to vector<1x128xi32>
    %443 = arith.cmpi slt, %232, %442 : vector<1x128xi32>
    %444 = arith.andi %441, %443 : vector<1x128xi1>
    %cst_284 = arith.constant 1.000000e+00 : f32
    %cst_285 = arith.constant 0.000000e+00 : f32
    %445 = vector.broadcast %cst_284 : f32 to vector<1x128xf32>
    %446 = vector.broadcast %cst_285 : f32 to vector<1x128xf32>
    %447 = arith.select %444, %445, %446 : vector<1x128xi1>, vector<1x128xf32>
    %448 = vector.broadcast %447 : vector<1x128xf32> to vector<16x128xf32>
    %449 = arith.mulf %429, %448 : vector<16x128xf32>
    %cst_286 = arith.constant dense<0.000000e+00> : vector<16x16xf32>
    %450 = tpu.matmul %449, %434, %cst_286 {dimension_numbers = #tpu.dot_dimension_numbers<[1], [1], [0], [0], [0, 0, 1, 0], [], []>} : vector<16x128xf32>, vector<16x128xf32>, vector<16x16xf32> -> vector<16x16xf32>
    %cst_287 = arith.constant 0.176776692 : f32
    %451 = vector.broadcast %cst_287 : f32 to vector<16x16xf32>
    %452 = arith.mulf %450, %451 : vector<16x16xf32>
    %cst_288 = arith.constant dense<0xFF800000> : vector<16xf32>
    %453 = vector.multi_reduction <maximumf>, %452, %cst_288 [1] : vector<16x16xf32> to vector<16xf32>
    %454 = vector.shape_cast %453 : vector<16xf32> to vector<16x1xf32>
    %455 = vector.broadcast %454 : vector<16x1xf32> to vector<16x16xf32>
    %456 = arith.subf %452, %455 : vector<16x16xf32>
    %457 = math.exp %456 : vector<16x16xf32>
    %cst_289 = arith.constant dense<0.000000e+00> : vector<16xf32>
    %458 = vector.multi_reduction <add>, %457, %cst_289 [1] : vector<16x16xf32> to vector<16xf32>
    %459 = vector.shape_cast %458 : vector<16xf32> to vector<16x1xf32>
    %460 = vector.broadcast %459 : vector<16x1xf32> to vector<16x16xf32>
    %461 = arith.divf %457, %460 : vector<16x16xf32>
    %462 = vector.broadcast %447 : vector<1x128xf32> to vector<16x128xf32>
    %463 = arith.mulf %439, %462 : vector<16x128xf32>
    %cst_290 = arith.constant dense<0.000000e+00> : vector<16x128xf32>
    %464 = tpu.matmul %461, %463, %cst_290 {dimension_numbers = #tpu.dot_dimension_numbers<[1], [0], [0], [1], [0, 0, 1, 1], [], []>} : vector<16x16xf32>, vector<16x128xf32>, vector<16x128xf32> -> vector<16x128xf32>
    %c32_i32_291 = arith.constant 32 : i32
    %465 = vector.broadcast %c32_i32_291 : i32 to vector<1x128xi32>
    %466 = arith.cmpi sge, %232, %465 : vector<1x128xi32>
    %c64_i32_292 = arith.constant 64 : i32
    %467 = vector.broadcast %c64_i32_292 : i32 to vector<1x128xi32>
    %468 = arith.cmpi slt, %232, %467 : vector<1x128xi32>
    %469 = arith.andi %466, %468 : vector<1x128xi1>
    %cst_293 = arith.constant 1.000000e+00 : f32
    %cst_294 = arith.constant 0.000000e+00 : f32
    %470 = vector.broadcast %cst_293 : f32 to vector<1x128xf32>
    %471 = vector.broadcast %cst_294 : f32 to vector<1x128xf32>
    %472 = arith.select %469, %470, %471 : vector<1x128xi1>, vector<1x128xf32>
    %473 = vector.broadcast %472 : vector<1x128xf32> to vector<16x128xf32>
    %474 = arith.mulf %429, %473 : vector<16x128xf32>
    %cst_295 = arith.constant dense<0.000000e+00> : vector<16x16xf32>
    %475 = tpu.matmul %474, %434, %cst_295 {dimension_numbers = #tpu.dot_dimension_numbers<[1], [1], [0], [0], [0, 0, 1, 0], [], []>} : vector<16x128xf32>, vector<16x128xf32>, vector<16x16xf32> -> vector<16x16xf32>
    %cst_296 = arith.constant 0.176776692 : f32
    %476 = vector.broadcast %cst_296 : f32 to vector<16x16xf32>
    %477 = arith.mulf %475, %476 : vector<16x16xf32>
    %cst_297 = arith.constant dense<0xFF800000> : vector<16xf32>
    %478 = vector.multi_reduction <maximumf>, %477, %cst_297 [1] : vector<16x16xf32> to vector<16xf32>
    %479 = vector.shape_cast %478 : vector<16xf32> to vector<16x1xf32>
    %480 = vector.broadcast %479 : vector<16x1xf32> to vector<16x16xf32>
    %481 = arith.subf %477, %480 : vector<16x16xf32>
    %482 = math.exp %481 : vector<16x16xf32>
    %cst_298 = arith.constant dense<0.000000e+00> : vector<16xf32>
    %483 = vector.multi_reduction <add>, %482, %cst_298 [1] : vector<16x16xf32> to vector<16xf32>
    %484 = vector.shape_cast %483 : vector<16xf32> to vector<16x1xf32>
    %485 = vector.broadcast %484 : vector<16x1xf32> to vector<16x16xf32>
    %486 = arith.divf %482, %485 : vector<16x16xf32>
    %487 = vector.broadcast %472 : vector<1x128xf32> to vector<16x128xf32>
    %488 = arith.mulf %439, %487 : vector<16x128xf32>
    %cst_299 = arith.constant dense<0.000000e+00> : vector<16x128xf32>
    %489 = tpu.matmul %486, %488, %cst_299 {dimension_numbers = #tpu.dot_dimension_numbers<[1], [0], [0], [1], [0, 0, 1, 1], [], []>} : vector<16x16xf32>, vector<16x128xf32>, vector<16x128xf32> -> vector<16x128xf32>
    %490 = arith.addf %464, %489 : vector<16x128xf32>
    %c64_i32_300 = arith.constant 64 : i32
    %491 = vector.broadcast %c64_i32_300 : i32 to vector<1x128xi32>
    %492 = arith.cmpi sge, %232, %491 : vector<1x128xi32>
    %c96_i32_301 = arith.constant 96 : i32
    %493 = vector.broadcast %c96_i32_301 : i32 to vector<1x128xi32>
    %494 = arith.cmpi slt, %232, %493 : vector<1x128xi32>
    %495 = arith.andi %492, %494 : vector<1x128xi1>
    %cst_302 = arith.constant 1.000000e+00 : f32
    %cst_303 = arith.constant 0.000000e+00 : f32
    %496 = vector.broadcast %cst_302 : f32 to vector<1x128xf32>
    %497 = vector.broadcast %cst_303 : f32 to vector<1x128xf32>
    %498 = arith.select %495, %496, %497 : vector<1x128xi1>, vector<1x128xf32>
    %499 = vector.broadcast %498 : vector<1x128xf32> to vector<16x128xf32>
    %500 = arith.mulf %429, %499 : vector<16x128xf32>
    %cst_304 = arith.constant dense<0.000000e+00> : vector<16x16xf32>
    %501 = tpu.matmul %500, %434, %cst_304 {dimension_numbers = #tpu.dot_dimension_numbers<[1], [1], [0], [0], [0, 0, 1, 0], [], []>} : vector<16x128xf32>, vector<16x128xf32>, vector<16x16xf32> -> vector<16x16xf32>
    %cst_305 = arith.constant 0.176776692 : f32
    %502 = vector.broadcast %cst_305 : f32 to vector<16x16xf32>
    %503 = arith.mulf %501, %502 : vector<16x16xf32>
    %cst_306 = arith.constant dense<0xFF800000> : vector<16xf32>
    %504 = vector.multi_reduction <maximumf>, %503, %cst_306 [1] : vector<16x16xf32> to vector<16xf32>
    %505 = vector.shape_cast %504 : vector<16xf32> to vector<16x1xf32>
    %506 = vector.broadcast %505 : vector<16x1xf32> to vector<16x16xf32>
    %507 = arith.subf %503, %506 : vector<16x16xf32>
    %508 = math.exp %507 : vector<16x16xf32>
    %cst_307 = arith.constant dense<0.000000e+00> : vector<16xf32>
    %509 = vector.multi_reduction <add>, %508, %cst_307 [1] : vector<16x16xf32> to vector<16xf32>
    %510 = vector.shape_cast %509 : vector<16xf32> to vector<16x1xf32>
    %511 = vector.broadcast %510 : vector<16x1xf32> to vector<16x16xf32>
    %512 = arith.divf %508, %511 : vector<16x16xf32>
    %513 = vector.broadcast %498 : vector<1x128xf32> to vector<16x128xf32>
    %514 = arith.mulf %439, %513 : vector<16x128xf32>
    %cst_308 = arith.constant dense<0.000000e+00> : vector<16x128xf32>
    %515 = tpu.matmul %512, %514, %cst_308 {dimension_numbers = #tpu.dot_dimension_numbers<[1], [0], [0], [1], [0, 0, 1, 1], [], []>} : vector<16x16xf32>, vector<16x128xf32>, vector<16x128xf32> -> vector<16x128xf32>
    %516 = arith.addf %490, %515 : vector<16x128xf32>
    %c96_i32_309 = arith.constant 96 : i32
    %517 = vector.broadcast %c96_i32_309 : i32 to vector<1x128xi32>
    %518 = arith.cmpi sge, %232, %517 : vector<1x128xi32>
    %c128_i32_310 = arith.constant 128 : i32
    %519 = vector.broadcast %c128_i32_310 : i32 to vector<1x128xi32>
    %520 = arith.cmpi slt, %232, %519 : vector<1x128xi32>
    %521 = arith.andi %518, %520 : vector<1x128xi1>
    %cst_311 = arith.constant 1.000000e+00 : f32
    %cst_312 = arith.constant 0.000000e+00 : f32
    %522 = vector.broadcast %cst_311 : f32 to vector<1x128xf32>
    %523 = vector.broadcast %cst_312 : f32 to vector<1x128xf32>
    %524 = arith.select %521, %522, %523 : vector<1x128xi1>, vector<1x128xf32>
    %525 = vector.broadcast %524 : vector<1x128xf32> to vector<16x128xf32>
    %526 = arith.mulf %429, %525 : vector<16x128xf32>
    %cst_313 = arith.constant dense<0.000000e+00> : vector<16x16xf32>
    %527 = tpu.matmul %526, %434, %cst_313 {dimension_numbers = #tpu.dot_dimension_numbers<[1], [1], [0], [0], [0, 0, 1, 0], [], []>} : vector<16x128xf32>, vector<16x128xf32>, vector<16x16xf32> -> vector<16x16xf32>
    %cst_314 = arith.constant 0.176776692 : f32
    %528 = vector.broadcast %cst_314 : f32 to vector<16x16xf32>
    %529 = arith.mulf %527, %528 : vector<16x16xf32>
    %cst_315 = arith.constant dense<0xFF800000> : vector<16xf32>
    %530 = vector.multi_reduction <maximumf>, %529, %cst_315 [1] : vector<16x16xf32> to vector<16xf32>
    %531 = vector.shape_cast %530 : vector<16xf32> to vector<16x1xf32>
    %532 = vector.broadcast %531 : vector<16x1xf32> to vector<16x16xf32>
    %533 = arith.subf %529, %532 : vector<16x16xf32>
    %534 = math.exp %533 : vector<16x16xf32>
    %cst_316 = arith.constant dense<0.000000e+00> : vector<16xf32>
    %535 = vector.multi_reduction <add>, %534, %cst_316 [1] : vector<16x16xf32> to vector<16xf32>
    %536 = vector.shape_cast %535 : vector<16xf32> to vector<16x1xf32>
    %537 = vector.broadcast %536 : vector<16x1xf32> to vector<16x16xf32>
    %538 = arith.divf %534, %537 : vector<16x16xf32>
    %539 = vector.broadcast %524 : vector<1x128xf32> to vector<16x128xf32>
    %540 = arith.mulf %439, %539 : vector<16x128xf32>
    %cst_317 = arith.constant dense<0.000000e+00> : vector<16x128xf32>
    %541 = tpu.matmul %538, %540, %cst_317 {dimension_numbers = #tpu.dot_dimension_numbers<[1], [0], [0], [1], [0, 0, 1, 1], [], []>} : vector<16x16xf32>, vector<16x128xf32>, vector<16x128xf32> -> vector<16x128xf32>
    %542 = arith.addf %516, %541 : vector<16x128xf32>
    %c0_318 = arith.constant 0 : index
    %c0_319 = arith.constant 0 : index
    %543 = vector.load %arg33[%c0_318, %c0_319] : memref<128x128xf32, #tpu.memory_space<vmem>>, vector<128x128xf32>
    %cst_320 = arith.constant dense<0.000000e+00> : vector<16x128xf32>
    %544 = tpu.matmul %542, %543, %cst_320 {dimension_numbers = #tpu.dot_dimension_numbers<[1], [0], [0], [1], [0, 0, 1, 1], [], []>} : vector<16x128xf32>, vector<128x128xf32>, vector<16x128xf32> -> vector<16x128xf32>
    %c0_321 = arith.constant 0 : index
    %c0_322 = arith.constant 0 : index
    %545 = vector.load %arg23[%c0_321, %c0_322] : memref<1x128xf32, #tpu.memory_space<vmem>>, vector<1x128xf32>
    %546 = vector.broadcast %545 : vector<1x128xf32> to vector<16x128xf32>
    %547 = arith.addf %544, %546 : vector<16x128xf32>
    %548 = arith.addf %424, %547 : vector<16x128xf32>
    %c0_323 = arith.constant 0 : index
    %c0_324 = arith.constant 0 : index
    %549 = vector.load %arg27[%c0_323, %c0_324] : memref<1x128xf32, #tpu.memory_space<vmem>>, vector<1x128xf32>
    %c0_325 = arith.constant 0 : index
    %c0_326 = arith.constant 0 : index
    %550 = vector.load %arg26[%c0_325, %c0_326] : memref<1x128xf32, #tpu.memory_space<vmem>>, vector<1x128xf32>
    %cst_327 = arith.constant dense<0.000000e+00> : vector<16xf32>
    %551 = vector.multi_reduction <add>, %548, %cst_327 [1] : vector<16x128xf32> to vector<16xf32>
    %552 = vector.shape_cast %551 : vector<16xf32> to vector<16x1xf32>
    %cst_328 = arith.constant 1.280000e+02 : f32
    %553 = vector.broadcast %cst_328 : f32 to vector<16x1xf32>
    %554 = arith.divf %552, %553 : vector<16x1xf32>
    %555 = vector.broadcast %554 : vector<16x1xf32> to vector<16x128xf32>
    %556 = arith.subf %548, %555 : vector<16x128xf32>
    %557 = arith.mulf %556, %556 : vector<16x128xf32>
    %cst_329 = arith.constant dense<0.000000e+00> : vector<16xf32>
    %558 = vector.multi_reduction <add>, %557, %cst_329 [1] : vector<16x128xf32> to vector<16xf32>
    %559 = vector.shape_cast %558 : vector<16xf32> to vector<16x1xf32>
    %cst_330 = arith.constant 1.280000e+02 : f32
    %560 = vector.broadcast %cst_330 : f32 to vector<16x1xf32>
    %561 = arith.divf %559, %560 : vector<16x1xf32>
    %cst_331 = arith.constant 9.99999974E-6 : f32
    %562 = vector.broadcast %cst_331 : f32 to vector<16x1xf32>
    %563 = arith.addf %561, %562 : vector<16x1xf32>
    %564 = math.rsqrt %563 : vector<16x1xf32>
    %565 = vector.broadcast %564 : vector<16x1xf32> to vector<16x128xf32>
    %566 = arith.mulf %556, %565 : vector<16x128xf32>
    %567 = vector.broadcast %549 : vector<1x128xf32> to vector<16x128xf32>
    %568 = arith.mulf %566, %567 : vector<16x128xf32>
    %569 = vector.broadcast %550 : vector<1x128xf32> to vector<16x128xf32>
    %570 = arith.addf %568, %569 : vector<16x128xf32>
    %c0_332 = arith.constant 0 : index
    %c0_333 = arith.constant 0 : index
    %571 = vector.load %arg30[%c0_332, %c0_333] : memref<128x256xf32, #tpu.memory_space<vmem>>, vector<128x256xf32>
    %cst_334 = arith.constant dense<0.000000e+00> : vector<16x256xf32>
    %572 = tpu.matmul %570, %571, %cst_334 {dimension_numbers = #tpu.dot_dimension_numbers<[1], [0], [0], [1], [0, 0, 1, 1], [], []>} : vector<16x128xf32>, vector<128x256xf32>, vector<16x256xf32> -> vector<16x256xf32>
    %c0_335 = arith.constant 0 : index
    %c0_336 = arith.constant 0 : index
    %573 = vector.load %arg20[%c0_335, %c0_336] : memref<1x256xf32, #tpu.memory_space<vmem>>, vector<1x256xf32>
    %574 = vector.broadcast %573 : vector<1x256xf32> to vector<16x256xf32>
    %575 = arith.addf %572, %574 : vector<16x256xf32>
    %cst_337 = arith.constant 5.000000e-01 : f32
    %576 = vector.broadcast %cst_337 : f32 to vector<16x256xf32>
    %577 = arith.mulf %576, %575 : vector<16x256xf32>
    %cst_338 = arith.constant 4.471500e-02 : f32
    %578 = vector.broadcast %cst_338 : f32 to vector<16x256xf32>
    %579 = arith.mulf %578, %575 : vector<16x256xf32>
    %580 = arith.mulf %579, %575 : vector<16x256xf32>
    %581 = arith.mulf %580, %575 : vector<16x256xf32>
    %582 = arith.addf %575, %581 : vector<16x256xf32>
    %cst_339 = arith.constant 0.797884583 : f32
    %583 = vector.broadcast %cst_339 : f32 to vector<16x256xf32>
    %584 = arith.mulf %583, %582 : vector<16x256xf32>
    %585 = math.tanh %584 : vector<16x256xf32>
    %cst_340 = arith.constant 1.000000e+00 : f32
    %586 = vector.broadcast %cst_340 : f32 to vector<16x256xf32>
    %587 = arith.addf %586, %585 : vector<16x256xf32>
    %588 = arith.mulf %577, %587 : vector<16x256xf32>
    %c0_341 = arith.constant 0 : index
    %c0_342 = arith.constant 0 : index
    %589 = vector.load %arg31[%c0_341, %c0_342] : memref<256x128xf32, #tpu.memory_space<vmem>>, vector<256x128xf32>
    %cst_343 = arith.constant dense<0.000000e+00> : vector<16x128xf32>
    %590 = tpu.matmul %588, %589, %cst_343 {dimension_numbers = #tpu.dot_dimension_numbers<[1], [0], [0], [1], [0, 0, 1, 1], [], []>} : vector<16x256xf32>, vector<256x128xf32>, vector<16x128xf32> -> vector<16x128xf32>
    %c0_344 = arith.constant 0 : index
    %c0_345 = arith.constant 0 : index
    %591 = vector.load %arg21[%c0_344, %c0_345] : memref<1x128xf32, #tpu.memory_space<vmem>>, vector<1x128xf32>
    %592 = vector.broadcast %591 : vector<1x128xf32> to vector<16x128xf32>
    %593 = arith.addf %590, %592 : vector<16x128xf32>
    %594 = arith.addf %570, %593 : vector<16x128xf32>
    %c0_346 = arith.constant 0 : index
    %c0_347 = arith.constant 0 : index
    %595 = vector.load %arg29[%c0_346, %c0_347] : memref<1x128xf32, #tpu.memory_space<vmem>>, vector<1x128xf32>
    %c0_348 = arith.constant 0 : index
    %c0_349 = arith.constant 0 : index
    %596 = vector.load %arg28[%c0_348, %c0_349] : memref<1x128xf32, #tpu.memory_space<vmem>>, vector<1x128xf32>
    %cst_350 = arith.constant dense<0.000000e+00> : vector<16xf32>
    %597 = vector.multi_reduction <add>, %594, %cst_350 [1] : vector<16x128xf32> to vector<16xf32>
    %598 = vector.shape_cast %597 : vector<16xf32> to vector<16x1xf32>
    %cst_351 = arith.constant 1.280000e+02 : f32
    %599 = vector.broadcast %cst_351 : f32 to vector<16x1xf32>
    %600 = arith.divf %598, %599 : vector<16x1xf32>
    %601 = vector.broadcast %600 : vector<16x1xf32> to vector<16x128xf32>
    %602 = arith.subf %594, %601 : vector<16x128xf32>
    %603 = arith.mulf %602, %602 : vector<16x128xf32>
    %cst_352 = arith.constant dense<0.000000e+00> : vector<16xf32>
    %604 = vector.multi_reduction <add>, %603, %cst_352 [1] : vector<16x128xf32> to vector<16xf32>
    %605 = vector.shape_cast %604 : vector<16xf32> to vector<16x1xf32>
    %cst_353 = arith.constant 1.280000e+02 : f32
    %606 = vector.broadcast %cst_353 : f32 to vector<16x1xf32>
    %607 = arith.divf %605, %606 : vector<16x1xf32>
    %cst_354 = arith.constant 9.99999974E-6 : f32
    %608 = vector.broadcast %cst_354 : f32 to vector<16x1xf32>
    %609 = arith.addf %607, %608 : vector<16x1xf32>
    %610 = math.rsqrt %609 : vector<16x1xf32>
    %611 = vector.broadcast %610 : vector<16x1xf32> to vector<16x128xf32>
    %612 = arith.mulf %602, %611 : vector<16x128xf32>
    %613 = vector.broadcast %595 : vector<1x128xf32> to vector<16x128xf32>
    %614 = arith.mulf %612, %613 : vector<16x128xf32>
    %615 = vector.broadcast %596 : vector<1x128xf32> to vector<16x128xf32>
    %616 = arith.addf %614, %615 : vector<16x128xf32>
    %c0_355 = arith.constant 0 : index
    %c0_356 = arith.constant 0 : index
    %617 = vector.load %arg36[%c0_355, %c0_356] : memref<128x128xf32, #tpu.memory_space<vmem>>, vector<128x128xf32>
    %cst_357 = arith.constant dense<0.000000e+00> : vector<16x128xf32>
    %618 = tpu.matmul %616, %617, %cst_357 {dimension_numbers = #tpu.dot_dimension_numbers<[1], [0], [0], [1], [0, 0, 1, 1], [], []>} : vector<16x128xf32>, vector<128x128xf32>, vector<16x128xf32> -> vector<16x128xf32>
    %c0_358 = arith.constant 0 : index
    %c0_359 = arith.constant 0 : index
    %619 = vector.load %arg37[%c0_358, %c0_359] : memref<1x128xf32, #tpu.memory_space<vmem>>, vector<1x128xf32>
    %620 = vector.broadcast %619 : vector<1x128xf32> to vector<16x128xf32>
    %621 = arith.addf %618, %620 : vector<16x128xf32>
    %c0_360 = arith.constant 0 : index
    %c0_361 = arith.constant 0 : index
    %c0_362 = arith.constant 0 : index
    %622 = vector.load %arg52[%c0_360, %c0_361, %c0_362] : memref<1x16x128xf32, #tpu.memory_space<vmem>>, vector<1x16x128xf32>
    %623 = vector.shape_cast %622 : vector<1x16x128xf32> to vector<16x128xf32>
    %624 = vector.shape_cast %621 : vector<16x128xf32> to vector<1x16x128xf32>
    tpu.vector_store %arg52[%c0_360, %c0_361, %c0_362], %624 {strides = array<i32>} : memref<1x16x128xf32, #tpu.memory_space<vmem>>, vector<1x16x128xf32>,
    return
  }
  func.func @transform_0(%arg0: i32) -> (i32, i32, i32) {
    %c0_i32 = arith.constant 0 : i32
    %c0_i32_0 = arith.constant 0 : i32
    %c0_i32_1 = arith.constant 0 : i32
    return %arg0, %c0_i32, %c0_i32_0 : i32, i32, i32
  }
  func.func @transform_1(%arg0: i32) -> (i32, i32, i32) {
    %c0_i32 = arith.constant 0 : i32
    %c0_i32_0 = arith.constant 0 : i32
    %c0_i32_1 = arith.constant 0 : i32
    %c0_i32_2 = arith.constant 0 : i32
    return %c0_i32, %c0_i32_0, %c0_i32_1 : i32, i32, i32
  }
  func.func @transform_2(%arg0: i32) -> (i32, i32) {
    %c0_i32 = arith.constant 0 : i32
    %c0_i32_0 = arith.constant 0 : i32
    %c0_i32_1 = arith.constant 0 : i32
    return %c0_i32, %c0_i32_0 : i32, i32
  }
  func.func @transform_3(%arg0: i32) -> (i32, i32) {
    %c0_i32 = arith.constant 0 : i32
    %c0_i32_0 = arith.constant 0 : i32
    %c0_i32_1 = arith.constant 0 : i32
    return %c0_i32, %c0_i32_0 : i32, i32
  }
  func.func @transform_4(%arg0: i32) -> (i32, i32) {
    %c0_i32 = arith.constant 0 : i32
    %c0_i32_0 = arith.constant 0 : i32
    %c0_i32_1 = arith.constant 0 : i32
    return %c0_i32, %c0_i32_0 : i32, i32
  }
  func.func @transform_5(%arg0: i32) -> (i32, i32) {
    %c0_i32 = arith.constant 0 : i32
    %c0_i32_0 = arith.constant 0 : i32
    %c0_i32_1 = arith.constant 0 : i32
    return %c0_i32, %c0_i32_0 : i32, i32
  }
  func.func @transform_6(%arg0: i32) -> (i32, i32) {
    %c0_i32 = arith.constant 0 : i32
    %c0_i32_0 = arith.constant 0 : i32
    %c0_i32_1 = arith.constant 0 : i32
    return %c0_i32, %c0_i32_0 : i32, i32
  }
  func.func @transform_7(%arg0: i32) -> (i32, i32) {
    %c0_i32 = arith.constant 0 : i32
    %c0_i32_0 = arith.constant 0 : i32
    %c0_i32_1 = arith.constant 0 : i32
    return %c0_i32, %c0_i32_0 : i32, i32
  }
  func.func @transform_8(%arg0: i32) -> (i32, i32) {
    %c0_i32 = arith.constant 0 : i32
    %c0_i32_0 = arith.constant 0 : i32
    %c0_i32_1 = arith.constant 0 : i32
    return %c0_i32, %c0_i32_0 : i32, i32
  }
  func.func @transform_9(%arg0: i32) -> (i32, i32) {
    %c0_i32 = arith.constant 0 : i32
    %c0_i32_0 = arith.constant 0 : i32
    %c0_i32_1 = arith.constant 0 : i32
    return %c0_i32, %c0_i32_0 : i32, i32
  }
  func.func @transform_10(%arg0: i32) -> (i32, i32) {
    %c0_i32 = arith.constant 0 : i32
    %c0_i32_0 = arith.constant 0 : i32
    %c0_i32_1 = arith.constant 0 : i32
    return %c0_i32, %c0_i32_0 : i32, i32
  }
  func.func @transform_11(%arg0: i32) -> (i32, i32) {
    %c0_i32 = arith.constant 0 : i32
    %c0_i32_0 = arith.constant 0 : i32
    %c0_i32_1 = arith.constant 0 : i32
    return %c0_i32, %c0_i32_0 : i32, i32
  }
  func.func @transform_12(%arg0: i32) -> (i32, i32) {
    %c0_i32 = arith.constant 0 : i32
    %c0_i32_0 = arith.constant 0 : i32
    %c0_i32_1 = arith.constant 0 : i32
    return %c0_i32, %c0_i32_0 : i32, i32
  }
  func.func @transform_13(%arg0: i32) -> (i32, i32) {
    %c0_i32 = arith.constant 0 : i32
    %c0_i32_0 = arith.constant 0 : i32
    %c0_i32_1 = arith.constant 0 : i32
    return %c0_i32, %c0_i32_0 : i32, i32
  }
  func.func @transform_14(%arg0: i32) -> (i32, i32) {
    %c0_i32 = arith.constant 0 : i32
    %c0_i32_0 = arith.constant 0 : i32
    %c0_i32_1 = arith.constant 0 : i32
    return %c0_i32, %c0_i32_0 : i32, i32
  }
  func.func @transform_15(%arg0: i32) -> (i32, i32) {
    %c0_i32 = arith.constant 0 : i32
    %c0_i32_0 = arith.constant 0 : i32
    %c0_i32_1 = arith.constant 0 : i32
    return %c0_i32, %c0_i32_0 : i32, i32
  }
  func.func @transform_16(%arg0: i32) -> (i32, i32) {
    %c0_i32 = arith.constant 0 : i32
    %c0_i32_0 = arith.constant 0 : i32
    %c0_i32_1 = arith.constant 0 : i32
    return %c0_i32, %c0_i32_0 : i32, i32
  }
  func.func @transform_17(%arg0: i32) -> (i32, i32) {
    %c0_i32 = arith.constant 0 : i32
    %c0_i32_0 = arith.constant 0 : i32
    %c0_i32_1 = arith.constant 0 : i32
    return %c0_i32, %c0_i32_0 : i32, i32
  }
  func.func @transform_18(%arg0: i32) -> (i32, i32) {
    %c0_i32 = arith.constant 0 : i32
    %c0_i32_0 = arith.constant 0 : i32
    %c0_i32_1 = arith.constant 0 : i32
    return %c0_i32, %c0_i32_0 : i32, i32
  }
  func.func @transform_19(%arg0: i32) -> (i32, i32) {
    %c0_i32 = arith.constant 0 : i32
    %c0_i32_0 = arith.constant 0 : i32
    %c0_i32_1 = arith.constant 0 : i32
    return %c0_i32, %c0_i32_0 : i32, i32
  }
  func.func @transform_20(%arg0: i32) -> (i32, i32) {
    %c0_i32 = arith.constant 0 : i32
    %c0_i32_0 = arith.constant 0 : i32
    %c0_i32_1 = arith.constant 0 : i32
    return %c0_i32, %c0_i32_0 : i32, i32
  }
  func.func @transform_21(%arg0: i32) -> (i32, i32) {
    %c0_i32 = arith.constant 0 : i32
    %c0_i32_0 = arith.constant 0 : i32
    %c0_i32_1 = arith.constant 0 : i32
    return %c0_i32, %c0_i32_0 : i32, i32
  }
  func.func @transform_22(%arg0: i32) -> (i32, i32) {
    %c0_i32 = arith.constant 0 : i32
    %c0_i32_0 = arith.constant 0 : i32
    %c0_i32_1 = arith.constant 0 : i32
    return %c0_i32, %c0_i32_0 : i32, i32
  }
  func.func @transform_23(%arg0: i32) -> (i32, i32) {
    %c0_i32 = arith.constant 0 : i32
    %c0_i32_0 = arith.constant 0 : i32
    %c0_i32_1 = arith.constant 0 : i32
    return %c0_i32, %c0_i32_0 : i32, i32
  }
  func.func @transform_24(%arg0: i32) -> (i32, i32) {
    %c0_i32 = arith.constant 0 : i32
    %c0_i32_0 = arith.constant 0 : i32
    %c0_i32_1 = arith.constant 0 : i32
    return %c0_i32, %c0_i32_0 : i32, i32
  }
  func.func @transform_25(%arg0: i32) -> (i32, i32) {
    %c0_i32 = arith.constant 0 : i32
    %c0_i32_0 = arith.constant 0 : i32
    %c0_i32_1 = arith.constant 0 : i32
    return %c0_i32, %c0_i32_0 : i32, i32
  }
  func.func @transform_26(%arg0: i32) -> (i32, i32) {
    %c0_i32 = arith.constant 0 : i32
    %c0_i32_0 = arith.constant 0 : i32
    %c0_i32_1 = arith.constant 0 : i32
    return %c0_i32, %c0_i32_0 : i32, i32
  }
  func.func @transform_27(%arg0: i32) -> (i32, i32) {
    %c0_i32 = arith.constant 0 : i32
    %c0_i32_0 = arith.constant 0 : i32
    %c0_i32_1 = arith.constant 0 : i32
    return %c0_i32, %c0_i32_0 : i32, i32
  }
  func.func @transform_28(%arg0: i32) -> (i32, i32) {
    %c0_i32 = arith.constant 0 : i32
    %c0_i32_0 = arith.constant 0 : i32
    %c0_i32_1 = arith.constant 0 : i32
    return %c0_i32, %c0_i32_0 : i32, i32
  }
  func.func @transform_29(%arg0: i32) -> (i32, i32) {
    %c0_i32 = arith.constant 0 : i32
    %c0_i32_0 = arith.constant 0 : i32
    %c0_i32_1 = arith.constant 0 : i32
    return %c0_i32, %c0_i32_0 : i32, i32
  }
  func.func @transform_30(%arg0: i32) -> (i32, i32) {
    %c0_i32 = arith.constant 0 : i32
    %c0_i32_0 = arith.constant 0 : i32
    %c0_i32_1 = arith.constant 0 : i32
    return %c0_i32, %c0_i32_0 : i32, i32
  }
  func.func @transform_31(%arg0: i32) -> (i32, i32) {
    %c0_i32 = arith.constant 0 : i32
    %c0_i32_0 = arith.constant 0 : i32
    %c0_i32_1 = arith.constant 0 : i32
    return %c0_i32, %c0_i32_0 : i32, i32
  }
  func.func @transform_32(%arg0: i32) -> (i32, i32) {
    %c0_i32 = arith.constant 0 : i32
    %c0_i32_0 = arith.constant 0 : i32
    %c0_i32_1 = arith.constant 0 : i32
    return %c0_i32, %c0_i32_0 : i32, i32
  }
  func.func @transform_33(%arg0: i32) -> (i32, i32) {
    %c0_i32 = arith.constant 0 : i32
    %c0_i32_0 = arith.constant 0 : i32
    %c0_i32_1 = arith.constant 0 : i32
    return %c0_i32, %c0_i32_0 : i32, i32
  }
  func.func @transform_34(%arg0: i32) -> (i32, i32) {
    %c0_i32 = arith.constant 0 : i32
    %c0_i32_0 = arith.constant 0 : i32
    %c0_i32_1 = arith.constant 0 : i32
    return %c0_i32, %c0_i32_0 : i32, i32
  }
  func.func @transform_35(%arg0: i32) -> (i32, i32) {
    %c0_i32 = arith.constant 0 : i32
    %c0_i32_0 = arith.constant 0 : i32
    %c0_i32_1 = arith.constant 0 : i32
    return %c0_i32, %c0_i32_0 : i32, i32
  }
  func.func @transform_36(%arg0: i32) -> (i32, i32) {
    %c0_i32 = arith.constant 0 : i32
    %c0_i32_0 = arith.constant 0 : i32
    %c0_i32_1 = arith.constant 0 : i32
    return %c0_i32, %c0_i32_0 : i32, i32
  }
  func.func @transform_37(%arg0: i32) -> (i32, i32) {
    %c0_i32 = arith.constant 0 : i32
    %c0_i32_0 = arith.constant 0 : i32
    %c0_i32_1 = arith.constant 0 : i32
    return %c0_i32, %c0_i32_0 : i32, i32
  }
  func.func @transform_38(%arg0: i32) -> (i32, i32, i32) {
    %c0_i32 = arith.constant 0 : i32
    %c0_i32_0 = arith.constant 0 : i32
    %c0_i32_1 = arith.constant 0 : i32
    %c0_i32_2 = arith.constant 0 : i32
    return %c0_i32, %c0_i32_0, %c0_i32_1 : i32, i32, i32
  }
  func.func @transform_39(%arg0: i32) -> (i32, i32) {
    %c0_i32 = arith.constant 0 : i32
    %c0_i32_0 = arith.constant 0 : i32
    %c0_i32_1 = arith.constant 0 : i32
    return %c0_i32, %c0_i32_0 : i32, i32
  }
  func.func @transform_40(%arg0: i32) -> (i32, i32, i32) {
    %c0_i32 = arith.constant 0 : i32
    %c0_i32_0 = arith.constant 0 : i32
    %c0_i32_1 = arith.constant 0 : i32
    %c0_i32_2 = arith.constant 0 : i32
    return %c0_i32, %c0_i32_0, %c0_i32_1 : i32, i32, i32
  }
  func.func @transform_41(%arg0: i32) -> (i32, i32) {
    %c0_i32 = arith.constant 0 : i32
    %c0_i32_0 = arith.constant 0 : i32
    %c0_i32_1 = arith.constant 0 : i32
    return %c0_i32, %c0_i32_0 : i32, i32
  }
  func.func @transform_42(%arg0: i32) -> (i32, i32, i32) {
    %c0_i32 = arith.constant 0 : i32
    %c0_i32_0 = arith.constant 0 : i32
    %c0_i32_1 = arith.constant 0 : i32
    %c0_i32_2 = arith.constant 0 : i32
    return %c0_i32, %c0_i32_0, %c0_i32_1 : i32, i32, i32
  }
  func.func @transform_43(%arg0: i32) -> (i32, i32) {
    %c0_i32 = arith.constant 0 : i32
    %c0_i32_0 = arith.constant 0 : i32
    %c0_i32_1 = arith.constant 0 : i32
    return %c0_i32, %c0_i32_0 : i32, i32
  }
  func.func @transform_44(%arg0: i32) -> (i32, i32, i32) {
    %c0_i32 = arith.constant 0 : i32
    %c0_i32_0 = arith.constant 0 : i32
    %c0_i32_1 = arith.constant 0 : i32
    %c0_i32_2 = arith.constant 0 : i32
    return %c0_i32, %c0_i32_0, %c0_i32_1 : i32, i32, i32
  }
  func.func @transform_45(%arg0: i32) -> (i32, i32) {
    %c0_i32 = arith.constant 0 : i32
    %c0_i32_0 = arith.constant 0 : i32
    %c0_i32_1 = arith.constant 0 : i32
    return %c0_i32, %c0_i32_0 : i32, i32
  }
  func.func @transform_46(%arg0: i32) -> (i32, i32) {
    %c0_i32 = arith.constant 0 : i32
    %c0_i32_0 = arith.constant 0 : i32
    %c0_i32_1 = arith.constant 0 : i32
    return %c0_i32, %c0_i32_0 : i32, i32
  }
  func.func @transform_47(%arg0: i32) -> (i32, i32) {
    %c0_i32 = arith.constant 0 : i32
    %c0_i32_0 = arith.constant 0 : i32
    %c0_i32_1 = arith.constant 0 : i32
    return %c0_i32, %c0_i32_0 : i32, i32
  }
  func.func @transform_48(%arg0: i32) -> (i32, i32) {
    %c0_i32 = arith.constant 0 : i32
    %c0_i32_0 = arith.constant 0 : i32
    %c0_i32_1 = arith.constant 0 : i32
    return %c0_i32, %c0_i32_0 : i32, i32
  }
  func.func @transform_49(%arg0: i32) -> (i32, i32) {
    %c0_i32 = arith.constant 0 : i32
    %c0_i32_0 = arith.constant 0 : i32
    %c0_i32_1 = arith.constant 0 : i32
    return %c0_i32, %c0_i32_0 : i32, i32
  }
  func.func @transform_50(%arg0: i32) -> (i32, i32) {
    %c0_i32 = arith.constant 0 : i32
    %c0_i32_0 = arith.constant 0 : i32
    %c0_i32_1 = arith.constant 0 : i32
    return %c0_i32, %c0_i32_0 : i32, i32
  }
  func.func @transform_51(%arg0: i32) -> (i32, i32, i32) {
    %c0_i32 = arith.constant 0 : i32
    %c0_i32_0 = arith.constant 0 : i32
    %c0_i32_1 = arith.constant 0 : i32
    return %arg0, %c0_i32, %c0_i32_0 : i32, i32, i32
  }
}

</mosaic_0001>

<llo_original>
// kernel: tpu_custom_call.1
$region0: #{tpu_custom_call.1}
  #allocation0 [shape = 'u32[]', space=smem, size = 0x4, offset = 0x4, fixed_abs, tag = 'smem constant byte address 0x4 - core index']
  #allocation1 [shape = 'u32[144,128]{1,0:T(1,128)}', space=vmem, size = 0x12000, scoped, tag = 'internal scratch']
  #allocation2 [shape = 'f32[8,128]{1,0:T(8,128)}', space=vmem, size = 0x1000, scoped, tag = 'scratch operand']
  #allocation3 [shape = 'f32[8,128]{1,0:T(8,128)}', space=vmem, size = 0x1000, scoped, tag = 'scratch operand']
  #allocation4 [shape = 'f32[16,128]{1,0:T(8,128)}', space=vmem, size = 0x2000, scoped, tag = 'scratch operand']
  %s0 = inlined_call_operand.smem [shape: u32[52], index: -1, kind: input, shape index: {}]
  %s1 = sld [smem:[%s0]]
  %s2 = scalar_lea.smem %s0, 1
  %s3 = sld [smem:[%s2]]
  %s4 = scalar_lea.smem %s0, 2
  %s5 = sld [smem:[%s4]]
  %s6 = scalar_lea.smem %s0, 3
  %s7 = sld [smem:[%s6]]
  %s8 = scalar_lea.smem %s0, 4
  %s9 = sld [smem:[%s8]]
  %s10 = scalar_lea.smem %s0, 5
  %s11 = sld [smem:[%s10]]
  %s12 = scalar_lea.smem %s0, 6
  %s13 = sld [smem:[%s12]]
  %s14 = scalar_lea.smem %s0, 7
  %s15 = sld [smem:[%s14]]
  %s16 = scalar_lea.smem %s0, 8
  %s17 = sld [smem:[%s16]]
  %s18 = scalar_lea.smem %s0, 9
  %s19 = sld [smem:[%s18]]
  %s20 = scalar_lea.smem %s0, 10
  %s21 = sld [smem:[%s20]]
  %s22 = scalar_lea.smem %s0, 11
  %s23 = sld [smem:[%s22]]
  %s24 = scalar_lea.smem %s0, 12
  %s25 = sld [smem:[%s24]]
  %s26 = scalar_lea.smem %s0, 13
  %s27 = sld [smem:[%s26]]
  %s28 = scalar_lea.smem %s0, 14
  %s29 = sld [smem:[%s28]]
  %s30 = scalar_lea.smem %s0, 15
  %s31 = sld [smem:[%s30]]
  %s32 = scalar_lea.smem %s0, 16
  %s33 = sld [smem:[%s32]]
  %s34 = scalar_lea.smem %s0, 17
  %s35 = sld [smem:[%s34]]
  %s36 = scalar_lea.smem %s0, 18
  %s37 = sld [smem:[%s36]]
  %s38 = scalar_lea.smem %s0, 19
  %s39 = sld [smem:[%s38]]
  %s40 = scalar_lea.smem %s0, 20
  %s41 = sld [smem:[%s40]]
  %s42 = scalar_lea.smem %s0, 21
  %s43 = sld [smem:[%s42]]
  %s44 = scalar_lea.smem %s0, 22
  %s45 = sld [smem:[%s44]]
  %s46 = scalar_lea.smem %s0, 23
  %s47 = sld [smem:[%s46]]
  %s48 = scalar_lea.smem %s0, 24
  %s49 = sld [smem:[%s48]]
  %s50 = scalar_lea.smem %s0, 25
  %s51 = sld [smem:[%s50]]
  %s52 = scalar_lea.smem %s0, 26
  %s53 = sld [smem:[%s52]]
  %s54 = scalar_lea.smem %s0, 27
  %s55 = sld [smem:[%s54]]
  %s56 = scalar_lea.smem %s0, 28
  %s57 = sld [smem:[%s56]]
  %s58 = scalar_lea.smem %s0, 29
  %s59 = sld [smem:[%s58]]
  %s60 = scalar_lea.smem %s0, 30
  %s61 = sld [smem:[%s60]]
  %s62 = scalar_lea.smem %s0, 31
  %s63 = sld [smem:[%s62]]
  %s64 = scalar_lea.smem %s0, 32
  %s65 = sld [smem:[%s64]]
  %s66 = scalar_lea.smem %s0, 33
  %s67 = sld [smem:[%s66]]
  %s68 = scalar_lea.smem %s0, 34
  %s69 = sld [smem:[%s68]]
  %s70 = scalar_lea.smem %s0, 35
  %s71 = sld [smem:[%s70]]
  %s72 = scalar_lea.smem %s0, 36
  %s73 = sld [smem:[%s72]]
  %s74 = scalar_lea.smem %s0, 37
  %s75 = sld [smem:[%s74]]
  %s76 = scalar_lea.smem %s0, 38
  %s77 = sld [smem:[%s76]]
  %s78 = scalar_lea.smem %s0, 39
  %s79 = sld [smem:[%s78]]
  %s80 = scalar_lea.smem %s0, 40
  %s81 = sld [smem:[%s80]]
  %s82 = scalar_lea.smem %s0, 41
  %s83 = sld [smem:[%s82]]
  %s84 = scalar_lea.smem %s0, 42
  %s85 = sld [smem:[%s84]]
  %s86 = scalar_lea.smem %s0, 43
  %s87 = sld [smem:[%s86]]
  %s88 = scalar_lea.smem %s0, 44
  %s89 = sld [smem:[%s88]]
  %s90 = scalar_lea.smem %s0, 45
  %s91 = sld [smem:[%s90]]
  %s92 = scalar_lea.smem %s0, 46
  %s93 = sld [smem:[%s92]]
  %s94 = scalar_lea.smem %s0, 47
  %s95 = sld [smem:[%s94]]
  %s96 = scalar_lea.smem %s0, 48
  %s97 = sld [smem:[%s96]]
  %s98 = scalar_lea.smem %s0, 49
  %s99 = sld [smem:[%s98]]
  %s100 = scalar_lea.smem %s0, 50
  %s101 = sld [smem:[%s100]]
  %s102 = scalar_lea.smem %s0, 51
  %s103 = sld [smem:[%s102]]
  %s104 = sld [smem:[#allocation0]]
  $region413: #{tpu_custom_call.1} parent=0
    _
  %s106 = ssub.s32 1, %s104
  %s107 = scalar_select 0, %s106, %s104
  $region1: #{tpu_custom_call.1} parent=0
    #allocation5 [shape = 'u8[8192]{0}', space=vmem, size = 0x2000, scoped, tag = 'input window, operand 0']
    #allocation6 [shape = 's32[2]{0}', space=sflag, size = 0x8, scoped, tag = 'scoped memory for tpu_custom_call.1']
    #allocation7 [shape = 's32[2]{0}', space=sflag, size = 0x8, scoped, tag = 'scoped memory for tpu_custom_call.1']
    #allocation8 [shape = 'u8[49152]{0}', space=vmem, size = 0xc000, scoped, tag = 'input window, operand 1, single buffered']
    #allocation9 [shape = 's32[1]{0}', space=sflag, size = 0x4, scoped, tag = 'scoped memory for tpu_custom_call.1']
    #allocation10 [shape = 'u8[512]{0}', space=vmem, size = 0x400, scoped, tag = 'input window, operand 2, single buffered']
    #allocation11 [shape = 'u8[1024]{0}', space=vmem, size = 0x400, scoped, tag = 'input window, operand 3, single buffered']
    #allocation12 [shape = 's32[1]{0}', space=sflag, size = 0x4, scoped, tag = 'scoped memory for tpu_custom_call.1']
    #allocation13 [shape = 'u8[512]{0}', space=vmem, size = 0x400, scoped, tag = 'input window, operand 4, single buffered']
    #allocation14 [shape = 'u8[512]{0}', space=vmem, size = 0x400, scoped, tag = 'input window, operand 5, single buffered']
    #allocation15 [shape = 's32[1]{0}', space=sflag, size = 0x4, scoped, tag = 'scoped memory for tpu_custom_call.1']
    #allocation16 [shape = 'u8[512]{0}', space=vmem, size = 0x400, scoped, tag = 'input window, operand 6, single buffered']
    #allocation17 [shape = 'u8[512]{0}', space=vmem, size = 0x400, scoped, tag = 'input window, operand 7, single buffered']
    #allocation18 [shape = 's32[1]{0}', space=sflag, size = 0x4, scoped, tag = 'scoped memory for tpu_custom_call.1']
    #allocation19 [shape = 'u8[512]{0}', space=vmem, size = 0x400, scoped, tag = 'input window, operand 8, single buffered']
    #allocation20 [shape = 'u8[512]{0}', space=vmem, size = 0x400, scoped, tag = 'input window, operand 9, single buffered']
    #allocation21 [shape = 's32[1]{0}', space=sflag, size = 0x4, scoped, tag = 'scoped memory for tpu_custom_call.1']
    #allocation22 [shape = 'u8[512]{0}', space=vmem, size = 0x400, scoped, tag = 'input window, operand 10, single buffered']
    #allocation23 [shape = 'u8[512]{0}', space=vmem, size = 0x400, scoped, tag = 'input window, operand 11, single buffered']
    #allocation24 [shape = 's32[1]{0}', space=sflag, size = 0x4, scoped, tag = 'scoped memory for tpu_custom_call.1']
    #allocation25 [shape = 'u8[512]{0}', space=vmem, size = 0x400, scoped, tag = 'input window, operand 12, single buffered']
    #allocation26 [shape = 'u8[131072]{0}', space=vmem, size = 0x20000, scoped, tag = 'input window, operand 13, single buffered']
    #allocation27 [shape = 's32[1]{0}', space=sflag, size = 0x4, scoped, tag = 'scoped memory for tpu_custom_call.1']
    #allocation28 [shape = 'u8[131072]{0}', space=vmem, size = 0x20000, scoped, tag = 'input window, operand 14, single buffered']
    #allocation29 [shape = 'u8[65536]{0}', space=vmem, size = 0x10000, scoped, tag = 'input window, operand 15, single buffered']
    #allocation30 [shape = 's32[1]{0}', space=sflag, size = 0x4, scoped, tag = 'scoped memory for tpu_custom_call.1']
    #allocation31 [shape = 'u8[65536]{0}', space=vmem, size = 0x10000, scoped, tag = 'input window, operand 16, single buffered']
    #allocation32 [shape = 'u8[65536]{0}', space=vmem, size = 0x10000, scoped, tag = 'input window, operand 17, single buffered']
    #allocation33 [shape = 's32[1]{0}', space=sflag, size = 0x4, scoped, tag = 'scoped memory for tpu_custom_call.1']
    #allocation34 [shape = 'u8[65536]{0}', space=vmem, size = 0x10000, scoped, tag = 'input window, operand 18, single buffered']
    #allocation35 [shape = 'u8[1024]{0}', space=vmem, size = 0x400, scoped, tag = 'input window, operand 19, single buffered']
    #allocation36 [shape = 's32[1]{0}', space=sflag, size = 0x4, scoped, tag = 'scoped memory for tpu_custom_call.1']
    #allocation37 [shape = 'u8[512]{0}', space=vmem, size = 0x400, scoped, tag = 'input window, operand 20, single buffered']
    #allocation38 [shape = 'u8[512]{0}', space=vmem, size = 0x400, scoped, tag = 'input window, operand 21, single buffered']
    #allocation39 [shape = 's32[1]{0}', space=sflag, size = 0x4, scoped, tag = 'scoped memory for tpu_custom_call.1']
    #allocation40 [shape = 'u8[512]{0}', space=vmem, size = 0x400, scoped, tag = 'input window, operand 22, single buffered']
    #allocation41 [shape = 'u8[512]{0}', space=vmem, size = 0x400, scoped, tag = 'input window, operand 23, single buffered']
    #allocation42 [shape = 's32[1]{0}', space=sflag, size = 0x4, scoped, tag = 'scoped memory for tpu_custom_call.1']
    #allocation43 [shape = 'u8[512]{0}', space=vmem, size = 0x400, scoped, tag = 'input window, operand 24, single buffered']
    #allocation44 [shape = 'u8[512]{0}', space=vmem, size = 0x400, scoped, tag = 'input window, operand 25, single buffered']
    #allocation45 [shape = 's32[1]{0}', space=sflag, size = 0x4, scoped, tag = 'scoped memory for tpu_custom_call.1']
    #allocation46 [shape = 'u8[512]{0}', space=vmem, size = 0x400, scoped, tag = 'input window, operand 26, single buffered']
    #allocation47 [shape = 'u8[512]{0}', space=vmem, size = 0x400, scoped, tag = 'input window, operand 27, single buffered']
    #allocation48 [shape = 's32[1]{0}', space=sflag, size = 0x4, scoped, tag = 'scoped memory for tpu_custom_call.1']
    #allocation49 [shape = 'u8[512]{0}', space=vmem, size = 0x400, scoped, tag = 'input window, operand 28, single buffered']
    #allocation50 [shape = 'u8[131072]{0}', space=vmem, size = 0x20000, scoped, tag = 'input window, operand 29, single buffered']
    #allocation51 [shape = 's32[1]{0}', space=sflag, size = 0x4, scoped, tag = 'scoped memory for tpu_custom_call.1']
    #allocation52 [shape = 'u8[131072]{0}', space=vmem, size = 0x20000, scoped, tag = 'input window, operand 30, single buffered']
    #allocation53 [shape = 'u8[65536]{0}', space=vmem, size = 0x10000, scoped, tag = 'input window, operand 31, single buffered']
    #allocation54 [shape = 's32[1]{0}', space=sflag, size = 0x4, scoped, tag = 'scoped memory for tpu_custom_call.1']
    #allocation55 [shape = 'u8[65536]{0}', space=vmem, size = 0x10000, scoped, tag = 'input window, operand 32, single buffered']
    #allocation56 [shape = 'u8[65536]{0}', space=vmem, size = 0x10000, scoped, tag = 'input window, operand 33, single buffered']
    #allocation57 [shape = 's32[1]{0}', space=sflag, size = 0x4, scoped, tag = 'scoped memory for tpu_custom_call.1']
    #allocation58 [shape = 'u8[65536]{0}', space=vmem, size = 0x10000, scoped, tag = 'input window, operand 35, single buffered']
    #allocation59 [shape = 'u8[8192]{0}', space=vmem, size = 0x2000, scoped, tag = 'input window, operand 37, single buffered']
    #allocation60 [shape = 's32[1]{0}', space=sflag, size = 0x4, scoped, tag = 'scoped memory for tpu_custom_call.1']
    #allocation61 [shape = 'u8[196608]{0}', space=vmem, size = 0x30000, scoped, tag = 'input window, operand 38, single buffered']
    #allocation62 [shape = 'u8[196608]{0}', space=vmem, size = 0x30000, scoped, tag = 'input window, operand 40, single buffered']
    #allocation63 [shape = 's32[1]{0}', space=sflag, size = 0x4, scoped, tag = 'scoped memory for tpu_custom_call.1']
    #allocation64 [shape = 'u8[196608]{0}', space=vmem, size = 0x30000, scoped, tag = 'input window, operand 42, single buffered']
    #allocation65 [shape = 'u8[196608]{0}', space=vmem, size = 0x30000, scoped, tag = 'input window, operand 44, single buffered']
    #allocation66 [shape = 's32[1]{0}', space=sflag, size = 0x4, scoped, tag = 'scoped memory for tpu_custom_call.1']
    #allocation67 [shape = 'u8[65536]{0}', space=vmem, size = 0x10000, scoped, tag = 'input window, operand 46, single buffered']
    #allocation68 [shape = 'u8[65536]{0}', space=vmem, size = 0x10000, scoped, tag = 'input window, operand 47, single buffered']
    #allocation69 [shape = 's32[1]{0}', space=sflag, size = 0x4, scoped, tag = 'scoped memory for tpu_custom_call.1']
    #allocation70 [shape = 'u8[65536]{0}', space=vmem, size = 0x10000, scoped, tag = 'input window, operand 48, single buffered']
    #allocation71 [shape = 'u8[65536]{0}', space=vmem, size = 0x10000, scoped, tag = 'input window, operand 49, single buffered']
    #allocation72 [shape = 's32[1]{0}', space=sflag, size = 0x4, scoped, tag = 'scoped memory for tpu_custom_call.1']
    #allocation73 [shape = 'u8[16384]{0}', space=vmem, size = 0x4000, scoped, tag = 'output window, operand 0']
    %108 = vsyncpa [#allocation6], 0
    %s109 = scalar_lea.sflag [#allocation6], 1
    %110 = vsyncpa %s109, 0
    %111 = vsyncpa [#allocation9], 0
    %112 = vsyncpa [#allocation12], 0
    %113 = vsyncpa [#allocation15], 0
    %114 = vsyncpa [#allocation18], 0
    %115 = vsyncpa [#allocation21], 0
    %116 = vsyncpa [#allocation24], 0
    %117 = vsyncpa [#allocation27], 0
    %118 = vsyncpa [#allocation30], 0
    %119 = vsyncpa [#allocation33], 0
    %120 = vsyncpa [#allocation36], 0
    %121 = vsyncpa [#allocation39], 0
    %122 = vsyncpa [#allocation42], 0
    %123 = vsyncpa [#allocation45], 0
    %124 = vsyncpa [#allocation48], 0
    %125 = vsyncpa [#allocation51], 0
    %126 = vsyncpa [#allocation54], 0
    %127 = vsyncpa [#allocation57], 0
    %128 = vsyncpa [#allocation60], 0
    %129 = vsyncpa [#allocation63], 0
    %130 = vsyncpa [#allocation66], 0
    %131 = vsyncpa [#allocation69], 0
    %132 = vsyncpa [#allocation72], 0
    %133 = vsyncpa [#allocation7], 0
    %s134 = scalar_lea.sflag [#allocation7], 1
    %135 = vsyncpa %s134, 0
    loop: start=0, step=1, limit=4
    $region2: #{tpu_custom_call.1} parent=1 // loop_pre_header
      _
    $region3: #{tpu_custom_call.1} parent=1 // loop_header
      %s137 = sphi 0, %s141
      %p138 = scmp.ge.s32.totalorder %s137, 4
      %s147 = sphi 0, %s149
      %s150 = sphi 0, %s147
      %s151 = sphi 0, %s150
      %s167 = sphi 0, %s151
      %s171 = sphi 0, %s171
      %s173 = sphi 0, %s171
      %s174 = sphi 0, %s173
      %s188 = sphi 0, %s174
      %s192 = sphi 0, %s192
      %s194 = sphi 0, %s192
      %s195 = sphi 0, %s194
      %s209 = sphi 0, %s195
      %s213 = sphi 0, %s213
      %s215 = sphi 0, %s213
      %s216 = sphi 0, %s215
      %s230 = sphi 0, %s216
      %s234 = sphi 0, %s234
      %s236 = sphi 0, %s234
      %s237 = sphi 0, %s236
      %s251 = sphi 0, %s237
      %s255 = sphi 0, %s255
      %s257 = sphi 0, %s255
      %s258 = sphi 0, %s257
      %s272 = sphi 0, %s258
      %s276 = sphi 0, %s276
      %s278 = sphi 0, %s276
      %s279 = sphi 0, %s278
      %s293 = sphi 0, %s279
      %s297 = sphi 0, %s297
      %s299 = sphi 0, %s297
      %s300 = sphi 0, %s299
      %s314 = sphi 0, %s300
      %s318 = sphi 0, %s318
      %s320 = sphi 0, %s318
      %s321 = sphi 0, %s320
      %s335 = sphi 0, %s321
      %s339 = sphi 0, %s339
      %s341 = sphi 0, %s339
      %s342 = sphi 0, %s341
      %s356 = sphi 0, %s342
      %s360 = sphi 0, %s360
      %s362 = sphi 0, %s360
      %s363 = sphi 0, %s362
      %s377 = sphi 0, %s363
      %s381 = sphi 0, %s381
      %s383 = sphi 0, %s381
      %s384 = sphi 0, %s383
      %s398 = sphi 0, %s384
      %s402 = sphi 0, %s402
      %s404 = sphi 0, %s402
      %s405 = sphi 0, %s404
      %s419 = sphi 0, %s405
      %s423 = sphi 0, %s423
      %s425 = sphi 0, %s423
      %s426 = sphi 0, %s425
      %s440 = sphi 0, %s426
      %s444 = sphi 0, %s444
      %s446 = sphi 0, %s444
      %s447 = sphi 0, %s446
      %s461 = sphi 0, %s447
      %s465 = sphi 0, %s465
      %s467 = sphi 0, %s465
      %s468 = sphi 0, %s467
      %s482 = sphi 0, %s468
      %s486 = sphi 0, %s486
      %s488 = sphi 0, %s486
      %s489 = sphi 0, %s488
      %s503 = sphi 0, %s489
      %s507 = sphi 0, %s507
      %s509 = sphi 0, %s507
      %s510 = sphi 0, %s509
      %s524 = sphi 0, %s510
      %s528 = sphi 0, %s528
      %s530 = sphi 0, %s528
      %s531 = sphi 0, %s530
      %s545 = sphi 0, %s531
      %s549 = sphi 0, %s549
      %s551 = sphi 0, %s549
      %s552 = sphi 0, %s551
      %s566 = sphi 0, %s552
      %s570 = sphi 0, %s570
      %s572 = sphi 0, %s570
      %s573 = sphi 0, %s572
      %s587 = sphi 0, %s573
      %s591 = sphi 0, %s591
      %s593 = sphi 0, %s591
      %s594 = sphi 0, %s593
      %s608 = sphi 0, %s594
      %s612 = sphi 0, %s612
      %s614 = sphi 0, %s612
      %s615 = sphi 0, %s614
      %s629 = sphi 0, %s615
      %s633 = sphi 0, %s633
      %s635 = sphi 0, %s633
      %s636 = sphi 0, %s635
      %s650 = sphi 0, %s636
      %s654 = sphi 0, %s654
      %s656 = sphi 0, %s654
      %s657 = sphi 0, %s656
      %s671 = sphi 0, %s657
      %s675 = sphi 0, %s675
      %s677 = sphi 0, %s675
      %s678 = sphi 0, %s677
      %s692 = sphi 0, %s678
      %s696 = sphi 0, %s696
      %s698 = sphi 0, %s696
      %s699 = sphi 0, %s698
      %s713 = sphi 0, %s699
      %s717 = sphi 0, %s717
      %s719 = sphi 0, %s717
      %s720 = sphi 0, %s719
      %s734 = sphi 0, %s720
      %s738 = sphi 0, %s738
      %s740 = sphi 0, %s738
      %s741 = sphi 0, %s740
      %s755 = sphi 0, %s741
      %s759 = sphi 0, %s759
      %s761 = sphi 0, %s759
      %s762 = sphi 0, %s761
      %s776 = sphi 0, %s762
      %s780 = sphi 0, %s780
      %s782 = sphi 0, %s780
      %s783 = sphi 0, %s782
      %s797 = sphi 0, %s783
      %s801 = sphi 0, %s801
      %s803 = sphi 0, %s801
      %s804 = sphi 0, %s803
      %s818 = sphi 0, %s804
      %s822 = sphi 0, %s822
      %s824 = sphi 0, %s822
      %s825 = sphi 0, %s824
      %s839 = sphi 0, %s825
      %s843 = sphi 0, %s843
      %s845 = sphi 0, %s843
      %s846 = sphi 0, %s845
      %s860 = sphi 0, %s846
      %s864 = sphi 0, %s864
      %s866 = sphi 0, %s864
      %s867 = sphi 0, %s866
      %s881 = sphi 0, %s867
      %s885 = sphi 0, %s885
      %s887 = sphi 0, %s885
      %s888 = sphi 0, %s887
      %s902 = sphi 0, %s888
      %s906 = sphi 0, %s906
      %s908 = sphi 0, %s906
      %s909 = sphi 0, %s908
      %s923 = sphi 0, %s909
      %s927 = sphi 0, %s927
      %s929 = sphi 0, %s927
      %s930 = sphi 0, %s929
      %s944 = sphi 0, %s930
      %s948 = sphi 0, %s948
      %s950 = sphi 0, %s948
      %s951 = sphi 0, %s950
      %s965 = sphi 0, %s951
      %s969 = sphi 0, %s969
      %s971 = sphi 0, %s969
      %s972 = sphi 0, %s971
      %s986 = sphi 0, %s972
      %s990 = sphi 0, %s990
      %s992 = sphi 0, %s990
      %s993 = sphi 0, %s992
      %s1007 = sphi 0, %s993
      %s1011 = sphi 0, %s1011
      %s1013 = sphi 0, %s1011
      %s1014 = sphi 0, %s1013
      %s1028 = sphi 0, %s1014
      %s1032 = sphi 0, %s1032
      %s1034 = sphi 0, %s1032
      %s1035 = sphi 0, %s1034
      %s1049 = sphi 0, %s1035
      %s1053 = sphi 0, %s1053
      %s1055 = sphi 0, %s1053
      %s1056 = sphi 0, %s1055
      %s1070 = sphi 0, %s1056
      %s1074 = sphi 0, %s1074
      %s1076 = sphi 0, %s1074
      %s1077 = sphi 0, %s1076
      %s1091 = sphi 0, %s1077
      %s1095 = sphi 0, %s1095
      %s1097 = sphi 0, %s1095
      %s1098 = sphi 0, %s1097
      %s1112 = sphi 0, %s1098
      %s1116 = sphi 0, %s1116
      %s1118 = sphi 0, %s1116
      %s1119 = sphi 0, %s1118
      %s1133 = sphi 0, %s1119
      %s1137 = sphi 0, %s1137
      %s1139 = sphi 0, %s1137
      %s1140 = sphi 0, %s1139
      %s1154 = sphi 0, %s1140
      %s1158 = sphi 0, %s1158
      %s1160 = sphi 0, %s1158
      %s1161 = sphi 0, %s1160
      %s1175 = sphi 0, %s1161
      %s1179 = sphi 0, %s1179
      %s1181 = sphi 0, %s1179
      %s1182 = sphi 0, %s1181
      %s1196 = sphi 0, %s1182
      %s1200 = sphi 0, %s1200
      %s1202 = sphi 0, %s1200
      %s1203 = sphi 0, %s1202
      %s1217 = sphi 0, %s1203
      %s1223 = sphi 0, %s1225
      %s1226 = sphi 0, %s1223
      %s1227 = sphi 0, %s1226
      %s1243 = sphi 0, %s1227
    $region4: #{tpu_custom_call.1} parent=1 // loop_header_branch
      %140 = sbr.rel (%p138) target = $region8
    $region5: #{tpu_custom_call.1} parent=1 // loop_body
      %s142 = ssub.s32 %s137, 1
      %s143 = ssub.s32 %s137, 2
      %s144 = sadd.s32 %s137, 1
      %s145 = ssub.s32 %s137, %s144
      %p146 = scmp.eq.s32.totalorder %s145, 0
      %s148 = sadd.s32 %s147, 1
      %s149 = scalar_select %p146, %s147, %s148
      %p152 = pneg %p146
      %p153 = scmp.eq.s32.totalorder %s137, 1
      %p154 = por %p152, %p153
      %p155 = scmp.ne.s32.totalorder %s147, %s150
      %p156 = scmp.eq.s32.totalorder %s137, 0
      %p157 = por %p155, %p156
      %p158 = scmp.ne.s32.totalorder %s147, %s150
      %p159 = scmp.eq.s32.totalorder %s142, 1
      %p160 = por %p158, %p159
      %p161 = scmp.ne.s32.totalorder %s150, %s151
      %p162 = scmp.eq.s32.totalorder %s142, 0
      %p163 = por %p161, %p162
      %p164 = scmp.ne.s32.totalorder %s150, %s151
      %p165 = scmp.eq.s32.totalorder %s143, 1
      %p166 = por %p164, %p165
      %p168 = scmp.ne.s32.totalorder %s151, %s167
      %p169 = scmp.eq.s32.totalorder %s143, 0
      %p170 = por %p168, %p169
      %s172 = sadd.s32 %s171, 1
      %p175 = scmp.eq.s32.totalorder %s137, 1
      %p176 = scmp.ne.s32.totalorder %s171, %s173
      %p177 = scmp.eq.s32.totalorder %s137, 0
      %p178 = por %p176, %p177
      %p179 = scmp.ne.s32.totalorder %s171, %s173
      %p180 = scmp.eq.s32.totalorder %s142, 1
      %p181 = por %p179, %p180
      %p182 = scmp.ne.s32.totalorder %s173, %s174
      %p183 = scmp.eq.s32.totalorder %s142, 0
      %p184 = por %p182, %p183
      %p185 = scmp.ne.s32.totalorder %s173, %s174
      %p186 = scmp.eq.s32.totalorder %s143, 1
      %p187 = por %p185, %p186
      %p189 = scmp.ne.s32.totalorder %s174, %s188
      %p190 = scmp.eq.s32.totalorder %s143, 0
      %p191 = por %p189, %p190
      %s193 = sadd.s32 %s192, 1
      %p196 = scmp.eq.s32.totalorder %s137, 1
      %p197 = scmp.ne.s32.totalorder %s192, %s194
      %p198 = scmp.eq.s32.totalorder %s137, 0
      %p199 = por %p197, %p198
      %p200 = scmp.ne.s32.totalorder %s192, %s194
      %p201 = scmp.eq.s32.totalorder %s142, 1
      %p202 = por %p200, %p201
      %p203 = scmp.ne.s32.totalorder %s194, %s195
      %p204 = scmp.eq.s32.totalorder %s142, 0
      %p205 = por %p203, %p204
      %p206 = scmp.ne.s32.totalorder %s194, %s195
      %p207 = scmp.eq.s32.totalorder %s143, 1
      %p208 = por %p206, %p207
      %p210 = scmp.ne.s32.totalorder %s195, %s209
      %p211 = scmp.eq.s32.totalorder %s143, 0
      %p212 = por %p210, %p211
      %s214 = sadd.s32 %s213, 1
      %p217 = scmp.eq.s32.totalorder %s137, 1
      %p218 = scmp.ne.s32.totalorder %s213, %s215
      %p219 = scmp.eq.s32.totalorder %s137, 0
      %p220 = por %p218, %p219
      %p221 = scmp.ne.s32.totalorder %s213, %s215
      %p222 = scmp.eq.s32.totalorder %s142, 1
      %p223 = por %p221, %p222
      %p224 = scmp.ne.s32.totalorder %s215, %s216
      %p225 = scmp.eq.s32.totalorder %s142, 0
      %p226 = por %p224, %p225
      %p227 = scmp.ne.s32.totalorder %s215, %s216
      %p228 = scmp.eq.s32.totalorder %s143, 1
      %p229 = por %p227, %p228
      %p231 = scmp.ne.s32.totalorder %s216, %s230
      %p232 = scmp.eq.s32.totalorder %s143, 0
      %p233 = por %p231, %p232
      %s235 = sadd.s32 %s234, 1
      %p238 = scmp.eq.s32.totalorder %s137, 1
      %p239 = scmp.ne.s32.totalorder %s234, %s236
      %p240 = scmp.eq.s32.totalorder %s137, 0
      %p241 = por %p239, %p240
      %p242 = scmp.ne.s32.totalorder %s234, %s236
      %p243 = scmp.eq.s32.totalorder %s142, 1
      %p244 = por %p242, %p243
      %p245 = scmp.ne.s32.totalorder %s236, %s237
      %p246 = scmp.eq.s32.totalorder %s142, 0
      %p247 = por %p245, %p246
      %p248 = scmp.ne.s32.totalorder %s236, %s237
      %p249 = scmp.eq.s32.totalorder %s143, 1
      %p250 = por %p248, %p249
      %p252 = scmp.ne.s32.totalorder %s237, %s251
      %p253 = scmp.eq.s32.totalorder %s143, 0
      %p254 = por %p252, %p253
      %s256 = sadd.s32 %s255, 1
      %p259 = scmp.eq.s32.totalorder %s137, 1
      %p260 = scmp.ne.s32.totalorder %s255, %s257
      %p261 = scmp.eq.s32.totalorder %s137, 0
      %p262 = por %p260, %p261
      %p263 = scmp.ne.s32.totalorder %s255, %s257
      %p264 = scmp.eq.s32.totalorder %s142, 1
      %p265 = por %p263, %p264
      %p266 = scmp.ne.s32.totalorder %s257, %s258
      %p267 = scmp.eq.s32.totalorder %s142, 0
      %p268 = por %p266, %p267
      %p269 = scmp.ne.s32.totalorder %s257, %s258
      %p270 = scmp.eq.s32.totalorder %s143, 1
      %p271 = por %p269, %p270
      %p273 = scmp.ne.s32.totalorder %s258, %s272
      %p274 = scmp.eq.s32.totalorder %s143, 0
      %p275 = por %p273, %p274
      %s277 = sadd.s32 %s276, 1
      %p280 = scmp.eq.s32.totalorder %s137, 1
      %p281 = scmp.ne.s32.totalorder %s276, %s278
      %p282 = scmp.eq.s32.totalorder %s137, 0
      %p283 = por %p281, %p282
      %p284 = scmp.ne.s32.totalorder %s276, %s278
      %p285 = scmp.eq.s32.totalorder %s142, 1
      %p286 = por %p284, %p285
      %p287 = scmp.ne.s32.totalorder %s278, %s279
      %p288 = scmp.eq.s32.totalorder %s142, 0
      %p289 = por %p287, %p288
      %p290 = scmp.ne.s32.totalorder %s278, %s279
      %p291 = scmp.eq.s32.totalorder %s143, 1
      %p292 = por %p290, %p291
      %p294 = scmp.ne.s32.totalorder %s279, %s293
      %p295 = scmp.eq.s32.totalorder %s143, 0
      %p296 = por %p294, %p295
      %s298 = sadd.s32 %s297, 1
      %p301 = scmp.eq.s32.totalorder %s137, 1
      %p302 = scmp.ne.s32.totalorder %s297, %s299
      %p303 = scmp.eq.s32.totalorder %s137, 0
      %p304 = por %p302, %p303
      %p305 = scmp.ne.s32.totalorder %s297, %s299
      %p306 = scmp.eq.s32.totalorder %s142, 1
      %p307 = por %p305, %p306
      %p308 = scmp.ne.s32.totalorder %s299, %s300
      %p309 = scmp.eq.s32.totalorder %s142, 0
      %p310 = por %p308, %p309
      %p311 = scmp.ne.s32.totalorder %s299, %s300
      %p312 = scmp.eq.s32.totalorder %s143, 1
      %p313 = por %p311, %p312
      %p315 = scmp.ne.s32.totalorder %s300, %s314
      %p316 = scmp.eq.s32.totalorder %s143, 0
      %p317 = por %p315, %p316
      %s319 = sadd.s32 %s318, 1
      %p322 = scmp.eq.s32.totalorder %s137, 1
      %p323 = scmp.ne.s32.totalorder %s318, %s320
      %p324 = scmp.eq.s32.totalorder %s137, 0
      %p325 = por %p323, %p324
      %p326 = scmp.ne.s32.totalorder %s318, %s320
      %p327 = scmp.eq.s32.totalorder %s142, 1
      %p328 = por %p326, %p327
      %p329 = scmp.ne.s32.totalorder %s320, %s321
      %p330 = scmp.eq.s32.totalorder %s142, 0
      %p331 = por %p329, %p330
      %p332 = scmp.ne.s32.totalorder %s320, %s321
      %p333 = scmp.eq.s32.totalorder %s143, 1
      %p334 = por %p332, %p333
      %p336 = scmp.ne.s32.totalorder %s321, %s335
      %p337 = scmp.eq.s32.totalorder %s143, 0
      %p338 = por %p336, %p337
      %s340 = sadd.s32 %s339, 1
      %p343 = scmp.eq.s32.totalorder %s137, 1
      %p344 = scmp.ne.s32.totalorder %s339, %s341
      %p345 = scmp.eq.s32.totalorder %s137, 0
      %p346 = por %p344, %p345
      %p347 = scmp.ne.s32.totalorder %s339, %s341
      %p348 = scmp.eq.s32.totalorder %s142, 1
      %p349 = por %p347, %p348
      %p350 = scmp.ne.s32.totalorder %s341, %s342
      %p351 = scmp.eq.s32.totalorder %s142, 0
      %p352 = por %p350, %p351
      %p353 = scmp.ne.s32.totalorder %s341, %s342
      %p354 = scmp.eq.s32.totalorder %s143, 1
      %p355 = por %p353, %p354
      %p357 = scmp.ne.s32.totalorder %s342, %s356
      %p358 = scmp.eq.s32.totalorder %s143, 0
      %p359 = por %p357, %p358
      %s361 = sadd.s32 %s360, 1
      %p364 = scmp.eq.s32.totalorder %s137, 1
      %p365 = scmp.ne.s32.totalorder %s360, %s362
      %p366 = scmp.eq.s32.totalorder %s137, 0
      %p367 = por %p365, %p366
      %p368 = scmp.ne.s32.totalorder %s360, %s362
      %p369 = scmp.eq.s32.totalorder %s142, 1
      %p370 = por %p368, %p369
      %p371 = scmp.ne.s32.totalorder %s362, %s363
      %p372 = scmp.eq.s32.totalorder %s142, 0
      %p373 = por %p371, %p372
      %p374 = scmp.ne.s32.totalorder %s362, %s363
      %p375 = scmp.eq.s32.totalorder %s143, 1
      %p376 = por %p374, %p375
      %p378 = scmp.ne.s32.totalorder %s363, %s377
      %p379 = scmp.eq.s32.totalorder %s143, 0
      %p380 = por %p378, %p379
      %s382 = sadd.s32 %s381, 1
      %p385 = scmp.eq.s32.totalorder %s137, 1
      %p386 = scmp.ne.s32.totalorder %s381, %s383
      %p387 = scmp.eq.s32.totalorder %s137, 0
      %p388 = por %p386, %p387
      %p389 = scmp.ne.s32.totalorder %s381, %s383
      %p390 = scmp.eq.s32.totalorder %s142, 1
      %p391 = por %p389, %p390
      %p392 = scmp.ne.s32.totalorder %s383, %s384
      %p393 = scmp.eq.s32.totalorder %s142, 0
      %p394 = por %p392, %p393
      %p395 = scmp.ne.s32.totalorder %s383, %s384
      %p396 = scmp.eq.s32.totalorder %s143, 1
      %p397 = por %p395, %p396
      %p399 = scmp.ne.s32.totalorder %s384, %s398
      %p400 = scmp.eq.s32.totalorder %s143, 0
      %p401 = por %p399, %p400
      %s403 = sadd.s32 %s402, 1
      %p406 = scmp.eq.s32.totalorder %s137, 1
      %p407 = scmp.ne.s32.totalorder %s402, %s404
      %p408 = scmp.eq.s32.totalorder %s137, 0
      %p409 = por %p407, %p408
      %p410 = scmp.ne.s32.totalorder %s402, %s404
      %p411 = scmp.eq.s32.totalorder %s142, 1
      %p412 = por %p410, %p411
      %p413 = scmp.ne.s32.totalorder %s404, %s405
      %p414 = scmp.eq.s32.totalorder %s142, 0
      %p415 = por %p413, %p414
      %p416 = scmp.ne.s32.totalorder %s404, %s405
      %p417 = scmp.eq.s32.totalorder %s143, 1
      %p418 = por %p416, %p417
      %p420 = scmp.ne.s32.totalorder %s405, %s419
      %p421 = scmp.eq.s32.totalorder %s143, 0
      %p422 = por %p420, %p421
      %s424 = sadd.s32 %s423, 1
      %p427 = scmp.eq.s32.totalorder %s137, 1
      %p428 = scmp.ne.s32.totalorder %s423, %s425
      %p429 = scmp.eq.s32.totalorder %s137, 0
      %p430 = por %p428, %p429
      %p431 = scmp.ne.s32.totalorder %s423, %s425
      %p432 = scmp.eq.s32.totalorder %s142, 1
      %p433 = por %p431, %p432
      %p434 = scmp.ne.s32.totalorder %s425, %s426
      %p435 = scmp.eq.s32.totalorder %s142, 0
      %p436 = por %p434, %p435
      %p437 = scmp.ne.s32.totalorder %s425, %s426
      %p438 = scmp.eq.s32.totalorder %s143, 1
      %p439 = por %p437, %p438
      %p441 = scmp.ne.s32.totalorder %s426, %s440
      %p442 = scmp.eq.s32.totalorder %s143, 0
      %p443 = por %p441, %p442
      %s445 = sadd.s32 %s444, 1
      %p448 = scmp.eq.s32.totalorder %s137, 1
      %p449 = scmp.ne.s32.totalorder %s444, %s446
      %p450 = scmp.eq.s32.totalorder %s137, 0
      %p451 = por %p449, %p450
      %p452 = scmp.ne.s32.totalorder %s444, %s446
      %p453 = scmp.eq.s32.totalorder %s142, 1
      %p454 = por %p452, %p453
      %p455 = scmp.ne.s32.totalorder %s446, %s447
      %p456 = scmp.eq.s32.totalorder %s142, 0
      %p457 = por %p455, %p456
      %p458 = scmp.ne.s32.totalorder %s446, %s447
      %p459 = scmp.eq.s32.totalorder %s143, 1
      %p460 = por %p458, %p459
      %p462 = scmp.ne.s32.totalorder %s447, %s461
      %p463 = scmp.eq.s32.totalorder %s143, 0
      %p464 = por %p462, %p463
      %s466 = sadd.s32 %s465, 1
      %p469 = scmp.eq.s32.totalorder %s137, 1
      %p470 = scmp.ne.s32.totalorder %s465, %s467
      %p471 = scmp.eq.s32.totalorder %s137, 0
      %p472 = por %p470, %p471
      %p473 = scmp.ne.s32.totalorder %s465, %s467
      %p474 = scmp.eq.s32.totalorder %s142, 1
      %p475 = por %p473, %p474
      %p476 = scmp.ne.s32.totalorder %s467, %s468
      %p477 = scmp.eq.s32.totalorder %s142, 0
      %p478 = por %p476, %p477
      %p479 = scmp.ne.s32.totalorder %s467, %s468
      %p480 = scmp.eq.s32.totalorder %s143, 1
      %p481 = por %p479, %p480
      %p483 = scmp.ne.s32.totalorder %s468, %s482
      %p484 = scmp.eq.s32.totalorder %s143, 0
      %p485 = por %p483, %p484
      %s487 = sadd.s32 %s486, 1
      %p490 = scmp.eq.s32.totalorder %s137, 1
      %p491 = scmp.ne.s32.totalorder %s486, %s488
      %p492 = scmp.eq.s32.totalorder %s137, 0
      %p493 = por %p491, %p492
      %p494 = scmp.ne.s32.totalorder %s486, %s488
      %p495 = scmp.eq.s32.totalorder %s142, 1
      %p496 = por %p494, %p495
      %p497 = scmp.ne.s32.totalorder %s488, %s489
      %p498 = scmp.eq.s32.totalorder %s142, 0
      %p499 = por %p497, %p498
      %p500 = scmp.ne.s32.totalorder %s488, %s489
      %p501 = scmp.eq.s32.totalorder %s143, 1
      %p502 = por %p500, %p501
      %p504 = scmp.ne.s32.totalorder %s489, %s503
      %p505 = scmp.eq.s32.totalorder %s143, 0
      %p506 = por %p504, %p505
      %s508 = sadd.s32 %s507, 1
      %p511 = scmp.eq.s32.totalorder %s137, 1
      %p512 = scmp.ne.s32.totalorder %s507, %s509
      %p513 = scmp.eq.s32.totalorder %s137, 0
      %p514 = por %p512, %p513
      %p515 = scmp.ne.s32.totalorder %s507, %s509
      %p516 = scmp.eq.s32.totalorder %s142, 1
      %p517 = por %p515, %p516
      %p518 = scmp.ne.s32.totalorder %s509, %s510
      %p519 = scmp.eq.s32.totalorder %s142, 0
      %p520 = por %p518, %p519
      %p521 = scmp.ne.s32.totalorder %s509, %s510
      %p522 = scmp.eq.s32.totalorder %s143, 1
      %p523 = por %p521, %p522
      %p525 = scmp.ne.s32.totalorder %s510, %s524
      %p526 = scmp.eq.s32.totalorder %s143, 0
      %p527 = por %p525, %p526
      %s529 = sadd.s32 %s528, 1
      %p532 = scmp.eq.s32.totalorder %s137, 1
      %p533 = scmp.ne.s32.totalorder %s528, %s530
      %p534 = scmp.eq.s32.totalorder %s137, 0
      %p535 = por %p533, %p534
      %p536 = scmp.ne.s32.totalorder %s528, %s530
      %p537 = scmp.eq.s32.totalorder %s142, 1
      %p538 = por %p536, %p537
      %p539 = scmp.ne.s32.totalorder %s530, %s531
      %p540 = scmp.eq.s32.totalorder %s142, 0
      %p541 = por %p539, %p540
      %p542 = scmp.ne.s32.totalorder %s530, %s531
      %p543 = scmp.eq.s32.totalorder %s143, 1
      %p544 = por %p542, %p543
      %p546 = scmp.ne.s32.totalorder %s531, %s545
      %p547 = scmp.eq.s32.totalorder %s143, 0
      %p548 = por %p546, %p547
      %s550 = sadd.s32 %s549, 1
      %p553 = scmp.eq.s32.totalorder %s137, 1
      %p554 = scmp.ne.s32.totalorder %s549, %s551
      %p555 = scmp.eq.s32.totalorder %s137, 0
      %p556 = por %p554, %p555
      %p557 = scmp.ne.s32.totalorder %s549, %s551
      %p558 = scmp.eq.s32.totalorder %s142, 1
      %p559 = por %p557, %p558
      %p560 = scmp.ne.s32.totalorder %s551, %s552
      %p561 = scmp.eq.s32.totalorder %s142, 0
      %p562 = por %p560, %p561
      %p563 = scmp.ne.s32.totalorder %s551, %s552
      %p564 = scmp.eq.s32.totalorder %s143, 1
      %p565 = por %p563, %p564
      %p567 = scmp.ne.s32.totalorder %s552, %s566
      %p568 = scmp.eq.s32.totalorder %s143, 0
      %p569 = por %p567, %p568
      %s571 = sadd.s32 %s570, 1
      %p574 = scmp.eq.s32.totalorder %s137, 1
      %p575 = scmp.ne.s32.totalorder %s570, %s572
      %p576 = scmp.eq.s32.totalorder %s137, 0
      %p577 = por %p575, %p576
      %p578 = scmp.ne.s32.totalorder %s570, %s572
      %p579 = scmp.eq.s32.totalorder %s142, 1
      %p580 = por %p578, %p579
      %p581 = scmp.ne.s32.totalorder %s572, %s573
      %p582 = scmp.eq.s32.totalorder %s142, 0
      %p583 = por %p581, %p582
      %p584 = scmp.ne.s32.totalorder %s572, %s573
      %p585 = scmp.eq.s32.totalorder %s143, 1
      %p586 = por %p584, %p585
      %p588 = scmp.ne.s32.totalorder %s573, %s587
      %p589 = scmp.eq.s32.totalorder %s143, 0
      %p590 = por %p588, %p589
      %s592 = sadd.s32 %s591, 1
      %p595 = scmp.eq.s32.totalorder %s137, 1
      %p596 = scmp.ne.s32.totalorder %s591, %s593
      %p597 = scmp.eq.s32.totalorder %s137, 0
      %p598 = por %p596, %p597
      %p599 = scmp.ne.s32.totalorder %s591, %s593
      %p600 = scmp.eq.s32.totalorder %s142, 1
      %p601 = por %p599, %p600
      %p602 = scmp.ne.s32.totalorder %s593, %s594
      %p603 = scmp.eq.s32.totalorder %s142, 0
      %p604 = por %p602, %p603
      %p605 = scmp.ne.s32.totalorder %s593, %s594
      %p606 = scmp.eq.s32.totalorder %s143, 1
      %p607 = por %p605, %p606
      %p609 = scmp.ne.s32.totalorder %s594, %s608
      %p610 = scmp.eq.s32.totalorder %s143, 0
      %p611 = por %p609, %p610
      %s613 = sadd.s32 %s612, 1
      %p616 = scmp.eq.s32.totalorder %s137, 1
      %p617 = scmp.ne.s32.totalorder %s612, %s614
      %p618 = scmp.eq.s32.totalorder %s137, 0
      %p619 = por %p617, %p618
      %p620 = scmp.ne.s32.totalorder %s612, %s614
      %p621 = scmp.eq.s32.totalorder %s142, 1
      %p622 = por %p620, %p621
      %p623 = scmp.ne.s32.totalorder %s614, %s615
      %p624 = scmp.eq.s32.totalorder %s142, 0
      %p625 = por %p623, %p624
      %p626 = scmp.ne.s32.totalorder %s614, %s615
      %p627 = scmp.eq.s32.totalorder %s143, 1
      %p628 = por %p626, %p627
      %p630 = scmp.ne.s32.totalorder %s615, %s629
      %p631 = scmp.eq.s32.totalorder %s143, 0
      %p632 = por %p630, %p631
      %s634 = sadd.s32 %s633, 1
      %p637 = scmp.eq.s32.totalorder %s137, 1
      %p638 = scmp.ne.s32.totalorder %s633, %s635
      %p639 = scmp.eq.s32.totalorder %s137, 0
      %p640 = por %p638, %p639
      %p641 = scmp.ne.s32.totalorder %s633, %s635
      %p642 = scmp.eq.s32.totalorder %s142, 1
      %p643 = por %p641, %p642
      %p644 = scmp.ne.s32.totalorder %s635, %s636
      %p645 = scmp.eq.s32.totalorder %s142, 0
      %p646 = por %p644, %p645
      %p647 = scmp.ne.s32.totalorder %s635, %s636
      %p648 = scmp.eq.s32.totalorder %s143, 1
      %p649 = por %p647, %p648
      %p651 = scmp.ne.s32.totalorder %s636, %s650
      %p652 = scmp.eq.s32.totalorder %s143, 0
      %p653 = por %p651, %p652
      %s655 = sadd.s32 %s654, 1
      %p658 = scmp.eq.s32.totalorder %s137, 1
      %p659 = scmp.ne.s32.totalorder %s654, %s656
      %p660 = scmp.eq.s32.totalorder %s137, 0
      %p661 = por %p659, %p660
      %p662 = scmp.ne.s32.totalorder %s654, %s656
      %p663 = scmp.eq.s32.totalorder %s142, 1
      %p664 = por %p662, %p663
      %p665 = scmp.ne.s32.totalorder %s656, %s657
      %p666 = scmp.eq.s32.totalorder %s142, 0
      %p667 = por %p665, %p666
      %p668 = scmp.ne.s32.totalorder %s656, %s657
      %p669 = scmp.eq.s32.totalorder %s143, 1
      %p670 = por %p668, %p669
      %p672 = scmp.ne.s32.totalorder %s657, %s671
      %p673 = scmp.eq.s32.totalorder %s143, 0
      %p674 = por %p672, %p673
      %s676 = sadd.s32 %s675, 1
      %p679 = scmp.eq.s32.totalorder %s137, 1
      %p680 = scmp.ne.s32.totalorder %s675, %s677
      %p681 = scmp.eq.s32.totalorder %s137, 0
      %p682 = por %p680, %p681
      %p683 = scmp.ne.s32.totalorder %s675, %s677
      %p684 = scmp.eq.s32.totalorder %s142, 1
      %p685 = por %p683, %p684
      %p686 = scmp.ne.s32.totalorder %s677, %s678
      %p687 = scmp.eq.s32.totalorder %s142, 0
      %p688 = por %p686, %p687
      %p689 = scmp.ne.s32.totalorder %s677, %s678
      %p690 = scmp.eq.s32.totalorder %s143, 1
      %p691 = por %p689, %p690
      %p693 = scmp.ne.s32.totalorder %s678, %s692
      %p694 = scmp.eq.s32.totalorder %s143, 0
      %p695 = por %p693, %p694
      %s697 = sadd.s32 %s696, 1
      %p700 = scmp.eq.s32.totalorder %s137, 1
      %p701 = scmp.ne.s32.totalorder %s696, %s698
      %p702 = scmp.eq.s32.totalorder %s137, 0
      %p703 = por %p701, %p702
      %p704 = scmp.ne.s32.totalorder %s696, %s698
      %p705 = scmp.eq.s32.totalorder %s142, 1
      %p706 = por %p704, %p705
      %p707 = scmp.ne.s32.totalorder %s698, %s699
      %p708 = scmp.eq.s32.totalorder %s142, 0
      %p709 = por %p707, %p708
      %p710 = scmp.ne.s32.totalorder %s698, %s699
      %p711 = scmp.eq.s32.totalorder %s143, 1
      %p712 = por %p710, %p711
      %p714 = scmp.ne.s32.totalorder %s699, %s713
      %p715 = scmp.eq.s32.totalorder %s143, 0
      %p716 = por %p714, %p715
      %s718 = sadd.s32 %s717, 1
      %p721 = scmp.eq.s32.totalorder %s137, 1
      %p722 = scmp.ne.s32.totalorder %s717, %s719
      %p723 = scmp.eq.s32.totalorder %s137, 0
      %p724 = por %p722, %p723
      %p725 = scmp.ne.s32.totalorder %s717, %s719
      %p726 = scmp.eq.s32.totalorder %s142, 1
      %p727 = por %p725, %p726
      %p728 = scmp.ne.s32.totalorder %s719, %s720
      %p729 = scmp.eq.s32.totalorder %s142, 0
      %p730 = por %p728, %p729
      %p731 = scmp.ne.s32.totalorder %s719, %s720
      %p732 = scmp.eq.s32.totalorder %s143, 1
      %p733 = por %p731, %p732
      %p735 = scmp.ne.s32.totalorder %s720, %s734
      %p736 = scmp.eq.s32.totalorder %s143, 0
      %p737 = por %p735, %p736
      %s739 = sadd.s32 %s738, 1
      %p742 = scmp.eq.s32.totalorder %s137, 1
      %p743 = scmp.ne.s32.totalorder %s738, %s740
      %p744 = scmp.eq.s32.totalorder %s137, 0
      %p745 = por %p743, %p744
      %p746 = scmp.ne.s32.totalorder %s738, %s740
      %p747 = scmp.eq.s32.totalorder %s142, 1
      %p748 = por %p746, %p747
      %p749 = scmp.ne.s32.totalorder %s740, %s741
      %p750 = scmp.eq.s32.totalorder %s142, 0
      %p751 = por %p749, %p750
      %p752 = scmp.ne.s32.totalorder %s740, %s741
      %p753 = scmp.eq.s32.totalorder %s143, 1
      %p754 = por %p752, %p753
      %p756 = scmp.ne.s32.totalorder %s741, %s755
      %p757 = scmp.eq.s32.totalorder %s143, 0
      %p758 = por %p756, %p757
      %s760 = sadd.s32 %s759, 1
      %p763 = scmp.eq.s32.totalorder %s137, 1
      %p764 = scmp.ne.s32.totalorder %s759, %s761
      %p765 = scmp.eq.s32.totalorder %s137, 0
      %p766 = por %p764, %p765
      %p767 = scmp.ne.s32.totalorder %s759, %s761
      %p768 = scmp.eq.s32.totalorder %s142, 1
      %p769 = por %p767, %p768
      %p770 = scmp.ne.s32.totalorder %s761, %s762
      %p771 = scmp.eq.s32.totalorder %s142, 0
      %p772 = por %p770, %p771
      %p773 = scmp.ne.s32.totalorder %s761, %s762
      %p774 = scmp.eq.s32.totalorder %s143, 1
      %p775 = por %p773, %p774
      %p777 = scmp.ne.s32.totalorder %s762, %s776
      %p778 = scmp.eq.s32.totalorder %s143, 0
      %p779 = por %p777, %p778
      %s781 = sadd.s32 %s780, 1
      %p784 = scmp.eq.s32.totalorder %s137, 1
      %p785 = scmp.ne.s32.totalorder %s780, %s782
      %p786 = scmp.eq.s32.totalorder %s137, 0
      %p787 = por %p785, %p786
      %p788 = scmp.ne.s32.totalorder %s780, %s782
      %p789 = scmp.eq.s32.totalorder %s142, 1
      %p790 = por %p788, %p789
      %p791 = scmp.ne.s32.totalorder %s782, %s783
      %p792 = scmp.eq.s32.totalorder %s142, 0
      %p793 = por %p791, %p792
      %p794 = scmp.ne.s32.totalorder %s782, %s783
      %p795 = scmp.eq.s32.totalorder %s143, 1
      %p796 = por %p794, %p795
      %p798 = scmp.ne.s32.totalorder %s783, %s797
      %p799 = scmp.eq.s32.totalorder %s143, 0
      %p800 = por %p798, %p799
      %s802 = sadd.s32 %s801, 1
      %p805 = scmp.eq.s32.totalorder %s137, 1
      %p806 = scmp.ne.s32.totalorder %s801, %s803
      %p807 = scmp.eq.s32.totalorder %s137, 0
      %p808 = por %p806, %p807
      %p809 = scmp.ne.s32.totalorder %s801, %s803
      %p810 = scmp.eq.s32.totalorder %s142, 1
      %p811 = por %p809, %p810
      %p812 = scmp.ne.s32.totalorder %s803, %s804
      %p813 = scmp.eq.s32.totalorder %s142, 0
      %p814 = por %p812, %p813
      %p815 = scmp.ne.s32.totalorder %s803, %s804
      %p816 = scmp.eq.s32.totalorder %s143, 1
      %p817 = por %p815, %p816
      %p819 = scmp.ne.s32.totalorder %s804, %s818
      %p820 = scmp.eq.s32.totalorder %s143, 0
      %p821 = por %p819, %p820
      %s823 = sadd.s32 %s822, 1
      %p826 = scmp.eq.s32.totalorder %s137, 1
      %p827 = scmp.ne.s32.totalorder %s822, %s824
      %p828 = scmp.eq.s32.totalorder %s137, 0
      %p829 = por %p827, %p828
      %p830 = scmp.ne.s32.totalorder %s822, %s824
      %p831 = scmp.eq.s32.totalorder %s142, 1
      %p832 = por %p830, %p831
      %p833 = scmp.ne.s32.totalorder %s824, %s825
      %p834 = scmp.eq.s32.totalorder %s142, 0
      %p835 = por %p833, %p834
      %p836 = scmp.ne.s32.totalorder %s824, %s825
      %p837 = scmp.eq.s32.totalorder %s143, 1
      %p838 = por %p836, %p837
      %p840 = scmp.ne.s32.totalorder %s825, %s839
      %p841 = scmp.eq.s32.totalorder %s143, 0
      %p842 = por %p840, %p841
      %s844 = sadd.s32 %s843, 1
      %p847 = scmp.eq.s32.totalorder %s137, 1
      %p848 = scmp.ne.s32.totalorder %s843, %s845
      %p849 = scmp.eq.s32.totalorder %s137, 0
      %p850 = por %p848, %p849
      %p851 = scmp.ne.s32.totalorder %s843, %s845
      %p852 = scmp.eq.s32.totalorder %s142, 1
      %p853 = por %p851, %p852
      %p854 = scmp.ne.s32.totalorder %s845, %s846
      %p855 = scmp.eq.s32.totalorder %s142, 0
      %p856 = por %p854, %p855
      %p857 = scmp.ne.s32.totalorder %s845, %s846
      %p858 = scmp.eq.s32.totalorder %s143, 1
      %p859 = por %p857, %p858
      %p861 = scmp.ne.s32.totalorder %s846, %s860
      %p862 = scmp.eq.s32.totalorder %s143, 0
      %p863 = por %p861, %p862
      %s865 = sadd.s32 %s864, 1
      %p868 = scmp.eq.s32.totalorder %s137, 1
      %p869 = scmp.ne.s32.totalorder %s864, %s866
      %p870 = scmp.eq.s32.totalorder %s137, 0
      %p871 = por %p869, %p870
      %p872 = scmp.ne.s32.totalorder %s864, %s866
      %p873 = scmp.eq.s32.totalorder %s142, 1
      %p874 = por %p872, %p873
      %p875 = scmp.ne.s32.totalorder %s866, %s867
      %p876 = scmp.eq.s32.totalorder %s142, 0
      %p877 = por %p875, %p876
      %p878 = scmp.ne.s32.totalorder %s866, %s867
      %p879 = scmp.eq.s32.totalorder %s143, 1
      %p880 = por %p878, %p879
      %p882 = scmp.ne.s32.totalorder %s867, %s881
      %p883 = scmp.eq.s32.totalorder %s143, 0
      %p884 = por %p882, %p883
      %s886 = sadd.s32 %s885, 1
      %p889 = scmp.eq.s32.totalorder %s137, 1
      %p890 = scmp.ne.s32.totalorder %s885, %s887
      %p891 = scmp.eq.s32.totalorder %s137, 0
      %p892 = por %p890, %p891
      %p893 = scmp.ne.s32.totalorder %s885, %s887
      %p894 = scmp.eq.s32.totalorder %s142, 1
      %p895 = por %p893, %p894
      %p896 = scmp.ne.s32.totalorder %s887, %s888
      %p897 = scmp.eq.s32.totalorder %s142, 0
      %p898 = por %p896, %p897
      %p899 = scmp.ne.s32.totalorder %s887, %s888
      %p900 = scmp.eq.s32.totalorder %s143, 1
      %p901 = por %p899, %p900
      %p903 = scmp.ne.s32.totalorder %s888, %s902
      %p904 = scmp.eq.s32.totalorder %s143, 0
      %p905 = por %p903, %p904
      %s907 = sadd.s32 %s906, 1
      %p910 = scmp.eq.s32.totalorder %s137, 1
      %p911 = scmp.ne.s32.totalorder %s906, %s908
      %p912 = scmp.eq.s32.totalorder %s137, 0
      %p913 = por %p911, %p912
      %p914 = scmp.ne.s32.totalorder %s906, %s908
      %p915 = scmp.eq.s32.totalorder %s142, 1
      %p916 = por %p914, %p915
      %p917 = scmp.ne.s32.totalorder %s908, %s909
      %p918 = scmp.eq.s32.totalorder %s142, 0
      %p919 = por %p917, %p918
      %p920 = scmp.ne.s32.totalorder %s908, %s909
      %p921 = scmp.eq.s32.totalorder %s143, 1
      %p922 = por %p920, %p921
      %p924 = scmp.ne.s32.totalorder %s909, %s923
      %p925 = scmp.eq.s32.totalorder %s143, 0
      %p926 = por %p924, %p925
      %s928 = sadd.s32 %s927, 1
      %p931 = scmp.eq.s32.totalorder %s137, 1
      %p932 = scmp.ne.s32.totalorder %s927, %s929
      %p933 = scmp.eq.s32.totalorder %s137, 0
      %p934 = por %p932, %p933
      %p935 = scmp.ne.s32.totalorder %s927, %s929
      %p936 = scmp.eq.s32.totalorder %s142, 1
      %p937 = por %p935, %p936
      %p938 = scmp.ne.s32.totalorder %s929, %s930
      %p939 = scmp.eq.s32.totalorder %s142, 0
      %p940 = por %p938, %p939
      %p941 = scmp.ne.s32.totalorder %s929, %s930
      %p942 = scmp.eq.s32.totalorder %s143, 1
      %p943 = por %p941, %p942
      %p945 = scmp.ne.s32.totalorder %s930, %s944
      %p946 = scmp.eq.s32.totalorder %s143, 0
      %p947 = por %p945, %p946
      %s949 = sadd.s32 %s948, 1
      %p952 = scmp.eq.s32.totalorder %s137, 1
      %p953 = scmp.ne.s32.totalorder %s948, %s950
      %p954 = scmp.eq.s32.totalorder %s137, 0
      %p955 = por %p953, %p954
      %p956 = scmp.ne.s32.totalorder %s948, %s950
      %p957 = scmp.eq.s32.totalorder %s142, 1
      %p958 = por %p956, %p957
      %p959 = scmp.ne.s32.totalorder %s950, %s951
      %p960 = scmp.eq.s32.totalorder %s142, 0
      %p961 = por %p959, %p960
      %p962 = scmp.ne.s32.totalorder %s950, %s951
      %p963 = scmp.eq.s32.totalorder %s143, 1
      %p964 = por %p962, %p963
      %p966 = scmp.ne.s32.totalorder %s951, %s965
      %p967 = scmp.eq.s32.totalorder %s143, 0
      %p968 = por %p966, %p967
      %s970 = sadd.s32 %s969, 1
      %p973 = scmp.eq.s32.totalorder %s137, 1
      %p974 = scmp.ne.s32.totalorder %s969, %s971
      %p975 = scmp.eq.s32.totalorder %s137, 0
      %p976 = por %p974, %p975
      %p977 = scmp.ne.s32.totalorder %s969, %s971
      %p978 = scmp.eq.s32.totalorder %s142, 1
      %p979 = por %p977, %p978
      %p980 = scmp.ne.s32.totalorder %s971, %s972
      %p981 = scmp.eq.s32.totalorder %s142, 0
      %p982 = por %p980, %p981
      %p983 = scmp.ne.s32.totalorder %s971, %s972
      %p984 = scmp.eq.s32.totalorder %s143, 1
      %p985 = por %p983, %p984
      %p987 = scmp.ne.s32.totalorder %s972, %s986
      %p988 = scmp.eq.s32.totalorder %s143, 0
      %p989 = por %p987, %p988
      %s991 = sadd.s32 %s990, 1
      %p994 = scmp.eq.s32.totalorder %s137, 1
      %p995 = scmp.ne.s32.totalorder %s990, %s992
      %p996 = scmp.eq.s32.totalorder %s137, 0
      %p997 = por %p995, %p996
      %p998 = scmp.ne.s32.totalorder %s990, %s992
      %p999 = scmp.eq.s32.totalorder %s142, 1
      %p1000 = por %p998, %p999
      %p1001 = scmp.ne.s32.totalorder %s992, %s993
      %p1002 = scmp.eq.s32.totalorder %s142, 0
      %p1003 = por %p1001, %p1002
      %p1004 = scmp.ne.s32.totalorder %s992, %s993
      %p1005 = scmp.eq.s32.totalorder %s143, 1
      %p1006 = por %p1004, %p1005
      %p1008 = scmp.ne.s32.totalorder %s993, %s1007
      %p1009 = scmp.eq.s32.totalorder %s143, 0
      %p1010 = por %p1008, %p1009
      %s1012 = sadd.s32 %s1011, 1
      %p1015 = scmp.eq.s32.totalorder %s137, 1
      %p1016 = scmp.ne.s32.totalorder %s1011, %s1013
      %p1017 = scmp.eq.s32.totalorder %s137, 0
      %p1018 = por %p1016, %p1017
      %p1019 = scmp.ne.s32.totalorder %s1011, %s1013
      %p1020 = scmp.eq.s32.totalorder %s142, 1
      %p1021 = por %p1019, %p1020
      %p1022 = scmp.ne.s32.totalorder %s1013, %s1014
      %p1023 = scmp.eq.s32.totalorder %s142, 0
      %p1024 = por %p1022, %p1023
      %p1025 = scmp.ne.s32.totalorder %s1013, %s1014
      %p1026 = scmp.eq.s32.totalorder %s143, 1
      %p1027 = por %p1025, %p1026
      %p1029 = scmp.ne.s32.totalorder %s1014, %s1028
      %p1030 = scmp.eq.s32.totalorder %s143, 0
      %p1031 = por %p1029, %p1030
      %s1033 = sadd.s32 %s1032, 1
      %p1036 = scmp.eq.s32.totalorder %s137, 1
      %p1037 = scmp.ne.s32.totalorder %s1032, %s1034
      %p1038 = scmp.eq.s32.totalorder %s137, 0
      %p1039 = por %p1037, %p1038
      %p1040 = scmp.ne.s32.totalorder %s1032, %s1034
      %p1041 = scmp.eq.s32.totalorder %s142, 1
      %p1042 = por %p1040, %p1041
      %p1043 = scmp.ne.s32.totalorder %s1034, %s1035
      %p1044 = scmp.eq.s32.totalorder %s142, 0
      %p1045 = por %p1043, %p1044
      %p1046 = scmp.ne.s32.totalorder %s1034, %s1035
      %p1047 = scmp.eq.s32.totalorder %s143, 1
      %p1048 = por %p1046, %p1047
      %p1050 = scmp.ne.s32.totalorder %s1035, %s1049
      %p1051 = scmp.eq.s32.totalorder %s143, 0
      %p1052 = por %p1050, %p1051
      %s1054 = sadd.s32 %s1053, 1
      %p1057 = scmp.eq.s32.totalorder %s137, 1
      %p1058 = scmp.ne.s32.totalorder %s1053, %s1055
      %p1059 = scmp.eq.s32.totalorder %s137, 0
      %p1060 = por %p1058, %p1059
      %p1061 = scmp.ne.s32.totalorder %s1053, %s1055
      %p1062 = scmp.eq.s32.totalorder %s142, 1
      %p1063 = por %p1061, %p1062
      %p1064 = scmp.ne.s32.totalorder %s1055, %s1056
      %p1065 = scmp.eq.s32.totalorder %s142, 0
      %p1066 = por %p1064, %p1065
      %p1067 = scmp.ne.s32.totalorder %s1055, %s1056
      %p1068 = scmp.eq.s32.totalorder %s143, 1
      %p1069 = por %p1067, %p1068
      %p1071 = scmp.ne.s32.totalorder %s1056, %s1070
      %p1072 = scmp.eq.s32.totalorder %s143, 0
      %p1073 = por %p1071, %p1072
      %s1075 = sadd.s32 %s1074, 1
      %p1078 = scmp.eq.s32.totalorder %s137, 1
      %p1079 = scmp.ne.s32.totalorder %s1074, %s1076
      %p1080 = scmp.eq.s32.totalorder %s137, 0
      %p1081 = por %p1079, %p1080
      %p1082 = scmp.ne.s32.totalorder %s1074, %s1076
      %p1083 = scmp.eq.s32.totalorder %s142, 1
      %p1084 = por %p1082, %p1083
      %p1085 = scmp.ne.s32.totalorder %s1076, %s1077
      %p1086 = scmp.eq.s32.totalorder %s142, 0
      %p1087 = por %p1085, %p1086
      %p1088 = scmp.ne.s32.totalorder %s1076, %s1077
      %p1089 = scmp.eq.s32.totalorder %s143, 1
      %p1090 = por %p1088, %p1089
      %p1092 = scmp.ne.s32.totalorder %s1077, %s1091
      %p1093 = scmp.eq.s32.totalorder %s143, 0
      %p1094 = por %p1092, %p1093
      %s1096 = sadd.s32 %s1095, 1
      %p1099 = scmp.eq.s32.totalorder %s137, 1
      %p1100 = scmp.ne.s32.totalorder %s1095, %s1097
      %p1101 = scmp.eq.s32.totalorder %s137, 0
      %p1102 = por %p1100, %p1101
      %p1103 = scmp.ne.s32.totalorder %s1095, %s1097
      %p1104 = scmp.eq.s32.totalorder %s142, 1
      %p1105 = por %p1103, %p1104
      %p1106 = scmp.ne.s32.totalorder %s1097, %s1098
      %p1107 = scmp.eq.s32.totalorder %s142, 0
      %p1108 = por %p1106, %p1107
      %p1109 = scmp.ne.s32.totalorder %s1097, %s1098
      %p1110 = scmp.eq.s32.totalorder %s143, 1
      %p1111 = por %p1109, %p1110
      %p1113 = scmp.ne.s32.totalorder %s1098, %s1112
      %p1114 = scmp.eq.s32.totalorder %s143, 0
      %p1115 = por %p1113, %p1114
      %s1117 = sadd.s32 %s1116, 1
      %p1120 = scmp.eq.s32.totalorder %s137, 1
      %p1121 = scmp.ne.s32.totalorder %s1116, %s1118
      %p1122 = scmp.eq.s32.totalorder %s137, 0
      %p1123 = por %p1121, %p1122
      %p1124 = scmp.ne.s32.totalorder %s1116, %s1118
      %p1125 = scmp.eq.s32.totalorder %s142, 1
      %p1126 = por %p1124, %p1125
      %p1127 = scmp.ne.s32.totalorder %s1118, %s1119
      %p1128 = scmp.eq.s32.totalorder %s142, 0
      %p1129 = por %p1127, %p1128
      %p1130 = scmp.ne.s32.totalorder %s1118, %s1119
      %p1131 = scmp.eq.s32.totalorder %s143, 1
      %p1132 = por %p1130, %p1131
      %p1134 = scmp.ne.s32.totalorder %s1119, %s1133
      %p1135 = scmp.eq.s32.totalorder %s143, 0
      %p1136 = por %p1134, %p1135
      %s1138 = sadd.s32 %s1137, 1
      %p1141 = scmp.eq.s32.totalorder %s137, 1
      %p1142 = scmp.ne.s32.totalorder %s1137, %s1139
      %p1143 = scmp.eq.s32.totalorder %s137, 0
      %p1144 = por %p1142, %p1143
      %p1145 = scmp.ne.s32.totalorder %s1137, %s1139
      %p1146 = scmp.eq.s32.totalorder %s142, 1
      %p1147 = por %p1145, %p1146
      %p1148 = scmp.ne.s32.totalorder %s1139, %s1140
      %p1149 = scmp.eq.s32.totalorder %s142, 0
      %p1150 = por %p1148, %p1149
      %p1151 = scmp.ne.s32.totalorder %s1139, %s1140
      %p1152 = scmp.eq.s32.totalorder %s143, 1
      %p1153 = por %p1151, %p1152
      %p1155 = scmp.ne.s32.totalorder %s1140, %s1154
      %p1156 = scmp.eq.s32.totalorder %s143, 0
      %p1157 = por %p1155, %p1156
      %s1159 = sadd.s32 %s1158, 1
      %p1162 = scmp.eq.s32.totalorder %s137, 1
      %p1163 = scmp.ne.s32.totalorder %s1158, %s1160
      %p1164 = scmp.eq.s32.totalorder %s137, 0
      %p1165 = por %p1163, %p1164
      %p1166 = scmp.ne.s32.totalorder %s1158, %s1160
      %p1167 = scmp.eq.s32.totalorder %s142, 1
      %p1168 = por %p1166, %p1167
      %p1169 = scmp.ne.s32.totalorder %s1160, %s1161
      %p1170 = scmp.eq.s32.totalorder %s142, 0
      %p1171 = por %p1169, %p1170
      %p1172 = scmp.ne.s32.totalorder %s1160, %s1161
      %p1173 = scmp.eq.s32.totalorder %s143, 1
      %p1174 = por %p1172, %p1173
      %p1176 = scmp.ne.s32.totalorder %s1161, %s1175
      %p1177 = scmp.eq.s32.totalorder %s143, 0
      %p1178 = por %p1176, %p1177
      %s1180 = sadd.s32 %s1179, 1
      %p1183 = scmp.eq.s32.totalorder %s137, 1
      %p1184 = scmp.ne.s32.totalorder %s1179, %s1181
      %p1185 = scmp.eq.s32.totalorder %s137, 0
      %p1186 = por %p1184, %p1185
      %p1187 = scmp.ne.s32.totalorder %s1179, %s1181
      %p1188 = scmp.eq.s32.totalorder %s142, 1
      %p1189 = por %p1187, %p1188
      %p1190 = scmp.ne.s32.totalorder %s1181, %s1182
      %p1191 = scmp.eq.s32.totalorder %s142, 0
      %p1192 = por %p1190, %p1191
      %p1193 = scmp.ne.s32.totalorder %s1181, %s1182
      %p1194 = scmp.eq.s32.totalorder %s143, 1
      %p1195 = por %p1193, %p1194
      %p1197 = scmp.ne.s32.totalorder %s1182, %s1196
      %p1198 = scmp.eq.s32.totalorder %s143, 0
      %p1199 = por %p1197, %p1198
      %s1201 = sadd.s32 %s1200, 1
      %p1204 = scmp.eq.s32.totalorder %s137, 1
      %p1205 = scmp.ne.s32.totalorder %s1200, %s1202
      %p1206 = scmp.eq.s32.totalorder %s137, 0
      %p1207 = por %p1205, %p1206
      %p1208 = scmp.ne.s32.totalorder %s1200, %s1202
      %p1209 = scmp.eq.s32.totalorder %s142, 1
      %p1210 = por %p1208, %p1209
      %p1211 = scmp.ne.s32.totalorder %s1202, %s1203
      %p1212 = scmp.eq.s32.totalorder %s142, 0
      %p1213 = por %p1211, %p1212
      %p1214 = scmp.ne.s32.totalorder %s1202, %s1203
      %p1215 = scmp.eq.s32.totalorder %s143, 1
      %p1216 = por %p1214, %p1215
      %p1218 = scmp.ne.s32.totalorder %s1203, %s1217
      %p1219 = scmp.eq.s32.totalorder %s143, 0
      %p1220 = por %p1218, %p1219
      %s1221 = ssub.s32 %s137, %s144
      %p1222 = scmp.eq.s32.totalorder %s1221, 0
      %s1224 = sadd.s32 %s1223, 1
      %s1225 = scalar_select %p1222, %s1223, %s1224
      %p1228 = pneg %p1222
      %p1229 = scmp.eq.s32.totalorder %s137, 1
      %p1230 = por %p1228, %p1229
      %p1231 = scmp.ne.s32.totalorder %s1223, %s1226
      %p1232 = scmp.eq.s32.totalorder %s137, 0
      %p1233 = por %p1231, %p1232
      %p1234 = scmp.ne.s32.totalorder %s1223, %s1226
      %p1235 = scmp.eq.s32.totalorder %s142, 1
      %p1236 = por %p1234, %p1235
      %p1237 = scmp.ne.s32.totalorder %s1226, %s1227
      %p1238 = scmp.eq.s32.totalorder %s142, 0
      %p1239 = por %p1237, %p1238
      %p1240 = scmp.ne.s32.totalorder %s1226, %s1227
      %p1241 = scmp.eq.s32.totalorder %s143, 1
      %p1242 = por %p1240, %p1241
      %p1244 = scmp.ne.s32.totalorder %s1227, %s1243
      %p1245 = scmp.eq.s32.totalorder %s143, 0
      %p1246 = por %p1244, %p1245
      %p1247 = scmp.le.s32.totalorder 1, %s137
      %p1248 = scmp.lt.s32.totalorder %s137, 3
      %p1249 = pnand %p1247, %p1248
      %p1250 = pneg %p1249
      // Predicated region
      $region9: #{tpu_custom_call.1} parent=5 // pred_check
        _
      $region10: #{tpu_custom_call.1} parent=5 // pred_check_branch
        %1252 = sbr.rel (%p1249) target = $region12
      $region11: #{tpu_custom_call.1} parent=5 // pred_region
        %s1253 = ssub.s32 %s137, 1
        // Predicated region
        $region13: #{tpu_custom_call.1} parent=11 // pred_check
          %p1254 = pneg %p184
        $region14: #{tpu_custom_call.1} parent=11 // pred_check_branch
          %1256 = sbr.rel (%p1254) target = $region16
        $region15: #{tpu_custom_call.1} parent=11 // pred_region
          %s1258 = ssub.s32 1536, 1536
          %1259 = vsyncadd [#allocation9], %s1258
          %s1260 = sshll.u32 [#allocation8], 4
          %s1261 = int_to_ptr.vmem [resolvable:$true] %s1260
          %1266 = dma.hbm_to_vmem [thread:$0]  %s3, 1536, %s1261, [#allocation9], 128, 128, 8
        $region16: #{tpu_custom_call.1} parent=11 // pred_fallthru
          _
        // Predicated region
        $region17: #{tpu_custom_call.1} parent=11 // pred_check
          %p1267 = pneg %p205
        $region18: #{tpu_custom_call.1} parent=11 // pred_check_branch
          %1269 = sbr.rel (%p1267) target = $region20
        $region19: #{tpu_custom_call.1} parent=11 // pred_region
          %s1271 = ssub.s32 16, 16
          %1272 = vsyncadd [#allocation9], %s1271
          %s1274 = sshll.u32 [#allocation10], 4
          %s1275 = int_to_ptr.vmem [resolvable:$true] %s1274
          %1277 = dma.hbm_to_vmem [thread:$0]  %s5, 16, %s1275, [#allocation9]
        $region20: #{tpu_custom_call.1} parent=11 // pred_fallthru
          _
        // Predicated region
        $region21: #{tpu_custom_call.1} parent=11 // pred_check
          %p1278 = pneg %p226
        $region22: #{tpu_custom_call.1} parent=11 // pred_check_branch
          %1280 = sbr.rel (%p1278) target = $region24
        $region23: #{tpu_custom_call.1} parent=11 // pred_region
          %s1282 = ssub.s32 32, 32
          %1283 = vsyncadd [#allocation12], %s1282
          %s1285 = sshll.u32 [#allocation11], 4
          %s1286 = int_to_ptr.vmem [resolvable:$true] %s1285
          %1288 = dma.hbm_to_vmem [thread:$0]  %s7, 32, %s1286, [#allocation12]
        $region24: #{tpu_custom_call.1} parent=11 // pred_fallthru
          _
        // Predicated region
        $region25: #{tpu_custom_call.1} parent=11 // pred_check
          %p1289 = pneg %p247
        $region26: #{tpu_custom_call.1} parent=11 // pred_check_branch
          %1291 = sbr.rel (%p1289) target = $region28
        $region27: #{tpu_custom_call.1} parent=11 // pred_region
          %s1293 = ssub.s32 16, 16
          %1294 = vsyncadd [#allocation12], %s1293
          %s1296 = sshll.u32 [#allocation13], 4
          %s1297 = int_to_ptr.vmem [resolvable:$true] %s1296
          %1299 = dma.hbm_to_vmem [thread:$0]  %s9, 16, %s1297, [#allocation12]
        $region28: #{tpu_custom_call.1} parent=11 // pred_fallthru
          _
        // Predicated region
        $region29: #{tpu_custom_call.1} parent=11 // pred_check
          %p1300 = pneg %p268
        $region30: #{tpu_custom_call.1} parent=11 // pred_check_branch
          %1302 = sbr.rel (%p1300) target = $region32
        $region31: #{tpu_custom_call.1} parent=11 // pred_region
          %s1304 = ssub.s32 16, 16
          %1305 = vsyncadd [#allocation15], %s1304
          %s1307 = sshll.u32 [#allocation14], 4
          %s1308 = int_to_ptr.vmem [resolvable:$true] %s1307
          %1310 = dma.hbm_to_vmem [thread:$0]  %s11, 16, %s1308, [#allocation15]
        $region32: #{tpu_custom_call.1} parent=11 // pred_fallthru
          _
        // Predicated region
        $region33: #{tpu_custom_call.1} parent=11 // pred_check
          %p1311 = pneg %p289
        $region34: #{tpu_custom_call.1} parent=11 // pred_check_branch
          %1313 = sbr.rel (%p1311) target = $region36
        $region35: #{tpu_custom_call.1} parent=11 // pred_region
          %s1315 = ssub.s32 16, 16
          %1316 = vsyncadd [#allocation15], %s1315
          %s1318 = sshll.u32 [#allocation16], 4
          %s1319 = int_to_ptr.vmem [resolvable:$true] %s1318
          %1321 = dma.hbm_to_vmem [thread:$0]  %s13, 16, %s1319, [#allocation15]
        $region36: #{tpu_custom_call.1} parent=11 // pred_fallthru
          _
        // Predicated region
        $region37: #{tpu_custom_call.1} parent=11 // pred_check
          %p1322 = pneg %p310
        $region38: #{tpu_custom_call.1} parent=11 // pred_check_branch
          %1324 = sbr.rel (%p1322) target = $region40
        $region39: #{tpu_custom_call.1} parent=11 // pred_region
          %s1326 = ssub.s32 16, 16
          %1327 = vsyncadd [#allocation18], %s1326
          %s1329 = sshll.u32 [#allocation17], 4
          %s1330 = int_to_ptr.vmem [resolvable:$true] %s1329
          %1332 = dma.hbm_to_vmem [thread:$0]  %s15, 16, %s1330, [#allocation18]
        $region40: #{tpu_custom_call.1} parent=11 // pred_fallthru
          _
        // Predicated region
        $region41: #{tpu_custom_call.1} parent=11 // pred_check
          %p1333 = pneg %p331
        $region42: #{tpu_custom_call.1} parent=11 // pred_check_branch
          %1335 = sbr.rel (%p1333) target = $region44
        $region43: #{tpu_custom_call.1} parent=11 // pred_region
          %s1337 = ssub.s32 16, 16
          %1338 = vsyncadd [#allocation18], %s1337
          %s1340 = sshll.u32 [#allocation19], 4
          %s1341 = int_to_ptr.vmem [resolvable:$true] %s1340
          %1343 = dma.hbm_to_vmem [thread:$0]  %s17, 16, %s1341, [#allocation18]
        $region44: #{tpu_custom_call.1} parent=11 // pred_fallthru
          _
        // Predicated region
        $region45: #{tpu_custom_call.1} parent=11 // pred_check
          %p1344 = pneg %p352
        $region46: #{tpu_custom_call.1} parent=11 // pred_check_branch
          %1346 = sbr.rel (%p1344) target = $region48
        $region47: #{tpu_custom_call.1} parent=11 // pred_region
          %s1348 = ssub.s32 16, 16
          %1349 = vsyncadd [#allocation21], %s1348
          %s1351 = sshll.u32 [#allocation20], 4
          %s1352 = int_to_ptr.vmem [resolvable:$true] %s1351
          %1354 = dma.hbm_to_vmem [thread:$0]  %s19, 16, %s1352, [#allocation21]
        $region48: #{tpu_custom_call.1} parent=11 // pred_fallthru
          _
        // Predicated region
        $region49: #{tpu_custom_call.1} parent=11 // pred_check
          %p1355 = pneg %p373
        $region50: #{tpu_custom_call.1} parent=11 // pred_check_branch
          %1357 = sbr.rel (%p1355) target = $region52
        $region51: #{tpu_custom_call.1} parent=11 // pred_region
          %s1359 = ssub.s32 16, 16
          %1360 = vsyncadd [#allocation21], %s1359
          %s1362 = sshll.u32 [#allocation22], 4
          %s1363 = int_to_ptr.vmem [resolvable:$true] %s1362
          %1365 = dma.hbm_to_vmem [thread:$0]  %s21, 16, %s1363, [#allocation21]
        $region52: #{tpu_custom_call.1} parent=11 // pred_fallthru
          _
        // Predicated region
        $region53: #{tpu_custom_call.1} parent=11 // pred_check
          %p1366 = pneg %p394
        $region54: #{tpu_custom_call.1} parent=11 // pred_check_branch
          %1368 = sbr.rel (%p1366) target = $region56
        $region55: #{tpu_custom_call.1} parent=11 // pred_region
          %s1370 = ssub.s32 16, 16
          %1371 = vsyncadd [#allocation24], %s1370
          %s1373 = sshll.u32 [#allocation23], 4
          %s1374 = int_to_ptr.vmem [resolvable:$true] %s1373
          %1376 = dma.hbm_to_vmem [thread:$0]  %s23, 16, %s1374, [#allocation24]
        $region56: #{tpu_custom_call.1} parent=11 // pred_fallthru
          _
        // Predicated region
        $region57: #{tpu_custom_call.1} parent=11 // pred_check
          %p1377 = pneg %p415
        $region58: #{tpu_custom_call.1} parent=11 // pred_check_branch
          %1379 = sbr.rel (%p1377) target = $region60
        $region59: #{tpu_custom_call.1} parent=11 // pred_region
          %s1381 = ssub.s32 16, 16
          %1382 = vsyncadd [#allocation24], %s1381
          %s1384 = sshll.u32 [#allocation25], 4
          %s1385 = int_to_ptr.vmem [resolvable:$true] %s1384
          %1387 = dma.hbm_to_vmem [thread:$0]  %s25, 16, %s1385, [#allocation24]
        $region60: #{tpu_custom_call.1} parent=11 // pred_fallthru
          _
        // Predicated region
        $region61: #{tpu_custom_call.1} parent=11 // pred_check
          %p1388 = pneg %p436
        $region62: #{tpu_custom_call.1} parent=11 // pred_check_branch
          %1390 = sbr.rel (%p1388) target = $region64
        $region63: #{tpu_custom_call.1} parent=11 // pred_region
          %s1392 = ssub.s32 4096, 4096
          %1393 = vsyncadd [#allocation27], %s1392
          %s1394 = sshll.u32 [#allocation26], 4
          %s1395 = int_to_ptr.vmem [resolvable:$true] %s1394
          %1400 = dma.hbm_to_vmem [thread:$0]  %s27, 4096, %s1395, [#allocation27], 256, 256, 16
        $region64: #{tpu_custom_call.1} parent=11 // pred_fallthru
          _
        // Predicated region
        $region65: #{tpu_custom_call.1} parent=11 // pred_check
          %p1401 = pneg %p457
        $region66: #{tpu_custom_call.1} parent=11 // pred_check_branch
          %1403 = sbr.rel (%p1401) target = $region68
        $region67: #{tpu_custom_call.1} parent=11 // pred_region
          %s1405 = ssub.s32 4096, 4096
          %1406 = vsyncadd [#allocation27], %s1405
          %s1407 = sshll.u32 [#allocation28], 4
          %s1408 = int_to_ptr.vmem [resolvable:$true] %s1407
          %1413 = dma.hbm_to_vmem [thread:$0]  %s29, 4096, %s1408, [#allocation27], 128, 128, 8
        $region68: #{tpu_custom_call.1} parent=11 // pred_fallthru
          _
        // Predicated region
        $region69: #{tpu_custom_call.1} parent=11 // pred_check
          %p1414 = pneg %p478
        $region70: #{tpu_custom_call.1} parent=11 // pred_check_branch
          %1416 = sbr.rel (%p1414) target = $region72
        $region71: #{tpu_custom_call.1} parent=11 // pred_region
          %s1418 = ssub.s32 2048, 2048
          %1419 = vsyncadd [#allocation30], %s1418
          %s1420 = sshll.u32 [#allocation29], 4
          %s1421 = int_to_ptr.vmem [resolvable:$true] %s1420
          %1426 = dma.hbm_to_vmem [thread:$0]  %s31, 2048, %s1421, [#allocation30], 128, 128, 8
        $region72: #{tpu_custom_call.1} parent=11 // pred_fallthru
          _
        // Predicated region
        $region73: #{tpu_custom_call.1} parent=11 // pred_check
          %p1427 = pneg %p499
        $region74: #{tpu_custom_call.1} parent=11 // pred_check_branch
          %1429 = sbr.rel (%p1427) target = $region76
        $region75: #{tpu_custom_call.1} parent=11 // pred_region
          %s1431 = ssub.s32 2048, 2048
          %1432 = vsyncadd [#allocation30], %s1431
          %s1433 = sshll.u32 [#allocation31], 4
          %s1434 = int_to_ptr.vmem [resolvable:$true] %s1433
          %1439 = dma.hbm_to_vmem [thread:$0]  %s33, 2048, %s1434, [#allocation30], 128, 128, 8
        $region76: #{tpu_custom_call.1} parent=11 // pred_fallthru
          _
        // Predicated region
        $region77: #{tpu_custom_call.1} parent=11 // pred_check
          %p1440 = pneg %p520
        $region78: #{tpu_custom_call.1} parent=11 // pred_check_branch
          %1442 = sbr.rel (%p1440) target = $region80
        $region79: #{tpu_custom_call.1} parent=11 // pred_region
          %s1444 = ssub.s32 2048, 2048
          %1445 = vsyncadd [#allocation33], %s1444
          %s1446 = sshll.u32 [#allocation32], 4
          %s1447 = int_to_ptr.vmem [resolvable:$true] %s1446
          %1452 = dma.hbm_to_vmem [thread:$0]  %s35, 2048, %s1447, [#allocation33], 128, 128, 8
        $region80: #{tpu_custom_call.1} parent=11 // pred_fallthru
          _
        // Predicated region
        $region81: #{tpu_custom_call.1} parent=11 // pred_check
          %p1453 = pneg %p541
        $region82: #{tpu_custom_call.1} parent=11 // pred_check_branch
          %1455 = sbr.rel (%p1453) target = $region84
        $region83: #{tpu_custom_call.1} parent=11 // pred_region
          %s1457 = ssub.s32 2048, 2048
          %1458 = vsyncadd [#allocation33], %s1457
          %s1459 = sshll.u32 [#allocation34], 4
          %s1460 = int_to_ptr.vmem [resolvable:$true] %s1459
          %1465 = dma.hbm_to_vmem [thread:$0]  %s37, 2048, %s1460, [#allocation33], 128, 128, 8
        $region84: #{tpu_custom_call.1} parent=11 // pred_fallthru
          _
        // Predicated region
        $region85: #{tpu_custom_call.1} parent=11 // pred_check
          %p1466 = pneg %p562
        $region86: #{tpu_custom_call.1} parent=11 // pred_check_branch
          %1468 = sbr.rel (%p1466) target = $region88
        $region87: #{tpu_custom_call.1} parent=11 // pred_region
          %s1470 = ssub.s32 32, 32
          %1471 = vsyncadd [#allocation36], %s1470
          %s1473 = sshll.u32 [#allocation35], 4
          %s1474 = int_to_ptr.vmem [resolvable:$true] %s1473
          %1476 = dma.hbm_to_vmem [thread:$0]  %s39, 32, %s1474, [#allocation36]
        $region88: #{tpu_custom_call.1} parent=11 // pred_fallthru
          _
        // Predicated region
        $region89: #{tpu_custom_call.1} parent=11 // pred_check
          %p1477 = pneg %p583
        $region90: #{tpu_custom_call.1} parent=11 // pred_check_branch
          %1479 = sbr.rel (%p1477) target = $region92
        $region91: #{tpu_custom_call.1} parent=11 // pred_region
          %s1481 = ssub.s32 16, 16
          %1482 = vsyncadd [#allocation36], %s1481
          %s1484 = sshll.u32 [#allocation37], 4
          %s1485 = int_to_ptr.vmem [resolvable:$true] %s1484
          %1487 = dma.hbm_to_vmem [thread:$0]  %s41, 16, %s1485, [#allocation36]
        $region92: #{tpu_custom_call.1} parent=11 // pred_fallthru
          _
        // Predicated region
        $region93: #{tpu_custom_call.1} parent=11 // pred_check
          %p1488 = pneg %p604
        $region94: #{tpu_custom_call.1} parent=11 // pred_check_branch
          %1490 = sbr.rel (%p1488) target = $region96
        $region95: #{tpu_custom_call.1} parent=11 // pred_region
          %s1492 = ssub.s32 16, 16
          %1493 = vsyncadd [#allocation39], %s1492
          %s1495 = sshll.u32 [#allocation38], 4
          %s1496 = int_to_ptr.vmem [resolvable:$true] %s1495
          %1498 = dma.hbm_to_vmem [thread:$0]  %s43, 16, %s1496, [#allocation39]
        $region96: #{tpu_custom_call.1} parent=11 // pred_fallthru
          _
        // Predicated region
        $region97: #{tpu_custom_call.1} parent=11 // pred_check
          %p1499 = pneg %p625
        $region98: #{tpu_custom_call.1} parent=11 // pred_check_branch
          %1501 = sbr.rel (%p1499) target = $region100
        $region99: #{tpu_custom_call.1} parent=11 // pred_region
          %s1503 = ssub.s32 16, 16
          %1504 = vsyncadd [#allocation39], %s1503
          %s1506 = sshll.u32 [#allocation40], 4
          %s1507 = int_to_ptr.vmem [resolvable:$true] %s1506
          %1509 = dma.hbm_to_vmem [thread:$0]  %s45, 16, %s1507, [#allocation39]
        $region100: #{tpu_custom_call.1} parent=11 // pred_fallthru
          _
        // Predicated region
        $region101: #{tpu_custom_call.1} parent=11 // pred_check
          %p1510 = pneg %p646
        $region102: #{tpu_custom_call.1} parent=11 // pred_check_branch
          %1512 = sbr.rel (%p1510) target = $region104
        $region103: #{tpu_custom_call.1} parent=11 // pred_region
          %s1514 = ssub.s32 16, 16
          %1515 = vsyncadd [#allocation42], %s1514
          %s1517 = sshll.u32 [#allocation41], 4
          %s1518 = int_to_ptr.vmem [resolvable:$true] %s1517
          %1520 = dma.hbm_to_vmem [thread:$0]  %s47, 16, %s1518, [#allocation42]
        $region104: #{tpu_custom_call.1} parent=11 // pred_fallthru
          _
        // Predicated region
        $region105: #{tpu_custom_call.1} parent=11 // pred_check
          %p1521 = pneg %p667
        $region106: #{tpu_custom_call.1} parent=11 // pred_check_branch
          %1523 = sbr.rel (%p1521) target = $region108
        $region107: #{tpu_custom_call.1} parent=11 // pred_region
          %s1525 = ssub.s32 16, 16
          %1526 = vsyncadd [#allocation42], %s1525
          %s1528 = sshll.u32 [#allocation43], 4
          %s1529 = int_to_ptr.vmem [resolvable:$true] %s1528
          %1531 = dma.hbm_to_vmem [thread:$0]  %s49, 16, %s1529, [#allocation42]
        $region108: #{tpu_custom_call.1} parent=11 // pred_fallthru
          _
        // Predicated region
        $region109: #{tpu_custom_call.1} parent=11 // pred_check
          %p1532 = pneg %p688
        $region110: #{tpu_custom_call.1} parent=11 // pred_check_branch
          %1534 = sbr.rel (%p1532) target = $region112
        $region111: #{tpu_custom_call.1} parent=11 // pred_region
          %s1536 = ssub.s32 16, 16
          %1537 = vsyncadd [#allocation45], %s1536
          %s1539 = sshll.u32 [#allocation44], 4
          %s1540 = int_to_ptr.vmem [resolvable:$true] %s1539
          %1542 = dma.hbm_to_vmem [thread:$0]  %s51, 16, %s1540, [#allocation45]
        $region112: #{tpu_custom_call.1} parent=11 // pred_fallthru
          _
        // Predicated region
        $region113: #{tpu_custom_call.1} parent=11 // pred_check
          %p1543 = pneg %p709
        $region114: #{tpu_custom_call.1} parent=11 // pred_check_branch
          %1545 = sbr.rel (%p1543) target = $region116
        $region115: #{tpu_custom_call.1} parent=11 // pred_region
          %s1547 = ssub.s32 16, 16
          %1548 = vsyncadd [#allocation45], %s1547
          %s1550 = sshll.u32 [#allocation46], 4
          %s1551 = int_to_ptr.vmem [resolvable:$true] %s1550
          %1553 = dma.hbm_to_vmem [thread:$0]  %s53, 16, %s1551, [#allocation45]
        $region116: #{tpu_custom_call.1} parent=11 // pred_fallthru
          _
        // Predicated region
        $region117: #{tpu_custom_call.1} parent=11 // pred_check
          %p1554 = pneg %p730
        $region118: #{tpu_custom_call.1} parent=11 // pred_check_branch
          %1556 = sbr.rel (%p1554) target = $region120
        $region119: #{tpu_custom_call.1} parent=11 // pred_region
          %s1558 = ssub.s32 16, 16
          %1559 = vsyncadd [#allocation48], %s1558
          %s1561 = sshll.u32 [#allocation47], 4
          %s1562 = int_to_ptr.vmem [resolvable:$true] %s1561
          %1564 = dma.hbm_to_vmem [thread:$0]  %s55, 16, %s1562, [#allocation48]
        $region120: #{tpu_custom_call.1} parent=11 // pred_fallthru
          _
        // Predicated region
        $region121: #{tpu_custom_call.1} parent=11 // pred_check
          %p1565 = pneg %p751
        $region122: #{tpu_custom_call.1} parent=11 // pred_check_branch
          %1567 = sbr.rel (%p1565) target = $region124
        $region123: #{tpu_custom_call.1} parent=11 // pred_region
          %s1569 = ssub.s32 16, 16
          %1570 = vsyncadd [#allocation48], %s1569
          %s1572 = sshll.u32 [#allocation49], 4
          %s1573 = int_to_ptr.vmem [resolvable:$true] %s1572
          %1575 = dma.hbm_to_vmem [thread:$0]  %s57, 16, %s1573, [#allocation48]
        $region124: #{tpu_custom_call.1} parent=11 // pred_fallthru
          _
        // Predicated region
        $region125: #{tpu_custom_call.1} parent=11 // pred_check
          %p1576 = pneg %p772
        $region126: #{tpu_custom_call.1} parent=11 // pred_check_branch
          %1578 = sbr.rel (%p1576) target = $region128
        $region127: #{tpu_custom_call.1} parent=11 // pred_region
          %s1580 = ssub.s32 4096, 4096
          %1581 = vsyncadd [#allocation51], %s1580
          %s1582 = sshll.u32 [#allocation50], 4
          %s1583 = int_to_ptr.vmem [resolvable:$true] %s1582
          %1588 = dma.hbm_to_vmem [thread:$0]  %s59, 4096, %s1583, [#allocation51], 256, 256, 16
        $region128: #{tpu_custom_call.1} parent=11 // pred_fallthru
          _
        // Predicated region
        $region129: #{tpu_custom_call.1} parent=11 // pred_check
          %p1589 = pneg %p793
        $region130: #{tpu_custom_call.1} parent=11 // pred_check_branch
          %1591 = sbr.rel (%p1589) target = $region132
        $region131: #{tpu_custom_call.1} parent=11 // pred_region
          %s1593 = ssub.s32 4096, 4096
          %1594 = vsyncadd [#allocation51], %s1593
          %s1595 = sshll.u32 [#allocation52], 4
          %s1596 = int_to_ptr.vmem [resolvable:$true] %s1595
          %1601 = dma.hbm_to_vmem [thread:$0]  %s61, 4096, %s1596, [#allocation51], 128, 128, 8
        $region132: #{tpu_custom_call.1} parent=11 // pred_fallthru
          _
        // Predicated region
        $region133: #{tpu_custom_call.1} parent=11 // pred_check
          %p1602 = pneg %p814
        $region134: #{tpu_custom_call.1} parent=11 // pred_check_branch
          %1604 = sbr.rel (%p1602) target = $region136
        $region135: #{tpu_custom_call.1} parent=11 // pred_region
          %s1606 = ssub.s32 2048, 2048
          %1607 = vsyncadd [#allocation54], %s1606
          %s1608 = sshll.u32 [#allocation53], 4
          %s1609 = int_to_ptr.vmem [resolvable:$true] %s1608
          %1614 = dma.hbm_to_vmem [thread:$0]  %s63, 2048, %s1609, [#allocation54], 128, 128, 8
        $region136: #{tpu_custom_call.1} parent=11 // pred_fallthru
          _
        // Predicated region
        $region137: #{tpu_custom_call.1} parent=11 // pred_check
          %p1615 = pneg %p835
        $region138: #{tpu_custom_call.1} parent=11 // pred_check_branch
          %1617 = sbr.rel (%p1615) target = $region140
        $region139: #{tpu_custom_call.1} parent=11 // pred_region
          %s1619 = ssub.s32 2048, 2048
          %1620 = vsyncadd [#allocation54], %s1619
          %s1621 = sshll.u32 [#allocation55], 4
          %s1622 = int_to_ptr.vmem [resolvable:$true] %s1621
          %1627 = dma.hbm_to_vmem [thread:$0]  %s65, 2048, %s1622, [#allocation54], 128, 128, 8
        $region140: #{tpu_custom_call.1} parent=11 // pred_fallthru
          _
        // Predicated region
        $region141: #{tpu_custom_call.1} parent=11 // pred_check
          %p1628 = pneg %p856
        $region142: #{tpu_custom_call.1} parent=11 // pred_check_branch
          %1630 = sbr.rel (%p1628) target = $region144
        $region143: #{tpu_custom_call.1} parent=11 // pred_region
          %s1632 = ssub.s32 2048, 2048
          %1633 = vsyncadd [#allocation57], %s1632
          %s1634 = sshll.u32 [#allocation56], 4
          %s1635 = int_to_ptr.vmem [resolvable:$true] %s1634
          %1640 = dma.hbm_to_vmem [thread:$0]  %s67, 2048, %s1635, [#allocation57], 128, 128, 8
        $region144: #{tpu_custom_call.1} parent=11 // pred_fallthru
          _
        // Predicated region
        $region145: #{tpu_custom_call.1} parent=11 // pred_check
          %p1641 = pneg %p877
        $region146: #{tpu_custom_call.1} parent=11 // pred_check_branch
          %1643 = sbr.rel (%p1641) target = $region148
        $region147: #{tpu_custom_call.1} parent=11 // pred_region
          _
        $region148: #{tpu_custom_call.1} parent=11 // pred_fallthru
          _
        // Predicated region
        $region149: #{tpu_custom_call.1} parent=11 // pred_check
          %p1644 = pneg %p898
        $region150: #{tpu_custom_call.1} parent=11 // pred_check_branch
          %1646 = sbr.rel (%p1644) target = $region152
        $region151: #{tpu_custom_call.1} parent=11 // pred_region
          %s1648 = ssub.s32 2048, 2048
          %1649 = vsyncadd [#allocation57], %s1648
          %s1650 = sshll.u32 [#allocation58], 4
          %s1651 = int_to_ptr.vmem [resolvable:$true] %s1650
          %1656 = dma.hbm_to_vmem [thread:$0]  %s71, 2048, %s1651, [#allocation57], 128, 128, 8
        $region152: #{tpu_custom_call.1} parent=11 // pred_fallthru
          _
        // Predicated region
        $region153: #{tpu_custom_call.1} parent=11 // pred_check
          %p1657 = pneg %p919
        $region154: #{tpu_custom_call.1} parent=11 // pred_check_branch
          %1659 = sbr.rel (%p1657) target = $region156
        $region155: #{tpu_custom_call.1} parent=11 // pred_region
          _
        $region156: #{tpu_custom_call.1} parent=11 // pred_fallthru
          _
        // Predicated region
        $region157: #{tpu_custom_call.1} parent=11 // pred_check
          %p1660 = pneg %p940
        $region158: #{tpu_custom_call.1} parent=11 // pred_check_branch
          %1662 = sbr.rel (%p1660) target = $region160
        $region159: #{tpu_custom_call.1} parent=11 // pred_region
          %s1664 = ssub.s32 256, 256
          %1665 = vsyncadd [#allocation60], %s1664
          %s1666 = sshll.u32 [#allocation59], 4
          %s1667 = int_to_ptr.vmem [resolvable:$true] %s1666
          %1672 = dma.hbm_to_vmem [thread:$0]  %s75, 256, %s1667, [#allocation60], 128, 128, 8
        $region160: #{tpu_custom_call.1} parent=11 // pred_fallthru
          _
        // Predicated region
        $region161: #{tpu_custom_call.1} parent=11 // pred_check
          %p1673 = pneg %p961
        $region162: #{tpu_custom_call.1} parent=11 // pred_check_branch
          %1675 = sbr.rel (%p1673) target = $region164
        $region163: #{tpu_custom_call.1} parent=11 // pred_region
          %s1677 = ssub.s32 6144, 6144
          %1678 = vsyncadd [#allocation60], %s1677
          %s1679 = sshll.u32 [#allocation61], 4
          %s1680 = int_to_ptr.vmem [resolvable:$true] %s1679
          %1685 = dma.hbm_to_vmem [thread:$0]  %s77, 6144, %s1680, [#allocation60], 128, 128, 8
        $region164: #{tpu_custom_call.1} parent=11 // pred_fallthru
          _
        // Predicated region
        $region165: #{tpu_custom_call.1} parent=11 // pred_check
          %p1686 = pneg %p982
        $region166: #{tpu_custom_call.1} parent=11 // pred_check_branch
          %1688 = sbr.rel (%p1686) target = $region168
        $region167: #{tpu_custom_call.1} parent=11 // pred_region
          _
        $region168: #{tpu_custom_call.1} parent=11 // pred_fallthru
          _
        // Predicated region
        $region169: #{tpu_custom_call.1} parent=11 // pred_check
          %p1689 = pneg %p1003
        $region170: #{tpu_custom_call.1} parent=11 // pred_check_branch
          %1691 = sbr.rel (%p1689) target = $region172
        $region171: #{tpu_custom_call.1} parent=11 // pred_region
          %s1693 = ssub.s32 6144, 6144
          %1694 = vsyncadd [#allocation63], %s1693
          %s1695 = sshll.u32 [#allocation62], 4
          %s1696 = int_to_ptr.vmem [resolvable:$true] %s1695
          %1701 = dma.hbm_to_vmem [thread:$0]  %s81, 6144, %s1696, [#allocation63], 128, 128, 8
        $region172: #{tpu_custom_call.1} parent=11 // pred_fallthru
          _
        // Predicated region
        $region173: #{tpu_custom_call.1} parent=11 // pred_check
          %p1702 = pneg %p1024
        $region174: #{tpu_custom_call.1} parent=11 // pred_check_branch
          %1704 = sbr.rel (%p1702) target = $region176
        $region175: #{tpu_custom_call.1} parent=11 // pred_region
          _
        $region176: #{tpu_custom_call.1} parent=11 // pred_fallthru
          _
        // Predicated region
        $region177: #{tpu_custom_call.1} parent=11 // pred_check
          %p1705 = pneg %p1045
        $region178: #{tpu_custom_call.1} parent=11 // pred_check_branch
          %1707 = sbr.rel (%p1705) target = $region180
        $region179: #{tpu_custom_call.1} parent=11 // pred_region
          %s1709 = ssub.s32 6144, 6144
          %1710 = vsyncadd [#allocation63], %s1709
          %s1711 = sshll.u32 [#allocation64], 4
          %s1712 = int_to_ptr.vmem [resolvable:$true] %s1711
          %1717 = dma.hbm_to_vmem [thread:$0]  %s85, 6144, %s1712, [#allocation63], 128, 128, 8
        $region180: #{tpu_custom_call.1} parent=11 // pred_fallthru
          _
        // Predicated region
        $region181: #{tpu_custom_call.1} parent=11 // pred_check
          %p1718 = pneg %p1066
        $region182: #{tpu_custom_call.1} parent=11 // pred_check_branch
          %1720 = sbr.rel (%p1718) target = $region184
        $region183: #{tpu_custom_call.1} parent=11 // pred_region
          _
        $region184: #{tpu_custom_call.1} parent=11 // pred_fallthru
          _
        // Predicated region
        $region185: #{tpu_custom_call.1} parent=11 // pred_check
          %p1721 = pneg %p1087
        $region186: #{tpu_custom_call.1} parent=11 // pred_check_branch
          %1723 = sbr.rel (%p1721) target = $region188
        $region187: #{tpu_custom_call.1} parent=11 // pred_region
          %s1725 = ssub.s32 6144, 6144
          %1726 = vsyncadd [#allocation66], %s1725
          %s1727 = sshll.u32 [#allocation65], 4
          %s1728 = int_to_ptr.vmem [resolvable:$true] %s1727
          %1733 = dma.hbm_to_vmem [thread:$0]  %s89, 6144, %s1728, [#allocation66], 128, 128, 8
        $region188: #{tpu_custom_call.1} parent=11 // pred_fallthru
          _
        // Predicated region
        $region189: #{tpu_custom_call.1} parent=11 // pred_check
          %p1734 = pneg %p1108
        $region190: #{tpu_custom_call.1} parent=11 // pred_check_branch
          %1736 = sbr.rel (%p1734) target = $region192
        $region191: #{tpu_custom_call.1} parent=11 // pred_region
          _
        $region192: #{tpu_custom_call.1} parent=11 // pred_fallthru
          _
        // Predicated region
        $region193: #{tpu_custom_call.1} parent=11 // pred_check
          %p1737 = pneg %p1129
        $region194: #{tpu_custom_call.1} parent=11 // pred_check_branch
          %1739 = sbr.rel (%p1737) target = $region196
        $region195: #{tpu_custom_call.1} parent=11 // pred_region
          %s1741 = ssub.s32 2048, 2048
          %1742 = vsyncadd [#allocation66], %s1741
          %s1743 = sshll.u32 [#allocation67], 4
          %s1744 = int_to_ptr.vmem [resolvable:$true] %s1743
          %1749 = dma.hbm_to_vmem [thread:$0]  %s93, 2048, %s1744, [#allocation66], 128, 128, 8
        $region196: #{tpu_custom_call.1} parent=11 // pred_fallthru
          _
        // Predicated region
        $region197: #{tpu_custom_call.1} parent=11 // pred_check
          %p1750 = pneg %p1150
        $region198: #{tpu_custom_call.1} parent=11 // pred_check_branch
          %1752 = sbr.rel (%p1750) target = $region200
        $region199: #{tpu_custom_call.1} parent=11 // pred_region
          %s1754 = ssub.s32 2048, 2048
          %1755 = vsyncadd [#allocation69], %s1754
          %s1756 = sshll.u32 [#allocation68], 4
          %s1757 = int_to_ptr.vmem [resolvable:$true] %s1756
          %1762 = dma.hbm_to_vmem [thread:$0]  %s95, 2048, %s1757, [#allocation69], 128, 128, 8
        $region200: #{tpu_custom_call.1} parent=11 // pred_fallthru
          _
        // Predicated region
        $region201: #{tpu_custom_call.1} parent=11 // pred_check
          %p1763 = pneg %p1171
        $region202: #{tpu_custom_call.1} parent=11 // pred_check_branch
          %1765 = sbr.rel (%p1763) target = $region204
        $region203: #{tpu_custom_call.1} parent=11 // pred_region
          %s1767 = ssub.s32 2048, 2048
          %1768 = vsyncadd [#allocation69], %s1767
          %s1769 = sshll.u32 [#allocation70], 4
          %s1770 = int_to_ptr.vmem [resolvable:$true] %s1769
          %1775 = dma.hbm_to_vmem [thread:$0]  %s97, 2048, %s1770, [#allocation69], 128, 128, 8
        $region204: #{tpu_custom_call.1} parent=11 // pred_fallthru
          _
        // Predicated region
        $region205: #{tpu_custom_call.1} parent=11 // pred_check
          %p1776 = pneg %p1192
        $region206: #{tpu_custom_call.1} parent=11 // pred_check_branch
          %1778 = sbr.rel (%p1776) target = $region208
        $region207: #{tpu_custom_call.1} parent=11 // pred_region
          %s1780 = ssub.s32 2048, 2048
          %1781 = vsyncadd [#allocation72], %s1780
          %s1782 = sshll.u32 [#allocation71], 4
          %s1783 = int_to_ptr.vmem [resolvable:$true] %s1782
          %1788 = dma.hbm_to_vmem [thread:$0]  %s99, 2048, %s1783, [#allocation72], 128, 128, 8
        $region208: #{tpu_custom_call.1} parent=11 // pred_fallthru
          _
        // Predicated region
        $region209: #{tpu_custom_call.1} parent=11 // pred_check
          %p1789 = pneg %p1213
        $region210: #{tpu_custom_call.1} parent=11 // pred_check_branch
          %1791 = sbr.rel (%p1789) target = $region212
        $region211: #{tpu_custom_call.1} parent=11 // pred_region
          _
        $region212: #{tpu_custom_call.1} parent=11 // pred_fallthru
          _
      $region12: #{tpu_custom_call.1} parent=5 // pred_fallthru
        _
      %p1792 = scmp.lt.s32.totalorder %s137, 2
      // Predicated region
      $region213: #{tpu_custom_call.1} parent=5 // pred_check
        %p1793 = pneg %p1792
      $region214: #{tpu_custom_call.1} parent=5 // pred_check_branch
        %1795 = sbr.rel (%p1793) target = $region216
      $region215: #{tpu_custom_call.1} parent=5 // pred_region
        // Predicated region
        $region217: #{tpu_custom_call.1} parent=215 // pred_check
          %p1796 = pneg %p157
        $region218: #{tpu_custom_call.1} parent=215 // pred_check_branch
          %1798 = sbr.rel (%p1796) target = $region220
        $region219: #{tpu_custom_call.1} parent=215 // pred_region
          %s1799 = sand.u32 %s147, 1
          %s1800 = scalar_lea.sflag [#allocation6], %s1799
          %s1801 = sand.u32 %s147, 1
          %s1802 = smul.addr %s1801, 8
          %s1803 = scalar_lea.vmem [#allocation5], %s1802
          %s1805 = ssub.s32 128, 128
          %1806 = vsyncadd %s1800, %s1805
          %s1807 = smul.addr %s137, 128
          %s1808 = scalar_lea.hbm %s1, %s1807
          %s1810 = sshll.u32 %s1803, 4
          %s1811 = int_to_ptr.vmem [resolvable:$true] %s1810
          %1813 = dma.hbm_to_vmem [thread:$0]  %s1808, 128, %s1811, %s1800
        $region220: #{tpu_custom_call.1} parent=215 // pred_fallthru
          _
      $region216: #{tpu_custom_call.1} parent=5 // pred_fallthru
        _
      %p1814 = scmp.le.s32.totalorder 1, %s137
      %p1815 = scmp.lt.s32.totalorder %s137, 3
      %p1816 = pnand %p1814, %p1815
      %p1817 = pneg %p1816
      // Predicated region
      $region221: #{tpu_custom_call.1} parent=5 // pred_check
        _
      $region222: #{tpu_custom_call.1} parent=5 // pred_check_branch
        %1819 = sbr.rel (%p1816) target = $region224
      $region223: #{tpu_custom_call.1} parent=5 // pred_region
        %s1820 = ssub.s32 %s137, 1
        %s1821 = sand.u32 %s150, 1
        %s1822 = scalar_lea.sflag [#allocation6], %s1821
        %s1823 = sand.u32 %s150, 1
        %s1824 = smul.addr %s1823, 8
        %s1825 = scalar_lea.vmem [#allocation5], %s1824
        // Predicated region
        $region225: #{tpu_custom_call.1} parent=223 // pred_check
          %p1826 = pneg %p163
        $region226: #{tpu_custom_call.1} parent=223 // pred_check_branch
          %1828 = sbr.rel (%p1826) target = $region228
        $region227: #{tpu_custom_call.1} parent=223 // pred_region
          %1829 = dma.done %s1822, 128
        $region228: #{tpu_custom_call.1} parent=223 // pred_fallthru
          _
        // Predicated region
        $region229: #{tpu_custom_call.1} parent=223 // pred_check
          %p1830 = pneg %p184
        $region230: #{tpu_custom_call.1} parent=223 // pred_check_branch
          %1832 = sbr.rel (%p1830) target = $region232
        $region231: #{tpu_custom_call.1} parent=223 // pred_region
          %1833 = dma.done [#allocation9], 1536
        $region232: #{tpu_custom_call.1} parent=223 // pred_fallthru
          _
        // Predicated region
        $region233: #{tpu_custom_call.1} parent=223 // pred_check
          %p1834 = pneg %p205
        $region234: #{tpu_custom_call.1} parent=223 // pred_check_branch
          %1836 = sbr.rel (%p1834) target = $region236
        $region235: #{tpu_custom_call.1} parent=223 // pred_region
          %1837 = dma.done [#allocation9], 16
        $region236: #{tpu_custom_call.1} parent=223 // pred_fallthru
          _
        // Predicated region
        $region237: #{tpu_custom_call.1} parent=223 // pred_check
          %p1838 = pneg %p226
        $region238: #{tpu_custom_call.1} parent=223 // pred_check_branch
          %1840 = sbr.rel (%p1838) target = $region240
        $region239: #{tpu_custom_call.1} parent=223 // pred_region
          %1841 = dma.done [#allocation12], 32
        $region240: #{tpu_custom_call.1} parent=223 // pred_fallthru
          _
        // Predicated region
        $region241: #{tpu_custom_call.1} parent=223 // pred_check
          %p1842 = pneg %p247
        $region242: #{tpu_custom_call.1} parent=223 // pred_check_branch
          %1844 = sbr.rel (%p1842) target = $region244
        $region243: #{tpu_custom_call.1} parent=223 // pred_region
          %1845 = dma.done [#allocation12], 16
        $region244: #{tpu_custom_call.1} parent=223 // pred_fallthru
          _
        // Predicated region
        $region245: #{tpu_custom_call.1} parent=223 // pred_check
          %p1846 = pneg %p268
        $region246: #{tpu_custom_call.1} parent=223 // pred_check_branch
          %1848 = sbr.rel (%p1846) target = $region248
        $region247: #{tpu_custom_call.1} parent=223 // pred_region
          %1849 = dma.done [#allocation15], 16
        $region248: #{tpu_custom_call.1} parent=223 // pred_fallthru
          _
        // Predicated region
        $region249: #{tpu_custom_call.1} parent=223 // pred_check
          %p1850 = pneg %p289
        $region250: #{tpu_custom_call.1} parent=223 // pred_check_branch
          %1852 = sbr.rel (%p1850) target = $region252
        $region251: #{tpu_custom_call.1} parent=223 // pred_region
          %1853 = dma.done [#allocation15], 16
        $region252: #{tpu_custom_call.1} parent=223 // pred_fallthru
          _
        // Predicated region
        $region253: #{tpu_custom_call.1} parent=223 // pred_check
          %p1854 = pneg %p310
        $region254: #{tpu_custom_call.1} parent=223 // pred_check_branch
          %1856 = sbr.rel (%p1854) target = $region256
        $region255: #{tpu_custom_call.1} parent=223 // pred_region
          %1857 = dma.done [#allocation18], 16
        $region256: #{tpu_custom_call.1} parent=223 // pred_fallthru
          _
        // Predicated region
        $region257: #{tpu_custom_call.1} parent=223 // pred_check
          %p1858 = pneg %p331
        $region258: #{tpu_custom_call.1} parent=223 // pred_check_branch
          %1860 = sbr.rel (%p1858) target = $region260
        $region259: #{tpu_custom_call.1} parent=223 // pred_region
          %1861 = dma.done [#allocation18], 16
        $region260: #{tpu_custom_call.1} parent=223 // pred_fallthru
          _
        // Predicated region
        $region261: #{tpu_custom_call.1} parent=223 // pred_check
          %p1862 = pneg %p352
        $region262: #{tpu_custom_call.1} parent=223 // pred_check_branch
          %1864 = sbr.rel (%p1862) target = $region264
        $region263: #{tpu_custom_call.1} parent=223 // pred_region
          %1865 = dma.done [#allocation21], 16
        $region264: #{tpu_custom_call.1} parent=223 // pred_fallthru
          _
        // Predicated region
        $region265: #{tpu_custom_call.1} parent=223 // pred_check
          %p1866 = pneg %p373
        $region266: #{tpu_custom_call.1} parent=223 // pred_check_branch
          %1868 = sbr.rel (%p1866) target = $region268
        $region267: #{tpu_custom_call.1} parent=223 // pred_region
          %1869 = dma.done [#allocation21], 16
        $region268: #{tpu_custom_call.1} parent=223 // pred_fallthru
          _
        // Predicated region
        $region269: #{tpu_custom_call.1} parent=223 // pred_check
          %p1870 = pneg %p394
        $region270: #{tpu_custom_call.1} parent=223 // pred_check_branch
          %1872 = sbr.rel (%p1870) target = $region272
        $region271: #{tpu_custom_call.1} parent=223 // pred_region
          %1873 = dma.done [#allocation24], 16
        $region272: #{tpu_custom_call.1} parent=223 // pred_fallthru
          _
        // Predicated region
        $region273: #{tpu_custom_call.1} parent=223 // pred_check
          %p1874 = pneg %p415
        $region274: #{tpu_custom_call.1} parent=223 // pred_check_branch
          %1876 = sbr.rel (%p1874) target = $region276
        $region275: #{tpu_custom_call.1} parent=223 // pred_region
          %1877 = dma.done [#allocation24], 16
        $region276: #{tpu_custom_call.1} parent=223 // pred_fallthru
          _
        // Predicated region
        $region277: #{tpu_custom_call.1} parent=223 // pred_check
          %p1878 = pneg %p436
        $region278: #{tpu_custom_call.1} parent=223 // pred_check_branch
          %1880 = sbr.rel (%p1878) target = $region280
        $region279: #{tpu_custom_call.1} parent=223 // pred_region
          %1881 = dma.done [#allocation27], 4096
        $region280: #{tpu_custom_call.1} parent=223 // pred_fallthru
          _
        // Predicated region
        $region281: #{tpu_custom_call.1} parent=223 // pred_check
          %p1882 = pneg %p457
        $region282: #{tpu_custom_call.1} parent=223 // pred_check_branch
          %1884 = sbr.rel (%p1882) target = $region284
        $region283: #{tpu_custom_call.1} parent=223 // pred_region
          %1885 = dma.done [#allocation27], 4096
        $region284: #{tpu_custom_call.1} parent=223 // pred_fallthru
          _
        // Predicated region
        $region285: #{tpu_custom_call.1} parent=223 // pred_check
          %p1886 = pneg %p478
        $region286: #{tpu_custom_call.1} parent=223 // pred_check_branch
          %1888 = sbr.rel (%p1886) target = $region288
        $region287: #{tpu_custom_call.1} parent=223 // pred_region
          %1889 = dma.done [#allocation30], 2048
        $region288: #{tpu_custom_call.1} parent=223 // pred_fallthru
          _
        // Predicated region
        $region289: #{tpu_custom_call.1} parent=223 // pred_check
          %p1890 = pneg %p499
        $region290: #{tpu_custom_call.1} parent=223 // pred_check_branch
          %1892 = sbr.rel (%p1890) target = $region292
        $region291: #{tpu_custom_call.1} parent=223 // pred_region
          %1893 = dma.done [#allocation30], 2048
        $region292: #{tpu_custom_call.1} parent=223 // pred_fallthru
          _
        // Predicated region
        $region293: #{tpu_custom_call.1} parent=223 // pred_check
          %p1894 = pneg %p520
        $region294: #{tpu_custom_call.1} parent=223 // pred_check_branch
          %1896 = sbr.rel (%p1894) target = $region296
        $region295: #{tpu_custom_call.1} parent=223 // pred_region
          %1897 = dma.done [#allocation33], 2048
        $region296: #{tpu_custom_call.1} parent=223 // pred_fallthru
          _
        // Predicated region
        $region297: #{tpu_custom_call.1} parent=223 // pred_check
          %p1898 = pneg %p541
        $region298: #{tpu_custom_call.1} parent=223 // pred_check_branch
          %1900 = sbr.rel (%p1898) target = $region300
        $region299: #{tpu_custom_call.1} parent=223 // pred_region
          %1901 = dma.done [#allocation33], 2048
        $region300: #{tpu_custom_call.1} parent=223 // pred_fallthru
          _
        // Predicated region
        $region301: #{tpu_custom_call.1} parent=223 // pred_check
          %p1902 = pneg %p562
        $region302: #{tpu_custom_call.1} parent=223 // pred_check_branch
          %1904 = sbr.rel (%p1902) target = $region304
        $region303: #{tpu_custom_call.1} parent=223 // pred_region
          %1905 = dma.done [#allocation36], 32
        $region304: #{tpu_custom_call.1} parent=223 // pred_fallthru
          _
        // Predicated region
        $region305: #{tpu_custom_call.1} parent=223 // pred_check
          %p1906 = pneg %p583
        $region306: #{tpu_custom_call.1} parent=223 // pred_check_branch
          %1908 = sbr.rel (%p1906) target = $region308
        $region307: #{tpu_custom_call.1} parent=223 // pred_region
          %1909 = dma.done [#allocation36], 16
        $region308: #{tpu_custom_call.1} parent=223 // pred_fallthru
          _
        // Predicated region
        $region309: #{tpu_custom_call.1} parent=223 // pred_check
          %p1910 = pneg %p604
        $region310: #{tpu_custom_call.1} parent=223 // pred_check_branch
          %1912 = sbr.rel (%p1910) target = $region312
        $region311: #{tpu_custom_call.1} parent=223 // pred_region
          %1913 = dma.done [#allocation39], 16
        $region312: #{tpu_custom_call.1} parent=223 // pred_fallthru
          _
        // Predicated region
        $region313: #{tpu_custom_call.1} parent=223 // pred_check
          %p1914 = pneg %p625
        $region314: #{tpu_custom_call.1} parent=223 // pred_check_branch
          %1916 = sbr.rel (%p1914) target = $region316
        $region315: #{tpu_custom_call.1} parent=223 // pred_region
          %1917 = dma.done [#allocation39], 16
        $region316: #{tpu_custom_call.1} parent=223 // pred_fallthru
          _
        // Predicated region
        $region317: #{tpu_custom_call.1} parent=223 // pred_check
          %p1918 = pneg %p646
        $region318: #{tpu_custom_call.1} parent=223 // pred_check_branch
          %1920 = sbr.rel (%p1918) target = $region320
        $region319: #{tpu_custom_call.1} parent=223 // pred_region
          %1921 = dma.done [#allocation42], 16
        $region320: #{tpu_custom_call.1} parent=223 // pred_fallthru
          _
        // Predicated region
        $region321: #{tpu_custom_call.1} parent=223 // pred_check
          %p1922 = pneg %p667
        $region322: #{tpu_custom_call.1} parent=223 // pred_check_branch
          %1924 = sbr.rel (%p1922) target = $region324
        $region323: #{tpu_custom_call.1} parent=223 // pred_region
          %1925 = dma.done [#allocation42], 16
        $region324: #{tpu_custom_call.1} parent=223 // pred_fallthru
          _
        // Predicated region
        $region325: #{tpu_custom_call.1} parent=223 // pred_check
          %p1926 = pneg %p688
        $region326: #{tpu_custom_call.1} parent=223 // pred_check_branch
          %1928 = sbr.rel (%p1926) target = $region328
        $region327: #{tpu_custom_call.1} parent=223 // pred_region
          %1929 = dma.done [#allocation45], 16
        $region328: #{tpu_custom_call.1} parent=223 // pred_fallthru
          _
        // Predicated region
        $region329: #{tpu_custom_call.1} parent=223 // pred_check
          %p1930 = pneg %p709
        $region330: #{tpu_custom_call.1} parent=223 // pred_check_branch
          %1932 = sbr.rel (%p1930) target = $region332
        $region331: #{tpu_custom_call.1} parent=223 // pred_region
          %1933 = dma.done [#allocation45], 16
        $region332: #{tpu_custom_call.1} parent=223 // pred_fallthru
          _
        // Predicated region
        $region333: #{tpu_custom_call.1} parent=223 // pred_check
          %p1934 = pneg %p730
        $region334: #{tpu_custom_call.1} parent=223 // pred_check_branch
          %1936 = sbr.rel (%p1934) target = $region336
        $region335: #{tpu_custom_call.1} parent=223 // pred_region
          %1937 = dma.done [#allocation48], 16
        $region336: #{tpu_custom_call.1} parent=223 // pred_fallthru
          _
        // Predicated region
        $region337: #{tpu_custom_call.1} parent=223 // pred_check
          %p1938 = pneg %p751
        $region338: #{tpu_custom_call.1} parent=223 // pred_check_branch
          %1940 = sbr.rel (%p1938) target = $region340
        $region339: #{tpu_custom_call.1} parent=223 // pred_region
          %1941 = dma.done [#allocation48], 16
        $region340: #{tpu_custom_call.1} parent=223 // pred_fallthru
          _
        // Predicated region
        $region341: #{tpu_custom_call.1} parent=223 // pred_check
          %p1942 = pneg %p772
        $region342: #{tpu_custom_call.1} parent=223 // pred_check_branch
          %1944 = sbr.rel (%p1942) target = $region344
        $region343: #{tpu_custom_call.1} parent=223 // pred_region
          %1945 = dma.done [#allocation51], 4096
        $region344: #{tpu_custom_call.1} parent=223 // pred_fallthru
          _
        // Predicated region
        $region345: #{tpu_custom_call.1} parent=223 // pred_check
          %p1946 = pneg %p793
        $region346: #{tpu_custom_call.1} parent=223 // pred_check_branch
          %1948 = sbr.rel (%p1946) target = $region348
        $region347: #{tpu_custom_call.1} parent=223 // pred_region
          %1949 = dma.done [#allocation51], 4096
        $region348: #{tpu_custom_call.1} parent=223 // pred_fallthru
          _
        // Predicated region
        $region349: #{tpu_custom_call.1} parent=223 // pred_check
          %p1950 = pneg %p814
        $region350: #{tpu_custom_call.1} parent=223 // pred_check_branch
          %1952 = sbr.rel (%p1950) target = $region352
        $region351: #{tpu_custom_call.1} parent=223 // pred_region
          %1953 = dma.done [#allocation54], 2048
        $region352: #{tpu_custom_call.1} parent=223 // pred_fallthru
          _
        // Predicated region
        $region353: #{tpu_custom_call.1} parent=223 // pred_check
          %p1954 = pneg %p835
        $region354: #{tpu_custom_call.1} parent=223 // pred_check_branch
          %1956 = sbr.rel (%p1954) target = $region356
        $region355: #{tpu_custom_call.1} parent=223 // pred_region
          %1957 = dma.done [#allocation54], 2048
        $region356: #{tpu_custom_call.1} parent=223 // pred_fallthru
          _
        // Predicated region
        $region357: #{tpu_custom_call.1} parent=223 // pred_check
          %p1958 = pneg %p856
        $region358: #{tpu_custom_call.1} parent=223 // pred_check_branch
          %1960 = sbr.rel (%p1958) target = $region360
        $region359: #{tpu_custom_call.1} parent=223 // pred_region
          %1961 = dma.done [#allocation57], 2048
        $region360: #{tpu_custom_call.1} parent=223 // pred_fallthru
          _
        // Predicated region
        $region361: #{tpu_custom_call.1} parent=223 // pred_check
          %p1962 = pneg %p898
        $region362: #{tpu_custom_call.1} parent=223 // pred_check_branch
          %1964 = sbr.rel (%p1962) target = $region364
        $region363: #{tpu_custom_call.1} parent=223 // pred_region
          %1965 = dma.done [#allocation57], 2048
        $region364: #{tpu_custom_call.1} parent=223 // pred_fallthru
          _
        // Predicated region
        $region365: #{tpu_custom_call.1} parent=223 // pred_check
          %p1966 = pneg %p940
        $region366: #{tpu_custom_call.1} parent=223 // pred_check_branch
          %1968 = sbr.rel (%p1966) target = $region368
        $region367: #{tpu_custom_call.1} parent=223 // pred_region
          %1969 = dma.done [#allocation60], 256
        $region368: #{tpu_custom_call.1} parent=223 // pred_fallthru
          _
        // Predicated region
        $region369: #{tpu_custom_call.1} parent=223 // pred_check
          %p1970 = pneg %p961
        $region370: #{tpu_custom_call.1} parent=223 // pred_check_branch
          %1972 = sbr.rel (%p1970) target = $region372
        $region371: #{tpu_custom_call.1} parent=223 // pred_region
          %1973 = dma.done [#allocation60], 6144
        $region372: #{tpu_custom_call.1} parent=223 // pred_fallthru
          _
        // Predicated region
        $region373: #{tpu_custom_call.1} parent=223 // pred_check
          %p1974 = pneg %p1003
        $region374: #{tpu_custom_call.1} parent=223 // pred_check_branch
          %1976 = sbr.rel (%p1974) target = $region376
        $region375: #{tpu_custom_call.1} parent=223 // pred_region
          %1977 = dma.done [#allocation63], 6144
        $region376: #{tpu_custom_call.1} parent=223 // pred_fallthru
          _
        // Predicated region
        $region377: #{tpu_custom_call.1} parent=223 // pred_check
          %p1978 = pneg %p1045
        $region378: #{tpu_custom_call.1} parent=223 // pred_check_branch
          %1980 = sbr.rel (%p1978) target = $region380
        $region379: #{tpu_custom_call.1} parent=223 // pred_region
          %1981 = dma.done [#allocation63], 6144
        $region380: #{tpu_custom_call.1} parent=223 // pred_fallthru
          _
        // Predicated region
        $region381: #{tpu_custom_call.1} parent=223 // pred_check
          %p1982 = pneg %p1087
        $region382: #{tpu_custom_call.1} parent=223 // pred_check_branch
          %1984 = sbr.rel (%p1982) target = $region384
        $region383: #{tpu_custom_call.1} parent=223 // pred_region
          %1985 = dma.done [#allocation66], 6144
        $region384: #{tpu_custom_call.1} parent=223 // pred_fallthru
          _
        // Predicated region
        $region385: #{tpu_custom_call.1} parent=223 // pred_check
          %p1986 = pneg %p1129
        $region386: #{tpu_custom_call.1} parent=223 // pred_check_branch
          %1988 = sbr.rel (%p1986) target = $region388
        $region387: #{tpu_custom_call.1} parent=223 // pred_region
          %1989 = dma.done [#allocation66], 2048
        $region388: #{tpu_custom_call.1} parent=223 // pred_fallthru
          _
        // Predicated region
        $region389: #{tpu_custom_call.1} parent=223 // pred_check
          %p1990 = pneg %p1150
        $region390: #{tpu_custom_call.1} parent=223 // pred_check_branch
          %1992 = sbr.rel (%p1990) target = $region392
        $region391: #{tpu_custom_call.1} parent=223 // pred_region
          %1993 = dma.done [#allocation69], 2048
        $region392: #{tpu_custom_call.1} parent=223 // pred_fallthru
          _
        // Predicated region
        $region393: #{tpu_custom_call.1} parent=223 // pred_check
          %p1994 = pneg %p1171
        $region394: #{tpu_custom_call.1} parent=223 // pred_check_branch
          %1996 = sbr.rel (%p1994) target = $region396
        $region395: #{tpu_custom_call.1} parent=223 // pred_region
          %1997 = dma.done [#allocation69], 2048
        $region396: #{tpu_custom_call.1} parent=223 // pred_fallthru
          _
        // Predicated region
        $region397: #{tpu_custom_call.1} parent=223 // pred_check
          %p1998 = pneg %p1192
        $region398: #{tpu_custom_call.1} parent=223 // pred_check_branch
          %2000 = sbr.rel (%p1998) target = $region400
        $region399: #{tpu_custom_call.1} parent=223 // pred_region
          %2001 = dma.done [#allocation72], 2048
        $region400: #{tpu_custom_call.1} parent=223 // pred_fallthru
          _
        %s2002 = sand.u32 %s150, 1
        %s2003 = scalar_lea.sflag [#allocation6], %s2002
        %s2004 = sand.u32 %s150, 1
        %s2005 = smul.addr %s2004, 8
        %s2006 = scalar_lea.vmem [#allocation5], %s2005
        %p2007 = pneg %p163
        %p2008 = pneg %p160
        %p2009 = pneg %p184
        %p2010 = pneg %p181
        %p2011 = pneg %p205
        %p2012 = pneg %p202
        %p2013 = pneg %p226
        %p2014 = pneg %p223
        %p2015 = pneg %p247
        %p2016 = pneg %p244
        %p2017 = pneg %p268
        %p2018 = pneg %p265
        %p2019 = pneg %p289
        %p2020 = pneg %p286
        %p2021 = pneg %p310
        %p2022 = pneg %p307
        %p2023 = pneg %p331
        %p2024 = pneg %p328
        %p2025 = pneg %p352
        %p2026 = pneg %p349
        %p2027 = pneg %p373
        %p2028 = pneg %p370
        %p2029 = pneg %p394
        %p2030 = pneg %p391
        %p2031 = pneg %p415
        %p2032 = pneg %p412
        %p2033 = pneg %p436
        %p2034 = pneg %p433
        %p2035 = pneg %p457
        %p2036 = pneg %p454
        %p2037 = pneg %p478
        %p2038 = pneg %p475
        %p2039 = pneg %p499
        %p2040 = pneg %p496
        %p2041 = pneg %p520
        %p2042 = pneg %p517
        %p2043 = pneg %p541
        %p2044 = pneg %p538
        %p2045 = pneg %p562
        %p2046 = pneg %p559
        %p2047 = pneg %p583
        %p2048 = pneg %p580
        %p2049 = pneg %p604
        %p2050 = pneg %p601
        %p2051 = pneg %p625
        %p2052 = pneg %p622
        %p2053 = pneg %p646
        %p2054 = pneg %p643
        %p2055 = pneg %p667
        %p2056 = pneg %p664
        %p2057 = pneg %p688
        %p2058 = pneg %p685
        %p2059 = pneg %p709
        %p2060 = pneg %p706
        %p2061 = pneg %p730
        %p2062 = pneg %p727
        %p2063 = pneg %p751
        %p2064 = pneg %p748
        %p2065 = pneg %p772
        %p2066 = pneg %p769
        %p2067 = pneg %p793
        %p2068 = pneg %p790
        %p2069 = pneg %p814
        %p2070 = pneg %p811
        %p2071 = pneg %p835
        %p2072 = pneg %p832
        %p2073 = pneg %p856
        %p2074 = pneg %p853
        %p2075 = pneg %p877
        %p2076 = pneg %p874
        %p2077 = pneg %p898
        %p2078 = pneg %p895
        %p2079 = pneg %p919
        %p2080 = pneg %p916
        %p2081 = pneg %p940
        %p2082 = pneg %p937
        %p2083 = pneg %p961
        %p2084 = pneg %p958
        %p2085 = pneg %p982
        %p2086 = pneg %p979
        %p2087 = pneg %p1003
        %p2088 = pneg %p1000
        %p2089 = pneg %p1024
        %p2090 = pneg %p1021
        %p2091 = pneg %p1045
        %p2092 = pneg %p1042
        %p2093 = pneg %p1066
        %p2094 = pneg %p1063
        %p2095 = pneg %p1087
        %p2096 = pneg %p1084
        %p2097 = pneg %p1108
        %p2098 = pneg %p1105
        %p2099 = pneg %p1129
        %p2100 = pneg %p1126
        %p2101 = pneg %p1150
        %p2102 = pneg %p1147
        %p2103 = pneg %p1171
        %p2104 = pneg %p1168
        %p2105 = pneg %p1192
        %p2106 = pneg %p1189
        %p2107 = pneg %p1213
        %p2108 = pneg %p1210
        %p2109 = pneg %p1239
        %p2110 = pneg %p1236
        %s2111 = sand.u32 %s1226, 1
        %s2112 = scalar_lea.sflag [#allocation7], %s2111
        %s2113 = sand.u32 %s1226, 1
        %s2114 = smul.addr %s2113, 16
        %s2115 = scalar_lea.vmem [#allocation73], %s2114
        %v2116 = vld [vmem:[%s1825] sm:$0xff]
        %v2117 = vlaneseq
        %v2118 = vshrl.u32 %v2117, 7
        %vm2119 = vcmp.eq.s32.totalorder %v2118, 0
        %v2120 = vrot.slane %v2116, 7
        %v2121 = vsel %vm2119, 1, 0
        %vm2122 = vcmp.eq.s32.totalorder %v2121, 1
        %v2123 = vsel %vm2122, 0.0, %v2120
        %vm2124 = vcmp.eq.s32.totalorder %v2118, 7
        %v2125 = vrot.slane %v2116, 1
        %v2126 = vsel %vm2124, 1, 0
        %vm2127 = vcmp.eq.s32.totalorder %v2126, 1
        %v2128 = vsel %vm2127, 0.0, %v2125
        %v2129 = vld [vmem:[#allocation8] sm:$0xff]
        %v2130 = vld [vmem:[#allocation8 + $0x8] sm:$0xff]
        %v2131 = vld [vmem:[#allocation8 + $0x10] sm:$0xff]
        %v2132 = vld [vmem:[#allocation8 + $0x18] sm:$0xff]
        %s2133 = scalar_lea.vmem [#allocation8], 32
        %v2134 = vld [vmem:[%s2133] sm:$0xff]
        %v2135 = vld [vmem:[%s2133 + $0x8] sm:$0xff]
        %v2136 = vld [vmem:[%s2133 + $0x10] sm:$0xff]
        %v2137 = vld [vmem:[%s2133 + $0x18] sm:$0xff]
        %vm2138 = vcmask 261120
        %v2140 = vsel %vm2138, %v2116, 0
        %2142 = vmatprep.subr.mxu0 0.0
        %2143 = vmatpush1.msra.mxu0 %v2134
        %2144 = vmatprep.subr.mxu0 0.0
        %2145 = vmatpush1.msra.mxu0 %v2135
        %2146 = vmatprep.subr.mxu0 0.0
        %2147 = vmatpush1.msra.mxu0 %v2136
        %2148 = vmatprep.subr.mxu0 0.0
        %2149 = vmatpush1.msra.mxu0 %v2137
        %2150 = vmatprep.subr.mxu0 0.0
        %2151 = vmatpush1.msra.mxu0 0.0
        %2152 = vmatprep.subr.mxu0 0.0
        %2153 = vmatpush1.msra.mxu0 0.0
        %2154 = vmatprep.subr.mxu0 0.0
        %2155 = vmatpush1.msra.mxu0 0.0
        %2156 = vmatprep.subr.mxu0 0.0
        %2157 = vmatpush1.msra.mxu0 0.0
        %2158 = vmatprep.subr.mxu0 0.0
        %2159 = vmatpush1.msra.mxu0 0.0
        %2160 = vmatprep.subr.mxu0 0.0
        %2161 = vmatpush1.msra.mxu0 0.0
        %2162 = vmatprep.subr.mxu0 0.0
        %2163 = vmatpush1.msra.mxu0 0.0
        %2164 = vmatprep.subr.mxu0 0.0
        %2165 = vmatpush1.msra.mxu0 0.0
        %2166 = vmatprep.subr.mxu0 0.0
        %2167 = vmatpush1.msra.mxu0 0.0
        %2168 = vmatprep.subr.mxu0 0.0
        %2169 = vmatpush1.msra.mxu0 0.0
        %2170 = vmatprep.subr.mxu0 0.0
        %2171 = vmatpush1.msra.mxu0 0.0
        %2172 = vmatprep.subr.mxu0 0.0
        %2173 = vmatpush1.msra.mxu0 0.0
        %2174 = vmatprep.subr.mxu0 0.0
        %2175 = vmatpush1.msra.mxu0 0.0
        %2176 = vmatprep.subr.mxu0 0.0
        %2177 = vmatpush1.msra.mxu0 0.0
        %2178 = vmatprep.subr.mxu0 0.0
        %2179 = vmatpush1.msra.mxu0 0.0
        %2180 = vmatprep.subr.mxu0 0.0
        %2181 = vmatpush1.msra.mxu0 0.0
        %2182 = vmatprep.subr.mxu0 0.0
        %2183 = vmatpush1.msra.mxu0 0.0
        %2184 = vmatprep.subr.mxu0 0.0
        %2185 = vmatpush1.msra.mxu0 0.0
        %2186 = vmatprep.subr.mxu0 0.0
        %2187 = vmatpush1.msra.mxu0 0.0
        %2188 = vmatprep.subr.mxu0 0.0
        %2189 = vmatpush1.msra.mxu0 0.0
        %2190 = vmatprep.subr.mxu0 0.0
        %2191 = vmatpush1.msra.mxu0 0.0
        %2192 = vmatprep.subr.mxu0 0.0
        %2193 = vmatpush1.msra.mxu0 0.0
        %2194 = vmatprep.subr.mxu0 0.0
        %2195 = vmatpush1.msra.mxu0 0.0
        %2196 = vmatprep.subr.mxu0 0.0
        %2197 = vmatpush1.msra.mxu0 0.0
        %2198 = vmatprep.subr.mxu0 0.0
        %2199 = vmatpush1.msra.mxu0 0.0
        %2200 = vmatprep.subr.mxu0 0.0
        %2201 = vmatpush1.msra.mxu0 0.0
        %2202 = vmatprep.subr.mxu0 0.0
        %2203 = vmatpush1.msra.mxu0 0.0
        %2204 = vmatprep.subr.mxu0 0.0
        %2205 = vmatpush1.msra.mxu0 0.0
        %2206 = vmatprep.mubr.f32.mxu0 0.0
        %2207 = vmatmul.mubr.f32.gmra.mrb[0].mxu0 %v2140
        %v2208 = vpop.f32.mrb[0].mxu0
        %v2209 = vadd.f32 0.0, %v2208
        %v2210 = vpop.f32.mrb[0].mxu0
        %2211 = vdwg.mxu0
        %v2213 = vsel %vm2138, %v2123, 0
        %2215 = vmatprep.subr.mxu0 0.0
        %2216 = vmatpush1.msra.mxu0 %v2129
        %2217 = vmatprep.subr.mxu0 0.0
        %2218 = vmatpush1.msra.mxu0 %v2130
        %2219 = vmatprep.subr.mxu0 0.0
        %2220 = vmatpush1.msra.mxu0 %v2131
        %2221 = vmatprep.subr.mxu0 0.0
        %2222 = vmatpush1.msra.mxu0 %v2132
        %2223 = vmatprep.subr.mxu0 0.0
        %2224 = vmatpush1.msra.mxu0 0.0
        %2225 = vmatprep.subr.mxu0 0.0
        %2226 = vmatpush1.msra.mxu0 0.0
        %2227 = vmatprep.subr.mxu0 0.0
        %2228 = vmatpush1.msra.mxu0 0.0
        %2229 = vmatprep.subr.mxu0 0.0
        %2230 = vmatpush1.msra.mxu0 0.0
        %2231 = vmatprep.subr.mxu0 0.0
        %2232 = vmatpush1.msra.mxu0 0.0
        %2233 = vmatprep.subr.mxu0 0.0
        %2234 = vmatpush1.msra.mxu0 0.0
        %2235 = vmatprep.subr.mxu0 0.0
        %2236 = vmatpush1.msra.mxu0 0.0
        %2237 = vmatprep.subr.mxu0 0.0
        %2238 = vmatpush1.msra.mxu0 0.0
        %2239 = vmatprep.subr.mxu0 0.0
        %2240 = vmatpush1.msra.mxu0 0.0
        %2241 = vmatprep.subr.mxu0 0.0
        %2242 = vmatpush1.msra.mxu0 0.0
        %2243 = vmatprep.subr.mxu0 0.0
        %2244 = vmatpush1.msra.mxu0 0.0
        %2245 = vmatprep.subr.mxu0 0.0
        %2246 = vmatpush1.msra.mxu0 0.0
        %2247 = vmatprep.subr.mxu0 0.0
        %2248 = vmatpush1.msra.mxu0 0.0
        %2249 = vmatprep.subr.mxu0 0.0
        %2250 = vmatpush1.msra.mxu0 0.0
        %2251 = vmatprep.subr.mxu0 0.0
        %2252 = vmatpush1.msra.mxu0 0.0
        %2253 = vmatprep.subr.mxu0 0.0
        %2254 = vmatpush1.msra.mxu0 0.0
        %2255 = vmatprep.subr.mxu0 0.0
        %2256 = vmatpush1.msra.mxu0 0.0
        %2257 = vmatprep.subr.mxu0 0.0
        %2258 = vmatpush1.msra.mxu0 0.0
        %2259 = vmatprep.subr.mxu0 0.0
        %2260 = vmatpush1.msra.mxu0 0.0
        %2261 = vmatprep.subr.mxu0 0.0
        %2262 = vmatpush1.msra.mxu0 0.0
        %2263 = vmatprep.subr.mxu0 0.0
        %2264 = vmatpush1.msra.mxu0 0.0
        %2265 = vmatprep.subr.mxu0 0.0
        %2266 = vmatpush1.msra.mxu0 0.0
        %2267 = vmatprep.subr.mxu0 0.0
        %2268 = vmatpush1.msra.mxu0 0.0
        %2269 = vmatprep.subr.mxu0 0.0
        %2270 = vmatpush1.msra.mxu0 0.0
        %2271 = vmatprep.subr.mxu0 0.0
        %2272 = vmatpush1.msra.mxu0 0.0
        %2273 = vmatprep.subr.mxu0 0.0
        %2274 = vmatpush1.msra.mxu0 0.0
        %2275 = vmatprep.subr.mxu0 0.0
        %2276 = vmatpush1.msra.mxu0 0.0
        %2277 = vmatprep.subr.mxu0 0.0
        %2278 = vmatpush1.msra.mxu0 0.0
        %2279 = vmatprep.mubr.f32.mxu0 0.0
        %2280 = vmatmul.mubr.f32.gmra.mrb[0].mxu0 %v2213
        %v2281 = vpop.f32.mrb[0].mxu0
        %v2282 = vadd.f32 %v2209, %v2281
        %v2283 = vpop.f32.mrb[0].mxu0
        %2284 = vdwg.mxu0
        %s2285 = scalar_lea.vmem [#allocation8], 64
        %v2286 = vld [vmem:[%s2285] sm:$0xff]
        %v2287 = vld [vmem:[%s2285 + $0x8] sm:$0xff]
        %v2288 = vld [vmem:[%s2285 + $0x10] sm:$0xff]
        %v2289 = vld [vmem:[%s2285 + $0x18] sm:$0xff]
        %v2291 = vsel %vm2138, %v2128, 0
        %2293 = vmatprep.subr.mxu0 0.0
        %2294 = vmatpush1.msra.mxu0 %v2286
        %2295 = vmatprep.subr.mxu0 0.0
        %2296 = vmatpush1.msra.mxu0 %v2287
        %2297 = vmatprep.subr.mxu0 0.0
        %2298 = vmatpush1.msra.mxu0 %v2288
        %2299 = vmatprep.subr.mxu0 0.0
        %2300 = vmatpush1.msra.mxu0 %v2289
        %2301 = vmatprep.subr.mxu0 0.0
        %2302 = vmatpush1.msra.mxu0 0.0
        %2303 = vmatprep.subr.mxu0 0.0
        %2304 = vmatpush1.msra.mxu0 0.0
        %2305 = vmatprep.subr.mxu0 0.0
        %2306 = vmatpush1.msra.mxu0 0.0
        %2307 = vmatprep.subr.mxu0 0.0
        %2308 = vmatpush1.msra.mxu0 0.0
        %2309 = vmatprep.subr.mxu0 0.0
        %2310 = vmatpush1.msra.mxu0 0.0
        %2311 = vmatprep.subr.mxu0 0.0
        %2312 = vmatpush1.msra.mxu0 0.0
        %2313 = vmatprep.subr.mxu0 0.0
        %2314 = vmatpush1.msra.mxu0 0.0
        %2315 = vmatprep.subr.mxu0 0.0
        %2316 = vmatpush1.msra.mxu0 0.0
        %2317 = vmatprep.subr.mxu0 0.0
        %2318 = vmatpush1.msra.mxu0 0.0
        %2319 = vmatprep.subr.mxu0 0.0
        %2320 = vmatpush1.msra.mxu0 0.0
        %2321 = vmatprep.subr.mxu0 0.0
        %2322 = vmatpush1.msra.mxu0 0.0
        %2323 = vmatprep.subr.mxu0 0.0
        %2324 = vmatpush1.msra.mxu0 0.0
        %2325 = vmatprep.subr.mxu0 0.0
        %2326 = vmatpush1.msra.mxu0 0.0
        %2327 = vmatprep.subr.mxu0 0.0
        %2328 = vmatpush1.msra.mxu0 0.0
        %2329 = vmatprep.subr.mxu0 0.0
        %2330 = vmatpush1.msra.mxu0 0.0
        %2331 = vmatprep.subr.mxu0 0.0
        %2332 = vmatpush1.msra.mxu0 0.0
        %2333 = vmatprep.subr.mxu0 0.0
        %2334 = vmatpush1.msra.mxu0 0.0
        %2335 = vmatprep.subr.mxu0 0.0
        %2336 = vmatpush1.msra.mxu0 0.0
        %2337 = vmatprep.subr.mxu0 0.0
        %2338 = vmatpush1.msra.mxu0 0.0
        %2339 = vmatprep.subr.mxu0 0.0
        %2340 = vmatpush1.msra.mxu0 0.0
        %2341 = vmatprep.subr.mxu0 0.0
        %2342 = vmatpush1.msra.mxu0 0.0
        %2343 = vmatprep.subr.mxu0 0.0
        %2344 = vmatpush1.msra.mxu0 0.0
        %2345 = vmatprep.subr.mxu0 0.0
        %2346 = vmatpush1.msra.mxu0 0.0
        %2347 = vmatprep.subr.mxu0 0.0
        %2348 = vmatpush1.msra.mxu0 0.0
        %2349 = vmatprep.subr.mxu0 0.0
        %2350 = vmatpush1.msra.mxu0 0.0
        %2351 = vmatprep.subr.mxu0 0.0
        %2352 = vmatpush1.msra.mxu0 0.0
        %2353 = vmatprep.subr.mxu0 0.0
        %2354 = vmatpush1.msra.mxu0 0.0
        %2355 = vmatprep.subr.mxu0 0.0
        %2356 = vmatpush1.msra.mxu0 0.0
        %2357 = vmatprep.mubr.f32.mxu0 0.0
        %2358 = vmatmul.mubr.f32.gmra.mrb[0].mxu0 %v2291
        %v2359 = vpop.f32.mrb[0].mxu0
        %v2360 = vadd.f32 0.0, %v2359
        %v2361 = vpop.f32.mrb[0].mxu0
        %2362 = vdwg.mxu0
        %v2363 = vadd.f32 %v2282, %v2360
        %v2364 = vld [vmem:[#allocation10] sm:$0x1]
        %v2366 = vlaneseq
        %v2367 = vshrl.u32 %v2366, 7
        %v2368 = vsub.s32 0, %v2367
        %v2369 = vrot.slane %v2364, %v2368
        %v2371 = vadd.f32 %v2363, %v2369
        %v2372 = vrot.slane %v2371, 7
        %v2373 = vsel %vm2122, 0.0, %v2372
        %v2374 = vrot.slane %v2371, 1
        %v2375 = vsel %vm2127, 0.0, %v2374
        %v2376 = vld [vmem:[#allocation61] sm:$0xff]
        %v2377 = vld [vmem:[#allocation61 + $0x8] sm:$0xff]
        %v2378 = vld [vmem:[#allocation61 + $0x10] sm:$0xff]
        %v2379 = vld [vmem:[#allocation61 + $0x18] sm:$0xff]
        %v2380 = vld [vmem:[#allocation61 + $0x20] sm:$0xff]
        %v2381 = vld [vmem:[#allocation61 + $0x28] sm:$0xff]
        %v2382 = vld [vmem:[#allocation61 + $0x30] sm:$0xff]
        %v2383 = vld [vmem:[#allocation61 + $0x38] sm:$0xff]
        %v2384 = vld [vmem:[#allocation61 + $0x40] sm:$0xff]
        %v2385 = vld [vmem:[#allocation61 + $0x48] sm:$0xff]
        %v2386 = vld [vmem:[#allocation61 + $0x50] sm:$0xff]
        %v2387 = vld [vmem:[#allocation61 + $0x58] sm:$0xff]
        %v2388 = vld [vmem:[#allocation61 + $0x60] sm:$0xff]
        %v2389 = vld [vmem:[#allocation61 + $0x68] sm:$0xff]
        %v2390 = vld [vmem:[#allocation61 + $0x70] sm:$0xff]
        %v2391 = vld [vmem:[#allocation61 + $0x78] sm:$0xff]
        %s2392 = scalar_lea.vmem [#allocation61], 128
        %v2393 = vld [vmem:[%s2392] sm:$0xff]
        %v2394 = vld [vmem:[%s2392 + $0x8] sm:$0xff]
        %v2395 = vld [vmem:[%s2392 + $0x10] sm:$0xff]
        %v2396 = vld [vmem:[%s2392 + $0x18] sm:$0xff]
        %v2397 = vld [vmem:[%s2392 + $0x20] sm:$0xff]
        %v2398 = vld [vmem:[%s2392 + $0x28] sm:$0xff]
        %v2399 = vld [vmem:[%s2392 + $0x30] sm:$0xff]
        %v2400 = vld [vmem:[%s2392 + $0x38] sm:$0xff]
        %v2401 = vld [vmem:[%s2392 + $0x40] sm:$0xff]
        %v2402 = vld [vmem:[%s2392 + $0x48] sm:$0xff]
        %v2403 = vld [vmem:[%s2392 + $0x50] sm:$0xff]
        %v2404 = vld [vmem:[%s2392 + $0x58] sm:$0xff]
        %v2405 = vld [vmem:[%s2392 + $0x60] sm:$0xff]
        %v2406 = vld [vmem:[%s2392 + $0x68] sm:$0xff]
        %v2407 = vld [vmem:[%s2392 + $0x70] sm:$0xff]
        %v2408 = vld [vmem:[%s2392 + $0x78] sm:$0xff]
        %2409 = vmatprep.subr.mxu0 0.0
        %2410 = vmatpush1.msra.mxu0 %v2393
        %2411 = vmatprep.subr.mxu0 0.0
        %2412 = vmatpush1.msra.mxu0 %v2394
        %2413 = vmatprep.subr.mxu0 0.0
        %2414 = vmatpush1.msra.mxu0 %v2395
        %2415 = vmatprep.subr.mxu0 0.0
        %2416 = vmatpush1.msra.mxu0 %v2396
        %2417 = vmatprep.subr.mxu0 0.0
        %2418 = vmatpush1.msra.mxu0 %v2397
        %2419 = vmatprep.subr.mxu0 0.0
        %2420 = vmatpush1.msra.mxu0 %v2398
        %2421 = vmatprep.subr.mxu0 0.0
        %2422 = vmatpush1.msra.mxu0 %v2399
        %2423 = vmatprep.subr.mxu0 0.0
        %2424 = vmatpush1.msra.mxu0 %v2400
        %2425 = vmatprep.subr.mxu0 0.0
        %2426 = vmatpush1.msra.mxu0 %v2401
        %2427 = vmatprep.subr.mxu0 0.0
        %2428 = vmatpush1.msra.mxu0 %v2402
        %2429 = vmatprep.subr.mxu0 0.0
        %2430 = vmatpush1.msra.mxu0 %v2403
        %2431 = vmatprep.subr.mxu0 0.0
        %2432 = vmatpush1.msra.mxu0 %v2404
        %2433 = vmatprep.subr.mxu0 0.0
        %2434 = vmatpush1.msra.mxu0 %v2405
        %2435 = vmatprep.subr.mxu0 0.0
        %2436 = vmatpush1.msra.mxu0 %v2406
        %2437 = vmatprep.subr.mxu0 0.0
        %2438 = vmatpush1.msra.mxu0 %v2407
        %2439 = vmatprep.subr.mxu0 0.0
        %2440 = vmatpush1.msra.mxu0 %v2408
        %2441 = vmatprep.subr.mxu0 0.0
        %2442 = vmatpush1.msra.mxu0 0.0
        %2443 = vmatprep.subr.mxu0 0.0
        %2444 = vmatpush1.msra.mxu0 0.0
        %2445 = vmatprep.subr.mxu0 0.0
        %2446 = vmatpush1.msra.mxu0 0.0
        %2447 = vmatprep.subr.mxu0 0.0
        %2448 = vmatpush1.msra.mxu0 0.0
        %2449 = vmatprep.subr.mxu0 0.0
        %2450 = vmatpush1.msra.mxu0 0.0
        %2451 = vmatprep.subr.mxu0 0.0
        %2452 = vmatpush1.msra.mxu0 0.0
        %2453 = vmatprep.subr.mxu0 0.0
        %2454 = vmatpush1.msra.mxu0 0.0
        %2455 = vmatprep.subr.mxu0 0.0
        %2456 = vmatpush1.msra.mxu0 0.0
        %2457 = vmatprep.subr.mxu0 0.0
        %2458 = vmatpush1.msra.mxu0 0.0
        %2459 = vmatprep.subr.mxu0 0.0
        %2460 = vmatpush1.msra.mxu0 0.0
        %2461 = vmatprep.subr.mxu0 0.0
        %2462 = vmatpush1.msra.mxu0 0.0
        %2463 = vmatprep.subr.mxu0 0.0
        %2464 = vmatpush1.msra.mxu0 0.0
        %2465 = vmatprep.subr.mxu0 0.0
        %2466 = vmatpush1.msra.mxu0 0.0
        %2467 = vmatprep.subr.mxu0 0.0
        %2468 = vmatpush1.msra.mxu0 0.0
        %2469 = vmatprep.subr.mxu0 0.0
        %2470 = vmatpush1.msra.mxu0 0.0
        %2471 = vmatprep.subr.mxu0 0.0
        %2472 = vmatpush1.msra.mxu0 0.0
        %2473 = vmatprep.mubr.f32.mxu0 0.0
        %2474 = vmatmul.mubr.f32.gmra.mrb[0].mxu0 %v2371
        %v2475 = vpop.f32.mrb[0].mxu0
        %v2476 = vadd.f32 0.0, %v2475
        %v2477 = vpop.f32.mrb[0].mxu0
        %2478 = vdwg.mxu0
        %2479 = vmatprep.subr.mxu0 0.0
        %2480 = vmatpush1.msra.mxu0 %v2376
        %2481 = vmatprep.subr.mxu0 0.0
        %2482 = vmatpush1.msra.mxu0 %v2377
        %2483 = vmatprep.subr.mxu0 0.0
        %2484 = vmatpush1.msra.mxu0 %v2378
        %2485 = vmatprep.subr.mxu0 0.0
        %2486 = vmatpush1.msra.mxu0 %v2379
        %2487 = vmatprep.subr.mxu0 0.0
        %2488 = vmatpush1.msra.mxu0 %v2380
        %2489 = vmatprep.subr.mxu0 0.0
        %2490 = vmatpush1.msra.mxu0 %v2381
        %2491 = vmatprep.subr.mxu0 0.0
        %2492 = vmatpush1.msra.mxu0 %v2382
        %2493 = vmatprep.subr.mxu0 0.0
        %2494 = vmatpush1.msra.mxu0 %v2383
        %2495 = vmatprep.subr.mxu0 0.0
        %2496 = vmatpush1.msra.mxu0 %v2384
        %2497 = vmatprep.subr.mxu0 0.0
        %2498 = vmatpush1.msra.mxu0 %v2385
        %2499 = vmatprep.subr.mxu0 0.0
        %2500 = vmatpush1.msra.mxu0 %v2386
        %2501 = vmatprep.subr.mxu0 0.0
        %2502 = vmatpush1.msra.mxu0 %v2387
        %2503 = vmatprep.subr.mxu0 0.0
        %2504 = vmatpush1.msra.mxu0 %v2388
        %2505 = vmatprep.subr.mxu0 0.0
        %2506 = vmatpush1.msra.mxu0 %v2389
        %2507 = vmatprep.subr.mxu0 0.0
        %2508 = vmatpush1.msra.mxu0 %v2390
        %2509 = vmatprep.subr.mxu0 0.0
        %2510 = vmatpush1.msra.mxu0 %v2391
        %2511 = vmatprep.subr.mxu0 0.0
        %2512 = vmatpush1.msra.mxu0 0.0
        %2513 = vmatprep.subr.mxu0 0.0
        %2514 = vmatpush1.msra.mxu0 0.0
        %2515 = vmatprep.subr.mxu0 0.0
        %2516 = vmatpush1.msra.mxu0 0.0
        %2517 = vmatprep.subr.mxu0 0.0
        %2518 = vmatpush1.msra.mxu0 0.0
        %2519 = vmatprep.subr.mxu0 0.0
        %2520 = vmatpush1.msra.mxu0 0.0
        %2521 = vmatprep.subr.mxu0 0.0
        %2522 = vmatpush1.msra.mxu0 0.0
        %2523 = vmatprep.subr.mxu0 0.0
        %2524 = vmatpush1.msra.mxu0 0.0
        %2525 = vmatprep.subr.mxu0 0.0
        %2526 = vmatpush1.msra.mxu0 0.0
        %2527 = vmatprep.subr.mxu0 0.0
        %2528 = vmatpush1.msra.mxu0 0.0
        %2529 = vmatprep.subr.mxu0 0.0
        %2530 = vmatpush1.msra.mxu0 0.0
        %2531 = vmatprep.subr.mxu0 0.0
        %2532 = vmatpush1.msra.mxu0 0.0
        %2533 = vmatprep.subr.mxu0 0.0
        %2534 = vmatpush1.msra.mxu0 0.0
        %2535 = vmatprep.subr.mxu0 0.0
        %2536 = vmatpush1.msra.mxu0 0.0
        %2537 = vmatprep.subr.mxu0 0.0
        %2538 = vmatpush1.msra.mxu0 0.0
        %2539 = vmatprep.subr.mxu0 0.0
        %2540 = vmatpush1.msra.mxu0 0.0
        %2541 = vmatprep.subr.mxu0 0.0
        %2542 = vmatpush1.msra.mxu0 0.0
        %2543 = vmatprep.mubr.f32.mxu0 0.0
        %2544 = vmatmul.mubr.f32.gmra.mrb[0].mxu0 %v2373
        %v2545 = vpop.f32.mrb[0].mxu0
        %v2546 = vadd.f32 %v2476, %v2545
        %v2547 = vpop.f32.mrb[0].mxu0
        %2548 = vdwg.mxu0
        %s2549 = scalar_lea.vmem [#allocation61], 256
        %v2550 = vld [vmem:[%s2549] sm:$0xff]
        %v2551 = vld [vmem:[%s2549 + $0x8] sm:$0xff]
        %v2552 = vld [vmem:[%s2549 + $0x10] sm:$0xff]
        %v2553 = vld [vmem:[%s2549 + $0x18] sm:$0xff]
        %v2554 = vld [vmem:[%s2549 + $0x20] sm:$0xff]
        %v2555 = vld [vmem:[%s2549 + $0x28] sm:$0xff]
        %v2556 = vld [vmem:[%s2549 + $0x30] sm:$0xff]
        %v2557 = vld [vmem:[%s2549 + $0x38] sm:$0xff]
        %v2558 = vld [vmem:[%s2549 + $0x40] sm:$0xff]
        %v2559 = vld [vmem:[%s2549 + $0x48] sm:$0xff]
        %v2560 = vld [vmem:[%s2549 + $0x50] sm:$0xff]
        %v2561 = vld [vmem:[%s2549 + $0x58] sm:$0xff]
        %v2562 = vld [vmem:[%s2549 + $0x60] sm:$0xff]
        %v2563 = vld [vmem:[%s2549 + $0x68] sm:$0xff]
        %v2564 = vld [vmem:[%s2549 + $0x70] sm:$0xff]
        %v2565 = vld [vmem:[%s2549 + $0x78] sm:$0xff]
        %2566 = vmatprep.subr.mxu0 0.0
        %2567 = vmatpush1.msra.mxu0 %v2550
        %2568 = vmatprep.subr.mxu0 0.0
        %2569 = vmatpush1.msra.mxu0 %v2551
        %2570 = vmatprep.subr.mxu0 0.0
        %2571 = vmatpush1.msra.mxu0 %v2552
        %2572 = vmatprep.subr.mxu0 0.0
        %2573 = vmatpush1.msra.mxu0 %v2553
        %2574 = vmatprep.subr.mxu0 0.0
        %2575 = vmatpush1.msra.mxu0 %v2554
        %2576 = vmatprep.subr.mxu0 0.0
        %2577 = vmatpush1.msra.mxu0 %v2555
        %2578 = vmatprep.subr.mxu0 0.0
        %2579 = vmatpush1.msra.mxu0 %v2556
        %2580 = vmatprep.subr.mxu0 0.0
        %2581 = vmatpush1.msra.mxu0 %v2557
        %2582 = vmatprep.subr.mxu0 0.0
        %2583 = vmatpush1.msra.mxu0 %v2558
        %2584 = vmatprep.subr.mxu0 0.0
        %2585 = vmatpush1.msra.mxu0 %v2559
        %2586 = vmatprep.subr.mxu0 0.0
        %2587 = vmatpush1.msra.mxu0 %v2560
        %2588 = vmatprep.subr.mxu0 0.0
        %2589 = vmatpush1.msra.mxu0 %v2561
        %2590 = vmatprep.subr.mxu0 0.0
        %2591 = vmatpush1.msra.mxu0 %v2562
        %2592 = vmatprep.subr.mxu0 0.0
        %2593 = vmatpush1.msra.mxu0 %v2563
        %2594 = vmatprep.subr.mxu0 0.0
        %2595 = vmatpush1.msra.mxu0 %v2564
        %2596 = vmatprep.subr.mxu0 0.0
        %2597 = vmatpush1.msra.mxu0 %v2565
        %2598 = vmatprep.subr.mxu0 0.0
        %2599 = vmatpush1.msra.mxu0 0.0
        %2600 = vmatprep.subr.mxu0 0.0
        %2601 = vmatpush1.msra.mxu0 0.0
        %2602 = vmatprep.subr.mxu0 0.0
        %2603 = vmatpush1.msra.mxu0 0.0
        %2604 = vmatprep.subr.mxu0 0.0
        %2605 = vmatpush1.msra.mxu0 0.0
        %2606 = vmatprep.subr.mxu0 0.0
        %2607 = vmatpush1.msra.mxu0 0.0
        %2608 = vmatprep.subr.mxu0 0.0
        %2609 = vmatpush1.msra.mxu0 0.0
        %2610 = vmatprep.subr.mxu0 0.0
        %2611 = vmatpush1.msra.mxu0 0.0
        %2612 = vmatprep.subr.mxu0 0.0
        %2613 = vmatpush1.msra.mxu0 0.0
        %2614 = vmatprep.subr.mxu0 0.0
        %2615 = vmatpush1.msra.mxu0 0.0
        %2616 = vmatprep.subr.mxu0 0.0
        %2617 = vmatpush1.msra.mxu0 0.0
        %2618 = vmatprep.subr.mxu0 0.0
        %2619 = vmatpush1.msra.mxu0 0.0
        %2620 = vmatprep.subr.mxu0 0.0
        %2621 = vmatpush1.msra.mxu0 0.0
        %2622 = vmatprep.subr.mxu0 0.0
        %2623 = vmatpush1.msra.mxu0 0.0
        %2624 = vmatprep.subr.mxu0 0.0
        %2625 = vmatpush1.msra.mxu0 0.0
        %2626 = vmatprep.subr.mxu0 0.0
        %2627 = vmatpush1.msra.mxu0 0.0
        %2628 = vmatprep.subr.mxu0 0.0
        %2629 = vmatpush1.msra.mxu0 0.0
        %2630 = vmatprep.mubr.f32.mxu0 0.0
        %2631 = vmatmul.mubr.f32.gmra.mrb[0].mxu0 %v2375
        %v2632 = vpop.f32.mrb[0].mxu0
        %v2633 = vadd.f32 0.0, %v2632
        %v2634 = vpop.f32.mrb[0].mxu0
        %2635 = vdwg.mxu0
        %v2636 = vadd.f32 %v2546, %v2633
        %v2637 = vld [vmem:[%s79] sm:$0x1]
        %v2639 = vlaneseq
        %v2640 = vshrl.u32 %v2639, 7
        %v2641 = vsub.s32 0, %v2640
        %v2642 = vrot.slane %v2637, %v2641
        %v2644 = vadd.f32 %v2636, %v2642
        %vm2645 = vcmp.ge.f32.partialorder %v2644, 0.0
        %v2646 = vmul.f32 %v2644, 0.2
        %v2647 = vsel %vm2645, %v2644, %v2646
        %v2648 = vrot.slane %v2647, 7
        %v2649 = vsel %vm2122, 0.0, %v2648
        %v2650 = vrot.slane %v2647, 1
        %v2651 = vsel %vm2127, 0.0, %v2650
        %v2652 = vld [vmem:[#allocation62] sm:$0xff]
        %v2653 = vld [vmem:[#allocation62 + $0x8] sm:$0xff]
        %v2654 = vld [vmem:[#allocation62 + $0x10] sm:$0xff]
        %v2655 = vld [vmem:[#allocation62 + $0x18] sm:$0xff]
        %v2656 = vld [vmem:[#allocation62 + $0x20] sm:$0xff]
        %v2657 = vld [vmem:[#allocation62 + $0x28] sm:$0xff]
        %v2658 = vld [vmem:[#allocation62 + $0x30] sm:$0xff]
        %v2659 = vld [vmem:[#allocation62 + $0x38] sm:$0xff]
        %v2660 = vld [vmem:[#allocation62 + $0x40] sm:$0xff]
        %v2661 = vld [vmem:[#allocation62 + $0x48] sm:$0xff]
        %v2662 = vld [vmem:[#allocation62 + $0x50] sm:$0xff]
        %v2663 = vld [vmem:[#allocation62 + $0x58] sm:$0xff]
        %v2664 = vld [vmem:[#allocation62 + $0x60] sm:$0xff]
        %v2665 = vld [vmem:[#allocation62 + $0x68] sm:$0xff]
        %v2666 = vld [vmem:[#allocation62 + $0x70] sm:$0xff]
        %v2667 = vld [vmem:[#allocation62 + $0x78] sm:$0xff]
        %s2668 = scalar_lea.vmem [#allocation62], 128
        %v2669 = vld [vmem:[%s2668] sm:$0xff]
        %v2670 = vld [vmem:[%s2668 + $0x8] sm:$0xff]
        %v2671 = vld [vmem:[%s2668 + $0x10] sm:$0xff]
        %v2672 = vld [vmem:[%s2668 + $0x18] sm:$0xff]
        %v2673 = vld [vmem:[%s2668 + $0x20] sm:$0xff]
        %v2674 = vld [vmem:[%s2668 + $0x28] sm:$0xff]
        %v2675 = vld [vmem:[%s2668 + $0x30] sm:$0xff]
        %v2676 = vld [vmem:[%s2668 + $0x38] sm:$0xff]
        %v2677 = vld [vmem:[%s2668 + $0x40] sm:$0xff]
        %v2678 = vld [vmem:[%s2668 + $0x48] sm:$0xff]
        %v2679 = vld [vmem:[%s2668 + $0x50] sm:$0xff]
        %v2680 = vld [vmem:[%s2668 + $0x58] sm:$0xff]
        %v2681 = vld [vmem:[%s2668 + $0x60] sm:$0xff]
        %v2682 = vld [vmem:[%s2668 + $0x68] sm:$0xff]
        %v2683 = vld [vmem:[%s2668 + $0x70] sm:$0xff]
        %v2684 = vld [vmem:[%s2668 + $0x78] sm:$0xff]
        %2685 = vmatprep.subr.mxu0 0.0
        %2686 = vmatpush1.msra.mxu0 %v2669
        %2687 = vmatprep.subr.mxu0 0.0
        %2688 = vmatpush1.msra.mxu0 %v2670
        %2689 = vmatprep.subr.mxu0 0.0
        %2690 = vmatpush1.msra.mxu0 %v2671
        %2691 = vmatprep.subr.mxu0 0.0
        %2692 = vmatpush1.msra.mxu0 %v2672
        %2693 = vmatprep.subr.mxu0 0.0
        %2694 = vmatpush1.msra.mxu0 %v2673
        %2695 = vmatprep.subr.mxu0 0.0
        %2696 = vmatpush1.msra.mxu0 %v2674
        %2697 = vmatprep.subr.mxu0 0.0
        %2698 = vmatpush1.msra.mxu0 %v2675
        %2699 = vmatprep.subr.mxu0 0.0
        %2700 = vmatpush1.msra.mxu0 %v2676
        %2701 = vmatprep.subr.mxu0 0.0
        %2702 = vmatpush1.msra.mxu0 %v2677
        %2703 = vmatprep.subr.mxu0 0.0
        %2704 = vmatpush1.msra.mxu0 %v2678
        %2705 = vmatprep.subr.mxu0 0.0
        %2706 = vmatpush1.msra.mxu0 %v2679
        %2707 = vmatprep.subr.mxu0 0.0
        %2708 = vmatpush1.msra.mxu0 %v2680
        %2709 = vmatprep.subr.mxu0 0.0
        %2710 = vmatpush1.msra.mxu0 %v2681
        %2711 = vmatprep.subr.mxu0 0.0
        %2712 = vmatpush1.msra.mxu0 %v2682
        %2713 = vmatprep.subr.mxu0 0.0
        %2714 = vmatpush1.msra.mxu0 %v2683
        %2715 = vmatprep.subr.mxu0 0.0
        %2716 = vmatpush1.msra.mxu0 %v2684
        %2717 = vmatprep.subr.mxu0 0.0
        %2718 = vmatpush1.msra.mxu0 0.0
        %2719 = vmatprep.subr.mxu0 0.0
        %2720 = vmatpush1.msra.mxu0 0.0
        %2721 = vmatprep.subr.mxu0 0.0
        %2722 = vmatpush1.msra.mxu0 0.0
        %2723 = vmatprep.subr.mxu0 0.0
        %2724 = vmatpush1.msra.mxu0 0.0
        %2725 = vmatprep.subr.mxu0 0.0
        %2726 = vmatpush1.msra.mxu0 0.0
        %2727 = vmatprep.subr.mxu0 0.0
        %2728 = vmatpush1.msra.mxu0 0.0
        %2729 = vmatprep.subr.mxu0 0.0
        %2730 = vmatpush1.msra.mxu0 0.0
        %2731 = vmatprep.subr.mxu0 0.0
        %2732 = vmatpush1.msra.mxu0 0.0
        %2733 = vmatprep.subr.mxu0 0.0
        %2734 = vmatpush1.msra.mxu0 0.0
        %2735 = vmatprep.subr.mxu0 0.0
        %2736 = vmatpush1.msra.mxu0 0.0
        %2737 = vmatprep.subr.mxu0 0.0
        %2738 = vmatpush1.msra.mxu0 0.0
        %2739 = vmatprep.subr.mxu0 0.0
        %2740 = vmatpush1.msra.mxu0 0.0
        %2741 = vmatprep.subr.mxu0 0.0
        %2742 = vmatpush1.msra.mxu0 0.0
        %2743 = vmatprep.subr.mxu0 0.0
        %2744 = vmatpush1.msra.mxu0 0.0
        %2745 = vmatprep.subr.mxu0 0.0
        %2746 = vmatpush1.msra.mxu0 0.0
        %2747 = vmatprep.subr.mxu0 0.0
        %2748 = vmatpush1.msra.mxu0 0.0
        %2749 = vmatprep.mubr.f32.mxu0 0.0
        %2750 = vmatmul.mubr.f32.gmra.mrb[0].mxu0 %v2647
        %v2751 = vpop.f32.mrb[0].mxu0
        %v2752 = vadd.f32 0.0, %v2751
        %v2753 = vpop.f32.mrb[0].mxu0
        %2754 = vdwg.mxu0
        %2755 = vmatprep.subr.mxu0 0.0
        %2756 = vmatpush1.msra.mxu0 %v2652
        %2757 = vmatprep.subr.mxu0 0.0
        %2758 = vmatpush1.msra.mxu0 %v2653
        %2759 = vmatprep.subr.mxu0 0.0
        %2760 = vmatpush1.msra.mxu0 %v2654
        %2761 = vmatprep.subr.mxu0 0.0
        %2762 = vmatpush1.msra.mxu0 %v2655
        %2763 = vmatprep.subr.mxu0 0.0
        %2764 = vmatpush1.msra.mxu0 %v2656
        %2765 = vmatprep.subr.mxu0 0.0
        %2766 = vmatpush1.msra.mxu0 %v2657
        %2767 = vmatprep.subr.mxu0 0.0
        %2768 = vmatpush1.msra.mxu0 %v2658
        %2769 = vmatprep.subr.mxu0 0.0
        %2770 = vmatpush1.msra.mxu0 %v2659
        %2771 = vmatprep.subr.mxu0 0.0
        %2772 = vmatpush1.msra.mxu0 %v2660
        %2773 = vmatprep.subr.mxu0 0.0
        %2774 = vmatpush1.msra.mxu0 %v2661
        %2775 = vmatprep.subr.mxu0 0.0
        %2776 = vmatpush1.msra.mxu0 %v2662
        %2777 = vmatprep.subr.mxu0 0.0
        %2778 = vmatpush1.msra.mxu0 %v2663
        %2779 = vmatprep.subr.mxu0 0.0
        %2780 = vmatpush1.msra.mxu0 %v2664
        %2781 = vmatprep.subr.mxu0 0.0
        %2782 = vmatpush1.msra.mxu0 %v2665
        %2783 = vmatprep.subr.mxu0 0.0
        %2784 = vmatpush1.msra.mxu0 %v2666
        %2785 = vmatprep.subr.mxu0 0.0
        %2786 = vmatpush1.msra.mxu0 %v2667
        %2787 = vmatprep.subr.mxu0 0.0
        %2788 = vmatpush1.msra.mxu0 0.0
        %2789 = vmatprep.subr.mxu0 0.0
        %2790 = vmatpush1.msra.mxu0 0.0
        %2791 = vmatprep.subr.mxu0 0.0
        %2792 = vmatpush1.msra.mxu0 0.0
        %2793 = vmatprep.subr.mxu0 0.0
        %2794 = vmatpush1.msra.mxu0 0.0
        %2795 = vmatprep.subr.mxu0 0.0
        %2796 = vmatpush1.msra.mxu0 0.0
        %2797 = vmatprep.subr.mxu0 0.0
        %2798 = vmatpush1.msra.mxu0 0.0
        %2799 = vmatprep.subr.mxu0 0.0
        %2800 = vmatpush1.msra.mxu0 0.0
        %2801 = vmatprep.subr.mxu0 0.0
        %2802 = vmatpush1.msra.mxu0 0.0
        %2803 = vmatprep.subr.mxu0 0.0
        %2804 = vmatpush1.msra.mxu0 0.0
        %2805 = vmatprep.subr.mxu0 0.0
        %2806 = vmatpush1.msra.mxu0 0.0
        %2807 = vmatprep.subr.mxu0 0.0
        %2808 = vmatpush1.msra.mxu0 0.0
        %2809 = vmatprep.subr.mxu0 0.0
        %2810 = vmatpush1.msra.mxu0 0.0
        %2811 = vmatprep.subr.mxu0 0.0
        %2812 = vmatpush1.msra.mxu0 0.0
        %2813 = vmatprep.subr.mxu0 0.0
        %2814 = vmatpush1.msra.mxu0 0.0
        %2815 = vmatprep.subr.mxu0 0.0
        %2816 = vmatpush1.msra.mxu0 0.0
        %2817 = vmatprep.subr.mxu0 0.0
        %2818 = vmatpush1.msra.mxu0 0.0
        %2819 = vmatprep.mubr.f32.mxu0 0.0
        %2820 = vmatmul.mubr.f32.gmra.mrb[0].mxu0 %v2649
        %v2821 = vpop.f32.mrb[0].mxu0
        %v2822 = vadd.f32 %v2752, %v2821
        %v2823 = vpop.f32.mrb[0].mxu0
        %2824 = vdwg.mxu0
        %s2825 = scalar_lea.vmem [#allocation62], 256
        %v2826 = vld [vmem:[%s2825] sm:$0xff]
        %v2827 = vld [vmem:[%s2825 + $0x8] sm:$0xff]
        %v2828 = vld [vmem:[%s2825 + $0x10] sm:$0xff]
        %v2829 = vld [vmem:[%s2825 + $0x18] sm:$0xff]
        %v2830 = vld [vmem:[%s2825 + $0x20] sm:$0xff]
        %v2831 = vld [vmem:[%s2825 + $0x28] sm:$0xff]
        %v2832 = vld [vmem:[%s2825 + $0x30] sm:$0xff]
        %v2833 = vld [vmem:[%s2825 + $0x38] sm:$0xff]
        %v2834 = vld [vmem:[%s2825 + $0x40] sm:$0xff]
        %v2835 = vld [vmem:[%s2825 + $0x48] sm:$0xff]
        %v2836 = vld [vmem:[%s2825 + $0x50] sm:$0xff]
        %v2837 = vld [vmem:[%s2825 + $0x58] sm:$0xff]
        %v2838 = vld [vmem:[%s2825 + $0x60] sm:$0xff]
        %v2839 = vld [vmem:[%s2825 + $0x68] sm:$0xff]
        %v2840 = vld [vmem:[%s2825 + $0x70] sm:$0xff]
        %v2841 = vld [vmem:[%s2825 + $0x78] sm:$0xff]
        %2842 = vmatprep.subr.mxu0 0.0
        %2843 = vmatpush1.msra.mxu0 %v2826
        %2844 = vmatprep.subr.mxu0 0.0
        %2845 = vmatpush1.msra.mxu0 %v2827
        %2846 = vmatprep.subr.mxu0 0.0
        %2847 = vmatpush1.msra.mxu0 %v2828
        %2848 = vmatprep.subr.mxu0 0.0
        %2849 = vmatpush1.msra.mxu0 %v2829
        %2850 = vmatprep.subr.mxu0 0.0
        %2851 = vmatpush1.msra.mxu0 %v2830
        %2852 = vmatprep.subr.mxu0 0.0
        %2853 = vmatpush1.msra.mxu0 %v2831
        %2854 = vmatprep.subr.mxu0 0.0
        %2855 = vmatpush1.msra.mxu0 %v2832
        %2856 = vmatprep.subr.mxu0 0.0
        %2857 = vmatpush1.msra.mxu0 %v2833
        %2858 = vmatprep.subr.mxu0 0.0
        %2859 = vmatpush1.msra.mxu0 %v2834
        %2860 = vmatprep.subr.mxu0 0.0
        %2861 = vmatpush1.msra.mxu0 %v2835
        %2862 = vmatprep.subr.mxu0 0.0
        %2863 = vmatpush1.msra.mxu0 %v2836
        %2864 = vmatprep.subr.mxu0 0.0
        %2865 = vmatpush1.msra.mxu0 %v2837
        %2866 = vmatprep.subr.mxu0 0.0
        %2867 = vmatpush1.msra.mxu0 %v2838
        %2868 = vmatprep.subr.mxu0 0.0
        %2869 = vmatpush1.msra.mxu0 %v2839
        %2870 = vmatprep.subr.mxu0 0.0
        %2871 = vmatpush1.msra.mxu0 %v2840
        %2872 = vmatprep.subr.mxu0 0.0
        %2873 = vmatpush1.msra.mxu0 %v2841
        %2874 = vmatprep.subr.mxu0 0.0
        %2875 = vmatpush1.msra.mxu0 0.0
        %2876 = vmatprep.subr.mxu0 0.0
        %2877 = vmatpush1.msra.mxu0 0.0
        %2878 = vmatprep.subr.mxu0 0.0
        %2879 = vmatpush1.msra.mxu0 0.0
        %2880 = vmatprep.subr.mxu0 0.0
        %2881 = vmatpush1.msra.mxu0 0.0
        %2882 = vmatprep.subr.mxu0 0.0
        %2883 = vmatpush1.msra.mxu0 0.0
        %2884 = vmatprep.subr.mxu0 0.0
        %2885 = vmatpush1.msra.mxu0 0.0
        %2886 = vmatprep.subr.mxu0 0.0
        %2887 = vmatpush1.msra.mxu0 0.0
        %2888 = vmatprep.subr.mxu0 0.0
        %2889 = vmatpush1.msra.mxu0 0.0
        %2890 = vmatprep.subr.mxu0 0.0
        %2891 = vmatpush1.msra.mxu0 0.0
        %2892 = vmatprep.subr.mxu0 0.0
        %2893 = vmatpush1.msra.mxu0 0.0
        %2894 = vmatprep.subr.mxu0 0.0
        %2895 = vmatpush1.msra.mxu0 0.0
        %2896 = vmatprep.subr.mxu0 0.0
        %2897 = vmatpush1.msra.mxu0 0.0
        %2898 = vmatprep.subr.mxu0 0.0
        %2899 = vmatpush1.msra.mxu0 0.0
        %2900 = vmatprep.subr.mxu0 0.0
        %2901 = vmatpush1.msra.mxu0 0.0
        %2902 = vmatprep.subr.mxu0 0.0
        %2903 = vmatpush1.msra.mxu0 0.0
        %2904 = vmatprep.subr.mxu0 0.0
        %2905 = vmatpush1.msra.mxu0 0.0
        %2906 = vmatprep.mubr.f32.mxu0 0.0
        %2907 = vmatmul.mubr.f32.gmra.mrb[0].mxu0 %v2651
        %v2908 = vpop.f32.mrb[0].mxu0
        %v2909 = vadd.f32 0.0, %v2908
        %v2910 = vpop.f32.mrb[0].mxu0
        %2911 = vdwg.mxu0
        %v2912 = vadd.f32 %v2822, %v2909
        %v2913 = vld [vmem:[%s83] sm:$0x1]
        %v2915 = vlaneseq
        %v2916 = vshrl.u32 %v2915, 7
        %v2917 = vsub.s32 0, %v2916
        %v2918 = vrot.slane %v2913, %v2917
        %v2920 = vadd.f32 %v2912, %v2918
        %v2921 = vadd.f32 %v2920, %v2371
        %v2922 = vrot.slane %v2921, 7
        %v2923 = vsel %vm2122, 0.0, %v2922
        %v2924 = vrot.slane %v2921, 1
        %v2925 = vsel %vm2127, 0.0, %v2924
        %v2926 = vld [vmem:[#allocation64] sm:$0xff]
        %v2927 = vld [vmem:[#allocation64 + $0x8] sm:$0xff]
        %v2928 = vld [vmem:[#allocation64 + $0x10] sm:$0xff]
        %v2929 = vld [vmem:[#allocation64 + $0x18] sm:$0xff]
        %v2930 = vld [vmem:[#allocation64 + $0x20] sm:$0xff]
        %v2931 = vld [vmem:[#allocation64 + $0x28] sm:$0xff]
        %v2932 = vld [vmem:[#allocation64 + $0x30] sm:$0xff]
        %v2933 = vld [vmem:[#allocation64 + $0x38] sm:$0xff]
        %v2934 = vld [vmem:[#allocation64 + $0x40] sm:$0xff]
        %v2935 = vld [vmem:[#allocation64 + $0x48] sm:$0xff]
        %v2936 = vld [vmem:[#allocation64 + $0x50] sm:$0xff]
        %v2937 = vld [vmem:[#allocation64 + $0x58] sm:$0xff]
        %v2938 = vld [vmem:[#allocation64 + $0x60] sm:$0xff]
        %v2939 = vld [vmem:[#allocation64 + $0x68] sm:$0xff]
        %v2940 = vld [vmem:[#allocation64 + $0x70] sm:$0xff]
        %v2941 = vld [vmem:[#allocation64 + $0x78] sm:$0xff]
        %s2942 = scalar_lea.vmem [#allocation64], 128
        %v2943 = vld [vmem:[%s2942] sm:$0xff]
        %v2944 = vld [vmem:[%s2942 + $0x8] sm:$0xff]
        %v2945 = vld [vmem:[%s2942 + $0x10] sm:$0xff]
        %v2946 = vld [vmem:[%s2942 + $0x18] sm:$0xff]
        %v2947 = vld [vmem:[%s2942 + $0x20] sm:$0xff]
        %v2948 = vld [vmem:[%s2942 + $0x28] sm:$0xff]
        %v2949 = vld [vmem:[%s2942 + $0x30] sm:$0xff]
        %v2950 = vld [vmem:[%s2942 + $0x38] sm:$0xff]
        %v2951 = vld [vmem:[%s2942 + $0x40] sm:$0xff]
        %v2952 = vld [vmem:[%s2942 + $0x48] sm:$0xff]
        %v2953 = vld [vmem:[%s2942 + $0x50] sm:$0xff]
        %v2954 = vld [vmem:[%s2942 + $0x58] sm:$0xff]
        %v2955 = vld [vmem:[%s2942 + $0x60] sm:$0xff]
        %v2956 = vld [vmem:[%s2942 + $0x68] sm:$0xff]
        %v2957 = vld [vmem:[%s2942 + $0x70] sm:$0xff]
        %v2958 = vld [vmem:[%s2942 + $0x78] sm:$0xff]
        %2959 = vmatprep.subr.mxu0 0.0
        %2960 = vmatpush1.msra.mxu0 %v2943
        %2961 = vmatprep.subr.mxu0 0.0
        %2962 = vmatpush1.msra.mxu0 %v2944
        %2963 = vmatprep.subr.mxu0 0.0
        %2964 = vmatpush1.msra.mxu0 %v2945
        %2965 = vmatprep.subr.mxu0 0.0
        %2966 = vmatpush1.msra.mxu0 %v2946
        %2967 = vmatprep.subr.mxu0 0.0
        %2968 = vmatpush1.msra.mxu0 %v2947
        %2969 = vmatprep.subr.mxu0 0.0
        %2970 = vmatpush1.msra.mxu0 %v2948
        %2971 = vmatprep.subr.mxu0 0.0
        %2972 = vmatpush1.msra.mxu0 %v2949
        %2973 = vmatprep.subr.mxu0 0.0
        %2974 = vmatpush1.msra.mxu0 %v2950
        %2975 = vmatprep.subr.mxu0 0.0
        %2976 = vmatpush1.msra.mxu0 %v2951
        %2977 = vmatprep.subr.mxu0 0.0
        %2978 = vmatpush1.msra.mxu0 %v2952
        %2979 = vmatprep.subr.mxu0 0.0
        %2980 = vmatpush1.msra.mxu0 %v2953
        %2981 = vmatprep.subr.mxu0 0.0
        %2982 = vmatpush1.msra.mxu0 %v2954
        %2983 = vmatprep.subr.mxu0 0.0
        %2984 = vmatpush1.msra.mxu0 %v2955
        %2985 = vmatprep.subr.mxu0 0.0
        %2986 = vmatpush1.msra.mxu0 %v2956
        %2987 = vmatprep.subr.mxu0 0.0
        %2988 = vmatpush1.msra.mxu0 %v2957
        %2989 = vmatprep.subr.mxu0 0.0
        %2990 = vmatpush1.msra.mxu0 %v2958
        %2991 = vmatprep.subr.mxu0 0.0
        %2992 = vmatpush1.msra.mxu0 0.0
        %2993 = vmatprep.subr.mxu0 0.0
        %2994 = vmatpush1.msra.mxu0 0.0
        %2995 = vmatprep.subr.mxu0 0.0
        %2996 = vmatpush1.msra.mxu0 0.0
        %2997 = vmatprep.subr.mxu0 0.0
        %2998 = vmatpush1.msra.mxu0 0.0
        %2999 = vmatprep.subr.mxu0 0.0
        %3000 = vmatpush1.msra.mxu0 0.0
        %3001 = vmatprep.subr.mxu0 0.0
        %3002 = vmatpush1.msra.mxu0 0.0
        %3003 = vmatprep.subr.mxu0 0.0
        %3004 = vmatpush1.msra.mxu0 0.0
        %3005 = vmatprep.subr.mxu0 0.0
        %3006 = vmatpush1.msra.mxu0 0.0
        %3007 = vmatprep.subr.mxu0 0.0
        %3008 = vmatpush1.msra.mxu0 0.0
        %3009 = vmatprep.subr.mxu0 0.0
        %3010 = vmatpush1.msra.mxu0 0.0
        %3011 = vmatprep.subr.mxu0 0.0
        %3012 = vmatpush1.msra.mxu0 0.0
        %3013 = vmatprep.subr.mxu0 0.0
        %3014 = vmatpush1.msra.mxu0 0.0
        %3015 = vmatprep.subr.mxu0 0.0
        %3016 = vmatpush1.msra.mxu0 0.0
        %3017 = vmatprep.subr.mxu0 0.0
        %3018 = vmatpush1.msra.mxu0 0.0
        %3019 = vmatprep.subr.mxu0 0.0
        %3020 = vmatpush1.msra.mxu0 0.0
        %3021 = vmatprep.subr.mxu0 0.0
        %3022 = vmatpush1.msra.mxu0 0.0
        %3023 = vmatprep.mubr.f32.mxu0 0.0
        %3024 = vmatmul.mubr.f32.gmra.mrb[0].mxu0 %v2921
        %v3025 = vpop.f32.mrb[0].mxu0
        %v3026 = vadd.f32 0.0, %v3025
        %v3027 = vpop.f32.mrb[0].mxu0
        %3028 = vdwg.mxu0
        %3029 = vmatprep.subr.mxu0 0.0
        %3030 = vmatpush1.msra.mxu0 %v2926
        %3031 = vmatprep.subr.mxu0 0.0
        %3032 = vmatpush1.msra.mxu0 %v2927
        %3033 = vmatprep.subr.mxu0 0.0
        %3034 = vmatpush1.msra.mxu0 %v2928
        %3035 = vmatprep.subr.mxu0 0.0
        %3036 = vmatpush1.msra.mxu0 %v2929
        %3037 = vmatprep.subr.mxu0 0.0
        %3038 = vmatpush1.msra.mxu0 %v2930
        %3039 = vmatprep.subr.mxu0 0.0
        %3040 = vmatpush1.msra.mxu0 %v2931
        %3041 = vmatprep.subr.mxu0 0.0
        %3042 = vmatpush1.msra.mxu0 %v2932
        %3043 = vmatprep.subr.mxu0 0.0
        %3044 = vmatpush1.msra.mxu0 %v2933
        %3045 = vmatprep.subr.mxu0 0.0
        %3046 = vmatpush1.msra.mxu0 %v2934
        %3047 = vmatprep.subr.mxu0 0.0
        %3048 = vmatpush1.msra.mxu0 %v2935
        %3049 = vmatprep.subr.mxu0 0.0
        %3050 = vmatpush1.msra.mxu0 %v2936
        %3051 = vmatprep.subr.mxu0 0.0
        %3052 = vmatpush1.msra.mxu0 %v2937
        %3053 = vmatprep.subr.mxu0 0.0
        %3054 = vmatpush1.msra.mxu0 %v2938
        %3055 = vmatprep.subr.mxu0 0.0
        %3056 = vmatpush1.msra.mxu0 %v2939
        %3057 = vmatprep.subr.mxu0 0.0
        %3058 = vmatpush1.msra.mxu0 %v2940
        %3059 = vmatprep.subr.mxu0 0.0
        %3060 = vmatpush1.msra.mxu0 %v2941
        %3061 = vmatprep.subr.mxu0 0.0
        %3062 = vmatpush1.msra.mxu0 0.0
        %3063 = vmatprep.subr.mxu0 0.0
        %3064 = vmatpush1.msra.mxu0 0.0
        %3065 = vmatprep.subr.mxu0 0.0
        %3066 = vmatpush1.msra.mxu0 0.0
        %3067 = vmatprep.subr.mxu0 0.0
        %3068 = vmatpush1.msra.mxu0 0.0
        %3069 = vmatprep.subr.mxu0 0.0
        %3070 = vmatpush1.msra.mxu0 0.0
        %3071 = vmatprep.subr.mxu0 0.0
        %3072 = vmatpush1.msra.mxu0 0.0
        %3073 = vmatprep.subr.mxu0 0.0
        %3074 = vmatpush1.msra.mxu0 0.0
        %3075 = vmatprep.subr.mxu0 0.0
        %3076 = vmatpush1.msra.mxu0 0.0
        %3077 = vmatprep.subr.mxu0 0.0
        %3078 = vmatpush1.msra.mxu0 0.0
        %3079 = vmatprep.subr.mxu0 0.0
        %3080 = vmatpush1.msra.mxu0 0.0
        %3081 = vmatprep.subr.mxu0 0.0
        %3082 = vmatpush1.msra.mxu0 0.0
        %3083 = vmatprep.subr.mxu0 0.0
        %3084 = vmatpush1.msra.mxu0 0.0
        %3085 = vmatprep.subr.mxu0 0.0
        %3086 = vmatpush1.msra.mxu0 0.0
        %3087 = vmatprep.subr.mxu0 0.0
        %3088 = vmatpush1.msra.mxu0 0.0
        %3089 = vmatprep.subr.mxu0 0.0
        %3090 = vmatpush1.msra.mxu0 0.0
        %3091 = vmatprep.subr.mxu0 0.0
        %3092 = vmatpush1.msra.mxu0 0.0
        %3093 = vmatprep.mubr.f32.mxu0 0.0
        %3094 = vmatmul.mubr.f32.gmra.mrb[0].mxu0 %v2923
        %v3095 = vpop.f32.mrb[0].mxu0
        %v3096 = vadd.f32 %v3026, %v3095
        %v3097 = vpop.f32.mrb[0].mxu0
        %3098 = vdwg.mxu0
        %s3099 = scalar_lea.vmem [#allocation64], 256
        %v3100 = vld [vmem:[%s3099] sm:$0xff]
        %v3101 = vld [vmem:[%s3099 + $0x8] sm:$0xff]
        %v3102 = vld [vmem:[%s3099 + $0x10] sm:$0xff]
        %v3103 = vld [vmem:[%s3099 + $0x18] sm:$0xff]
        %v3104 = vld [vmem:[%s3099 + $0x20] sm:$0xff]
        %v3105 = vld [vmem:[%s3099 + $0x28] sm:$0xff]
        %v3106 = vld [vmem:[%s3099 + $0x30] sm:$0xff]
        %v3107 = vld [vmem:[%s3099 + $0x38] sm:$0xff]
        %v3108 = vld [vmem:[%s3099 + $0x40] sm:$0xff]
        %v3109 = vld [vmem:[%s3099 + $0x48] sm:$0xff]
        %v3110 = vld [vmem:[%s3099 + $0x50] sm:$0xff]
        %v3111 = vld [vmem:[%s3099 + $0x58] sm:$0xff]
        %v3112 = vld [vmem:[%s3099 + $0x60] sm:$0xff]
        %v3113 = vld [vmem:[%s3099 + $0x68] sm:$0xff]
        %v3114 = vld [vmem:[%s3099 + $0x70] sm:$0xff]
        %v3115 = vld [vmem:[%s3099 + $0x78] sm:$0xff]
        %3116 = vmatprep.subr.mxu0 0.0
        %3117 = vmatpush1.msra.mxu0 %v3100
        %3118 = vmatprep.subr.mxu0 0.0
        %3119 = vmatpush1.msra.mxu0 %v3101
        %3120 = vmatprep.subr.mxu0 0.0
        %3121 = vmatpush1.msra.mxu0 %v3102
        %3122 = vmatprep.subr.mxu0 0.0
        %3123 = vmatpush1.msra.mxu0 %v3103
        %3124 = vmatprep.subr.mxu0 0.0
        %3125 = vmatpush1.msra.mxu0 %v3104
        %3126 = vmatprep.subr.mxu0 0.0
        %3127 = vmatpush1.msra.mxu0 %v3105
        %3128 = vmatprep.subr.mxu0 0.0
        %3129 = vmatpush1.msra.mxu0 %v3106
        %3130 = vmatprep.subr.mxu0 0.0
        %3131 = vmatpush1.msra.mxu0 %v3107
        %3132 = vmatprep.subr.mxu0 0.0
        %3133 = vmatpush1.msra.mxu0 %v3108
        %3134 = vmatprep.subr.mxu0 0.0
        %3135 = vmatpush1.msra.mxu0 %v3109
        %3136 = vmatprep.subr.mxu0 0.0
        %3137 = vmatpush1.msra.mxu0 %v3110
        %3138 = vmatprep.subr.mxu0 0.0
        %3139 = vmatpush1.msra.mxu0 %v3111
        %3140 = vmatprep.subr.mxu0 0.0
        %3141 = vmatpush1.msra.mxu0 %v3112
        %3142 = vmatprep.subr.mxu0 0.0
        %3143 = vmatpush1.msra.mxu0 %v3113
        %3144 = vmatprep.subr.mxu0 0.0
        %3145 = vmatpush1.msra.mxu0 %v3114
        %3146 = vmatprep.subr.mxu0 0.0
        %3147 = vmatpush1.msra.mxu0 %v3115
        %3148 = vmatprep.subr.mxu0 0.0
        %3149 = vmatpush1.msra.mxu0 0.0
        %3150 = vmatprep.subr.mxu0 0.0
        %3151 = vmatpush1.msra.mxu0 0.0
        %3152 = vmatprep.subr.mxu0 0.0
        %3153 = vmatpush1.msra.mxu0 0.0
        %3154 = vmatprep.subr.mxu0 0.0
        %3155 = vmatpush1.msra.mxu0 0.0
        %3156 = vmatprep.subr.mxu0 0.0
        %3157 = vmatpush1.msra.mxu0 0.0
        %3158 = vmatprep.subr.mxu0 0.0
        %3159 = vmatpush1.msra.mxu0 0.0
        %3160 = vmatprep.subr.mxu0 0.0
        %3161 = vmatpush1.msra.mxu0 0.0
        %3162 = vmatprep.subr.mxu0 0.0
        %3163 = vmatpush1.msra.mxu0 0.0
        %3164 = vmatprep.subr.mxu0 0.0
        %3165 = vmatpush1.msra.mxu0 0.0
        %3166 = vmatprep.subr.mxu0 0.0
        %3167 = vmatpush1.msra.mxu0 0.0
        %3168 = vmatprep.subr.mxu0 0.0
        %3169 = vmatpush1.msra.mxu0 0.0
        %3170 = vmatprep.subr.mxu0 0.0
        %3171 = vmatpush1.msra.mxu0 0.0
        %3172 = vmatprep.subr.mxu0 0.0
        %3173 = vmatpush1.msra.mxu0 0.0
        %3174 = vmatprep.subr.mxu0 0.0
        %3175 = vmatpush1.msra.mxu0 0.0
        %3176 = vmatprep.subr.mxu0 0.0
        %3177 = vmatpush1.msra.mxu0 0.0
        %3178 = vmatprep.subr.mxu0 0.0
        %3179 = vmatpush1.msra.mxu0 0.0
        %3180 = vmatprep.mubr.f32.mxu0 0.0
        %3181 = vmatmul.mubr.f32.gmra.mrb[0].mxu0 %v2925
        %v3182 = vpop.f32.mrb[0].mxu0
        %v3183 = vadd.f32 0.0, %v3182
        %v3184 = vpop.f32.mrb[0].mxu0
        %3185 = vdwg.mxu0
        %v3186 = vadd.f32 %v3096, %v3183
        %v3187 = vld [vmem:[%s87] sm:$0x1]
        %v3189 = vlaneseq
        %v3190 = vshrl.u32 %v3189, 7
        %v3191 = vsub.s32 0, %v3190
        %v3192 = vrot.slane %v3187, %v3191
        %v3194 = vadd.f32 %v3186, %v3192
        %vm3195 = vcmp.ge.f32.partialorder %v3194, 0.0
        %v3196 = vmul.f32 %v3194, 0.2
        %v3197 = vsel %vm3195, %v3194, %v3196
        %v3198 = vrot.slane %v3197, 7
        %v3199 = vsel %vm2122, 0.0, %v3198
        %v3200 = vrot.slane %v3197, 1
        %v3201 = vsel %vm2127, 0.0, %v3200
        %v3202 = vld [vmem:[#allocation65] sm:$0xff]
        %v3203 = vld [vmem:[#allocation65 + $0x8] sm:$0xff]
        %v3204 = vld [vmem:[#allocation65 + $0x10] sm:$0xff]
        %v3205 = vld [vmem:[#allocation65 + $0x18] sm:$0xff]
        %v3206 = vld [vmem:[#allocation65 + $0x20] sm:$0xff]
        %v3207 = vld [vmem:[#allocation65 + $0x28] sm:$0xff]
        %v3208 = vld [vmem:[#allocation65 + $0x30] sm:$0xff]
        %v3209 = vld [vmem:[#allocation65 + $0x38] sm:$0xff]
        %v3210 = vld [vmem:[#allocation65 + $0x40] sm:$0xff]
        %v3211 = vld [vmem:[#allocation65 + $0x48] sm:$0xff]
        %v3212 = vld [vmem:[#allocation65 + $0x50] sm:$0xff]
        %v3213 = vld [vmem:[#allocation65 + $0x58] sm:$0xff]
        %v3214 = vld [vmem:[#allocation65 + $0x60] sm:$0xff]
        %v3215 = vld [vmem:[#allocation65 + $0x68] sm:$0xff]
        %v3216 = vld [vmem:[#allocation65 + $0x70] sm:$0xff]
        %v3217 = vld [vmem:[#allocation65 + $0x78] sm:$0xff]
        %s3218 = scalar_lea.vmem [#allocation65], 128
        %v3219 = vld [vmem:[%s3218] sm:$0xff]
        %v3220 = vld [vmem:[%s3218 + $0x8] sm:$0xff]
        %v3221 = vld [vmem:[%s3218 + $0x10] sm:$0xff]
        %v3222 = vld [vmem:[%s3218 + $0x18] sm:$0xff]
        %v3223 = vld [vmem:[%s3218 + $0x20] sm:$0xff]
        %v3224 = vld [vmem:[%s3218 + $0x28] sm:$0xff]
        %v3225 = vld [vmem:[%s3218 + $0x30] sm:$0xff]
        %v3226 = vld [vmem:[%s3218 + $0x38] sm:$0xff]
        %v3227 = vld [vmem:[%s3218 + $0x40] sm:$0xff]
        %v3228 = vld [vmem:[%s3218 + $0x48] sm:$0xff]
        %v3229 = vld [vmem:[%s3218 + $0x50] sm:$0xff]
        %v3230 = vld [vmem:[%s3218 + $0x58] sm:$0xff]
        %v3231 = vld [vmem:[%s3218 + $0x60] sm:$0xff]
        %v3232 = vld [vmem:[%s3218 + $0x68] sm:$0xff]
        %v3233 = vld [vmem:[%s3218 + $0x70] sm:$0xff]
        %v3234 = vld [vmem:[%s3218 + $0x78] sm:$0xff]
        %3235 = vmatprep.subr.mxu0 0.0
        %3236 = vmatpush1.msra.mxu0 %v3219
        %3237 = vmatprep.subr.mxu0 0.0
        %3238 = vmatpush1.msra.mxu0 %v3220
        %3239 = vmatprep.subr.mxu0 0.0
        %3240 = vmatpush1.msra.mxu0 %v3221
        %3241 = vmatprep.subr.mxu0 0.0
        %3242 = vmatpush1.msra.mxu0 %v3222
        %3243 = vmatprep.subr.mxu0 0.0
        %3244 = vmatpush1.msra.mxu0 %v3223
        %3245 = vmatprep.subr.mxu0 0.0
        %3246 = vmatpush1.msra.mxu0 %v3224
        %3247 = vmatprep.subr.mxu0 0.0
        %3248 = vmatpush1.msra.mxu0 %v3225
        %3249 = vmatprep.subr.mxu0 0.0
        %3250 = vmatpush1.msra.mxu0 %v3226
        %3251 = vmatprep.subr.mxu0 0.0
        %3252 = vmatpush1.msra.mxu0 %v3227
        %3253 = vmatprep.subr.mxu0 0.0
        %3254 = vmatpush1.msra.mxu0 %v3228
        %3255 = vmatprep.subr.mxu0 0.0
        %3256 = vmatpush1.msra.mxu0 %v3229
        %3257 = vmatprep.subr.mxu0 0.0
        %3258 = vmatpush1.msra.mxu0 %v3230
        %3259 = vmatprep.subr.mxu0 0.0
        %3260 = vmatpush1.msra.mxu0 %v3231
        %3261 = vmatprep.subr.mxu0 0.0
        %3262 = vmatpush1.msra.mxu0 %v3232
        %3263 = vmatprep.subr.mxu0 0.0
        %3264 = vmatpush1.msra.mxu0 %v3233
        %3265 = vmatprep.subr.mxu0 0.0
        %3266 = vmatpush1.msra.mxu0 %v3234
        %3267 = vmatprep.subr.mxu0 0.0
        %3268 = vmatpush1.msra.mxu0 0.0
        %3269 = vmatprep.subr.mxu0 0.0
        %3270 = vmatpush1.msra.mxu0 0.0
        %3271 = vmatprep.subr.mxu0 0.0
        %3272 = vmatpush1.msra.mxu0 0.0
        %3273 = vmatprep.subr.mxu0 0.0
        %3274 = vmatpush1.msra.mxu0 0.0
        %3275 = vmatprep.subr.mxu0 0.0
        %3276 = vmatpush1.msra.mxu0 0.0
        %3277 = vmatprep.subr.mxu0 0.0
        %3278 = vmatpush1.msra.mxu0 0.0
        %3279 = vmatprep.subr.mxu0 0.0
        %3280 = vmatpush1.msra.mxu0 0.0
        %3281 = vmatprep.subr.mxu0 0.0
        %3282 = vmatpush1.msra.mxu0 0.0
        %3283 = vmatprep.subr.mxu0 0.0
        %3284 = vmatpush1.msra.mxu0 0.0
        %3285 = vmatprep.subr.mxu0 0.0
        %3286 = vmatpush1.msra.mxu0 0.0
        %3287 = vmatprep.subr.mxu0 0.0
        %3288 = vmatpush1.msra.mxu0 0.0
        %3289 = vmatprep.subr.mxu0 0.0
        %3290 = vmatpush1.msra.mxu0 0.0
        %3291 = vmatprep.subr.mxu0 0.0
        %3292 = vmatpush1.msra.mxu0 0.0
        %3293 = vmatprep.subr.mxu0 0.0
        %3294 = vmatpush1.msra.mxu0 0.0
        %3295 = vmatprep.subr.mxu0 0.0
        %3296 = vmatpush1.msra.mxu0 0.0
        %3297 = vmatprep.subr.mxu0 0.0
        %3298 = vmatpush1.msra.mxu0 0.0
        %3299 = vmatprep.mubr.f32.mxu0 0.0
        %3300 = vmatmul.mubr.f32.gmra.mrb[0].mxu0 %v3197
        %v3301 = vpop.f32.mrb[0].mxu0
        %v3302 = vadd.f32 0.0, %v3301
        %v3303 = vpop.f32.mrb[0].mxu0
        %3304 = vdwg.mxu0
        %3305 = vmatprep.subr.mxu0 0.0
        %3306 = vmatpush1.msra.mxu0 %v3202
        %3307 = vmatprep.subr.mxu0 0.0
        %3308 = vmatpush1.msra.mxu0 %v3203
        %3309 = vmatprep.subr.mxu0 0.0
        %3310 = vmatpush1.msra.mxu0 %v3204
        %3311 = vmatprep.subr.mxu0 0.0
        %3312 = vmatpush1.msra.mxu0 %v3205
        %3313 = vmatprep.subr.mxu0 0.0
        %3314 = vmatpush1.msra.mxu0 %v3206
        %3315 = vmatprep.subr.mxu0 0.0
        %3316 = vmatpush1.msra.mxu0 %v3207
        %3317 = vmatprep.subr.mxu0 0.0
        %3318 = vmatpush1.msra.mxu0 %v3208
        %3319 = vmatprep.subr.mxu0 0.0
        %3320 = vmatpush1.msra.mxu0 %v3209
        %3321 = vmatprep.subr.mxu0 0.0
        %3322 = vmatpush1.msra.mxu0 %v3210
        %3323 = vmatprep.subr.mxu0 0.0
        %3324 = vmatpush1.msra.mxu0 %v3211
        %3325 = vmatprep.subr.mxu0 0.0
        %3326 = vmatpush1.msra.mxu0 %v3212
        %3327 = vmatprep.subr.mxu0 0.0
        %3328 = vmatpush1.msra.mxu0 %v3213
        %3329 = vmatprep.subr.mxu0 0.0
        %3330 = vmatpush1.msra.mxu0 %v3214
        %3331 = vmatprep.subr.mxu0 0.0
        %3332 = vmatpush1.msra.mxu0 %v3215
        %3333 = vmatprep.subr.mxu0 0.0
        %3334 = vmatpush1.msra.mxu0 %v3216
        %3335 = vmatprep.subr.mxu0 0.0
        %3336 = vmatpush1.msra.mxu0 %v3217
        %3337 = vmatprep.subr.mxu0 0.0
        %3338 = vmatpush1.msra.mxu0 0.0
        %3339 = vmatprep.subr.mxu0 0.0
        %3340 = vmatpush1.msra.mxu0 0.0
        %3341 = vmatprep.subr.mxu0 0.0
        %3342 = vmatpush1.msra.mxu0 0.0
        %3343 = vmatprep.subr.mxu0 0.0
        %3344 = vmatpush1.msra.mxu0 0.0
        %3345 = vmatprep.subr.mxu0 0.0
        %3346 = vmatpush1.msra.mxu0 0.0
        %3347 = vmatprep.subr.mxu0 0.0
        %3348 = vmatpush1.msra.mxu0 0.0
        %3349 = vmatprep.subr.mxu0 0.0
        %3350 = vmatpush1.msra.mxu0 0.0
        %3351 = vmatprep.subr.mxu0 0.0
        %3352 = vmatpush1.msra.mxu0 0.0
        %3353 = vmatprep.subr.mxu0 0.0
        %3354 = vmatpush1.msra.mxu0 0.0
        %3355 = vmatprep.subr.mxu0 0.0
        %3356 = vmatpush1.msra.mxu0 0.0
        %3357 = vmatprep.subr.mxu0 0.0
        %3358 = vmatpush1.msra.mxu0 0.0
        %3359 = vmatprep.subr.mxu0 0.0
        %3360 = vmatpush1.msra.mxu0 0.0
        %3361 = vmatprep.subr.mxu0 0.0
        %3362 = vmatpush1.msra.mxu0 0.0
        %3363 = vmatprep.subr.mxu0 0.0
        %3364 = vmatpush1.msra.mxu0 0.0
        %3365 = vmatprep.subr.mxu0 0.0
        %3366 = vmatpush1.msra.mxu0 0.0
        %3367 = vmatprep.subr.mxu0 0.0
        %3368 = vmatpush1.msra.mxu0 0.0
        %3369 = vmatprep.mubr.f32.mxu0 0.0
        %3370 = vmatmul.mubr.f32.gmra.mrb[0].mxu0 %v3199
        %v3371 = vpop.f32.mrb[0].mxu0
        %v3372 = vadd.f32 %v3302, %v3371
        %v3373 = vpop.f32.mrb[0].mxu0
        %3374 = vdwg.mxu0
        %s3375 = scalar_lea.vmem [#allocation65], 256
        %v3376 = vld [vmem:[%s3375] sm:$0xff]
        %v3377 = vld [vmem:[%s3375 + $0x8] sm:$0xff]
        %v3378 = vld [vmem:[%s3375 + $0x10] sm:$0xff]
        %v3379 = vld [vmem:[%s3375 + $0x18] sm:$0xff]
        %v3380 = vld [vmem:[%s3375 + $0x20] sm:$0xff]
        %v3381 = vld [vmem:[%s3375 + $0x28] sm:$0xff]
        %v3382 = vld [vmem:[%s3375 + $0x30] sm:$0xff]
        %v3383 = vld [vmem:[%s3375 + $0x38] sm:$0xff]
        %v3384 = vld [vmem:[%s3375 + $0x40] sm:$0xff]
        %v3385 = vld [vmem:[%s3375 + $0x48] sm:$0xff]
        %v3386 = vld [vmem:[%s3375 + $0x50] sm:$0xff]
        %v3387 = vld [vmem:[%s3375 + $0x58] sm:$0xff]
        %v3388 = vld [vmem:[%s3375 + $0x60] sm:$0xff]
        %v3389 = vld [vmem:[%s3375 + $0x68] sm:$0xff]
        %v3390 = vld [vmem:[%s3375 + $0x70] sm:$0xff]
        %v3391 = vld [vmem:[%s3375 + $0x78] sm:$0xff]
        %3392 = vmatprep.subr.mxu0 0.0
        %3393 = vmatpush1.msra.mxu0 %v3376
        %3394 = vmatprep.subr.mxu0 0.0
        %3395 = vmatpush1.msra.mxu0 %v3377
        %3396 = vmatprep.subr.mxu0 0.0
        %3397 = vmatpush1.msra.mxu0 %v3378
        %3398 = vmatprep.subr.mxu0 0.0
        %3399 = vmatpush1.msra.mxu0 %v3379
        %3400 = vmatprep.subr.mxu0 0.0
        %3401 = vmatpush1.msra.mxu0 %v3380
        %3402 = vmatprep.subr.mxu0 0.0
        %3403 = vmatpush1.msra.mxu0 %v3381
        %3404 = vmatprep.subr.mxu0 0.0
        %3405 = vmatpush1.msra.mxu0 %v3382
        %3406 = vmatprep.subr.mxu0 0.0
        %3407 = vmatpush1.msra.mxu0 %v3383
        %3408 = vmatprep.subr.mxu0 0.0
        %3409 = vmatpush1.msra.mxu0 %v3384
        %3410 = vmatprep.subr.mxu0 0.0
        %3411 = vmatpush1.msra.mxu0 %v3385
        %3412 = vmatprep.subr.mxu0 0.0
        %3413 = vmatpush1.msra.mxu0 %v3386
        %3414 = vmatprep.subr.mxu0 0.0
        %3415 = vmatpush1.msra.mxu0 %v3387
        %3416 = vmatprep.subr.mxu0 0.0
        %3417 = vmatpush1.msra.mxu0 %v3388
        %3418 = vmatprep.subr.mxu0 0.0
        %3419 = vmatpush1.msra.mxu0 %v3389
        %3420 = vmatprep.subr.mxu0 0.0
        %3421 = vmatpush1.msra.mxu0 %v3390
        %3422 = vmatprep.subr.mxu0 0.0
        %3423 = vmatpush1.msra.mxu0 %v3391
        %3424 = vmatprep.subr.mxu0 0.0
        %3425 = vmatpush1.msra.mxu0 0.0
        %3426 = vmatprep.subr.mxu0 0.0
        %3427 = vmatpush1.msra.mxu0 0.0
        %3428 = vmatprep.subr.mxu0 0.0
        %3429 = vmatpush1.msra.mxu0 0.0
        %3430 = vmatprep.subr.mxu0 0.0
        %3431 = vmatpush1.msra.mxu0 0.0
        %3432 = vmatprep.subr.mxu0 0.0
        %3433 = vmatpush1.msra.mxu0 0.0
        %3434 = vmatprep.subr.mxu0 0.0
        %3435 = vmatpush1.msra.mxu0 0.0
        %3436 = vmatprep.subr.mxu0 0.0
        %3437 = vmatpush1.msra.mxu0 0.0
        %3438 = vmatprep.subr.mxu0 0.0
        %3439 = vmatpush1.msra.mxu0 0.0
        %3440 = vmatprep.subr.mxu0 0.0
        %3441 = vmatpush1.msra.mxu0 0.0
        %3442 = vmatprep.subr.mxu0 0.0
        %3443 = vmatpush1.msra.mxu0 0.0
        %3444 = vmatprep.subr.mxu0 0.0
        %3445 = vmatpush1.msra.mxu0 0.0
        %3446 = vmatprep.subr.mxu0 0.0
        %3447 = vmatpush1.msra.mxu0 0.0
        %3448 = vmatprep.subr.mxu0 0.0
        %3449 = vmatpush1.msra.mxu0 0.0
        %3450 = vmatprep.subr.mxu0 0.0
        %3451 = vmatpush1.msra.mxu0 0.0
        %3452 = vmatprep.subr.mxu0 0.0
        %3453 = vmatpush1.msra.mxu0 0.0
        %3454 = vmatprep.subr.mxu0 0.0
        %3455 = vmatpush1.msra.mxu0 0.0
        %3456 = vmatprep.mubr.f32.mxu0 0.0
        %3457 = vmatmul.mubr.f32.gmra.mrb[0].mxu0 %v3201
        %v3458 = vpop.f32.mrb[0].mxu0
        %v3459 = vadd.f32 0.0, %v3458
        %v3460 = vpop.f32.mrb[0].mxu0
        %3461 = vdwg.mxu0
        %v3462 = vadd.f32 %v3372, %v3459
        %v3463 = vld [vmem:[%s91] sm:$0x1]
        %v3465 = vlaneseq
        %v3466 = vshrl.u32 %v3465, 7
        %v3467 = vsub.s32 0, %v3466
        %v3468 = vrot.slane %v3463, %v3467
        %v3470 = vadd.f32 %v3462, %v3468
        %v3471 = vadd.f32 %v3470, %v2921
        %v3472 = vrot.slane %v3471, 7
        %v3473 = vsel %vm2122, 0.0, %v3472
        %v3474 = vrot.slane %v3471, 1
        %v3475 = vsel %vm2127, 0.0, %v3474
        %v3476 = vld [vmem:[#allocation67] sm:$0xff]
        %v3477 = vld [vmem:[#allocation67 + $0x8] sm:$0xff]
        %v3478 = vld [vmem:[#allocation67 + $0x10] sm:$0xff]
        %v3479 = vld [vmem:[#allocation67 + $0x18] sm:$0xff]
        %v3480 = vld [vmem:[#allocation67 + $0x20] sm:$0xff]
        %v3481 = vld [vmem:[#allocation67 + $0x28] sm:$0xff]
        %v3482 = vld [vmem:[#allocation67 + $0x30] sm:$0xff]
        %v3483 = vld [vmem:[#allocation67 + $0x38] sm:$0xff]
        %v3484 = vld [vmem:[#allocation67 + $0x40] sm:$0xff]
        %v3485 = vld [vmem:[#allocation67 + $0x48] sm:$0xff]
        %v3486 = vld [vmem:[#allocation67 + $0x50] sm:$0xff]
        %v3487 = vld [vmem:[#allocation67 + $0x58] sm:$0xff]
        %v3488 = vld [vmem:[#allocation67 + $0x60] sm:$0xff]
        %v3489 = vld [vmem:[#allocation67 + $0x68] sm:$0xff]
        %v3490 = vld [vmem:[#allocation67 + $0x70] sm:$0xff]
        %v3491 = vld [vmem:[#allocation67 + $0x78] sm:$0xff]
        %v3492 = vld [vmem:[#allocation68] sm:$0xff]
        %v3493 = vld [vmem:[#allocation68 + $0x8] sm:$0xff]
        %v3494 = vld [vmem:[#allocation68 + $0x10] sm:$0xff]
        %v3495 = vld [vmem:[#allocation68 + $0x18] sm:$0xff]
        %v3496 = vld [vmem:[#allocation68 + $0x20] sm:$0xff]
        %v3497 = vld [vmem:[#allocation68 + $0x28] sm:$0xff]
        %v3498 = vld [vmem:[#allocation68 + $0x30] sm:$0xff]
        %v3499 = vld [vmem:[#allocation68 + $0x38] sm:$0xff]
        %v3500 = vld [vmem:[#allocation68 + $0x40] sm:$0xff]
        %v3501 = vld [vmem:[#allocation68 + $0x48] sm:$0xff]
        %v3502 = vld [vmem:[#allocation68 + $0x50] sm:$0xff]
        %v3503 = vld [vmem:[#allocation68 + $0x58] sm:$0xff]
        %v3504 = vld [vmem:[#allocation68 + $0x60] sm:$0xff]
        %v3505 = vld [vmem:[#allocation68 + $0x68] sm:$0xff]
        %v3506 = vld [vmem:[#allocation68 + $0x70] sm:$0xff]
        %v3507 = vld [vmem:[#allocation68 + $0x78] sm:$0xff]
        %3508 = vmatprep.subr.mxu0 0.0
        %3509 = vmatpush1.msra.mxu0 %v3492
        %3510 = vmatprep.subr.mxu0 0.0
        %3511 = vmatpush1.msra.mxu0 %v3493
        %3512 = vmatprep.subr.mxu0 0.0
        %3513 = vmatpush1.msra.mxu0 %v3494
        %3514 = vmatprep.subr.mxu0 0.0
        %3515 = vmatpush1.msra.mxu0 %v3495
        %3516 = vmatprep.subr.mxu0 0.0
        %3517 = vmatpush1.msra.mxu0 %v3496
        %3518 = vmatprep.subr.mxu0 0.0
        %3519 = vmatpush1.msra.mxu0 %v3497
        %3520 = vmatprep.subr.mxu0 0.0
        %3521 = vmatpush1.msra.mxu0 %v3498
        %3522 = vmatprep.subr.mxu0 0.0
        %3523 = vmatpush1.msra.mxu0 %v3499
        %3524 = vmatprep.subr.mxu0 0.0
        %3525 = vmatpush1.msra.mxu0 %v3500
        %3526 = vmatprep.subr.mxu0 0.0
        %3527 = vmatpush1.msra.mxu0 %v3501
        %3528 = vmatprep.subr.mxu0 0.0
        %3529 = vmatpush1.msra.mxu0 %v3502
        %3530 = vmatprep.subr.mxu0 0.0
        %3531 = vmatpush1.msra.mxu0 %v3503
        %3532 = vmatprep.subr.mxu0 0.0
        %3533 = vmatpush1.msra.mxu0 %v3504
        %3534 = vmatprep.subr.mxu0 0.0
        %3535 = vmatpush1.msra.mxu0 %v3505
        %3536 = vmatprep.subr.mxu0 0.0
        %3537 = vmatpush1.msra.mxu0 %v3506
        %3538 = vmatprep.subr.mxu0 0.0
        %3539 = vmatpush1.msra.mxu0 %v3507
        %3540 = vmatprep.subr.mxu0 0.0
        %3541 = vmatpush1.msra.mxu0 0.0
        %3542 = vmatprep.subr.mxu0 0.0
        %3543 = vmatpush1.msra.mxu0 0.0
        %3544 = vmatprep.subr.mxu0 0.0
        %3545 = vmatpush1.msra.mxu0 0.0
        %3546 = vmatprep.subr.mxu0 0.0
        %3547 = vmatpush1.msra.mxu0 0.0
        %3548 = vmatprep.subr.mxu0 0.0
        %3549 = vmatpush1.msra.mxu0 0.0
        %3550 = vmatprep.subr.mxu0 0.0
        %3551 = vmatpush1.msra.mxu0 0.0
        %3552 = vmatprep.subr.mxu0 0.0
        %3553 = vmatpush1.msra.mxu0 0.0
        %3554 = vmatprep.subr.mxu0 0.0
        %3555 = vmatpush1.msra.mxu0 0.0
        %3556 = vmatprep.subr.mxu0 0.0
        %3557 = vmatpush1.msra.mxu0 0.0
        %3558 = vmatprep.subr.mxu0 0.0
        %3559 = vmatpush1.msra.mxu0 0.0
        %3560 = vmatprep.subr.mxu0 0.0
        %3561 = vmatpush1.msra.mxu0 0.0
        %3562 = vmatprep.subr.mxu0 0.0
        %3563 = vmatpush1.msra.mxu0 0.0
        %3564 = vmatprep.subr.mxu0 0.0
        %3565 = vmatpush1.msra.mxu0 0.0
        %3566 = vmatprep.subr.mxu0 0.0
        %3567 = vmatpush1.msra.mxu0 0.0
        %3568 = vmatprep.subr.mxu0 0.0
        %3569 = vmatpush1.msra.mxu0 0.0
        %3570 = vmatprep.subr.mxu0 0.0
        %3571 = vmatpush1.msra.mxu0 0.0
        %3572 = vmatprep.mubr.f32.mxu0 0.0
        %3573 = vmatmul.mubr.f32.gmra.mrb[0].mxu0 %v3471
        %v3574 = vpop.f32.mrb[0].mxu0
        %v3575 = vadd.f32 0.0, %v3574
        %v3576 = vpop.f32.mrb[0].mxu0
        %3577 = vdwg.mxu0
        %3578 = vmatprep.subr.mxu0 0.0
        %3579 = vmatpush1.msra.mxu0 %v3476
        %3580 = vmatprep.subr.mxu0 0.0
        %3581 = vmatpush1.msra.mxu0 %v3477
        %3582 = vmatprep.subr.mxu0 0.0
        %3583 = vmatpush1.msra.mxu0 %v3478
        %3584 = vmatprep.subr.mxu0 0.0
        %3585 = vmatpush1.msra.mxu0 %v3479
        %3586 = vmatprep.subr.mxu0 0.0
        %3587 = vmatpush1.msra.mxu0 %v3480
        %3588 = vmatprep.subr.mxu0 0.0
        %3589 = vmatpush1.msra.mxu0 %v3481
        %3590 = vmatprep.subr.mxu0 0.0
        %3591 = vmatpush1.msra.mxu0 %v3482
        %3592 = vmatprep.subr.mxu0 0.0
        %3593 = vmatpush1.msra.mxu0 %v3483
        %3594 = vmatprep.subr.mxu0 0.0
        %3595 = vmatpush1.msra.mxu0 %v3484
        %3596 = vmatprep.subr.mxu0 0.0
        %3597 = vmatpush1.msra.mxu0 %v3485
        %3598 = vmatprep.subr.mxu0 0.0
        %3599 = vmatpush1.msra.mxu0 %v3486
        %3600 = vmatprep.subr.mxu0 0.0
        %3601 = vmatpush1.msra.mxu0 %v3487
        %3602 = vmatprep.subr.mxu0 0.0
        %3603 = vmatpush1.msra.mxu0 %v3488
        %3604 = vmatprep.subr.mxu0 0.0
        %3605 = vmatpush1.msra.mxu0 %v3489
        %3606 = vmatprep.subr.mxu0 0.0
        %3607 = vmatpush1.msra.mxu0 %v3490
        %3608 = vmatprep.subr.mxu0 0.0
        %3609 = vmatpush1.msra.mxu0 %v3491
        %3610 = vmatprep.subr.mxu0 0.0
        %3611 = vmatpush1.msra.mxu0 0.0
        %3612 = vmatprep.subr.mxu0 0.0
        %3613 = vmatpush1.msra.mxu0 0.0
        %3614 = vmatprep.subr.mxu0 0.0
        %3615 = vmatpush1.msra.mxu0 0.0
        %3616 = vmatprep.subr.mxu0 0.0
        %3617 = vmatpush1.msra.mxu0 0.0
        %3618 = vmatprep.subr.mxu0 0.0
        %3619 = vmatpush1.msra.mxu0 0.0
        %3620 = vmatprep.subr.mxu0 0.0
        %3621 = vmatpush1.msra.mxu0 0.0
        %3622 = vmatprep.subr.mxu0 0.0
        %3623 = vmatpush1.msra.mxu0 0.0
        %3624 = vmatprep.subr.mxu0 0.0
        %3625 = vmatpush1.msra.mxu0 0.0
        %3626 = vmatprep.subr.mxu0 0.0
        %3627 = vmatpush1.msra.mxu0 0.0
        %3628 = vmatprep.subr.mxu0 0.0
        %3629 = vmatpush1.msra.mxu0 0.0
        %3630 = vmatprep.subr.mxu0 0.0
        %3631 = vmatpush1.msra.mxu0 0.0
        %3632 = vmatprep.subr.mxu0 0.0
        %3633 = vmatpush1.msra.mxu0 0.0
        %3634 = vmatprep.subr.mxu0 0.0
        %3635 = vmatpush1.msra.mxu0 0.0
        %3636 = vmatprep.subr.mxu0 0.0
        %3637 = vmatpush1.msra.mxu0 0.0
        %3638 = vmatprep.subr.mxu0 0.0
        %3639 = vmatpush1.msra.mxu0 0.0
        %3640 = vmatprep.subr.mxu0 0.0
        %3641 = vmatpush1.msra.mxu0 0.0
        %3642 = vmatprep.mubr.f32.mxu0 0.0
        %3643 = vmatmul.mubr.f32.gmra.mrb[0].mxu0 %v3473
        %v3644 = vpop.f32.mrb[0].mxu0
        %v3645 = vadd.f32 %v3575, %v3644
        %v3646 = vpop.f32.mrb[0].mxu0
        %3647 = vdwg.mxu0
        %v3648 = vld [vmem:[%s101] sm:$0x1]
        %v3650 = vlaneseq
        %v3651 = vshrl.u32 %v3650, 7
        %v3652 = vsub.s32 0, %v3651
        %v3653 = vrot.slane %v3648, %v3652
        %v3655 = vadd.f32 %v3645, %v3653
        %v3656 = vld [vmem:[#allocation70] sm:$0xff]
        %v3657 = vld [vmem:[#allocation70 + $0x8] sm:$0xff]
        %v3658 = vld [vmem:[#allocation70 + $0x10] sm:$0xff]
        %v3659 = vld [vmem:[#allocation70 + $0x18] sm:$0xff]
        %v3660 = vld [vmem:[#allocation70 + $0x20] sm:$0xff]
        %v3661 = vld [vmem:[#allocation70 + $0x28] sm:$0xff]
        %v3662 = vld [vmem:[#allocation70 + $0x30] sm:$0xff]
        %v3663 = vld [vmem:[#allocation70 + $0x38] sm:$0xff]
        %v3664 = vld [vmem:[#allocation70 + $0x40] sm:$0xff]
        %v3665 = vld [vmem:[#allocation70 + $0x48] sm:$0xff]
        %v3666 = vld [vmem:[#allocation70 + $0x50] sm:$0xff]
        %v3667 = vld [vmem:[#allocation70 + $0x58] sm:$0xff]
        %v3668 = vld [vmem:[#allocation70 + $0x60] sm:$0xff]
        %v3669 = vld [vmem:[#allocation70 + $0x68] sm:$0xff]
        %v3670 = vld [vmem:[#allocation70 + $0x70] sm:$0xff]
        %v3671 = vld [vmem:[#allocation70 + $0x78] sm:$0xff]
        %v3672 = vld [vmem:[#allocation71] sm:$0xff]
        %v3673 = vld [vmem:[#allocation71 + $0x8] sm:$0xff]
        %v3674 = vld [vmem:[#allocation71 + $0x10] sm:$0xff]
        %v3675 = vld [vmem:[#allocation71 + $0x18] sm:$0xff]
        %v3676 = vld [vmem:[#allocation71 + $0x20] sm:$0xff]
        %v3677 = vld [vmem:[#allocation71 + $0x28] sm:$0xff]
        %v3678 = vld [vmem:[#allocation71 + $0x30] sm:$0xff]
        %v3679 = vld [vmem:[#allocation71 + $0x38] sm:$0xff]
        %v3680 = vld [vmem:[#allocation71 + $0x40] sm:$0xff]
        %v3681 = vld [vmem:[#allocation71 + $0x48] sm:$0xff]
        %v3682 = vld [vmem:[#allocation71 + $0x50] sm:$0xff]
        %v3683 = vld [vmem:[#allocation71 + $0x58] sm:$0xff]
        %v3684 = vld [vmem:[#allocation71 + $0x60] sm:$0xff]
        %v3685 = vld [vmem:[#allocation71 + $0x68] sm:$0xff]
        %v3686 = vld [vmem:[#allocation71 + $0x70] sm:$0xff]
        %v3687 = vld [vmem:[#allocation71 + $0x78] sm:$0xff]
        %3688 = vmatprep.subr.mxu0 0.0
        %3689 = vmatpush1.msra.mxu0 %v3672
        %3690 = vmatprep.subr.mxu0 0.0
        %3691 = vmatpush1.msra.mxu0 %v3673
        %3692 = vmatprep.subr.mxu0 0.0
        %3693 = vmatpush1.msra.mxu0 %v3674
        %3694 = vmatprep.subr.mxu0 0.0
        %3695 = vmatpush1.msra.mxu0 %v3675
        %3696 = vmatprep.subr.mxu0 0.0
        %3697 = vmatpush1.msra.mxu0 %v3676
        %3698 = vmatprep.subr.mxu0 0.0
        %3699 = vmatpush1.msra.mxu0 %v3677
        %3700 = vmatprep.subr.mxu0 0.0
        %3701 = vmatpush1.msra.mxu0 %v3678
        %3702 = vmatprep.subr.mxu0 0.0
        %3703 = vmatpush1.msra.mxu0 %v3679
        %3704 = vmatprep.subr.mxu0 0.0
        %3705 = vmatpush1.msra.mxu0 %v3680
        %3706 = vmatprep.subr.mxu0 0.0
        %3707 = vmatpush1.msra.mxu0 %v3681
        %3708 = vmatprep.subr.mxu0 0.0
        %3709 = vmatpush1.msra.mxu0 %v3682
        %3710 = vmatprep.subr.mxu0 0.0
        %3711 = vmatpush1.msra.mxu0 %v3683
        %3712 = vmatprep.subr.mxu0 0.0
        %3713 = vmatpush1.msra.mxu0 %v3684
        %3714 = vmatprep.subr.mxu0 0.0
        %3715 = vmatpush1.msra.mxu0 %v3685
        %3716 = vmatprep.subr.mxu0 0.0
        %3717 = vmatpush1.msra.mxu0 %v3686
        %3718 = vmatprep.subr.mxu0 0.0
        %3719 = vmatpush1.msra.mxu0 %v3687
        %3720 = vmatprep.subr.mxu0 0.0
        %3721 = vmatpush1.msra.mxu0 0.0
        %3722 = vmatprep.subr.mxu0 0.0
        %3723 = vmatpush1.msra.mxu0 0.0
        %3724 = vmatprep.subr.mxu0 0.0
        %3725 = vmatpush1.msra.mxu0 0.0
        %3726 = vmatprep.subr.mxu0 0.0
        %3727 = vmatpush1.msra.mxu0 0.0
        %3728 = vmatprep.subr.mxu0 0.0
        %3729 = vmatpush1.msra.mxu0 0.0
        %3730 = vmatprep.subr.mxu0 0.0
        %3731 = vmatpush1.msra.mxu0 0.0
        %3732 = vmatprep.subr.mxu0 0.0
        %3733 = vmatpush1.msra.mxu0 0.0
        %3734 = vmatprep.subr.mxu0 0.0
        %3735 = vmatpush1.msra.mxu0 0.0
        %3736 = vmatprep.subr.mxu0 0.0
        %3737 = vmatpush1.msra.mxu0 0.0
        %3738 = vmatprep.subr.mxu0 0.0
        %3739 = vmatpush1.msra.mxu0 0.0
        %3740 = vmatprep.subr.mxu0 0.0
        %3741 = vmatpush1.msra.mxu0 0.0
        %3742 = vmatprep.subr.mxu0 0.0
        %3743 = vmatpush1.msra.mxu0 0.0
        %3744 = vmatprep.subr.mxu0 0.0
        %3745 = vmatpush1.msra.mxu0 0.0
        %3746 = vmatprep.subr.mxu0 0.0
        %3747 = vmatpush1.msra.mxu0 0.0
        %3748 = vmatprep.subr.mxu0 0.0
        %3749 = vmatpush1.msra.mxu0 0.0
        %3750 = vmatprep.subr.mxu0 0.0
        %3751 = vmatpush1.msra.mxu0 0.0
        %3752 = vmatprep.mubr.f32.mxu0 0.0
        %3753 = vmatmul.mubr.f32.gmra.mrb[0].mxu0 %v3475
        %v3754 = vpop.f32.mrb[0].mxu0
        %v3755 = vadd.f32 0.0, %v3754
        %v3756 = vpop.f32.mrb[0].mxu0
        %3757 = vdwg.mxu0
        %3758 = vmatprep.subr.mxu0 0.0
        %3759 = vmatpush1.msra.mxu0 %v3656
        %3760 = vmatprep.subr.mxu0 0.0
        %3761 = vmatpush1.msra.mxu0 %v3657
        %3762 = vmatprep.subr.mxu0 0.0
        %3763 = vmatpush1.msra.mxu0 %v3658
        %3764 = vmatprep.subr.mxu0 0.0
        %3765 = vmatpush1.msra.mxu0 %v3659
        %3766 = vmatprep.subr.mxu0 0.0
        %3767 = vmatpush1.msra.mxu0 %v3660
        %3768 = vmatprep.subr.mxu0 0.0
        %3769 = vmatpush1.msra.mxu0 %v3661
        %3770 = vmatprep.subr.mxu0 0.0
        %3771 = vmatpush1.msra.mxu0 %v3662
        %3772 = vmatprep.subr.mxu0 0.0
        %3773 = vmatpush1.msra.mxu0 %v3663
        %3774 = vmatprep.subr.mxu0 0.0
        %3775 = vmatpush1.msra.mxu0 %v3664
        %3776 = vmatprep.subr.mxu0 0.0
        %3777 = vmatpush1.msra.mxu0 %v3665
        %3778 = vmatprep.subr.mxu0 0.0
        %3779 = vmatpush1.msra.mxu0 %v3666
        %3780 = vmatprep.subr.mxu0 0.0
        %3781 = vmatpush1.msra.mxu0 %v3667
        %3782 = vmatprep.subr.mxu0 0.0
        %3783 = vmatpush1.msra.mxu0 %v3668
        %3784 = vmatprep.subr.mxu0 0.0
        %3785 = vmatpush1.msra.mxu0 %v3669
        %3786 = vmatprep.subr.mxu0 0.0
        %3787 = vmatpush1.msra.mxu0 %v3670
        %3788 = vmatprep.subr.mxu0 0.0
        %3789 = vmatpush1.msra.mxu0 %v3671
        %3790 = vmatprep.subr.mxu0 0.0
        %3791 = vmatpush1.msra.mxu0 0.0
        %3792 = vmatprep.subr.mxu0 0.0
        %3793 = vmatpush1.msra.mxu0 0.0
        %3794 = vmatprep.subr.mxu0 0.0
        %3795 = vmatpush1.msra.mxu0 0.0
        %3796 = vmatprep.subr.mxu0 0.0
        %3797 = vmatpush1.msra.mxu0 0.0
        %3798 = vmatprep.subr.mxu0 0.0
        %3799 = vmatpush1.msra.mxu0 0.0
        %3800 = vmatprep.subr.mxu0 0.0
        %3801 = vmatpush1.msra.mxu0 0.0
        %3802 = vmatprep.subr.mxu0 0.0
        %3803 = vmatpush1.msra.mxu0 0.0
        %3804 = vmatprep.subr.mxu0 0.0
        %3805 = vmatpush1.msra.mxu0 0.0
        %3806 = vmatprep.subr.mxu0 0.0
        %3807 = vmatpush1.msra.mxu0 0.0
        %3808 = vmatprep.subr.mxu0 0.0
        %3809 = vmatpush1.msra.mxu0 0.0
        %3810 = vmatprep.subr.mxu0 0.0
        %3811 = vmatpush1.msra.mxu0 0.0
        %3812 = vmatprep.subr.mxu0 0.0
        %3813 = vmatpush1.msra.mxu0 0.0
        %3814 = vmatprep.subr.mxu0 0.0
        %3815 = vmatpush1.msra.mxu0 0.0
        %3816 = vmatprep.subr.mxu0 0.0
        %3817 = vmatpush1.msra.mxu0 0.0
        %3818 = vmatprep.subr.mxu0 0.0
        %3819 = vmatpush1.msra.mxu0 0.0
        %3820 = vmatprep.subr.mxu0 0.0
        %3821 = vmatpush1.msra.mxu0 0.0
        %3822 = vmatprep.mubr.f32.mxu0 0.0
        %3823 = vmatmul.mubr.f32.gmra.mrb[0].mxu0 %v3471
        %v3824 = vpop.f32.mrb[0].mxu0
        %v3825 = vadd.f32 %v3755, %v3824
        %v3826 = vpop.f32.mrb[0].mxu0
        %3827 = vdwg.mxu0
        %v3828 = vadd.f32 %v3825, %v3653
        %3829 = vst [vmem:[#allocation2] sm:$0xff] %v3655
        %3830 = vst [vmem:[#allocation3] sm:$0xff] %v3828
        %v3831 = vld [vmem:[#allocation2] sm:$0x1]
        %3832 = vst [vmem:[#allocation4] sm:$0x1] %v3831
        %v3833 = vld [vmem:[#allocation3] sm:$0x1]
        %3834 = vst [vmem:[#allocation4 + $0x1] sm:$0x1] %v3833
        %v3835 = vld [vmem:[#allocation2 + $0x1] sm:$0x1]
        %3836 = vst [vmem:[#allocation4 + $0x2] sm:$0x1] %v3835
        %v3837 = vld [vmem:[#allocation3 + $0x1] sm:$0x1]
        %3838 = vst [vmem:[#allocation4 + $0x3] sm:$0x1] %v3837
        %v3839 = vld [vmem:[#allocation2 + $0x2] sm:$0x1]
        %3840 = vst [vmem:[#allocation4 + $0x4] sm:$0x1] %v3839
        %v3841 = vld [vmem:[#allocation3 + $0x2] sm:$0x1]
        %3842 = vst [vmem:[#allocation4 + $0x5] sm:$0x1] %v3841
        %v3843 = vld [vmem:[#allocation2 + $0x3] sm:$0x1]
        %3844 = vst [vmem:[#allocation4 + $0x6] sm:$0x1] %v3843
        %v3845 = vld [vmem:[#allocation3 + $0x3] sm:$0x1]
        %3846 = vst [vmem:[#allocation4 + $0x7] sm:$0x1] %v3845
        %v3847 = vld [vmem:[#allocation2 + $0x4] sm:$0x1]
        %3848 = vst [vmem:[#allocation4 + $0x8] sm:$0x1] %v3847
        %v3849 = vld [vmem:[#allocation3 + $0x4] sm:$0x1]
        %3850 = vst [vmem:[#allocation4 + $0x9] sm:$0x1] %v3849
        %v3851 = vld [vmem:[#allocation2 + $0x5] sm:$0x1]
        %3852 = vst [vmem:[#allocation4 + $0xa] sm:$0x1] %v3851
        %v3853 = vld [vmem:[#allocation3 + $0x5] sm:$0x1]
        %3854 = vst [vmem:[#allocation4 + $0xb] sm:$0x1] %v3853
        %v3855 = vld [vmem:[#allocation2 + $0x6] sm:$0x1]
        %3856 = vst [vmem:[#allocation4 + $0xc] sm:$0x1] %v3855
        %v3857 = vld [vmem:[#allocation3 + $0x6] sm:$0x1]
        %3858 = vst [vmem:[#allocation4 + $0xd] sm:$0x1] %v3857
        %v3859 = vld [vmem:[#allocation2 + $0x7] sm:$0x1]
        %3860 = vst [vmem:[#allocation4 + $0xe] sm:$0x1] %v3859
        %v3861 = vld [vmem:[#allocation3 + $0x7] sm:$0x1]
        %3862 = vst [vmem:[#allocation4 + $0xf] sm:$0x1] %v3861
        %v3863 = vld [vmem:[#allocation4] sm:$0xff]
        %v3864 = vld [vmem:[#allocation4 + $0x8] sm:$0xff]
        %vm3865 = vcmp.ge.f32.partialorder %v3863, 0.0
        %vm3866 = vcmp.ge.f32.partialorder %v3864, 0.0
        %v3867 = vmul.f32 %v3863, 0.2
        %v3868 = vmul.f32 %v3864, 0.2
        %v3869 = vsel %vm3865, %v3863, %v3867
        %v3870 = vsel %vm3866, %v3864, %v3868
        %v3871 = vld [vmem:[#allocation59] sm:$0xff]
        %v3872 = vld [vmem:[#allocation59 + $0x8] sm:$0xff]
        %v3873 = vadd.f32 %v3869, %v3871
        %v3874 = vadd.f32 %v3870, %v3872
        %v3875 = vlaneseq
        %v3876 = vand.u32 %v3875, 127
        %v3877 = vld [vmem:[#allocation32] sm:$0xff]
        %v3878 = vld [vmem:[#allocation32 + $0x8] sm:$0xff]
        %v3879 = vld [vmem:[#allocation32 + $0x10] sm:$0xff]
        %v3880 = vld [vmem:[#allocation32 + $0x18] sm:$0xff]
        %v3881 = vld [vmem:[#allocation32 + $0x20] sm:$0xff]
        %v3882 = vld [vmem:[#allocation32 + $0x28] sm:$0xff]
        %v3883 = vld [vmem:[#allocation32 + $0x30] sm:$0xff]
        %v3884 = vld [vmem:[#allocation32 + $0x38] sm:$0xff]
        %v3885 = vld [vmem:[#allocation32 + $0x40] sm:$0xff]
        %v3886 = vld [vmem:[#allocation32 + $0x48] sm:$0xff]
        %v3887 = vld [vmem:[#allocation32 + $0x50] sm:$0xff]
        %v3888 = vld [vmem:[#allocation32 + $0x58] sm:$0xff]
        %v3889 = vld [vmem:[#allocation32 + $0x60] sm:$0xff]
        %v3890 = vld [vmem:[#allocation32 + $0x68] sm:$0xff]
        %v3891 = vld [vmem:[#allocation32 + $0x70] sm:$0xff]
        %v3892 = vld [vmem:[#allocation32 + $0x78] sm:$0xff]
        %v3893 = vld [vmem:[#allocation17] sm:$0x1]
        %v3895 = vlaneseq
        %v3896 = vshrl.u32 %v3895, 7
        %v3897 = vsub.s32 0, %v3896
        %v3898 = vrot.slane %v3893, %v3897
        %3900 = vmatprep.subr.mxu0 0.0
        %3901 = vmatpush1.msra.mxu0 %v3877
        %3902 = vmatprep.subr.mxu0 0.0
        %3903 = vmatpush1.msra.mxu0 %v3878
        %3904 = vmatprep.subr.mxu0 0.0
        %3905 = vmatpush1.msra.mxu0 %v3879
        %3906 = vmatprep.subr.mxu0 0.0
        %3907 = vmatpush1.msra.mxu0 %v3880
        %3908 = vmatprep.subr.mxu0 0.0
        %3909 = vmatpush1.msra.mxu0 %v3881
        %3910 = vmatprep.subr.mxu0 0.0
        %3911 = vmatpush1.msra.mxu0 %v3882
        %3912 = vmatprep.subr.mxu0 0.0
        %3913 = vmatpush1.msra.mxu0 %v3883
        %3914 = vmatprep.subr.mxu0 0.0
        %3915 = vmatpush1.msra.mxu0 %v3884
        %3916 = vmatprep.subr.mxu0 0.0
        %3917 = vmatpush1.msra.mxu0 %v3885
        %3918 = vmatprep.subr.mxu0 0.0
        %3919 = vmatpush1.msra.mxu0 %v3886
        %3920 = vmatprep.subr.mxu0 0.0
        %3921 = vmatpush1.msra.mxu0 %v3887
        %3922 = vmatprep.subr.mxu0 0.0
        %3923 = vmatpush1.msra.mxu0 %v3888
        %3924 = vmatprep.subr.mxu0 0.0
        %3925 = vmatpush1.msra.mxu0 %v3889
        %3926 = vmatprep.subr.mxu0 0.0
        %3927 = vmatpush1.msra.mxu0 %v3890
        %3928 = vmatprep.subr.mxu0 0.0
        %3929 = vmatpush1.msra.mxu0 %v3891
        %3930 = vmatprep.subr.mxu0 0.0
        %3931 = vmatpush1.msra.mxu0 %v3892
        %3932 = vmatprep.subr.mxu0 0.0
        %3933 = vmatpush1.msra.mxu0 0.0
        %3934 = vmatprep.subr.mxu0 0.0
        %3935 = vmatpush1.msra.mxu0 0.0
        %3936 = vmatprep.subr.mxu0 0.0
        %3937 = vmatpush1.msra.mxu0 0.0
        %3938 = vmatprep.subr.mxu0 0.0
        %3939 = vmatpush1.msra.mxu0 0.0
        %3940 = vmatprep.subr.mxu0 0.0
        %3941 = vmatpush1.msra.mxu0 0.0
        %3942 = vmatprep.subr.mxu0 0.0
        %3943 = vmatpush1.msra.mxu0 0.0
        %3944 = vmatprep.subr.mxu0 0.0
        %3945 = vmatpush1.msra.mxu0 0.0
        %3946 = vmatprep.subr.mxu0 0.0
        %3947 = vmatpush1.msra.mxu0 0.0
        %3948 = vmatprep.subr.mxu0 0.0
        %3949 = vmatpush1.msra.mxu0 0.0
        %3950 = vmatprep.subr.mxu0 0.0
        %3951 = vmatpush1.msra.mxu0 0.0
        %3952 = vmatprep.subr.mxu0 0.0
        %3953 = vmatpush1.msra.mxu0 0.0
        %3954 = vmatprep.subr.mxu0 0.0
        %3955 = vmatpush1.msra.mxu0 0.0
        %3956 = vmatprep.subr.mxu0 0.0
        %3957 = vmatpush1.msra.mxu0 0.0
        %3958 = vmatprep.subr.mxu0 0.0
        %3959 = vmatpush1.msra.mxu0 0.0
        %3960 = vmatprep.subr.mxu0 0.0
        %3961 = vmatpush1.msra.mxu0 0.0
        %3962 = vmatprep.subr.mxu0 0.0
        %3963 = vmatpush1.msra.mxu0 0.0
        %3964 = vmatprep.mubr.f32.mxu0 0.0
        %3965 = vmatmul.mubr.f32.gmra.mrb[0].mxu0 %v3873
        %v3966 = vpop.f32.mrb[0].mxu0
        %v3967 = vadd.f32 %v3898, %v3966
        %v3968 = vpop.f32.mrb[0].mxu0
        %3969 = vmatprep.mubr.f32.mxu0 0.0
        %3970 = vmatmul.mubr.f32.gmra.mrb[0].mxu0 %v3874
        %v3971 = vpop.f32.mrb[0].mxu0
        %v3972 = vadd.f32 %v3898, %v3971
        %v3973 = vpop.f32.mrb[0].mxu0
        %3974 = vdwg.mxu0
        %v3975 = vld [vmem:[#allocation29] sm:$0xff]
        %v3976 = vld [vmem:[#allocation29 + $0x8] sm:$0xff]
        %v3977 = vld [vmem:[#allocation29 + $0x10] sm:$0xff]
        %v3978 = vld [vmem:[#allocation29 + $0x18] sm:$0xff]
        %v3979 = vld [vmem:[#allocation29 + $0x20] sm:$0xff]
        %v3980 = vld [vmem:[#allocation29 + $0x28] sm:$0xff]
        %v3981 = vld [vmem:[#allocation29 + $0x30] sm:$0xff]
        %v3982 = vld [vmem:[#allocation29 + $0x38] sm:$0xff]
        %v3983 = vld [vmem:[#allocation29 + $0x40] sm:$0xff]
        %v3984 = vld [vmem:[#allocation29 + $0x48] sm:$0xff]
        %v3985 = vld [vmem:[#allocation29 + $0x50] sm:$0xff]
        %v3986 = vld [vmem:[#allocation29 + $0x58] sm:$0xff]
        %v3987 = vld [vmem:[#allocation29 + $0x60] sm:$0xff]
        %v3988 = vld [vmem:[#allocation29 + $0x68] sm:$0xff]
        %v3989 = vld [vmem:[#allocation29 + $0x70] sm:$0xff]
        %v3990 = vld [vmem:[#allocation29 + $0x78] sm:$0xff]
        %v3991 = vld [vmem:[#allocation14] sm:$0x1]
        %v3993 = vlaneseq
        %v3994 = vshrl.u32 %v3993, 7
        %v3995 = vsub.s32 0, %v3994
        %v3996 = vrot.slane %v3991, %v3995
        %3998 = vmatprep.subr.mxu0 0.0
        %3999 = vmatpush1.msra.mxu0 %v3975
        %4000 = vmatprep.subr.mxu0 0.0
        %4001 = vmatpush1.msra.mxu0 %v3976
        %4002 = vmatprep.subr.mxu0 0.0
        %4003 = vmatpush1.msra.mxu0 %v3977
        %4004 = vmatprep.subr.mxu0 0.0
        %4005 = vmatpush1.msra.mxu0 %v3978
        %4006 = vmatprep.subr.mxu0 0.0
        %4007 = vmatpush1.msra.mxu0 %v3979
        %4008 = vmatprep.subr.mxu0 0.0
        %4009 = vmatpush1.msra.mxu0 %v3980
        %4010 = vmatprep.subr.mxu0 0.0
        %4011 = vmatpush1.msra.mxu0 %v3981
        %4012 = vmatprep.subr.mxu0 0.0
        %4013 = vmatpush1.msra.mxu0 %v3982
        %4014 = vmatprep.subr.mxu0 0.0
        %4015 = vmatpush1.msra.mxu0 %v3983
        %4016 = vmatprep.subr.mxu0 0.0
        %4017 = vmatpush1.msra.mxu0 %v3984
        %4018 = vmatprep.subr.mxu0 0.0
        %4019 = vmatpush1.msra.mxu0 %v3985
        %4020 = vmatprep.subr.mxu0 0.0
        %4021 = vmatpush1.msra.mxu0 %v3986
        %4022 = vmatprep.subr.mxu0 0.0
        %4023 = vmatpush1.msra.mxu0 %v3987
        %4024 = vmatprep.subr.mxu0 0.0
        %4025 = vmatpush1.msra.mxu0 %v3988
        %4026 = vmatprep.subr.mxu0 0.0
        %4027 = vmatpush1.msra.mxu0 %v3989
        %4028 = vmatprep.subr.mxu0 0.0
        %4029 = vmatpush1.msra.mxu0 %v3990
        %4030 = vmatprep.subr.mxu0 0.0
        %4031 = vmatpush1.msra.mxu0 0.0
        %4032 = vmatprep.subr.mxu0 0.0
        %4033 = vmatpush1.msra.mxu0 0.0
        %4034 = vmatprep.subr.mxu0 0.0
        %4035 = vmatpush1.msra.mxu0 0.0
        %4036 = vmatprep.subr.mxu0 0.0
        %4037 = vmatpush1.msra.mxu0 0.0
        %4038 = vmatprep.subr.mxu0 0.0
        %4039 = vmatpush1.msra.mxu0 0.0
        %4040 = vmatprep.subr.mxu0 0.0
        %4041 = vmatpush1.msra.mxu0 0.0
        %4042 = vmatprep.subr.mxu0 0.0
        %4043 = vmatpush1.msra.mxu0 0.0
        %4044 = vmatprep.subr.mxu0 0.0
        %4045 = vmatpush1.msra.mxu0 0.0
        %4046 = vmatprep.subr.mxu0 0.0
        %4047 = vmatpush1.msra.mxu0 0.0
        %4048 = vmatprep.subr.mxu0 0.0
        %4049 = vmatpush1.msra.mxu0 0.0
        %4050 = vmatprep.subr.mxu0 0.0
        %4051 = vmatpush1.msra.mxu0 0.0
        %4052 = vmatprep.subr.mxu0 0.0
        %4053 = vmatpush1.msra.mxu0 0.0
        %4054 = vmatprep.subr.mxu0 0.0
        %4055 = vmatpush1.msra.mxu0 0.0
        %4056 = vmatprep.subr.mxu0 0.0
        %4057 = vmatpush1.msra.mxu0 0.0
        %4058 = vmatprep.subr.mxu0 0.0
        %4059 = vmatpush1.msra.mxu0 0.0
        %4060 = vmatprep.subr.mxu0 0.0
        %4061 = vmatpush1.msra.mxu0 0.0
        %4062 = vmatprep.mubr.f32.mxu0 0.0
        %4063 = vmatmul.mubr.f32.gmra.mrb[0].mxu0 %v3873
        %v4064 = vpop.f32.mrb[0].mxu0
        %v4065 = vadd.f32 %v3996, %v4064
        %v4066 = vpop.f32.mrb[0].mxu0
        %4067 = vmatprep.mubr.f32.mxu0 0.0
        %4068 = vmatmul.mubr.f32.gmra.mrb[0].mxu0 %v3874
        %v4069 = vpop.f32.mrb[0].mxu0
        %v4070 = vadd.f32 %v3996, %v4069
        %v4071 = vpop.f32.mrb[0].mxu0
        %4072 = vdwg.mxu0
        %v4073 = vld [vmem:[#allocation34] sm:$0xff]
        %v4074 = vld [vmem:[#allocation34 + $0x8] sm:$0xff]
        %v4075 = vld [vmem:[#allocation34 + $0x10] sm:$0xff]
        %v4076 = vld [vmem:[#allocation34 + $0x18] sm:$0xff]
        %v4077 = vld [vmem:[#allocation34 + $0x20] sm:$0xff]
        %v4078 = vld [vmem:[#allocation34 + $0x28] sm:$0xff]
        %v4079 = vld [vmem:[#allocation34 + $0x30] sm:$0xff]
        %v4080 = vld [vmem:[#allocation34 + $0x38] sm:$0xff]
        %v4081 = vld [vmem:[#allocation34 + $0x40] sm:$0xff]
        %v4082 = vld [vmem:[#allocation34 + $0x48] sm:$0xff]
        %v4083 = vld [vmem:[#allocation34 + $0x50] sm:$0xff]
        %v4084 = vld [vmem:[#allocation34 + $0x58] sm:$0xff]
        %v4085 = vld [vmem:[#allocation34 + $0x60] sm:$0xff]
        %v4086 = vld [vmem:[#allocation34 + $0x68] sm:$0xff]
        %v4087 = vld [vmem:[#allocation34 + $0x70] sm:$0xff]
        %v4088 = vld [vmem:[#allocation34 + $0x78] sm:$0xff]
        %v4089 = vld [vmem:[#allocation19] sm:$0x1]
        %v4091 = vlaneseq
        %v4092 = vshrl.u32 %v4091, 7
        %v4093 = vsub.s32 0, %v4092
        %v4094 = vrot.slane %v4089, %v4093
        %4096 = vmatprep.subr.mxu0 0.0
        %4097 = vmatpush1.msra.mxu0 %v4073
        %4098 = vmatprep.subr.mxu0 0.0
        %4099 = vmatpush1.msra.mxu0 %v4074
        %4100 = vmatprep.subr.mxu0 0.0
        %4101 = vmatpush1.msra.mxu0 %v4075
        %4102 = vmatprep.subr.mxu0 0.0
        %4103 = vmatpush1.msra.mxu0 %v4076
        %4104 = vmatprep.subr.mxu0 0.0
        %4105 = vmatpush1.msra.mxu0 %v4077
        %4106 = vmatprep.subr.mxu0 0.0
        %4107 = vmatpush1.msra.mxu0 %v4078
        %4108 = vmatprep.subr.mxu0 0.0
        %4109 = vmatpush1.msra.mxu0 %v4079
        %4110 = vmatprep.subr.mxu0 0.0
        %4111 = vmatpush1.msra.mxu0 %v4080
        %4112 = vmatprep.subr.mxu0 0.0
        %4113 = vmatpush1.msra.mxu0 %v4081
        %4114 = vmatprep.subr.mxu0 0.0
        %4115 = vmatpush1.msra.mxu0 %v4082
        %4116 = vmatprep.subr.mxu0 0.0
        %4117 = vmatpush1.msra.mxu0 %v4083
        %4118 = vmatprep.subr.mxu0 0.0
        %4119 = vmatpush1.msra.mxu0 %v4084
        %4120 = vmatprep.subr.mxu0 0.0
        %4121 = vmatpush1.msra.mxu0 %v4085
        %4122 = vmatprep.subr.mxu0 0.0
        %4123 = vmatpush1.msra.mxu0 %v4086
        %4124 = vmatprep.subr.mxu0 0.0
        %4125 = vmatpush1.msra.mxu0 %v4087
        %4126 = vmatprep.subr.mxu0 0.0
        %4127 = vmatpush1.msra.mxu0 %v4088
        %4128 = vmatprep.subr.mxu0 0.0
        %4129 = vmatpush1.msra.mxu0 0.0
        %4130 = vmatprep.subr.mxu0 0.0
        %4131 = vmatpush1.msra.mxu0 0.0
        %4132 = vmatprep.subr.mxu0 0.0
        %4133 = vmatpush1.msra.mxu0 0.0
        %4134 = vmatprep.subr.mxu0 0.0
        %4135 = vmatpush1.msra.mxu0 0.0
        %4136 = vmatprep.subr.mxu0 0.0
        %4137 = vmatpush1.msra.mxu0 0.0
        %4138 = vmatprep.subr.mxu0 0.0
        %4139 = vmatpush1.msra.mxu0 0.0
        %4140 = vmatprep.subr.mxu0 0.0
        %4141 = vmatpush1.msra.mxu0 0.0
        %4142 = vmatprep.subr.mxu0 0.0
        %4143 = vmatpush1.msra.mxu0 0.0
        %4144 = vmatprep.subr.mxu0 0.0
        %4145 = vmatpush1.msra.mxu0 0.0
        %4146 = vmatprep.subr.mxu0 0.0
        %4147 = vmatpush1.msra.mxu0 0.0
        %4148 = vmatprep.subr.mxu0 0.0
        %4149 = vmatpush1.msra.mxu0 0.0
        %4150 = vmatprep.subr.mxu0 0.0
        %4151 = vmatpush1.msra.mxu0 0.0
        %4152 = vmatprep.subr.mxu0 0.0
        %4153 = vmatpush1.msra.mxu0 0.0
        %4154 = vmatprep.subr.mxu0 0.0
        %4155 = vmatpush1.msra.mxu0 0.0
        %4156 = vmatprep.subr.mxu0 0.0
        %4157 = vmatpush1.msra.mxu0 0.0
        %4158 = vmatprep.subr.mxu0 0.0
        %4159 = vmatpush1.msra.mxu0 0.0
        %4160 = vmatprep.mubr.f32.mxu0 0.0
        %4161 = vmatmul.mubr.f32.gmra.mrb[0].mxu0 %v3873
        %v4162 = vpop.f32.mrb[0].mxu0
        %v4163 = vadd.f32 %v4094, %v4162
        %v4164 = vpop.f32.mrb[0].mxu0
        %4165 = vmatprep.mubr.f32.mxu0 0.0
        %4166 = vmatmul.mubr.f32.gmra.mrb[0].mxu0 %v3874
        %v4167 = vpop.f32.mrb[0].mxu0
        %v4168 = vadd.f32 %v4094, %v4167
        %v4169 = vpop.f32.mrb[0].mxu0
        %4170 = vdwg.mxu0
        %vm4171 = vcmp.ge.s32.totalorder %v3876, 0
        %vm4172 = vcmp.lt.s32.totalorder %v3876, 32
        %vm4173 = vmand %vm4171, %vm4172
        %v4174 = vsel %vm4173, 1.0, 0.0
        %v4175 = vmul.f32 %v3967, %v4174
        %v4176 = vmul.f32 %v3972, %v4174
        %4177 = vmatprep.subr.mxu0 0.0
        %4178 = vmatpush1.xpose.msra.mxu0 %v4065
        %4179 = vmatprep.subr.mxu0 0.0
        %4180 = vmatpush1.xpose.msra.mxu0 %v4070
        %4181 = vmatprep.subr.mxu0 0.0
        %4182 = vmatpush1.xpose.msra.mxu0 0.0
        %4183 = vmatprep.subr.mxu0 0.0
        %4184 = vmatpush1.xpose.msra.mxu0 0.0
        %4185 = vmatprep.subr.mxu0 0.0
        %4186 = vmatpush1.xpose.msra.mxu0 0.0
        %4187 = vmatprep.subr.mxu0 0.0
        %4188 = vmatpush1.xpose.msra.mxu0 0.0
        %4189 = vmatprep.subr.mxu0 0.0
        %4190 = vmatpush1.xpose.msra.mxu0 0.0
        %4191 = vmatprep.subr.mxu0 0.0
        %4192 = vmatpush1.xpose.msra.mxu0 0.0
        %4193 = vmatprep.subr.mxu0 0.0
        %4194 = vmatpush1.xpose.msra.mxu0 0.0
        %4195 = vmatprep.subr.mxu0 0.0
        %4196 = vmatpush1.xpose.msra.mxu0 0.0
        %4197 = vmatprep.subr.mxu0 0.0
        %4198 = vmatpush1.xpose.msra.mxu0 0.0
        %4199 = vmatprep.subr.mxu0 0.0
        %4200 = vmatpush1.xpose.msra.mxu0 0.0
        %4201 = vmatprep.subr.mxu0 0.0
        %4202 = vmatpush1.xpose.msra.mxu0 0.0
        %4203 = vmatprep.subr.mxu0 0.0
        %4204 = vmatpush1.xpose.msra.mxu0 0.0
        %4205 = vmatprep.subr.mxu0 0.0
        %4206 = vmatpush1.xpose.msra.mxu0 0.0
        %4207 = vmatprep.subr.mxu0 0.0
        %4208 = vmatpush1.xpose.msra.mxu0 0.0
        %4209 = vmatprep.subr.mxu0 0.0
        %4210 = vmatpush1.xpose.msra.mxu0 0.0
        %4211 = vmatprep.subr.mxu0 0.0
        %4212 = vmatpush1.xpose.msra.mxu0 0.0
        %4213 = vmatprep.subr.mxu0 0.0
        %4214 = vmatpush1.xpose.msra.mxu0 0.0
        %4215 = vmatprep.subr.mxu0 0.0
        %4216 = vmatpush1.xpose.msra.mxu0 0.0
        %4217 = vmatprep.subr.mxu0 0.0
        %4218 = vmatpush1.xpose.msra.mxu0 0.0
        %4219 = vmatprep.subr.mxu0 0.0
        %4220 = vmatpush1.xpose.msra.mxu0 0.0
        %4221 = vmatprep.subr.mxu0 0.0
        %4222 = vmatpush1.xpose.msra.mxu0 0.0
        %4223 = vmatprep.subr.mxu0 0.0
        %4224 = vmatpush1.xpose.msra.mxu0 0.0
        %4225 = vmatprep.subr.mxu0 0.0
        %4226 = vmatpush1.xpose.msra.mxu0 0.0
        %4227 = vmatprep.subr.mxu0 0.0
        %4228 = vmatpush1.xpose.msra.mxu0 0.0
        %4229 = vmatprep.subr.mxu0 0.0
        %4230 = vmatpush1.xpose.msra.mxu0 0.0
        %4231 = vmatprep.subr.mxu0 0.0
        %4232 = vmatpush1.xpose.msra.mxu0 0.0
        %4233 = vmatprep.subr.mxu0 0.0
        %4234 = vmatpush1.xpose.msra.mxu0 0.0
        %4235 = vmatprep.subr.mxu0 0.0
        %4236 = vmatpush1.xpose.msra.mxu0 0.0
        %4237 = vmatprep.subr.mxu0 0.0
        %4238 = vmatpush1.xpose.msra.mxu0 0.0
        %4239 = vmatprep.subr.mxu0 0.0
        %4240 = vmatpush1.xpose.msra.mxu0 0.0
        %4241 = vmatprep.mubr.f32.mxu0 0.0
        %4242 = vmatmul.mubr.f32.gmra.mrb[0].mxu0 %v4175
        %v4243 = vpop.f32.mrb[0].mxu0
        %v4244 = vadd.f32 0.0, %v4243
        %v4245 = vpop.f32.mrb[0].mxu0
        %4246 = vmatprep.mubr.f32.mxu0 0.0
        %4247 = vmatmul.mubr.f32.gmra.mrb[0].mxu0 %v4176
        %v4248 = vpop.f32.mrb[0].mxu0
        %v4249 = vadd.f32 0.0, %v4248
        %v4250 = vpop.f32.mrb[0].mxu0
        %4251 = vdwg.mxu0
        %v4252 = vmul.f32 %v4244, 0.17677669
        %v4253 = vmul.f32 %v4249, 0.17677669
        %vm4254 = vcmask 130048
        %v4255 = vsel %vm4254, %v4252, -inf
        %4256 = vmax.xlane.f32.xlu0 %v4255
        %v4257 = vpop.xlane.xlu0 %4256
        %v4258 = vsel %vm4254, %v4253, -inf
        %4259 = vmax.xlane.f32.xlu0 %v4258
        %v4260 = vpop.xlane.xlu0 %4259
        %v4261 = vsub.f32 %v4252, %v4257
        %v4262 = vsub.f32 %v4253, %v4260
        %v4263 = vmul.f32 %v4261, 1.442695
        %v4264 = vpow.pop %v4263
        %v4265 = vmul.f32 %v4262, 1.442695
        %v4266 = vpow.pop %v4265
        %v4267 = vsel %vm4254, %v4264, 0.0
        %4268 = vadd.xlane.f32.xlu0 %v4267
        %v4269 = vpop.xlane.xlu0 %4268
        %v4270 = vsel %vm4254, %v4266, 0.0
        %4271 = vadd.xlane.f32.xlu0 %v4270
        %v4272 = vpop.xlane.xlu0 %4271
        %v4273 = vrcp.pop %v4269
        %v4274 = vmul.f32 %v4264, %v4273
        %v4275 = vrcp.pop %v4272
        %v4276 = vmul.f32 %v4266, %v4275
        %v4277 = vmul.f32 %v4163, %v4174
        %v4278 = vmul.f32 %v4168, %v4174
        %vm4279 = vcmp.ge.s32.totalorder %v3876, 32
        %vm4280 = vcmp.lt.s32.totalorder %v3876, 64
        %vm4281 = vmand %vm4279, %vm4280
        %v4282 = vsel %vm4281, 1.0, 0.0
        %v4283 = vmul.f32 %v3967, %v4282
        %v4284 = vmul.f32 %v3972, %v4282
        %4285 = vmatprep.subr.mxu0 0.0
        %4286 = vmatpush1.xpose.msra.mxu0 %v4065
        %4287 = vmatprep.subr.mxu0 0.0
        %4288 = vmatpush1.xpose.msra.mxu0 %v4070
        %4289 = vmatprep.subr.mxu0 0.0
        %4290 = vmatpush1.xpose.msra.mxu0 0.0
        %4291 = vmatprep.subr.mxu0 0.0
        %4292 = vmatpush1.xpose.msra.mxu0 0.0
        %4293 = vmatprep.subr.mxu0 0.0
        %4294 = vmatpush1.xpose.msra.mxu0 0.0
        %4295 = vmatprep.subr.mxu0 0.0
        %4296 = vmatpush1.xpose.msra.mxu0 0.0
        %4297 = vmatprep.subr.mxu0 0.0
        %4298 = vmatpush1.xpose.msra.mxu0 0.0
        %4299 = vmatprep.subr.mxu0 0.0
        %4300 = vmatpush1.xpose.msra.mxu0 0.0
        %4301 = vmatprep.subr.mxu0 0.0
        %4302 = vmatpush1.xpose.msra.mxu0 0.0
        %4303 = vmatprep.subr.mxu0 0.0
        %4304 = vmatpush1.xpose.msra.mxu0 0.0
        %4305 = vmatprep.subr.mxu0 0.0
        %4306 = vmatpush1.xpose.msra.mxu0 0.0
        %4307 = vmatprep.subr.mxu0 0.0
        %4308 = vmatpush1.xpose.msra.mxu0 0.0
        %4309 = vmatprep.subr.mxu0 0.0
        %4310 = vmatpush1.xpose.msra.mxu0 0.0
        %4311 = vmatprep.subr.mxu0 0.0
        %4312 = vmatpush1.xpose.msra.mxu0 0.0
        %4313 = vmatprep.subr.mxu0 0.0
        %4314 = vmatpush1.xpose.msra.mxu0 0.0
        %4315 = vmatprep.subr.mxu0 0.0
        %4316 = vmatpush1.xpose.msra.mxu0 0.0
        %4317 = vmatprep.subr.mxu0 0.0
        %4318 = vmatpush1.xpose.msra.mxu0 0.0
        %4319 = vmatprep.subr.mxu0 0.0
        %4320 = vmatpush1.xpose.msra.mxu0 0.0
        %4321 = vmatprep.subr.mxu0 0.0
        %4322 = vmatpush1.xpose.msra.mxu0 0.0
        %4323 = vmatprep.subr.mxu0 0.0
        %4324 = vmatpush1.xpose.msra.mxu0 0.0
        %4325 = vmatprep.subr.mxu0 0.0
        %4326 = vmatpush1.xpose.msra.mxu0 0.0
        %4327 = vmatprep.subr.mxu0 0.0
        %4328 = vmatpush1.xpose.msra.mxu0 0.0
        %4329 = vmatprep.subr.mxu0 0.0
        %4330 = vmatpush1.xpose.msra.mxu0 0.0
        %4331 = vmatprep.subr.mxu0 0.0
        %4332 = vmatpush1.xpose.msra.mxu0 0.0
        %4333 = vmatprep.subr.mxu0 0.0
        %4334 = vmatpush1.xpose.msra.mxu0 0.0
        %4335 = vmatprep.subr.mxu0 0.0
        %4336 = vmatpush1.xpose.msra.mxu0 0.0
        %4337 = vmatprep.subr.mxu0 0.0
        %4338 = vmatpush1.xpose.msra.mxu0 0.0
        %4339 = vmatprep.subr.mxu0 0.0
        %4340 = vmatpush1.xpose.msra.mxu0 0.0
        %4341 = vmatprep.subr.mxu0 0.0
        %4342 = vmatpush1.xpose.msra.mxu0 0.0
        %4343 = vmatprep.subr.mxu0 0.0
        %4344 = vmatpush1.xpose.msra.mxu0 0.0
        %4345 = vmatprep.subr.mxu0 0.0
        %4346 = vmatpush1.xpose.msra.mxu0 0.0
        %4347 = vmatprep.subr.mxu0 0.0
        %4348 = vmatpush1.xpose.msra.mxu0 0.0
        %4349 = vmatprep.mubr.f32.mxu0 0.0
        %4350 = vmatmul.mubr.f32.gmra.mrb[0].mxu0 %v4283
        %v4351 = vpop.f32.mrb[0].mxu0
        %v4352 = vadd.f32 0.0, %v4351
        %v4353 = vpop.f32.mrb[0].mxu0
        %4354 = vmatprep.mubr.f32.mxu0 0.0
        %4355 = vmatmul.mubr.f32.gmra.mrb[0].mxu0 %v4284
        %v4356 = vpop.f32.mrb[0].mxu0
        %v4357 = vadd.f32 0.0, %v4356
        %v4358 = vpop.f32.mrb[0].mxu0
        %4359 = vdwg.mxu0
        %v4360 = vmul.f32 %v4352, 0.17677669
        %v4361 = vmul.f32 %v4357, 0.17677669
        %v4362 = vsel %vm4254, %v4360, -inf
        %4363 = vmax.xlane.f32.xlu0 %v4362
        %v4364 = vpop.xlane.xlu0 %4363
        %v4365 = vsel %vm4254, %v4361, -inf
        %4366 = vmax.xlane.f32.xlu0 %v4365
        %v4367 = vpop.xlane.xlu0 %4366
        %v4368 = vsub.f32 %v4360, %v4364
        %v4369 = vsub.f32 %v4361, %v4367
        %v4370 = vmul.f32 %v4368, 1.442695
        %v4371 = vpow.pop %v4370
        %v4372 = vmul.f32 %v4369, 1.442695
        %v4373 = vpow.pop %v4372
        %v4374 = vsel %vm4254, %v4371, 0.0
        %4375 = vadd.xlane.f32.xlu0 %v4374
        %v4376 = vpop.xlane.xlu0 %4375
        %v4377 = vsel %vm4254, %v4373, 0.0
        %4378 = vadd.xlane.f32.xlu0 %v4377
        %v4379 = vpop.xlane.xlu0 %4378
        %v4380 = vrcp.pop %v4376
        %v4381 = vmul.f32 %v4371, %v4380
        %v4382 = vrcp.pop %v4379
        %v4383 = vmul.f32 %v4373, %v4382
        %v4384 = vmul.f32 %v4163, %v4282
        %v4385 = vmul.f32 %v4168, %v4282
        %v4387 = vsel %vm4254, %v4381, 0
        %v4390 = vsel %vm4254, %v4383, 0
        %4392 = vmatprep.subr.mxu0 0.0
        %4393 = vmatpush1.msra.mxu0 %v4384
        %4394 = vmatprep.subr.mxu0 0.0
        %4395 = vmatpush1.msra.mxu0 %v4385
        %4396 = vmatprep.subr.mxu0 0.0
        %4397 = vmatpush1.msra.mxu0 0.0
        %4398 = vmatprep.subr.mxu0 0.0
        %4399 = vmatpush1.msra.mxu0 0.0
        %4400 = vmatprep.subr.mxu0 0.0
        %4401 = vmatpush1.msra.mxu0 0.0
        %4402 = vmatprep.subr.mxu0 0.0
        %4403 = vmatpush1.msra.mxu0 0.0
        %4404 = vmatprep.subr.mxu0 0.0
        %4405 = vmatpush1.msra.mxu0 0.0
        %4406 = vmatprep.subr.mxu0 0.0
        %4407 = vmatpush1.msra.mxu0 0.0
        %4408 = vmatprep.subr.mxu0 0.0
        %4409 = vmatpush1.msra.mxu0 0.0
        %4410 = vmatprep.subr.mxu0 0.0
        %4411 = vmatpush1.msra.mxu0 0.0
        %4412 = vmatprep.subr.mxu0 0.0
        %4413 = vmatpush1.msra.mxu0 0.0
        %4414 = vmatprep.subr.mxu0 0.0
        %4415 = vmatpush1.msra.mxu0 0.0
        %4416 = vmatprep.subr.mxu0 0.0
        %4417 = vmatpush1.msra.mxu0 0.0
        %4418 = vmatprep.subr.mxu0 0.0
        %4419 = vmatpush1.msra.mxu0 0.0
        %4420 = vmatprep.subr.mxu0 0.0
        %4421 = vmatpush1.msra.mxu0 0.0
        %4422 = vmatprep.subr.mxu0 0.0
        %4423 = vmatpush1.msra.mxu0 0.0
        %4424 = vmatprep.subr.mxu0 0.0
        %4425 = vmatpush1.msra.mxu0 0.0
        %4426 = vmatprep.subr.mxu0 0.0
        %4427 = vmatpush1.msra.mxu0 0.0
        %4428 = vmatprep.subr.mxu0 0.0
        %4429 = vmatpush1.msra.mxu0 0.0
        %4430 = vmatprep.subr.mxu0 0.0
        %4431 = vmatpush1.msra.mxu0 0.0
        %4432 = vmatprep.subr.mxu0 0.0
        %4433 = vmatpush1.msra.mxu0 0.0
        %4434 = vmatprep.subr.mxu0 0.0
        %4435 = vmatpush1.msra.mxu0 0.0
        %4436 = vmatprep.subr.mxu0 0.0
        %4437 = vmatpush1.msra.mxu0 0.0
        %4438 = vmatprep.subr.mxu0 0.0
        %4439 = vmatpush1.msra.mxu0 0.0
        %4440 = vmatprep.subr.mxu0 0.0
        %4441 = vmatpush1.msra.mxu0 0.0
        %4442 = vmatprep.subr.mxu0 0.0
        %4443 = vmatpush1.msra.mxu0 0.0
        %4444 = vmatprep.subr.mxu0 0.0
        %4445 = vmatpush1.msra.mxu0 0.0
        %4446 = vmatprep.subr.mxu0 0.0
        %4447 = vmatpush1.msra.mxu0 0.0
        %4448 = vmatprep.subr.mxu0 0.0
        %4449 = vmatpush1.msra.mxu0 0.0
        %4450 = vmatprep.subr.mxu0 0.0
        %4451 = vmatpush1.msra.mxu0 0.0
        %4452 = vmatprep.subr.mxu0 0.0
        %4453 = vmatpush1.msra.mxu0 0.0
        %4454 = vmatprep.subr.mxu0 0.0
        %4455 = vmatpush1.msra.mxu0 0.0
        %4456 = vmatprep.mubr.f32.mxu0 0.0
        %4457 = vmatmul.mubr.f32.gmra.mrb[0].mxu0 %v4387
        %v4458 = vpop.f32.mrb[0].mxu0
        %v4459 = vadd.f32 0.0, %v4458
        %v4460 = vpop.f32.mrb[0].mxu0
        %4461 = vmatprep.mubr.f32.mxu0 0.0
        %4462 = vmatmul.mubr.f32.gmra.mrb[0].mxu0 %v4390
        %v4463 = vpop.f32.mrb[0].mxu0
        %v4464 = vadd.f32 0.0, %v4463
        %v4465 = vpop.f32.mrb[0].mxu0
        %4466 = vdwg.mxu0
        %v4468 = vsel %vm4254, %v4274, 0
        %v4471 = vsel %vm4254, %v4276, 0
        %4473 = vmatprep.subr.mxu0 0.0
        %4474 = vmatpush1.msra.mxu0 %v4277
        %4475 = vmatprep.subr.mxu0 0.0
        %4476 = vmatpush1.msra.mxu0 %v4278
        %4477 = vmatprep.subr.mxu0 0.0
        %4478 = vmatpush1.msra.mxu0 0.0
        %4479 = vmatprep.subr.mxu0 0.0
        %4480 = vmatpush1.msra.mxu0 0.0
        %4481 = vmatprep.subr.mxu0 0.0
        %4482 = vmatpush1.msra.mxu0 0.0
        %4483 = vmatprep.subr.mxu0 0.0
        %4484 = vmatpush1.msra.mxu0 0.0
        %4485 = vmatprep.subr.mxu0 0.0
        %4486 = vmatpush1.msra.mxu0 0.0
        %4487 = vmatprep.subr.mxu0 0.0
        %4488 = vmatpush1.msra.mxu0 0.0
        %4489 = vmatprep.subr.mxu0 0.0
        %4490 = vmatpush1.msra.mxu0 0.0
        %4491 = vmatprep.subr.mxu0 0.0
        %4492 = vmatpush1.msra.mxu0 0.0
        %4493 = vmatprep.subr.mxu0 0.0
        %4494 = vmatpush1.msra.mxu0 0.0
        %4495 = vmatprep.subr.mxu0 0.0
        %4496 = vmatpush1.msra.mxu0 0.0
        %4497 = vmatprep.subr.mxu0 0.0
        %4498 = vmatpush1.msra.mxu0 0.0
        %4499 = vmatprep.subr.mxu0 0.0
        %4500 = vmatpush1.msra.mxu0 0.0
        %4501 = vmatprep.subr.mxu0 0.0
        %4502 = vmatpush1.msra.mxu0 0.0
        %4503 = vmatprep.subr.mxu0 0.0
        %4504 = vmatpush1.msra.mxu0 0.0
        %4505 = vmatprep.subr.mxu0 0.0
        %4506 = vmatpush1.msra.mxu0 0.0
        %4507 = vmatprep.subr.mxu0 0.0
        %4508 = vmatpush1.msra.mxu0 0.0
        %4509 = vmatprep.subr.mxu0 0.0
        %4510 = vmatpush1.msra.mxu0 0.0
        %4511 = vmatprep.subr.mxu0 0.0
        %4512 = vmatpush1.msra.mxu0 0.0
        %4513 = vmatprep.subr.mxu0 0.0
        %4514 = vmatpush1.msra.mxu0 0.0
        %4515 = vmatprep.subr.mxu0 0.0
        %4516 = vmatpush1.msra.mxu0 0.0
        %4517 = vmatprep.subr.mxu0 0.0
        %4518 = vmatpush1.msra.mxu0 0.0
        %4519 = vmatprep.subr.mxu0 0.0
        %4520 = vmatpush1.msra.mxu0 0.0
        %4521 = vmatprep.subr.mxu0 0.0
        %4522 = vmatpush1.msra.mxu0 0.0
        %4523 = vmatprep.subr.mxu0 0.0
        %4524 = vmatpush1.msra.mxu0 0.0
        %4525 = vmatprep.subr.mxu0 0.0
        %4526 = vmatpush1.msra.mxu0 0.0
        %4527 = vmatprep.subr.mxu0 0.0
        %4528 = vmatpush1.msra.mxu0 0.0
        %4529 = vmatprep.subr.mxu0 0.0
        %4530 = vmatpush1.msra.mxu0 0.0
        %4531 = vmatprep.subr.mxu0 0.0
        %4532 = vmatpush1.msra.mxu0 0.0
        %4533 = vmatprep.subr.mxu0 0.0
        %4534 = vmatpush1.msra.mxu0 0.0
        %4535 = vmatprep.subr.mxu0 0.0
        %4536 = vmatpush1.msra.mxu0 0.0
        %4537 = vmatprep.mubr.f32.mxu0 0.0
        %4538 = vmatmul.mubr.f32.gmra.mrb[0].mxu0 %v4468
        %v4539 = vpop.f32.mrb[0].mxu0
        %v4540 = vadd.f32 %v4459, %v4539
        %v4541 = vpop.f32.mrb[0].mxu0
        %4542 = vmatprep.mubr.f32.mxu0 0.0
        %4543 = vmatmul.mubr.f32.gmra.mrb[0].mxu0 %v4471
        %v4544 = vpop.f32.mrb[0].mxu0
        %v4545 = vadd.f32 %v4464, %v4544
        %v4546 = vpop.f32.mrb[0].mxu0
        %4547 = vdwg.mxu0
        %vm4548 = vcmp.ge.s32.totalorder %v3876, 64
        %vm4549 = vcmp.lt.s32.totalorder %v3876, 96
        %vm4550 = vmand %vm4548, %vm4549
        %v4551 = vsel %vm4550, 1.0, 0.0
        %v4552 = vmul.f32 %v3967, %v4551
        %v4553 = vmul.f32 %v3972, %v4551
        %4554 = vmatprep.subr.mxu0 0.0
        %4555 = vmatpush1.xpose.msra.mxu0 %v4065
        %4556 = vmatprep.subr.mxu0 0.0
        %4557 = vmatpush1.xpose.msra.mxu0 %v4070
        %4558 = vmatprep.subr.mxu0 0.0
        %4559 = vmatpush1.xpose.msra.mxu0 0.0
        %4560 = vmatprep.subr.mxu0 0.0
        %4561 = vmatpush1.xpose.msra.mxu0 0.0
        %4562 = vmatprep.subr.mxu0 0.0
        %4563 = vmatpush1.xpose.msra.mxu0 0.0
        %4564 = vmatprep.subr.mxu0 0.0
        %4565 = vmatpush1.xpose.msra.mxu0 0.0
        %4566 = vmatprep.subr.mxu0 0.0
        %4567 = vmatpush1.xpose.msra.mxu0 0.0
        %4568 = vmatprep.subr.mxu0 0.0
        %4569 = vmatpush1.xpose.msra.mxu0 0.0
        %4570 = vmatprep.subr.mxu0 0.0
        %4571 = vmatpush1.xpose.msra.mxu0 0.0
        %4572 = vmatprep.subr.mxu0 0.0
        %4573 = vmatpush1.xpose.msra.mxu0 0.0
        %4574 = vmatprep.subr.mxu0 0.0
        %4575 = vmatpush1.xpose.msra.mxu0 0.0
        %4576 = vmatprep.subr.mxu0 0.0
        %4577 = vmatpush1.xpose.msra.mxu0 0.0
        %4578 = vmatprep.subr.mxu0 0.0
        %4579 = vmatpush1.xpose.msra.mxu0 0.0
        %4580 = vmatprep.subr.mxu0 0.0
        %4581 = vmatpush1.xpose.msra.mxu0 0.0
        %4582 = vmatprep.subr.mxu0 0.0
        %4583 = vmatpush1.xpose.msra.mxu0 0.0
        %4584 = vmatprep.subr.mxu0 0.0
        %4585 = vmatpush1.xpose.msra.mxu0 0.0
        %4586 = vmatprep.subr.mxu0 0.0
        %4587 = vmatpush1.xpose.msra.mxu0 0.0
        %4588 = vmatprep.subr.mxu0 0.0
        %4589 = vmatpush1.xpose.msra.mxu0 0.0
        %4590 = vmatprep.subr.mxu0 0.0
        %4591 = vmatpush1.xpose.msra.mxu0 0.0
        %4592 = vmatprep.subr.mxu0 0.0
        %4593 = vmatpush1.xpose.msra.mxu0 0.0
        %4594 = vmatprep.subr.mxu0 0.0
        %4595 = vmatpush1.xpose.msra.mxu0 0.0
        %4596 = vmatprep.subr.mxu0 0.0
        %4597 = vmatpush1.xpose.msra.mxu0 0.0
        %4598 = vmatprep.subr.mxu0 0.0
        %4599 = vmatpush1.xpose.msra.mxu0 0.0
        %4600 = vmatprep.subr.mxu0 0.0
        %4601 = vmatpush1.xpose.msra.mxu0 0.0
        %4602 = vmatprep.subr.mxu0 0.0
        %4603 = vmatpush1.xpose.msra.mxu0 0.0
        %4604 = vmatprep.subr.mxu0 0.0
        %4605 = vmatpush1.xpose.msra.mxu0 0.0
        %4606 = vmatprep.subr.mxu0 0.0
        %4607 = vmatpush1.xpose.msra.mxu0 0.0
        %4608 = vmatprep.subr.mxu0 0.0
        %4609 = vmatpush1.xpose.msra.mxu0 0.0
        %4610 = vmatprep.subr.mxu0 0.0
        %4611 = vmatpush1.xpose.msra.mxu0 0.0
        %4612 = vmatprep.subr.mxu0 0.0
        %4613 = vmatpush1.xpose.msra.mxu0 0.0
        %4614 = vmatprep.subr.mxu0 0.0
        %4615 = vmatpush1.xpose.msra.mxu0 0.0
        %4616 = vmatprep.subr.mxu0 0.0
        %4617 = vmatpush1.xpose.msra.mxu0 0.0
        %4618 = vmatprep.mubr.f32.mxu0 0.0
        %4619 = vmatmul.mubr.f32.gmra.mrb[0].mxu0 %v4552
        %v4620 = vpop.f32.mrb[0].mxu0
        %v4621 = vadd.f32 0.0, %v4620
        %v4622 = vpop.f32.mrb[0].mxu0
        %4623 = vmatprep.mubr.f32.mxu0 0.0
        %4624 = vmatmul.mubr.f32.gmra.mrb[0].mxu0 %v4553
        %v4625 = vpop.f32.mrb[0].mxu0
        %v4626 = vadd.f32 0.0, %v4625
        %v4627 = vpop.f32.mrb[0].mxu0
        %4628 = vdwg.mxu0
        %v4629 = vmul.f32 %v4621, 0.17677669
        %v4630 = vmul.f32 %v4626, 0.17677669
        %v4631 = vsel %vm4254, %v4629, -inf
        %4632 = vmax.xlane.f32.xlu0 %v4631
        %v4633 = vpop.xlane.xlu0 %4632
        %v4634 = vsel %vm4254, %v4630, -inf
        %4635 = vmax.xlane.f32.xlu0 %v4634
        %v4636 = vpop.xlane.xlu0 %4635
        %v4637 = vsub.f32 %v4629, %v4633
        %v4638 = vsub.f32 %v4630, %v4636
        %v4639 = vmul.f32 %v4637, 1.442695
        %v4640 = vpow.pop %v4639
        %v4641 = vmul.f32 %v4638, 1.442695
        %v4642 = vpow.pop %v4641
        %v4643 = vsel %vm4254, %v4640, 0.0
        %4644 = vadd.xlane.f32.xlu0 %v4643
        %v4645 = vpop.xlane.xlu0 %4644
        %v4646 = vsel %vm4254, %v4642, 0.0
        %4647 = vadd.xlane.f32.xlu0 %v4646
        %v4648 = vpop.xlane.xlu0 %4647
        %v4649 = vrcp.pop %v4645
        %v4650 = vmul.f32 %v4640, %v4649
        %v4651 = vrcp.pop %v4648
        %v4652 = vmul.f32 %v4642, %v4651
        %v4653 = vmul.f32 %v4163, %v4551
        %v4654 = vmul.f32 %v4168, %v4551
        %v4656 = vsel %vm4254, %v4650, 0
        %v4659 = vsel %vm4254, %v4652, 0
        %4661 = vmatprep.subr.mxu0 0.0
        %4662 = vmatpush1.msra.mxu0 %v4653
        %4663 = vmatprep.subr.mxu0 0.0
        %4664 = vmatpush1.msra.mxu0 %v4654
        %4665 = vmatprep.subr.mxu0 0.0
        %4666 = vmatpush1.msra.mxu0 0.0
        %4667 = vmatprep.subr.mxu0 0.0
        %4668 = vmatpush1.msra.mxu0 0.0
        %4669 = vmatprep.subr.mxu0 0.0
        %4670 = vmatpush1.msra.mxu0 0.0
        %4671 = vmatprep.subr.mxu0 0.0
        %4672 = vmatpush1.msra.mxu0 0.0
        %4673 = vmatprep.subr.mxu0 0.0
        %4674 = vmatpush1.msra.mxu0 0.0
        %4675 = vmatprep.subr.mxu0 0.0
        %4676 = vmatpush1.msra.mxu0 0.0
        %4677 = vmatprep.subr.mxu0 0.0
        %4678 = vmatpush1.msra.mxu0 0.0
        %4679 = vmatprep.subr.mxu0 0.0
        %4680 = vmatpush1.msra.mxu0 0.0
        %4681 = vmatprep.subr.mxu0 0.0
        %4682 = vmatpush1.msra.mxu0 0.0
        %4683 = vmatprep.subr.mxu0 0.0
        %4684 = vmatpush1.msra.mxu0 0.0
        %4685 = vmatprep.subr.mxu0 0.0
        %4686 = vmatpush1.msra.mxu0 0.0
        %4687 = vmatprep.subr.mxu0 0.0
        %4688 = vmatpush1.msra.mxu0 0.0
        %4689 = vmatprep.subr.mxu0 0.0
        %4690 = vmatpush1.msra.mxu0 0.0
        %4691 = vmatprep.subr.mxu0 0.0
        %4692 = vmatpush1.msra.mxu0 0.0
        %4693 = vmatprep.subr.mxu0 0.0
        %4694 = vmatpush1.msra.mxu0 0.0
        %4695 = vmatprep.subr.mxu0 0.0
        %4696 = vmatpush1.msra.mxu0 0.0
        %4697 = vmatprep.subr.mxu0 0.0
        %4698 = vmatpush1.msra.mxu0 0.0
        %4699 = vmatprep.subr.mxu0 0.0
        %4700 = vmatpush1.msra.mxu0 0.0
        %4701 = vmatprep.subr.mxu0 0.0
        %4702 = vmatpush1.msra.mxu0 0.0
        %4703 = vmatprep.subr.mxu0 0.0
        %4704 = vmatpush1.msra.mxu0 0.0
        %4705 = vmatprep.subr.mxu0 0.0
        %4706 = vmatpush1.msra.mxu0 0.0
        %4707 = vmatprep.subr.mxu0 0.0
        %4708 = vmatpush1.msra.mxu0 0.0
        %4709 = vmatprep.subr.mxu0 0.0
        %4710 = vmatpush1.msra.mxu0 0.0
        %4711 = vmatprep.subr.mxu0 0.0
        %4712 = vmatpush1.msra.mxu0 0.0
        %4713 = vmatprep.subr.mxu0 0.0
        %4714 = vmatpush1.msra.mxu0 0.0
        %4715 = vmatprep.subr.mxu0 0.0
        %4716 = vmatpush1.msra.mxu0 0.0
        %4717 = vmatprep.subr.mxu0 0.0
        %4718 = vmatpush1.msra.mxu0 0.0
        %4719 = vmatprep.subr.mxu0 0.0
        %4720 = vmatpush1.msra.mxu0 0.0
        %4721 = vmatprep.subr.mxu0 0.0
        %4722 = vmatpush1.msra.mxu0 0.0
        %4723 = vmatprep.subr.mxu0 0.0
        %4724 = vmatpush1.msra.mxu0 0.0
        %4725 = vmatprep.mubr.f32.mxu0 0.0
        %4726 = vmatmul.mubr.f32.gmra.mrb[0].mxu0 %v4656
        %v4727 = vpop.f32.mrb[0].mxu0
        %v4728 = vadd.f32 0.0, %v4727
        %v4729 = vpop.f32.mrb[0].mxu0
        %4730 = vmatprep.mubr.f32.mxu0 0.0
        %4731 = vmatmul.mubr.f32.gmra.mrb[0].mxu0 %v4659
        %v4732 = vpop.f32.mrb[0].mxu0
        %v4733 = vadd.f32 0.0, %v4732
        %v4734 = vpop.f32.mrb[0].mxu0
        %4735 = vdwg.mxu0
        %v4736 = vadd.f32 %v4540, %v4728
        %v4737 = vadd.f32 %v4545, %v4733
        %vm4738 = vcmp.ge.s32.totalorder %v3876, 96
        %vm4739 = vcmp.lt.s32.totalorder %v3876, 128
        %vm4740 = vmand %vm4738, %vm4739
        %v4741 = vsel %vm4740, 1.0, 0.0
        %v4742 = vmul.f32 %v3967, %v4741
        %v4743 = vmul.f32 %v3972, %v4741
        %4744 = vmatprep.subr.mxu0 0.0
        %4745 = vmatpush1.xpose.msra.mxu0 %v4065
        %4746 = vmatprep.subr.mxu0 0.0
        %4747 = vmatpush1.xpose.msra.mxu0 %v4070
        %4748 = vmatprep.subr.mxu0 0.0
        %4749 = vmatpush1.xpose.msra.mxu0 0.0
        %4750 = vmatprep.subr.mxu0 0.0
        %4751 = vmatpush1.xpose.msra.mxu0 0.0
        %4752 = vmatprep.subr.mxu0 0.0
        %4753 = vmatpush1.xpose.msra.mxu0 0.0
        %4754 = vmatprep.subr.mxu0 0.0
        %4755 = vmatpush1.xpose.msra.mxu0 0.0
        %4756 = vmatprep.subr.mxu0 0.0
        %4757 = vmatpush1.xpose.msra.mxu0 0.0
        %4758 = vmatprep.subr.mxu0 0.0
        %4759 = vmatpush1.xpose.msra.mxu0 0.0
        %4760 = vmatprep.subr.mxu0 0.0
        %4761 = vmatpush1.xpose.msra.mxu0 0.0
        %4762 = vmatprep.subr.mxu0 0.0
        %4763 = vmatpush1.xpose.msra.mxu0 0.0
        %4764 = vmatprep.subr.mxu0 0.0
        %4765 = vmatpush1.xpose.msra.mxu0 0.0
        %4766 = vmatprep.subr.mxu0 0.0
        %4767 = vmatpush1.xpose.msra.mxu0 0.0
        %4768 = vmatprep.subr.mxu0 0.0
        %4769 = vmatpush1.xpose.msra.mxu0 0.0
        %4770 = vmatprep.subr.mxu0 0.0
        %4771 = vmatpush1.xpose.msra.mxu0 0.0
        %4772 = vmatprep.subr.mxu0 0.0
        %4773 = vmatpush1.xpose.msra.mxu0 0.0
        %4774 = vmatprep.subr.mxu0 0.0
        %4775 = vmatpush1.xpose.msra.mxu0 0.0
        %4776 = vmatprep.subr.mxu0 0.0
        %4777 = vmatpush1.xpose.msra.mxu0 0.0
        %4778 = vmatprep.subr.mxu0 0.0
        %4779 = vmatpush1.xpose.msra.mxu0 0.0
        %4780 = vmatprep.subr.mxu0 0.0
        %4781 = vmatpush1.xpose.msra.mxu0 0.0
        %4782 = vmatprep.subr.mxu0 0.0
        %4783 = vmatpush1.xpose.msra.mxu0 0.0
        %4784 = vmatprep.subr.mxu0 0.0
        %4785 = vmatpush1.xpose.msra.mxu0 0.0
        %4786 = vmatprep.subr.mxu0 0.0
        %4787 = vmatpush1.xpose.msra.mxu0 0.0
        %4788 = vmatprep.subr.mxu0 0.0
        %4789 = vmatpush1.xpose.msra.mxu0 0.0
        %4790 = vmatprep.subr.mxu0 0.0
        %4791 = vmatpush1.xpose.msra.mxu0 0.0
        %4792 = vmatprep.subr.mxu0 0.0
        %4793 = vmatpush1.xpose.msra.mxu0 0.0
        %4794 = vmatprep.subr.mxu0 0.0
        %4795 = vmatpush1.xpose.msra.mxu0 0.0
        %4796 = vmatprep.subr.mxu0 0.0
        %4797 = vmatpush1.xpose.msra.mxu0 0.0
        %4798 = vmatprep.subr.mxu0 0.0
        %4799 = vmatpush1.xpose.msra.mxu0 0.0
        %4800 = vmatprep.subr.mxu0 0.0
        %4801 = vmatpush1.xpose.msra.mxu0 0.0
        %4802 = vmatprep.subr.mxu0 0.0
        %4803 = vmatpush1.xpose.msra.mxu0 0.0
        %4804 = vmatprep.subr.mxu0 0.0
        %4805 = vmatpush1.xpose.msra.mxu0 0.0
        %4806 = vmatprep.subr.mxu0 0.0
        %4807 = vmatpush1.xpose.msra.mxu0 0.0
        %4808 = vmatprep.mubr.f32.mxu0 0.0
        %4809 = vmatmul.mubr.f32.gmra.mrb[0].mxu0 %v4742
        %v4810 = vpop.f32.mrb[0].mxu0
        %v4811 = vadd.f32 0.0, %v4810
        %v4812 = vpop.f32.mrb[0].mxu0
        %4813 = vmatprep.mubr.f32.mxu0 0.0
        %4814 = vmatmul.mubr.f32.gmra.mrb[0].mxu0 %v4743
        %v4815 = vpop.f32.mrb[0].mxu0
        %v4816 = vadd.f32 0.0, %v4815
        %v4817 = vpop.f32.mrb[0].mxu0
        %4818 = vdwg.mxu0
        %v4819 = vmul.f32 %v4811, 0.17677669
        %v4820 = vmul.f32 %v4816, 0.17677669
        %v4821 = vsel %vm4254, %v4819, -inf
        %4822 = vmax.xlane.f32.xlu0 %v4821
        %v4823 = vpop.xlane.xlu0 %4822
        %v4824 = vsel %vm4254, %v4820, -inf
        %4825 = vmax.xlane.f32.xlu0 %v4824
        %v4826 = vpop.xlane.xlu0 %4825
        %v4827 = vsub.f32 %v4819, %v4823
        %v4828 = vsub.f32 %v4820, %v4826
        %v4829 = vmul.f32 %v4827, 1.442695
        %v4830 = vpow.pop %v4829
        %v4831 = vmul.f32 %v4828, 1.442695
        %v4832 = vpow.pop %v4831
        %v4833 = vsel %vm4254, %v4830, 0.0
        %4834 = vadd.xlane.f32.xlu0 %v4833
        %v4835 = vpop.xlane.xlu0 %4834
        %v4836 = vsel %vm4254, %v4832, 0.0
        %4837 = vadd.xlane.f32.xlu0 %v4836
        %v4838 = vpop.xlane.xlu0 %4837
        %v4839 = vrcp.pop %v4835
        %v4840 = vmul.f32 %v4830, %v4839
        %v4841 = vrcp.pop %v4838
        %v4842 = vmul.f32 %v4832, %v4841
        %v4843 = vmul.f32 %v4163, %v4741
        %v4844 = vmul.f32 %v4168, %v4741
        %v4846 = vsel %vm4254, %v4840, 0
        %v4849 = vsel %vm4254, %v4842, 0
        %4851 = vmatprep.subr.mxu0 0.0
        %4852 = vmatpush1.msra.mxu0 %v4843
        %4853 = vmatprep.subr.mxu0 0.0
        %4854 = vmatpush1.msra.mxu0 %v4844
        %4855 = vmatprep.subr.mxu0 0.0
        %4856 = vmatpush1.msra.mxu0 0.0
        %4857 = vmatprep.subr.mxu0 0.0
        %4858 = vmatpush1.msra.mxu0 0.0
        %4859 = vmatprep.subr.mxu0 0.0
        %4860 = vmatpush1.msra.mxu0 0.0
        %4861 = vmatprep.subr.mxu0 0.0
        %4862 = vmatpush1.msra.mxu0 0.0
        %4863 = vmatprep.subr.mxu0 0.0
        %4864 = vmatpush1.msra.mxu0 0.0
        %4865 = vmatprep.subr.mxu0 0.0
        %4866 = vmatpush1.msra.mxu0 0.0
        %4867 = vmatprep.subr.mxu0 0.0
        %4868 = vmatpush1.msra.mxu0 0.0
        %4869 = vmatprep.subr.mxu0 0.0
        %4870 = vmatpush1.msra.mxu0 0.0
        %4871 = vmatprep.subr.mxu0 0.0
        %4872 = vmatpush1.msra.mxu0 0.0
        %4873 = vmatprep.subr.mxu0 0.0
        %4874 = vmatpush1.msra.mxu0 0.0
        %4875 = vmatprep.subr.mxu0 0.0
        %4876 = vmatpush1.msra.mxu0 0.0
        %4877 = vmatprep.subr.mxu0 0.0
        %4878 = vmatpush1.msra.mxu0 0.0
        %4879 = vmatprep.subr.mxu0 0.0
        %4880 = vmatpush1.msra.mxu0 0.0
        %4881 = vmatprep.subr.mxu0 0.0
        %4882 = vmatpush1.msra.mxu0 0.0
        %4883 = vmatprep.subr.mxu0 0.0
        %4884 = vmatpush1.msra.mxu0 0.0
        %4885 = vmatprep.subr.mxu0 0.0
        %4886 = vmatpush1.msra.mxu0 0.0
        %4887 = vmatprep.subr.mxu0 0.0
        %4888 = vmatpush1.msra.mxu0 0.0
        %4889 = vmatprep.subr.mxu0 0.0
        %4890 = vmatpush1.msra.mxu0 0.0
        %4891 = vmatprep.subr.mxu0 0.0
        %4892 = vmatpush1.msra.mxu0 0.0
        %4893 = vmatprep.subr.mxu0 0.0
        %4894 = vmatpush1.msra.mxu0 0.0
        %4895 = vmatprep.subr.mxu0 0.0
        %4896 = vmatpush1.msra.mxu0 0.0
        %4897 = vmatprep.subr.mxu0 0.0
        %4898 = vmatpush1.msra.mxu0 0.0
        %4899 = vmatprep.subr.mxu0 0.0
        %4900 = vmatpush1.msra.mxu0 0.0
        %4901 = vmatprep.subr.mxu0 0.0
        %4902 = vmatpush1.msra.mxu0 0.0
        %4903 = vmatprep.subr.mxu0 0.0
        %4904 = vmatpush1.msra.mxu0 0.0
        %4905 = vmatprep.subr.mxu0 0.0
        %4906 = vmatpush1.msra.mxu0 0.0
        %4907 = vmatprep.subr.mxu0 0.0
        %4908 = vmatpush1.msra.mxu0 0.0
        %4909 = vmatprep.subr.mxu0 0.0
        %4910 = vmatpush1.msra.mxu0 0.0
        %4911 = vmatprep.subr.mxu0 0.0
        %4912 = vmatpush1.msra.mxu0 0.0
        %4913 = vmatprep.subr.mxu0 0.0
        %4914 = vmatpush1.msra.mxu0 0.0
        %4915 = vmatprep.mubr.f32.mxu0 0.0
        %4916 = vmatmul.mubr.f32.gmra.mrb[0].mxu0 %v4846
        %v4917 = vpop.f32.mrb[0].mxu0
        %v4918 = vadd.f32 0.0, %v4917
        %v4919 = vpop.f32.mrb[0].mxu0
        %4920 = vmatprep.mubr.f32.mxu0 0.0
        %4921 = vmatmul.mubr.f32.gmra.mrb[0].mxu0 %v4849
        %v4922 = vpop.f32.mrb[0].mxu0
        %v4923 = vadd.f32 0.0, %v4922
        %v4924 = vpop.f32.mrb[0].mxu0
        %4925 = vdwg.mxu0
        %v4926 = vadd.f32 %v4736, %v4918
        %v4927 = vadd.f32 %v4737, %v4923
        %v4928 = vld [vmem:[#allocation31] sm:$0xff]
        %v4929 = vld [vmem:[#allocation31 + $0x8] sm:$0xff]
        %v4930 = vld [vmem:[#allocation31 + $0x10] sm:$0xff]
        %v4931 = vld [vmem:[#allocation31 + $0x18] sm:$0xff]
        %v4932 = vld [vmem:[#allocation31 + $0x20] sm:$0xff]
        %v4933 = vld [vmem:[#allocation31 + $0x28] sm:$0xff]
        %v4934 = vld [vmem:[#allocation31 + $0x30] sm:$0xff]
        %v4935 = vld [vmem:[#allocation31 + $0x38] sm:$0xff]
        %v4936 = vld [vmem:[#allocation31 + $0x40] sm:$0xff]
        %v4937 = vld [vmem:[#allocation31 + $0x48] sm:$0xff]
        %v4938 = vld [vmem:[#allocation31 + $0x50] sm:$0xff]
        %v4939 = vld [vmem:[#allocation31 + $0x58] sm:$0xff]
        %v4940 = vld [vmem:[#allocation31 + $0x60] sm:$0xff]
        %v4941 = vld [vmem:[#allocation31 + $0x68] sm:$0xff]
        %v4942 = vld [vmem:[#allocation31 + $0x70] sm:$0xff]
        %v4943 = vld [vmem:[#allocation31 + $0x78] sm:$0xff]
        %v4944 = vld [vmem:[#allocation16] sm:$0x1]
        %v4946 = vlaneseq
        %v4947 = vshrl.u32 %v4946, 7
        %v4948 = vsub.s32 0, %v4947
        %v4949 = vrot.slane %v4944, %v4948
        %4951 = vmatprep.subr.mxu0 0.0
        %4952 = vmatpush1.msra.mxu0 %v4928
        %4953 = vmatprep.subr.mxu0 0.0
        %4954 = vmatpush1.msra.mxu0 %v4929
        %4955 = vmatprep.subr.mxu0 0.0
        %4956 = vmatpush1.msra.mxu0 %v4930
        %4957 = vmatprep.subr.mxu0 0.0
        %4958 = vmatpush1.msra.mxu0 %v4931
        %4959 = vmatprep.subr.mxu0 0.0
        %4960 = vmatpush1.msra.mxu0 %v4932
        %4961 = vmatprep.subr.mxu0 0.0
        %4962 = vmatpush1.msra.mxu0 %v4933
        %4963 = vmatprep.subr.mxu0 0.0
        %4964 = vmatpush1.msra.mxu0 %v4934
        %4965 = vmatprep.subr.mxu0 0.0
        %4966 = vmatpush1.msra.mxu0 %v4935
        %4967 = vmatprep.subr.mxu0 0.0
        %4968 = vmatpush1.msra.mxu0 %v4936
        %4969 = vmatprep.subr.mxu0 0.0
        %4970 = vmatpush1.msra.mxu0 %v4937
        %4971 = vmatprep.subr.mxu0 0.0
        %4972 = vmatpush1.msra.mxu0 %v4938
        %4973 = vmatprep.subr.mxu0 0.0
        %4974 = vmatpush1.msra.mxu0 %v4939
        %4975 = vmatprep.subr.mxu0 0.0
        %4976 = vmatpush1.msra.mxu0 %v4940
        %4977 = vmatprep.subr.mxu0 0.0
        %4978 = vmatpush1.msra.mxu0 %v4941
        %4979 = vmatprep.subr.mxu0 0.0
        %4980 = vmatpush1.msra.mxu0 %v4942
        %4981 = vmatprep.subr.mxu0 0.0
        %4982 = vmatpush1.msra.mxu0 %v4943
        %4983 = vmatprep.subr.mxu0 0.0
        %4984 = vmatpush1.msra.mxu0 0.0
        %4985 = vmatprep.subr.mxu0 0.0
        %4986 = vmatpush1.msra.mxu0 0.0
        %4987 = vmatprep.subr.mxu0 0.0
        %4988 = vmatpush1.msra.mxu0 0.0
        %4989 = vmatprep.subr.mxu0 0.0
        %4990 = vmatpush1.msra.mxu0 0.0
        %4991 = vmatprep.subr.mxu0 0.0
        %4992 = vmatpush1.msra.mxu0 0.0
        %4993 = vmatprep.subr.mxu0 0.0
        %4994 = vmatpush1.msra.mxu0 0.0
        %4995 = vmatprep.subr.mxu0 0.0
        %4996 = vmatpush1.msra.mxu0 0.0
        %4997 = vmatprep.subr.mxu0 0.0
        %4998 = vmatpush1.msra.mxu0 0.0
        %4999 = vmatprep.subr.mxu0 0.0
        %5000 = vmatpush1.msra.mxu0 0.0
        %5001 = vmatprep.subr.mxu0 0.0
        %5002 = vmatpush1.msra.mxu0 0.0
        %5003 = vmatprep.subr.mxu0 0.0
        %5004 = vmatpush1.msra.mxu0 0.0
        %5005 = vmatprep.subr.mxu0 0.0
        %5006 = vmatpush1.msra.mxu0 0.0
        %5007 = vmatprep.subr.mxu0 0.0
        %5008 = vmatpush1.msra.mxu0 0.0
        %5009 = vmatprep.subr.mxu0 0.0
        %5010 = vmatpush1.msra.mxu0 0.0
        %5011 = vmatprep.subr.mxu0 0.0
        %5012 = vmatpush1.msra.mxu0 0.0
        %5013 = vmatprep.subr.mxu0 0.0
        %5014 = vmatpush1.msra.mxu0 0.0
        %5015 = vmatprep.mubr.f32.mxu0 0.0
        %5016 = vmatmul.mubr.f32.gmra.mrb[0].mxu0 %v4926
        %v5017 = vpop.f32.mrb[0].mxu0
        %v5018 = vadd.f32 %v4949, %v5017
        %v5019 = vpop.f32.mrb[0].mxu0
        %5020 = vmatprep.mubr.f32.mxu0 0.0
        %5021 = vmatmul.mubr.f32.gmra.mrb[0].mxu0 %v4927
        %v5022 = vpop.f32.mrb[0].mxu0
        %v5023 = vadd.f32 %v4949, %v5022
        %v5024 = vpop.f32.mrb[0].mxu0
        %5025 = vdwg.mxu0
        %v5026 = vadd.f32 %v3873, %v5018
        %v5027 = vadd.f32 %v3874, %v5023
        %v5028 = vld [vmem:[#allocation22] sm:$0x1]
        %v5029 = vld [vmem:[#allocation20] sm:$0x1]
        %5030 = vadd.xlane.f32.xlu0 %v5026
        %v5031 = vpop.xlane.xlu0 %5030
        %5032 = vadd.xlane.f32.xlu0 %v5027
        %v5033 = vpop.xlane.xlu0 %5032
        %v5034 = vrcp.pop 128.0
        %v5035 = vmul.f32 %v5031, %v5034
        %v5036 = vmul.f32 %v5033, %v5034
        %v5037 = vsub.f32 %v5026, %v5035
        %v5038 = vsub.f32 %v5027, %v5036
        %v5039 = vmul.f32 %v5037, %v5037
        %v5040 = vmul.f32 %v5038, %v5038
        %5041 = vadd.xlane.f32.xlu0 %v5039
        %v5042 = vpop.xlane.xlu0 %5041
        %5043 = vadd.xlane.f32.xlu0 %v5040
        %v5044 = vpop.xlane.xlu0 %5043
        %v5045 = vmul.f32 %v5042, %v5034
        %v5046 = vmul.f32 %v5044, %v5034
        %v5047 = vadd.f32 %v5045, 1e-05
        %v5048 = vadd.f32 %v5046, 1e-05
        %v5049 = vrsqrt.pop %v5047
        %v5050 = vrsqrt.pop %v5048
        %v5051 = vmul.f32 %v5037, %v5049
        %v5052 = vmul.f32 %v5038, %v5050
        %v5054 = vlaneseq
        %v5055 = vshrl.u32 %v5054, 7
        %v5056 = vsub.s32 0, %v5055
        %v5057 = vrot.slane %v5028, %v5056
        %v5059 = vmul.f32 %v5051, %v5057
        %v5060 = vmul.f32 %v5052, %v5057
        %v5062 = vlaneseq
        %v5063 = vshrl.u32 %v5062, 7
        %v5064 = vsub.s32 0, %v5063
        %v5065 = vrot.slane %v5029, %v5064
        %v5067 = vadd.f32 %v5059, %v5065
        %v5068 = vadd.f32 %v5060, %v5065
        %v5069 = vld [vmem:[#allocation26] sm:$0xff]
        %v5070 = vld [vmem:[#allocation26 + $0x8] sm:$0xff]
        %v5071 = vld [vmem:[#allocation26 + $0x10] sm:$0xff]
        %v5072 = vld [vmem:[#allocation26 + $0x18] sm:$0xff]
        %v5073 = vld [vmem:[#allocation26 + $0x20] sm:$0xff]
        %v5074 = vld [vmem:[#allocation26 + $0x28] sm:$0xff]
        %v5075 = vld [vmem:[#allocation26 + $0x30] sm:$0xff]
        %v5076 = vld [vmem:[#allocation26 + $0x38] sm:$0xff]
        %v5077 = vld [vmem:[#allocation26 + $0x40] sm:$0xff]
        %v5078 = vld [vmem:[#allocation26 + $0x48] sm:$0xff]
        %v5079 = vld [vmem:[#allocation26 + $0x50] sm:$0xff]
        %v5080 = vld [vmem:[#allocation26 + $0x58] sm:$0xff]
        %v5081 = vld [vmem:[#allocation26 + $0x60] sm:$0xff]
        %v5082 = vld [vmem:[#allocation26 + $0x68] sm:$0xff]
        %v5083 = vld [vmem:[#allocation26 + $0x70] sm:$0xff]
        %v5084 = vld [vmem:[#allocation26 + $0x78] sm:$0xff]
        %v5085 = vld [vmem:[#allocation26 + $0x80] sm:$0xff]
        %v5086 = vld [vmem:[#allocation26 + $0x88] sm:$0xff]
        %v5087 = vld [vmem:[#allocation26 + $0x90] sm:$0xff]
        %v5088 = vld [vmem:[#allocation26 + $0x98] sm:$0xff]
        %v5089 = vld [vmem:[#allocation26 + $0xa0] sm:$0xff]
        %v5090 = vld [vmem:[#allocation26 + $0xa8] sm:$0xff]
        %v5091 = vld [vmem:[#allocation26 + $0xb0] sm:$0xff]
        %v5092 = vld [vmem:[#allocation26 + $0xb8] sm:$0xff]
        %v5093 = vld [vmem:[#allocation26 + $0xc0] sm:$0xff]
        %v5094 = vld [vmem:[#allocation26 + $0xc8] sm:$0xff]
        %v5095 = vld [vmem:[#allocation26 + $0xd0] sm:$0xff]
        %v5096 = vld [vmem:[#allocation26 + $0xd8] sm:$0xff]
        %v5097 = vld [vmem:[#allocation26 + $0xe0] sm:$0xff]
        %v5098 = vld [vmem:[#allocation26 + $0xe8] sm:$0xff]
        %v5099 = vld [vmem:[#allocation26 + $0xf0] sm:$0xff]
        %v5100 = vld [vmem:[#allocation26 + $0xf8] sm:$0xff]
        %v5101 = vld [vmem:[#allocation11] sm:$0x3]
        %v5103 = vlaneseq
        %v5104 = vshrl.u32 %v5103, 7
        %v5105 = vsub.s32 0, %v5104
        %v5106 = vrot.slane %v5101, %v5105
        %v5107 = vlaneseq
        %v5108 = vshrl.u32 %v5107, 7
        %v5109 = vsub.s32 1, %v5108
        %v5110 = vrot.slane %v5101, %v5109
        %5113 = vmatprep.subr.mxu0 %v5070
        %5114 = vmatpush1.msra.mxu0 %v5069
        %5115 = vmatprep.subr.mxu0 %v5072
        %5116 = vmatpush1.msra.mxu0 %v5071
        %5117 = vmatprep.subr.mxu0 %v5074
        %5118 = vmatpush1.msra.mxu0 %v5073
        %5119 = vmatprep.subr.mxu0 %v5076
        %5120 = vmatpush1.msra.mxu0 %v5075
        %5121 = vmatprep.subr.mxu0 %v5078
        %5122 = vmatpush1.msra.mxu0 %v5077
        %5123 = vmatprep.subr.mxu0 %v5080
        %5124 = vmatpush1.msra.mxu0 %v5079
        %5125 = vmatprep.subr.mxu0 %v5082
        %5126 = vmatpush1.msra.mxu0 %v5081
        %5127 = vmatprep.subr.mxu0 %v5084
        %5128 = vmatpush1.msra.mxu0 %v5083
        %5129 = vmatprep.subr.mxu0 %v5086
        %5130 = vmatpush1.msra.mxu0 %v5085
        %5131 = vmatprep.subr.mxu0 %v5088
        %5132 = vmatpush1.msra.mxu0 %v5087
        %5133 = vmatprep.subr.mxu0 %v5090
        %5134 = vmatpush1.msra.mxu0 %v5089
        %5135 = vmatprep.subr.mxu0 %v5092
        %5136 = vmatpush1.msra.mxu0 %v5091
        %5137 = vmatprep.subr.mxu0 %v5094
        %5138 = vmatpush1.msra.mxu0 %v5093
        %5139 = vmatprep.subr.mxu0 %v5096
        %5140 = vmatpush1.msra.mxu0 %v5095
        %5141 = vmatprep.subr.mxu0 %v5098
        %5142 = vmatpush1.msra.mxu0 %v5097
        %5143 = vmatprep.subr.mxu0 %v5100
        %5144 = vmatpush1.msra.mxu0 %v5099
        %5145 = vmatprep.subr.mxu0 0.0
        %5146 = vmatpush1.msra.mxu0 0.0
        %5147 = vmatprep.subr.mxu0 0.0
        %5148 = vmatpush1.msra.mxu0 0.0
        %5149 = vmatprep.subr.mxu0 0.0
        %5150 = vmatpush1.msra.mxu0 0.0
        %5151 = vmatprep.subr.mxu0 0.0
        %5152 = vmatpush1.msra.mxu0 0.0
        %5153 = vmatprep.subr.mxu0 0.0
        %5154 = vmatpush1.msra.mxu0 0.0
        %5155 = vmatprep.subr.mxu0 0.0
        %5156 = vmatpush1.msra.mxu0 0.0
        %5157 = vmatprep.subr.mxu0 0.0
        %5158 = vmatpush1.msra.mxu0 0.0
        %5159 = vmatprep.subr.mxu0 0.0
        %5160 = vmatpush1.msra.mxu0 0.0
        %5161 = vmatprep.subr.mxu0 0.0
        %5162 = vmatpush1.msra.mxu0 0.0
        %5163 = vmatprep.subr.mxu0 0.0
        %5164 = vmatpush1.msra.mxu0 0.0
        %5165 = vmatprep.subr.mxu0 0.0
        %5166 = vmatpush1.msra.mxu0 0.0
        %5167 = vmatprep.subr.mxu0 0.0
        %5168 = vmatpush1.msra.mxu0 0.0
        %5169 = vmatprep.subr.mxu0 0.0
        %5170 = vmatpush1.msra.mxu0 0.0
        %5171 = vmatprep.subr.mxu0 0.0
        %5172 = vmatpush1.msra.mxu0 0.0
        %5173 = vmatprep.subr.mxu0 0.0
        %5174 = vmatpush1.msra.mxu0 0.0
        %5175 = vmatprep.subr.mxu0 0.0
        %5176 = vmatpush1.msra.mxu0 0.0
        %5177 = vmatprep.mubr.f32.mxu0 0.0
        %5178 = vmatmul.mubr.f32.gmra.mrb[0].mxu0 %v5067
        %v5179 = vpop.f32.mrb[0].mxu0
        %v5180 = vadd.f32 %v5106, %v5179
        %v5181 = vpop.f32.mrb[0].mxu0
        %v5182 = vadd.f32 %v5110, %v5181
        %5183 = vmatprep.mubr.f32.mxu0 0.0
        %5184 = vmatmul.mubr.f32.gmra.mrb[0].mxu0 %v5068
        %v5185 = vpop.f32.mrb[0].mxu0
        %v5186 = vadd.f32 %v5106, %v5185
        %v5187 = vpop.f32.mrb[0].mxu0
        %v5188 = vadd.f32 %v5110, %v5187
        %5189 = vdwg.mxu0
        %v5190 = vmul.f32 %v5180, 0.5
        %v5191 = vmul.f32 %v5182, 0.5
        %v5192 = vmul.f32 %v5186, 0.5
        %v5193 = vmul.f32 %v5188, 0.5
        %v5194 = vmul.f32 %v5180, 0.044715
        %v5195 = vmul.f32 %v5182, 0.044715
        %v5196 = vmul.f32 %v5186, 0.044715
        %v5197 = vmul.f32 %v5188, 0.044715
        %v5198 = vmul.f32 %v5194, %v5180
        %v5199 = vmul.f32 %v5195, %v5182
        %v5200 = vmul.f32 %v5196, %v5186
        %v5201 = vmul.f32 %v5197, %v5188
        %v5202 = vmul.f32 %v5198, %v5180
        %v5203 = vmul.f32 %v5199, %v5182
        %v5204 = vmul.f32 %v5200, %v5186
        %v5205 = vmul.f32 %v5201, %v5188
        %v5206 = vadd.f32 %v5180, %v5202
        %v5207 = vadd.f32 %v5182, %v5203
        %v5208 = vadd.f32 %v5186, %v5204
        %v5209 = vadd.f32 %v5188, %v5205
        %v5210 = vmul.f32 %v5206, 0.7978846
        %v5211 = vmul.f32 %v5207, 0.7978846
        %v5212 = vmul.f32 %v5208, 0.7978846
        %v5213 = vmul.f32 %v5209, 0.7978846
        %v5214 = vtanh.pop %v5210
        %v5215 = vtanh.pop %v5211
        %v5216 = vtanh.pop %v5212
        %v5217 = vtanh.pop %v5213
        %v5218 = vadd.f32 %v5214, 1.0
        %v5219 = vadd.f32 %v5215, 1.0
        %v5220 = vadd.f32 %v5216, 1.0
        %v5221 = vadd.f32 %v5217, 1.0
        %v5222 = vmul.f32 %v5190, %v5218
        %v5223 = vmul.f32 %v5191, %v5219
        %v5224 = vmul.f32 %v5192, %v5220
        %v5225 = vmul.f32 %v5193, %v5221
        %v5226 = vld [vmem:[#allocation28] sm:$0xff]
        %v5227 = vld [vmem:[#allocation28 + $0x8] sm:$0xff]
        %v5228 = vld [vmem:[#allocation28 + $0x10] sm:$0xff]
        %v5229 = vld [vmem:[#allocation28 + $0x18] sm:$0xff]
        %v5230 = vld [vmem:[#allocation28 + $0x20] sm:$0xff]
        %v5231 = vld [vmem:[#allocation28 + $0x28] sm:$0xff]
        %v5232 = vld [vmem:[#allocation28 + $0x30] sm:$0xff]
        %v5233 = vld [vmem:[#allocation28 + $0x38] sm:$0xff]
        %v5234 = vld [vmem:[#allocation28 + $0x40] sm:$0xff]
        %v5235 = vld [vmem:[#allocation28 + $0x48] sm:$0xff]
        %v5236 = vld [vmem:[#allocation28 + $0x50] sm:$0xff]
        %v5237 = vld [vmem:[#allocation28 + $0x58] sm:$0xff]
        %v5238 = vld [vmem:[#allocation28 + $0x60] sm:$0xff]
        %v5239 = vld [vmem:[#allocation28 + $0x68] sm:$0xff]
        %v5240 = vld [vmem:[#allocation28 + $0x70] sm:$0xff]
        %v5241 = vld [vmem:[#allocation28 + $0x78] sm:$0xff]
        %v5242 = vld [vmem:[#allocation28 + $0x80] sm:$0xff]
        %v5243 = vld [vmem:[#allocation28 + $0x88] sm:$0xff]
        %v5244 = vld [vmem:[#allocation28 + $0x90] sm:$0xff]
        %v5245 = vld [vmem:[#allocation28 + $0x98] sm:$0xff]
        %v5246 = vld [vmem:[#allocation28 + $0xa0] sm:$0xff]
        %v5247 = vld [vmem:[#allocation28 + $0xa8] sm:$0xff]
        %v5248 = vld [vmem:[#allocation28 + $0xb0] sm:$0xff]
        %v5249 = vld [vmem:[#allocation28 + $0xb8] sm:$0xff]
        %v5250 = vld [vmem:[#allocation28 + $0xc0] sm:$0xff]
        %v5251 = vld [vmem:[#allocation28 + $0xc8] sm:$0xff]
        %v5252 = vld [vmem:[#allocation28 + $0xd0] sm:$0xff]
        %v5253 = vld [vmem:[#allocation28 + $0xd8] sm:$0xff]
        %v5254 = vld [vmem:[#allocation28 + $0xe0] sm:$0xff]
        %v5255 = vld [vmem:[#allocation28 + $0xe8] sm:$0xff]
        %v5256 = vld [vmem:[#allocation28 + $0xf0] sm:$0xff]
        %v5257 = vld [vmem:[#allocation28 + $0xf8] sm:$0xff]
        %v5258 = vld [vmem:[#allocation13] sm:$0x1]
        %v5260 = vlaneseq
        %v5261 = vshrl.u32 %v5260, 7
        %v5262 = vsub.s32 0, %v5261
        %v5263 = vrot.slane %v5258, %v5262
        %5265 = vmatprep.subr.mxu0 0.0
        %5266 = vmatpush1.msra.mxu0 %v5226
        %5267 = vmatprep.subr.mxu0 0.0
        %5268 = vmatpush1.msra.mxu0 %v5227
        %5269 = vmatprep.subr.mxu0 0.0
        %5270 = vmatpush1.msra.mxu0 %v5228
        %5271 = vmatprep.subr.mxu0 0.0
        %5272 = vmatpush1.msra.mxu0 %v5229
        %5273 = vmatprep.subr.mxu0 0.0
        %5274 = vmatpush1.msra.mxu0 %v5230
        %5275 = vmatprep.subr.mxu0 0.0
        %5276 = vmatpush1.msra.mxu0 %v5231
        %5277 = vmatprep.subr.mxu0 0.0
        %5278 = vmatpush1.msra.mxu0 %v5232
        %5279 = vmatprep.subr.mxu0 0.0
        %5280 = vmatpush1.msra.mxu0 %v5233
        %5281 = vmatprep.subr.mxu0 0.0
        %5282 = vmatpush1.msra.mxu0 %v5234
        %5283 = vmatprep.subr.mxu0 0.0
        %5284 = vmatpush1.msra.mxu0 %v5235
        %5285 = vmatprep.subr.mxu0 0.0
        %5286 = vmatpush1.msra.mxu0 %v5236
        %5287 = vmatprep.subr.mxu0 0.0
        %5288 = vmatpush1.msra.mxu0 %v5237
        %5289 = vmatprep.subr.mxu0 0.0
        %5290 = vmatpush1.msra.mxu0 %v5238
        %5291 = vmatprep.subr.mxu0 0.0
        %5292 = vmatpush1.msra.mxu0 %v5239
        %5293 = vmatprep.subr.mxu0 0.0
        %5294 = vmatpush1.msra.mxu0 %v5240
        %5295 = vmatprep.subr.mxu0 0.0
        %5296 = vmatpush1.msra.mxu0 %v5241
        %5297 = vmatprep.subr.mxu0 0.0
        %5298 = vmatpush1.msra.mxu0 %v5242
        %5299 = vmatprep.subr.mxu0 0.0
        %5300 = vmatpush1.msra.mxu0 %v5243
        %5301 = vmatprep.subr.mxu0 0.0
        %5302 = vmatpush1.msra.mxu0 %v5244
        %5303 = vmatprep.subr.mxu0 0.0
        %5304 = vmatpush1.msra.mxu0 %v5245
        %5305 = vmatprep.subr.mxu0 0.0
        %5306 = vmatpush1.msra.mxu0 %v5246
        %5307 = vmatprep.subr.mxu0 0.0
        %5308 = vmatpush1.msra.mxu0 %v5247
        %5309 = vmatprep.subr.mxu0 0.0
        %5310 = vmatpush1.msra.mxu0 %v5248
        %5311 = vmatprep.subr.mxu0 0.0
        %5312 = vmatpush1.msra.mxu0 %v5249
        %5313 = vmatprep.subr.mxu0 0.0
        %5314 = vmatpush1.msra.mxu0 %v5250
        %5315 = vmatprep.subr.mxu0 0.0
        %5316 = vmatpush1.msra.mxu0 %v5251
        %5317 = vmatprep.subr.mxu0 0.0
        %5318 = vmatpush1.msra.mxu0 %v5252
        %5319 = vmatprep.subr.mxu0 0.0
        %5320 = vmatpush1.msra.mxu0 %v5253
        %5321 = vmatprep.subr.mxu0 0.0
        %5322 = vmatpush1.msra.mxu0 %v5254
        %5323 = vmatprep.subr.mxu0 0.0
        %5324 = vmatpush1.msra.mxu0 %v5255
        %5325 = vmatprep.subr.mxu0 0.0
        %5326 = vmatpush1.msra.mxu0 %v5256
        %5327 = vmatprep.subr.mxu0 0.0
        %5328 = vmatpush1.msra.mxu0 %v5257
        %5329 = vmatprep.mubr.f32.mxu0 %v5223
        %5330 = vmatmul.mubr.f32.gmra.mrb[0].mxu0 %v5222
        %v5331 = vpop.f32.mrb[0].mxu0
        %v5332 = vadd.f32 %v5263, %v5331
        %v5333 = vpop.f32.mrb[0].mxu0
        %5334 = vmatprep.mubr.f32.mxu0 %v5225
        %5335 = vmatmul.mubr.f32.gmra.mrb[0].mxu0 %v5224
        %v5336 = vpop.f32.mrb[0].mxu0
        %v5337 = vadd.f32 %v5263, %v5336
        %v5338 = vpop.f32.mrb[0].mxu0
        %5339 = vdwg.mxu0
        %v5340 = vadd.f32 %v5067, %v5332
        %v5341 = vadd.f32 %v5068, %v5337
        %v5342 = vld [vmem:[#allocation25] sm:$0x1]
        %v5343 = vld [vmem:[#allocation23] sm:$0x1]
        %5344 = vadd.xlane.f32.xlu0 %v5340
        %v5345 = vpop.xlane.xlu0 %5344
        %5346 = vadd.xlane.f32.xlu0 %v5341
        %v5347 = vpop.xlane.xlu0 %5346
        %v5348 = vmul.f32 %v5345, %v5034
        %v5349 = vmul.f32 %v5347, %v5034
        %v5350 = vsub.f32 %v5340, %v5348
        %v5351 = vsub.f32 %v5341, %v5349
        %v5352 = vmul.f32 %v5350, %v5350
        %v5353 = vmul.f32 %v5351, %v5351
        %5354 = vadd.xlane.f32.xlu0 %v5352
        %v5355 = vpop.xlane.xlu0 %5354
        %5356 = vadd.xlane.f32.xlu0 %v5353
        %v5357 = vpop.xlane.xlu0 %5356
        %v5358 = vmul.f32 %v5355, %v5034
        %v5359 = vmul.f32 %v5357, %v5034
        %v5360 = vadd.f32 %v5358, 1e-05
        %v5361 = vadd.f32 %v5359, 1e-05
        %v5362 = vrsqrt.pop %v5360
        %v5363 = vrsqrt.pop %v5361
        %v5364 = vmul.f32 %v5350, %v5362
        %v5365 = vmul.f32 %v5351, %v5363
        %v5367 = vlaneseq
        %v5368 = vshrl.u32 %v5367, 7
        %v5369 = vsub.s32 0, %v5368
        %v5370 = vrot.slane %v5342, %v5369
        %v5372 = vmul.f32 %v5364, %v5370
        %v5373 = vmul.f32 %v5365, %v5370
        %v5375 = vlaneseq
        %v5376 = vshrl.u32 %v5375, 7
        %v5377 = vsub.s32 0, %v5376
        %v5378 = vrot.slane %v5343, %v5377
        %v5380 = vadd.f32 %v5372, %v5378
        %v5381 = vadd.f32 %v5373, %v5378
        %v5382 = vld [vmem:[#allocation56] sm:$0xff]
        %v5383 = vld [vmem:[#allocation56 + $0x8] sm:$0xff]
        %v5384 = vld [vmem:[#allocation56 + $0x10] sm:$0xff]
        %v5385 = vld [vmem:[#allocation56 + $0x18] sm:$0xff]
        %v5386 = vld [vmem:[#allocation56 + $0x20] sm:$0xff]
        %v5387 = vld [vmem:[#allocation56 + $0x28] sm:$0xff]
        %v5388 = vld [vmem:[#allocation56 + $0x30] sm:$0xff]
        %v5389 = vld [vmem:[#allocation56 + $0x38] sm:$0xff]
        %v5390 = vld [vmem:[#allocation56 + $0x40] sm:$0xff]
        %v5391 = vld [vmem:[#allocation56 + $0x48] sm:$0xff]
        %v5392 = vld [vmem:[#allocation56 + $0x50] sm:$0xff]
        %v5393 = vld [vmem:[#allocation56 + $0x58] sm:$0xff]
        %v5394 = vld [vmem:[#allocation56 + $0x60] sm:$0xff]
        %v5395 = vld [vmem:[#allocation56 + $0x68] sm:$0xff]
        %v5396 = vld [vmem:[#allocation56 + $0x70] sm:$0xff]
        %v5397 = vld [vmem:[#allocation56 + $0x78] sm:$0xff]
        %v5398 = vld [vmem:[#allocation41] sm:$0x1]
        %v5400 = vlaneseq
        %v5401 = vshrl.u32 %v5400, 7
        %v5402 = vsub.s32 0, %v5401
        %v5403 = vrot.slane %v5398, %v5402
        %5405 = vmatprep.subr.mxu0 0.0
        %5406 = vmatpush1.msra.mxu0 %v5382
        %5407 = vmatprep.subr.mxu0 0.0
        %5408 = vmatpush1.msra.mxu0 %v5383
        %5409 = vmatprep.subr.mxu0 0.0
        %5410 = vmatpush1.msra.mxu0 %v5384
        %5411 = vmatprep.subr.mxu0 0.0
        %5412 = vmatpush1.msra.mxu0 %v5385
        %5413 = vmatprep.subr.mxu0 0.0
        %5414 = vmatpush1.msra.mxu0 %v5386
        %5415 = vmatprep.subr.mxu0 0.0
        %5416 = vmatpush1.msra.mxu0 %v5387
        %5417 = vmatprep.subr.mxu0 0.0
        %5418 = vmatpush1.msra.mxu0 %v5388
        %5419 = vmatprep.subr.mxu0 0.0
        %5420 = vmatpush1.msra.mxu0 %v5389
        %5421 = vmatprep.subr.mxu0 0.0
        %5422 = vmatpush1.msra.mxu0 %v5390
        %5423 = vmatprep.subr.mxu0 0.0
        %5424 = vmatpush1.msra.mxu0 %v5391
        %5425 = vmatprep.subr.mxu0 0.0
        %5426 = vmatpush1.msra.mxu0 %v5392
        %5427 = vmatprep.subr.mxu0 0.0
        %5428 = vmatpush1.msra.mxu0 %v5393
        %5429 = vmatprep.subr.mxu0 0.0
        %5430 = vmatpush1.msra.mxu0 %v5394
        %5431 = vmatprep.subr.mxu0 0.0
        %5432 = vmatpush1.msra.mxu0 %v5395
        %5433 = vmatprep.subr.mxu0 0.0
        %5434 = vmatpush1.msra.mxu0 %v5396
        %5435 = vmatprep.subr.mxu0 0.0
        %5436 = vmatpush1.msra.mxu0 %v5397
        %5437 = vmatprep.subr.mxu0 0.0
        %5438 = vmatpush1.msra.mxu0 0.0
        %5439 = vmatprep.subr.mxu0 0.0
        %5440 = vmatpush1.msra.mxu0 0.0
        %5441 = vmatprep.subr.mxu0 0.0
        %5442 = vmatpush1.msra.mxu0 0.0
        %5443 = vmatprep.subr.mxu0 0.0
        %5444 = vmatpush1.msra.mxu0 0.0
        %5445 = vmatprep.subr.mxu0 0.0
        %5446 = vmatpush1.msra.mxu0 0.0
        %5447 = vmatprep.subr.mxu0 0.0
        %5448 = vmatpush1.msra.mxu0 0.0
        %5449 = vmatprep.subr.mxu0 0.0
        %5450 = vmatpush1.msra.mxu0 0.0
        %5451 = vmatprep.subr.mxu0 0.0
        %5452 = vmatpush1.msra.mxu0 0.0
        %5453 = vmatprep.subr.mxu0 0.0
        %5454 = vmatpush1.msra.mxu0 0.0
        %5455 = vmatprep.subr.mxu0 0.0
        %5456 = vmatpush1.msra.mxu0 0.0
        %5457 = vmatprep.subr.mxu0 0.0
        %5458 = vmatpush1.msra.mxu0 0.0
        %5459 = vmatprep.subr.mxu0 0.0
        %5460 = vmatpush1.msra.mxu0 0.0
        %5461 = vmatprep.subr.mxu0 0.0
        %5462 = vmatpush1.msra.mxu0 0.0
        %5463 = vmatprep.subr.mxu0 0.0
        %5464 = vmatpush1.msra.mxu0 0.0
        %5465 = vmatprep.subr.mxu0 0.0
        %5466 = vmatpush1.msra.mxu0 0.0
        %5467 = vmatprep.subr.mxu0 0.0
        %5468 = vmatpush1.msra.mxu0 0.0
        %5469 = vmatprep.mubr.f32.mxu0 0.0
        %5470 = vmatmul.mubr.f32.gmra.mrb[0].mxu0 %v5380
        %v5471 = vpop.f32.mrb[0].mxu0
        %v5472 = vadd.f32 %v5403, %v5471
        %v5473 = vpop.f32.mrb[0].mxu0
        %5474 = vmatprep.mubr.f32.mxu0 0.0
        %5475 = vmatmul.mubr.f32.gmra.mrb[0].mxu0 %v5381
        %v5476 = vpop.f32.mrb[0].mxu0
        %v5477 = vadd.f32 %v5403, %v5476
        %v5478 = vpop.f32.mrb[0].mxu0
        %5479 = vdwg.mxu0
        %v5480 = vld [vmem:[#allocation53] sm:$0xff]
        %v5481 = vld [vmem:[#allocation53 + $0x8] sm:$0xff]
        %v5482 = vld [vmem:[#allocation53 + $0x10] sm:$0xff]
        %v5483 = vld [vmem:[#allocation53 + $0x18] sm:$0xff]
        %v5484 = vld [vmem:[#allocation53 + $0x20] sm:$0xff]
        %v5485 = vld [vmem:[#allocation53 + $0x28] sm:$0xff]
        %v5486 = vld [vmem:[#allocation53 + $0x30] sm:$0xff]
        %v5487 = vld [vmem:[#allocation53 + $0x38] sm:$0xff]
        %v5488 = vld [vmem:[#allocation53 + $0x40] sm:$0xff]
        %v5489 = vld [vmem:[#allocation53 + $0x48] sm:$0xff]
        %v5490 = vld [vmem:[#allocation53 + $0x50] sm:$0xff]
        %v5491 = vld [vmem:[#allocation53 + $0x58] sm:$0xff]
        %v5492 = vld [vmem:[#allocation53 + $0x60] sm:$0xff]
        %v5493 = vld [vmem:[#allocation53 + $0x68] sm:$0xff]
        %v5494 = vld [vmem:[#allocation53 + $0x70] sm:$0xff]
        %v5495 = vld [vmem:[#allocation53 + $0x78] sm:$0xff]
        %v5496 = vld [vmem:[#allocation38] sm:$0x1]
        %v5498 = vlaneseq
        %v5499 = vshrl.u32 %v5498, 7
        %v5500 = vsub.s32 0, %v5499
        %v5501 = vrot.slane %v5496, %v5500
        %5503 = vmatprep.subr.mxu0 0.0
        %5504 = vmatpush1.msra.mxu0 %v5480
        %5505 = vmatprep.subr.mxu0 0.0
        %5506 = vmatpush1.msra.mxu0 %v5481
        %5507 = vmatprep.subr.mxu0 0.0
        %5508 = vmatpush1.msra.mxu0 %v5482
        %5509 = vmatprep.subr.mxu0 0.0
        %5510 = vmatpush1.msra.mxu0 %v5483
        %5511 = vmatprep.subr.mxu0 0.0
        %5512 = vmatpush1.msra.mxu0 %v5484
        %5513 = vmatprep.subr.mxu0 0.0
        %5514 = vmatpush1.msra.mxu0 %v5485
        %5515 = vmatprep.subr.mxu0 0.0
        %5516 = vmatpush1.msra.mxu0 %v5486
        %5517 = vmatprep.subr.mxu0 0.0
        %5518 = vmatpush1.msra.mxu0 %v5487
        %5519 = vmatprep.subr.mxu0 0.0
        %5520 = vmatpush1.msra.mxu0 %v5488
        %5521 = vmatprep.subr.mxu0 0.0
        %5522 = vmatpush1.msra.mxu0 %v5489
        %5523 = vmatprep.subr.mxu0 0.0
        %5524 = vmatpush1.msra.mxu0 %v5490
        %5525 = vmatprep.subr.mxu0 0.0
        %5526 = vmatpush1.msra.mxu0 %v5491
        %5527 = vmatprep.subr.mxu0 0.0
        %5528 = vmatpush1.msra.mxu0 %v5492
        %5529 = vmatprep.subr.mxu0 0.0
        %5530 = vmatpush1.msra.mxu0 %v5493
        %5531 = vmatprep.subr.mxu0 0.0
        %5532 = vmatpush1.msra.mxu0 %v5494
        %5533 = vmatprep.subr.mxu0 0.0
        %5534 = vmatpush1.msra.mxu0 %v5495
        %5535 = vmatprep.subr.mxu0 0.0
        %5536 = vmatpush1.msra.mxu0 0.0
        %5537 = vmatprep.subr.mxu0 0.0
        %5538 = vmatpush1.msra.mxu0 0.0
        %5539 = vmatprep.subr.mxu0 0.0
        %5540 = vmatpush1.msra.mxu0 0.0
        %5541 = vmatprep.subr.mxu0 0.0
        %5542 = vmatpush1.msra.mxu0 0.0
        %5543 = vmatprep.subr.mxu0 0.0
        %5544 = vmatpush1.msra.mxu0 0.0
        %5545 = vmatprep.subr.mxu0 0.0
        %5546 = vmatpush1.msra.mxu0 0.0
        %5547 = vmatprep.subr.mxu0 0.0
        %5548 = vmatpush1.msra.mxu0 0.0
        %5549 = vmatprep.subr.mxu0 0.0
        %5550 = vmatpush1.msra.mxu0 0.0
        %5551 = vmatprep.subr.mxu0 0.0
        %5552 = vmatpush1.msra.mxu0 0.0
        %5553 = vmatprep.subr.mxu0 0.0
        %5554 = vmatpush1.msra.mxu0 0.0
        %5555 = vmatprep.subr.mxu0 0.0
        %5556 = vmatpush1.msra.mxu0 0.0
        %5557 = vmatprep.subr.mxu0 0.0
        %5558 = vmatpush1.msra.mxu0 0.0
        %5559 = vmatprep.subr.mxu0 0.0
        %5560 = vmatpush1.msra.mxu0 0.0
        %5561 = vmatprep.subr.mxu0 0.0
        %5562 = vmatpush1.msra.mxu0 0.0
        %5563 = vmatprep.subr.mxu0 0.0
        %5564 = vmatpush1.msra.mxu0 0.0
        %5565 = vmatprep.subr.mxu0 0.0
        %5566 = vmatpush1.msra.mxu0 0.0
        %5567 = vmatprep.mubr.f32.mxu0 0.0
        %5568 = vmatmul.mubr.f32.gmra.mrb[0].mxu0 %v5380
        %v5569 = vpop.f32.mrb[0].mxu0
        %v5570 = vadd.f32 %v5501, %v5569
        %v5571 = vpop.f32.mrb[0].mxu0
        %5572 = vmatprep.mubr.f32.mxu0 0.0
        %5573 = vmatmul.mubr.f32.gmra.mrb[0].mxu0 %v5381
        %v5574 = vpop.f32.mrb[0].mxu0
        %v5575 = vadd.f32 %v5501, %v5574
        %v5576 = vpop.f32.mrb[0].mxu0
        %5577 = vdwg.mxu0
        %v5578 = vld [vmem:[%s69] sm:$0xff]
        %v5579 = vld [vmem:[%s69 + $0x8] sm:$0xff]
        %v5580 = vld [vmem:[%s69 + $0x10] sm:$0xff]
        %v5581 = vld [vmem:[%s69 + $0x18] sm:$0xff]
        %v5582 = vld [vmem:[%s69 + $0x20] sm:$0xff]
        %v5583 = vld [vmem:[%s69 + $0x28] sm:$0xff]
        %v5584 = vld [vmem:[%s69 + $0x30] sm:$0xff]
        %v5585 = vld [vmem:[%s69 + $0x38] sm:$0xff]
        %v5586 = vld [vmem:[%s69 + $0x40] sm:$0xff]
        %v5587 = vld [vmem:[%s69 + $0x48] sm:$0xff]
        %v5588 = vld [vmem:[%s69 + $0x50] sm:$0xff]
        %v5589 = vld [vmem:[%s69 + $0x58] sm:$0xff]
        %v5590 = vld [vmem:[%s69 + $0x60] sm:$0xff]
        %v5591 = vld [vmem:[%s69 + $0x68] sm:$0xff]
        %v5592 = vld [vmem:[%s69 + $0x70] sm:$0xff]
        %v5593 = vld [vmem:[%s69 + $0x78] sm:$0xff]
        %v5594 = vld [vmem:[#allocation43] sm:$0x1]
        %v5596 = vlaneseq
        %v5597 = vshrl.u32 %v5596, 7
        %v5598 = vsub.s32 0, %v5597
        %v5599 = vrot.slane %v5594, %v5598
        %5601 = vmatprep.subr.mxu0 0.0
        %5602 = vmatpush1.msra.mxu0 %v5578
        %5603 = vmatprep.subr.mxu0 0.0
        %5604 = vmatpush1.msra.mxu0 %v5579
        %5605 = vmatprep.subr.mxu0 0.0
        %5606 = vmatpush1.msra.mxu0 %v5580
        %5607 = vmatprep.subr.mxu0 0.0
        %5608 = vmatpush1.msra.mxu0 %v5581
        %5609 = vmatprep.subr.mxu0 0.0
        %5610 = vmatpush1.msra.mxu0 %v5582
        %5611 = vmatprep.subr.mxu0 0.0
        %5612 = vmatpush1.msra.mxu0 %v5583
        %5613 = vmatprep.subr.mxu0 0.0
        %5614 = vmatpush1.msra.mxu0 %v5584
        %5615 = vmatprep.subr.mxu0 0.0
        %5616 = vmatpush1.msra.mxu0 %v5585
        %5617 = vmatprep.subr.mxu0 0.0
        %5618 = vmatpush1.msra.mxu0 %v5586
        %5619 = vmatprep.subr.mxu0 0.0
        %5620 = vmatpush1.msra.mxu0 %v5587
        %5621 = vmatprep.subr.mxu0 0.0
        %5622 = vmatpush1.msra.mxu0 %v5588
        %5623 = vmatprep.subr.mxu0 0.0
        %5624 = vmatpush1.msra.mxu0 %v5589
        %5625 = vmatprep.subr.mxu0 0.0
        %5626 = vmatpush1.msra.mxu0 %v5590
        %5627 = vmatprep.subr.mxu0 0.0
        %5628 = vmatpush1.msra.mxu0 %v5591
        %5629 = vmatprep.subr.mxu0 0.0
        %5630 = vmatpush1.msra.mxu0 %v5592
        %5631 = vmatprep.subr.mxu0 0.0
        %5632 = vmatpush1.msra.mxu0 %v5593
        %5633 = vmatprep.subr.mxu0 0.0
        %5634 = vmatpush1.msra.mxu0 0.0
        %5635 = vmatprep.subr.mxu0 0.0
        %5636 = vmatpush1.msra.mxu0 0.0
        %5637 = vmatprep.subr.mxu0 0.0
        %5638 = vmatpush1.msra.mxu0 0.0
        %5639 = vmatprep.subr.mxu0 0.0
        %5640 = vmatpush1.msra.mxu0 0.0
        %5641 = vmatprep.subr.mxu0 0.0
        %5642 = vmatpush1.msra.mxu0 0.0
        %5643 = vmatprep.subr.mxu0 0.0
        %5644 = vmatpush1.msra.mxu0 0.0
        %5645 = vmatprep.subr.mxu0 0.0
        %5646 = vmatpush1.msra.mxu0 0.0
        %5647 = vmatprep.subr.mxu0 0.0
        %5648 = vmatpush1.msra.mxu0 0.0
        %5649 = vmatprep.subr.mxu0 0.0
        %5650 = vmatpush1.msra.mxu0 0.0
        %5651 = vmatprep.subr.mxu0 0.0
        %5652 = vmatpush1.msra.mxu0 0.0
        %5653 = vmatprep.subr.mxu0 0.0
        %5654 = vmatpush1.msra.mxu0 0.0
        %5655 = vmatprep.subr.mxu0 0.0
        %5656 = vmatpush1.msra.mxu0 0.0
        %5657 = vmatprep.subr.mxu0 0.0
        %5658 = vmatpush1.msra.mxu0 0.0
        %5659 = vmatprep.subr.mxu0 0.0
        %5660 = vmatpush1.msra.mxu0 0.0
        %5661 = vmatprep.subr.mxu0 0.0
        %5662 = vmatpush1.msra.mxu0 0.0
        %5663 = vmatprep.subr.mxu0 0.0
        %5664 = vmatpush1.msra.mxu0 0.0
        %5665 = vmatprep.mubr.f32.mxu0 0.0
        %5666 = vmatmul.mubr.f32.gmra.mrb[0].mxu0 %v5380
        %v5667 = vpop.f32.mrb[0].mxu0
        %v5668 = vadd.f32 %v5599, %v5667
        %v5669 = vpop.f32.mrb[0].mxu0
        %5670 = vmatprep.mubr.f32.mxu0 0.0
        %5671 = vmatmul.mubr.f32.gmra.mrb[0].mxu0 %v5381
        %v5672 = vpop.f32.mrb[0].mxu0
        %v5673 = vadd.f32 %v5599, %v5672
        %v5674 = vpop.f32.mrb[0].mxu0
        %5675 = vdwg.mxu0
        %v5676 = vmul.f32 %v5472, %v4174
        %v5677 = vmul.f32 %v5477, %v4174
        %5678 = vmatprep.subr.mxu0 0.0
        %5679 = vmatpush1.xpose.msra.mxu0 %v5570
        %5680 = vmatprep.subr.mxu0 0.0
        %5681 = vmatpush1.xpose.msra.mxu0 %v5575
        %5682 = vmatprep.subr.mxu0 0.0
        %5683 = vmatpush1.xpose.msra.mxu0 0.0
        %5684 = vmatprep.subr.mxu0 0.0
        %5685 = vmatpush1.xpose.msra.mxu0 0.0
        %5686 = vmatprep.subr.mxu0 0.0
        %5687 = vmatpush1.xpose.msra.mxu0 0.0
        %5688 = vmatprep.subr.mxu0 0.0
        %5689 = vmatpush1.xpose.msra.mxu0 0.0
        %5690 = vmatprep.subr.mxu0 0.0
        %5691 = vmatpush1.xpose.msra.mxu0 0.0
        %5692 = vmatprep.subr.mxu0 0.0
        %5693 = vmatpush1.xpose.msra.mxu0 0.0
        %5694 = vmatprep.subr.mxu0 0.0
        %5695 = vmatpush1.xpose.msra.mxu0 0.0
        %5696 = vmatprep.subr.mxu0 0.0
        %5697 = vmatpush1.xpose.msra.mxu0 0.0
        %5698 = vmatprep.subr.mxu0 0.0
        %5699 = vmatpush1.xpose.msra.mxu0 0.0
        %5700 = vmatprep.subr.mxu0 0.0
        %5701 = vmatpush1.xpose.msra.mxu0 0.0
        %5702 = vmatprep.subr.mxu0 0.0
        %5703 = vmatpush1.xpose.msra.mxu0 0.0
        %5704 = vmatprep.subr.mxu0 0.0
        %5705 = vmatpush1.xpose.msra.mxu0 0.0
        %5706 = vmatprep.subr.mxu0 0.0
        %5707 = vmatpush1.xpose.msra.mxu0 0.0
        %5708 = vmatprep.subr.mxu0 0.0
        %5709 = vmatpush1.xpose.msra.mxu0 0.0
        %5710 = vmatprep.subr.mxu0 0.0
        %5711 = vmatpush1.xpose.msra.mxu0 0.0
        %5712 = vmatprep.subr.mxu0 0.0
        %5713 = vmatpush1.xpose.msra.mxu0 0.0
        %5714 = vmatprep.subr.mxu0 0.0
        %5715 = vmatpush1.xpose.msra.mxu0 0.0
        %5716 = vmatprep.subr.mxu0 0.0
        %5717 = vmatpush1.xpose.msra.mxu0 0.0
        %5718 = vmatprep.subr.mxu0 0.0
        %5719 = vmatpush1.xpose.msra.mxu0 0.0
        %5720 = vmatprep.subr.mxu0 0.0
        %5721 = vmatpush1.xpose.msra.mxu0 0.0
        %5722 = vmatprep.subr.mxu0 0.0
        %5723 = vmatpush1.xpose.msra.mxu0 0.0
        %5724 = vmatprep.subr.mxu0 0.0
        %5725 = vmatpush1.xpose.msra.mxu0 0.0
        %5726 = vmatprep.subr.mxu0 0.0
        %5727 = vmatpush1.xpose.msra.mxu0 0.0
        %5728 = vmatprep.subr.mxu0 0.0
        %5729 = vmatpush1.xpose.msra.mxu0 0.0
        %5730 = vmatprep.subr.mxu0 0.0
        %5731 = vmatpush1.xpose.msra.mxu0 0.0
        %5732 = vmatprep.subr.mxu0 0.0
        %5733 = vmatpush1.xpose.msra.mxu0 0.0
        %5734 = vmatprep.subr.mxu0 0.0
        %5735 = vmatpush1.xpose.msra.mxu0 0.0
        %5736 = vmatprep.subr.mxu0 0.0
        %5737 = vmatpush1.xpose.msra.mxu0 0.0
        %5738 = vmatprep.subr.mxu0 0.0
        %5739 = vmatpush1.xpose.msra.mxu0 0.0
        %5740 = vmatprep.subr.mxu0 0.0
        %5741 = vmatpush1.xpose.msra.mxu0 0.0
        %5742 = vmatprep.mubr.f32.mxu0 0.0
        %5743 = vmatmul.mubr.f32.gmra.mrb[0].mxu0 %v5676
        %v5744 = vpop.f32.mrb[0].mxu0
        %v5745 = vadd.f32 0.0, %v5744
        %v5746 = vpop.f32.mrb[0].mxu0
        %5747 = vmatprep.mubr.f32.mxu0 0.0
        %5748 = vmatmul.mubr.f32.gmra.mrb[0].mxu0 %v5677
        %v5749 = vpop.f32.mrb[0].mxu0
        %v5750 = vadd.f32 0.0, %v5749
        %v5751 = vpop.f32.mrb[0].mxu0
        %5752 = vdwg.mxu0
        %v5753 = vmul.f32 %v5745, 0.17677669
        %v5754 = vmul.f32 %v5750, 0.17677669
        %v5755 = vsel %vm4254, %v5753, -inf
        %5756 = vmax.xlane.f32.xlu0 %v5755
        %v5757 = vpop.xlane.xlu0 %5756
        %v5758 = vsel %vm4254, %v5754, -inf
        %5759 = vmax.xlane.f32.xlu0 %v5758
        %v5760 = vpop.xlane.xlu0 %5759
        %v5761 = vsub.f32 %v5753, %v5757
        %v5762 = vsub.f32 %v5754, %v5760
        %v5763 = vmul.f32 %v5761, 1.442695
        %v5764 = vpow.pop %v5763
        %v5765 = vmul.f32 %v5762, 1.442695
        %v5766 = vpow.pop %v5765
        %v5767 = vsel %vm4254, %v5764, 0.0
        %5768 = vadd.xlane.f32.xlu0 %v5767
        %v5769 = vpop.xlane.xlu0 %5768
        %v5770 = vsel %vm4254, %v5766, 0.0
        %5771 = vadd.xlane.f32.xlu0 %v5770
        %v5772 = vpop.xlane.xlu0 %5771
        %v5773 = vrcp.pop %v5769
        %v5774 = vmul.f32 %v5764, %v5773
        %v5775 = vrcp.pop %v5772
        %v5776 = vmul.f32 %v5766, %v5775
        %v5777 = vmul.f32 %v5668, %v4174
        %v5778 = vmul.f32 %v5673, %v4174
        %v5779 = vmul.f32 %v5472, %v4282
        %v5780 = vmul.f32 %v5477, %v4282
        %5781 = vmatprep.subr.mxu0 0.0
        %5782 = vmatpush1.xpose.msra.mxu0 %v5570
        %5783 = vmatprep.subr.mxu0 0.0
        %5784 = vmatpush1.xpose.msra.mxu0 %v5575
        %5785 = vmatprep.subr.mxu0 0.0
        %5786 = vmatpush1.xpose.msra.mxu0 0.0
        %5787 = vmatprep.subr.mxu0 0.0
        %5788 = vmatpush1.xpose.msra.mxu0 0.0
        %5789 = vmatprep.subr.mxu0 0.0
        %5790 = vmatpush1.xpose.msra.mxu0 0.0
        %5791 = vmatprep.subr.mxu0 0.0
        %5792 = vmatpush1.xpose.msra.mxu0 0.0
        %5793 = vmatprep.subr.mxu0 0.0
        %5794 = vmatpush1.xpose.msra.mxu0 0.0
        %5795 = vmatprep.subr.mxu0 0.0
        %5796 = vmatpush1.xpose.msra.mxu0 0.0
        %5797 = vmatprep.subr.mxu0 0.0
        %5798 = vmatpush1.xpose.msra.mxu0 0.0
        %5799 = vmatprep.subr.mxu0 0.0
        %5800 = vmatpush1.xpose.msra.mxu0 0.0
        %5801 = vmatprep.subr.mxu0 0.0
        %5802 = vmatpush1.xpose.msra.mxu0 0.0
        %5803 = vmatprep.subr.mxu0 0.0
        %5804 = vmatpush1.xpose.msra.mxu0 0.0
        %5805 = vmatprep.subr.mxu0 0.0
        %5806 = vmatpush1.xpose.msra.mxu0 0.0
        %5807 = vmatprep.subr.mxu0 0.0
        %5808 = vmatpush1.xpose.msra.mxu0 0.0
        %5809 = vmatprep.subr.mxu0 0.0
        %5810 = vmatpush1.xpose.msra.mxu0 0.0
        %5811 = vmatprep.subr.mxu0 0.0
        %5812 = vmatpush1.xpose.msra.mxu0 0.0
        %5813 = vmatprep.subr.mxu0 0.0
        %5814 = vmatpush1.xpose.msra.mxu0 0.0
        %5815 = vmatprep.subr.mxu0 0.0
        %5816 = vmatpush1.xpose.msra.mxu0 0.0
        %5817 = vmatprep.subr.mxu0 0.0
        %5818 = vmatpush1.xpose.msra.mxu0 0.0
        %5819 = vmatprep.subr.mxu0 0.0
        %5820 = vmatpush1.xpose.msra.mxu0 0.0
        %5821 = vmatprep.subr.mxu0 0.0
        %5822 = vmatpush1.xpose.msra.mxu0 0.0
        %5823 = vmatprep.subr.mxu0 0.0
        %5824 = vmatpush1.xpose.msra.mxu0 0.0
        %5825 = vmatprep.subr.mxu0 0.0
        %5826 = vmatpush1.xpose.msra.mxu0 0.0
        %5827 = vmatprep.subr.mxu0 0.0
        %5828 = vmatpush1.xpose.msra.mxu0 0.0
        %5829 = vmatprep.subr.mxu0 0.0
        %5830 = vmatpush1.xpose.msra.mxu0 0.0
        %5831 = vmatprep.subr.mxu0 0.0
        %5832 = vmatpush1.xpose.msra.mxu0 0.0
        %5833 = vmatprep.subr.mxu0 0.0
        %5834 = vmatpush1.xpose.msra.mxu0 0.0
        %5835 = vmatprep.subr.mxu0 0.0
        %5836 = vmatpush1.xpose.msra.mxu0 0.0
        %5837 = vmatprep.subr.mxu0 0.0
        %5838 = vmatpush1.xpose.msra.mxu0 0.0
        %5839 = vmatprep.subr.mxu0 0.0
        %5840 = vmatpush1.xpose.msra.mxu0 0.0
        %5841 = vmatprep.subr.mxu0 0.0
        %5842 = vmatpush1.xpose.msra.mxu0 0.0
        %5843 = vmatprep.subr.mxu0 0.0
        %5844 = vmatpush1.xpose.msra.mxu0 0.0
        %5845 = vmatprep.mubr.f32.mxu0 0.0
        %5846 = vmatmul.mubr.f32.gmra.mrb[0].mxu0 %v5779
        %v5847 = vpop.f32.mrb[0].mxu0
        %v5848 = vadd.f32 0.0, %v5847
        %v5849 = vpop.f32.mrb[0].mxu0
        %5850 = vmatprep.mubr.f32.mxu0 0.0
        %5851 = vmatmul.mubr.f32.gmra.mrb[0].mxu0 %v5780
        %v5852 = vpop.f32.mrb[0].mxu0
        %v5853 = vadd.f32 0.0, %v5852
        %v5854 = vpop.f32.mrb[0].mxu0
        %5855 = vdwg.mxu0
        %v5856 = vmul.f32 %v5848, 0.17677669
        %v5857 = vmul.f32 %v5853, 0.17677669
        %v5858 = vsel %vm4254, %v5856, -inf
        %5859 = vmax.xlane.f32.xlu0 %v5858
        %v5860 = vpop.xlane.xlu0 %5859
        %v5861 = vsel %vm4254, %v5857, -inf
        %5862 = vmax.xlane.f32.xlu0 %v5861
        %v5863 = vpop.xlane.xlu0 %5862
        %v5864 = vsub.f32 %v5856, %v5860
        %v5865 = vsub.f32 %v5857, %v5863
        %v5866 = vmul.f32 %v5864, 1.442695
        %v5867 = vpow.pop %v5866
        %v5868 = vmul.f32 %v5865, 1.442695
        %v5869 = vpow.pop %v5868
        %v5870 = vsel %vm4254, %v5867, 0.0
        %5871 = vadd.xlane.f32.xlu0 %v5870
        %v5872 = vpop.xlane.xlu0 %5871
        %v5873 = vsel %vm4254, %v5869, 0.0
        %5874 = vadd.xlane.f32.xlu0 %v5873
        %v5875 = vpop.xlane.xlu0 %5874
        %v5876 = vrcp.pop %v5872
        %v5877 = vmul.f32 %v5867, %v5876
        %v5878 = vrcp.pop %v5875
        %v5879 = vmul.f32 %v5869, %v5878
        %v5880 = vmul.f32 %v5668, %v4282
        %v5881 = vmul.f32 %v5673, %v4282
        %v5883 = vsel %vm4254, %v5877, 0
        %v5886 = vsel %vm4254, %v5879, 0
        %5888 = vmatprep.subr.mxu0 0.0
        %5889 = vmatpush1.msra.mxu0 %v5880
        %5890 = vmatprep.subr.mxu0 0.0
        %5891 = vmatpush1.msra.mxu0 %v5881
        %5892 = vmatprep.subr.mxu0 0.0
        %5893 = vmatpush1.msra.mxu0 0.0
        %5894 = vmatprep.subr.mxu0 0.0
        %5895 = vmatpush1.msra.mxu0 0.0
        %5896 = vmatprep.subr.mxu0 0.0
        %5897 = vmatpush1.msra.mxu0 0.0
        %5898 = vmatprep.subr.mxu0 0.0
        %5899 = vmatpush1.msra.mxu0 0.0
        %5900 = vmatprep.subr.mxu0 0.0
        %5901 = vmatpush1.msra.mxu0 0.0
        %5902 = vmatprep.subr.mxu0 0.0
        %5903 = vmatpush1.msra.mxu0 0.0
        %5904 = vmatprep.subr.mxu0 0.0
        %5905 = vmatpush1.msra.mxu0 0.0
        %5906 = vmatprep.subr.mxu0 0.0
        %5907 = vmatpush1.msra.mxu0 0.0
        %5908 = vmatprep.subr.mxu0 0.0
        %5909 = vmatpush1.msra.mxu0 0.0
        %5910 = vmatprep.subr.mxu0 0.0
        %5911 = vmatpush1.msra.mxu0 0.0
        %5912 = vmatprep.subr.mxu0 0.0
        %5913 = vmatpush1.msra.mxu0 0.0
        %5914 = vmatprep.subr.mxu0 0.0
        %5915 = vmatpush1.msra.mxu0 0.0
        %5916 = vmatprep.subr.mxu0 0.0
        %5917 = vmatpush1.msra.mxu0 0.0
        %5918 = vmatprep.subr.mxu0 0.0
        %5919 = vmatpush1.msra.mxu0 0.0
        %5920 = vmatprep.subr.mxu0 0.0
        %5921 = vmatpush1.msra.mxu0 0.0
        %5922 = vmatprep.subr.mxu0 0.0
        %5923 = vmatpush1.msra.mxu0 0.0
        %5924 = vmatprep.subr.mxu0 0.0
        %5925 = vmatpush1.msra.mxu0 0.0
        %5926 = vmatprep.subr.mxu0 0.0
        %5927 = vmatpush1.msra.mxu0 0.0
        %5928 = vmatprep.subr.mxu0 0.0
        %5929 = vmatpush1.msra.mxu0 0.0
        %5930 = vmatprep.subr.mxu0 0.0
        %5931 = vmatpush1.msra.mxu0 0.0
        %5932 = vmatprep.subr.mxu0 0.0
        %5933 = vmatpush1.msra.mxu0 0.0
        %5934 = vmatprep.subr.mxu0 0.0
        %5935 = vmatpush1.msra.mxu0 0.0
        %5936 = vmatprep.subr.mxu0 0.0
        %5937 = vmatpush1.msra.mxu0 0.0
        %5938 = vmatprep.subr.mxu0 0.0
        %5939 = vmatpush1.msra.mxu0 0.0
        %5940 = vmatprep.subr.mxu0 0.0
        %5941 = vmatpush1.msra.mxu0 0.0
        %5942 = vmatprep.subr.mxu0 0.0
        %5943 = vmatpush1.msra.mxu0 0.0
        %5944 = vmatprep.subr.mxu0 0.0
        %5945 = vmatpush1.msra.mxu0 0.0
        %5946 = vmatprep.subr.mxu0 0.0
        %5947 = vmatpush1.msra.mxu0 0.0
        %5948 = vmatprep.subr.mxu0 0.0
        %5949 = vmatpush1.msra.mxu0 0.0
        %5950 = vmatprep.subr.mxu0 0.0
        %5951 = vmatpush1.msra.mxu0 0.0
        %5952 = vmatprep.mubr.f32.mxu0 0.0
        %5953 = vmatmul.mubr.f32.gmra.mrb[0].mxu0 %v5883
        %v5954 = vpop.f32.mrb[0].mxu0
        %v5955 = vadd.f32 0.0, %v5954
        %v5956 = vpop.f32.mrb[0].mxu0
        %5957 = vmatprep.mubr.f32.mxu0 0.0
        %5958 = vmatmul.mubr.f32.gmra.mrb[0].mxu0 %v5886
        %v5959 = vpop.f32.mrb[0].mxu0
        %v5960 = vadd.f32 0.0, %v5959
        %v5961 = vpop.f32.mrb[0].mxu0
        %5962 = vdwg.mxu0
        %v5964 = vsel %vm4254, %v5774, 0
        %v5967 = vsel %vm4254, %v5776, 0
        %5969 = vmatprep.subr.mxu0 0.0
        %5970 = vmatpush1.msra.mxu0 %v5777
        %5971 = vmatprep.subr.mxu0 0.0
        %5972 = vmatpush1.msra.mxu0 %v5778
        %5973 = vmatprep.subr.mxu0 0.0
        %5974 = vmatpush1.msra.mxu0 0.0
        %5975 = vmatprep.subr.mxu0 0.0
        %5976 = vmatpush1.msra.mxu0 0.0
        %5977 = vmatprep.subr.mxu0 0.0
        %5978 = vmatpush1.msra.mxu0 0.0
        %5979 = vmatprep.subr.mxu0 0.0
        %5980 = vmatpush1.msra.mxu0 0.0
        %5981 = vmatprep.subr.mxu0 0.0
        %5982 = vmatpush1.msra.mxu0 0.0
        %5983 = vmatprep.subr.mxu0 0.0
        %5984 = vmatpush1.msra.mxu0 0.0
        %5985 = vmatprep.subr.mxu0 0.0
        %5986 = vmatpush1.msra.mxu0 0.0
        %5987 = vmatprep.subr.mxu0 0.0
        %5988 = vmatpush1.msra.mxu0 0.0
        %5989 = vmatprep.subr.mxu0 0.0
        %5990 = vmatpush1.msra.mxu0 0.0
        %5991 = vmatprep.subr.mxu0 0.0
        %5992 = vmatpush1.msra.mxu0 0.0
        %5993 = vmatprep.subr.mxu0 0.0
        %5994 = vmatpush1.msra.mxu0 0.0
        %5995 = vmatprep.subr.mxu0 0.0
        %5996 = vmatpush1.msra.mxu0 0.0
        %5997 = vmatprep.subr.mxu0 0.0
        %5998 = vmatpush1.msra.mxu0 0.0
        %5999 = vmatprep.subr.mxu0 0.0
        %6000 = vmatpush1.msra.mxu0 0.0
        %6001 = vmatprep.subr.mxu0 0.0
        %6002 = vmatpush1.msra.mxu0 0.0
        %6003 = vmatprep.subr.mxu0 0.0
        %6004 = vmatpush1.msra.mxu0 0.0
        %6005 = vmatprep.subr.mxu0 0.0
        %6006 = vmatpush1.msra.mxu0 0.0
        %6007 = vmatprep.subr.mxu0 0.0
        %6008 = vmatpush1.msra.mxu0 0.0
        %6009 = vmatprep.subr.mxu0 0.0
        %6010 = vmatpush1.msra.mxu0 0.0
        %6011 = vmatprep.subr.mxu0 0.0
        %6012 = vmatpush1.msra.mxu0 0.0
        %6013 = vmatprep.subr.mxu0 0.0
        %6014 = vmatpush1.msra.mxu0 0.0
        %6015 = vmatprep.subr.mxu0 0.0
        %6016 = vmatpush1.msra.mxu0 0.0
        %6017 = vmatprep.subr.mxu0 0.0
        %6018 = vmatpush1.msra.mxu0 0.0
        %6019 = vmatprep.subr.mxu0 0.0
        %6020 = vmatpush1.msra.mxu0 0.0
        %6021 = vmatprep.subr.mxu0 0.0
        %6022 = vmatpush1.msra.mxu0 0.0
        %6023 = vmatprep.subr.mxu0 0.0
        %6024 = vmatpush1.msra.mxu0 0.0
        %6025 = vmatprep.subr.mxu0 0.0
        %6026 = vmatpush1.msra.mxu0 0.0
        %6027 = vmatprep.subr.mxu0 0.0
        %6028 = vmatpush1.msra.mxu0 0.0
        %6029 = vmatprep.subr.mxu0 0.0
        %6030 = vmatpush1.msra.mxu0 0.0
        %6031 = vmatprep.subr.mxu0 0.0
        %6032 = vmatpush1.msra.mxu0 0.0
        %6033 = vmatprep.mubr.f32.mxu0 0.0
        %6034 = vmatmul.mubr.f32.gmra.mrb[0].mxu0 %v5964
        %v6035 = vpop.f32.mrb[0].mxu0
        %v6036 = vadd.f32 %v5955, %v6035
        %v6037 = vpop.f32.mrb[0].mxu0
        %6038 = vmatprep.mubr.f32.mxu0 0.0
        %6039 = vmatmul.mubr.f32.gmra.mrb[0].mxu0 %v5967
        %v6040 = vpop.f32.mrb[0].mxu0
        %v6041 = vadd.f32 %v5960, %v6040
        %v6042 = vpop.f32.mrb[0].mxu0
        %6043 = vdwg.mxu0
        %v6044 = vmul.f32 %v5472, %v4551
        %v6045 = vmul.f32 %v5477, %v4551
        %6046 = vmatprep.subr.mxu0 0.0
        %6047 = vmatpush1.xpose.msra.mxu0 %v5570
        %6048 = vmatprep.subr.mxu0 0.0
        %6049 = vmatpush1.xpose.msra.mxu0 %v5575
        %6050 = vmatprep.subr.mxu0 0.0
        %6051 = vmatpush1.xpose.msra.mxu0 0.0
        %6052 = vmatprep.subr.mxu0 0.0
        %6053 = vmatpush1.xpose.msra.mxu0 0.0
        %6054 = vmatprep.subr.mxu0 0.0
        %6055 = vmatpush1.xpose.msra.mxu0 0.0
        %6056 = vmatprep.subr.mxu0 0.0
        %6057 = vmatpush1.xpose.msra.mxu0 0.0
        %6058 = vmatprep.subr.mxu0 0.0
        %6059 = vmatpush1.xpose.msra.mxu0 0.0
        %6060 = vmatprep.subr.mxu0 0.0
        %6061 = vmatpush1.xpose.msra.mxu0 0.0
        %6062 = vmatprep.subr.mxu0 0.0
        %6063 = vmatpush1.xpose.msra.mxu0 0.0
        %6064 = vmatprep.subr.mxu0 0.0
        %6065 = vmatpush1.xpose.msra.mxu0 0.0
        %6066 = vmatprep.subr.mxu0 0.0
        %6067 = vmatpush1.xpose.msra.mxu0 0.0
        %6068 = vmatprep.subr.mxu0 0.0
        %6069 = vmatpush1.xpose.msra.mxu0 0.0
        %6070 = vmatprep.subr.mxu0 0.0
        %6071 = vmatpush1.xpose.msra.mxu0 0.0
        %6072 = vmatprep.subr.mxu0 0.0
        %6073 = vmatpush1.xpose.msra.mxu0 0.0
        %6074 = vmatprep.subr.mxu0 0.0
        %6075 = vmatpush1.xpose.msra.mxu0 0.0
        %6076 = vmatprep.subr.mxu0 0.0
        %6077 = vmatpush1.xpose.msra.mxu0 0.0
        %6078 = vmatprep.subr.mxu0 0.0
        %6079 = vmatpush1.xpose.msra.mxu0 0.0
        %6080 = vmatprep.subr.mxu0 0.0
        %6081 = vmatpush1.xpose.msra.mxu0 0.0
        %6082 = vmatprep.subr.mxu0 0.0
        %6083 = vmatpush1.xpose.msra.mxu0 0.0
        %6084 = vmatprep.subr.mxu0 0.0
        %6085 = vmatpush1.xpose.msra.mxu0 0.0
        %6086 = vmatprep.subr.mxu0 0.0
        %6087 = vmatpush1.xpose.msra.mxu0 0.0
        %6088 = vmatprep.subr.mxu0 0.0
        %6089 = vmatpush1.xpose.msra.mxu0 0.0
        %6090 = vmatprep.subr.mxu0 0.0
        %6091 = vmatpush1.xpose.msra.mxu0 0.0
        %6092 = vmatprep.subr.mxu0 0.0
        %6093 = vmatpush1.xpose.msra.mxu0 0.0
        %6094 = vmatprep.subr.mxu0 0.0
        %6095 = vmatpush1.xpose.msra.mxu0 0.0
        %6096 = vmatprep.subr.mxu0 0.0
        %6097 = vmatpush1.xpose.msra.mxu0 0.0
        %6098 = vmatprep.subr.mxu0 0.0
        %6099 = vmatpush1.xpose.msra.mxu0 0.0
        %6100 = vmatprep.subr.mxu0 0.0
        %6101 = vmatpush1.xpose.msra.mxu0 0.0
        %6102 = vmatprep.subr.mxu0 0.0
        %6103 = vmatpush1.xpose.msra.mxu0 0.0
        %6104 = vmatprep.subr.mxu0 0.0
        %6105 = vmatpush1.xpose.msra.mxu0 0.0
        %6106 = vmatprep.subr.mxu0 0.0
        %6107 = vmatpush1.xpose.msra.mxu0 0.0
        %6108 = vmatprep.subr.mxu0 0.0
        %6109 = vmatpush1.xpose.msra.mxu0 0.0
        %6110 = vmatprep.mubr.f32.mxu0 0.0
        %6111 = vmatmul.mubr.f32.gmra.mrb[0].mxu0 %v6044
        %v6112 = vpop.f32.mrb[0].mxu0
        %v6113 = vadd.f32 0.0, %v6112
        %v6114 = vpop.f32.mrb[0].mxu0
        %6115 = vmatprep.mubr.f32.mxu0 0.0
        %6116 = vmatmul.mubr.f32.gmra.mrb[0].mxu0 %v6045
        %v6117 = vpop.f32.mrb[0].mxu0
        %v6118 = vadd.f32 0.0, %v6117
        %v6119 = vpop.f32.mrb[0].mxu0
        %6120 = vdwg.mxu0
        %v6121 = vmul.f32 %v6113, 0.17677669
        %v6122 = vmul.f32 %v6118, 0.17677669
        %v6123 = vsel %vm4254, %v6121, -inf
        %6124 = vmax.xlane.f32.xlu0 %v6123
        %v6125 = vpop.xlane.xlu0 %6124
        %v6126 = vsel %vm4254, %v6122, -inf
        %6127 = vmax.xlane.f32.xlu0 %v6126
        %v6128 = vpop.xlane.xlu0 %6127
        %v6129 = vsub.f32 %v6121, %v6125
        %v6130 = vsub.f32 %v6122, %v6128
        %v6131 = vmul.f32 %v6129, 1.442695
        %v6132 = vpow.pop %v6131
        %v6133 = vmul.f32 %v6130, 1.442695
        %v6134 = vpow.pop %v6133
        %v6135 = vsel %vm4254, %v6132, 0.0
        %6136 = vadd.xlane.f32.xlu0 %v6135
        %v6137 = vpop.xlane.xlu0 %6136
        %v6138 = vsel %vm4254, %v6134, 0.0
        %6139 = vadd.xlane.f32.xlu0 %v6138
        %v6140 = vpop.xlane.xlu0 %6139
        %v6141 = vrcp.pop %v6137
        %v6142 = vmul.f32 %v6132, %v6141
        %v6143 = vrcp.pop %v6140
        %v6144 = vmul.f32 %v6134, %v6143
        %v6145 = vmul.f32 %v5668, %v4551
        %v6146 = vmul.f32 %v5673, %v4551
        %v6148 = vsel %vm4254, %v6142, 0
        %v6151 = vsel %vm4254, %v6144, 0
        %6153 = vmatprep.subr.mxu0 0.0
        %6154 = vmatpush1.msra.mxu0 %v6145
        %6155 = vmatprep.subr.mxu0 0.0
        %6156 = vmatpush1.msra.mxu0 %v6146
        %6157 = vmatprep.subr.mxu0 0.0
        %6158 = vmatpush1.msra.mxu0 0.0
        %6159 = vmatprep.subr.mxu0 0.0
        %6160 = vmatpush1.msra.mxu0 0.0
        %6161 = vmatprep.subr.mxu0 0.0
        %6162 = vmatpush1.msra.mxu0 0.0
        %6163 = vmatprep.subr.mxu0 0.0
        %6164 = vmatpush1.msra.mxu0 0.0
        %6165 = vmatprep.subr.mxu0 0.0
        %6166 = vmatpush1.msra.mxu0 0.0
        %6167 = vmatprep.subr.mxu0 0.0
        %6168 = vmatpush1.msra.mxu0 0.0
        %6169 = vmatprep.subr.mxu0 0.0
        %6170 = vmatpush1.msra.mxu0 0.0
        %6171 = vmatprep.subr.mxu0 0.0
        %6172 = vmatpush1.msra.mxu0 0.0
        %6173 = vmatprep.subr.mxu0 0.0
        %6174 = vmatpush1.msra.mxu0 0.0
        %6175 = vmatprep.subr.mxu0 0.0
        %6176 = vmatpush1.msra.mxu0 0.0
        %6177 = vmatprep.subr.mxu0 0.0
        %6178 = vmatpush1.msra.mxu0 0.0
        %6179 = vmatprep.subr.mxu0 0.0
        %6180 = vmatpush1.msra.mxu0 0.0
        %6181 = vmatprep.subr.mxu0 0.0
        %6182 = vmatpush1.msra.mxu0 0.0
        %6183 = vmatprep.subr.mxu0 0.0
        %6184 = vmatpush1.msra.mxu0 0.0
        %6185 = vmatprep.subr.mxu0 0.0
        %6186 = vmatpush1.msra.mxu0 0.0
        %6187 = vmatprep.subr.mxu0 0.0
        %6188 = vmatpush1.msra.mxu0 0.0
        %6189 = vmatprep.subr.mxu0 0.0
        %6190 = vmatpush1.msra.mxu0 0.0
        %6191 = vmatprep.subr.mxu0 0.0
        %6192 = vmatpush1.msra.mxu0 0.0
        %6193 = vmatprep.subr.mxu0 0.0
        %6194 = vmatpush1.msra.mxu0 0.0
        %6195 = vmatprep.subr.mxu0 0.0
        %6196 = vmatpush1.msra.mxu0 0.0
        %6197 = vmatprep.subr.mxu0 0.0
        %6198 = vmatpush1.msra.mxu0 0.0
        %6199 = vmatprep.subr.mxu0 0.0
        %6200 = vmatpush1.msra.mxu0 0.0
        %6201 = vmatprep.subr.mxu0 0.0
        %6202 = vmatpush1.msra.mxu0 0.0
        %6203 = vmatprep.subr.mxu0 0.0
        %6204 = vmatpush1.msra.mxu0 0.0
        %6205 = vmatprep.subr.mxu0 0.0
        %6206 = vmatpush1.msra.mxu0 0.0
        %6207 = vmatprep.subr.mxu0 0.0
        %6208 = vmatpush1.msra.mxu0 0.0
        %6209 = vmatprep.subr.mxu0 0.0
        %6210 = vmatpush1.msra.mxu0 0.0
        %6211 = vmatprep.subr.mxu0 0.0
        %6212 = vmatpush1.msra.mxu0 0.0
        %6213 = vmatprep.subr.mxu0 0.0
        %6214 = vmatpush1.msra.mxu0 0.0
        %6215 = vmatprep.subr.mxu0 0.0
        %6216 = vmatpush1.msra.mxu0 0.0
        %6217 = vmatprep.mubr.f32.mxu0 0.0
        %6218 = vmatmul.mubr.f32.gmra.mrb[0].mxu0 %v6148
        %v6219 = vpop.f32.mrb[0].mxu0
        %v6220 = vadd.f32 0.0, %v6219
        %v6221 = vpop.f32.mrb[0].mxu0
        %6222 = vmatprep.mubr.f32.mxu0 0.0
        %6223 = vmatmul.mubr.f32.gmra.mrb[0].mxu0 %v6151
        %v6224 = vpop.f32.mrb[0].mxu0
        %v6225 = vadd.f32 0.0, %v6224
        %v6226 = vpop.f32.mrb[0].mxu0
        %6227 = vdwg.mxu0
        %v6228 = vadd.f32 %v6036, %v6220
        %v6229 = vadd.f32 %v6041, %v6225
        %v6230 = vmul.f32 %v5472, %v4741
        %v6231 = vmul.f32 %v5477, %v4741
        %6232 = vmatprep.subr.mxu0 0.0
        %6233 = vmatpush1.xpose.msra.mxu0 %v5570
        %6234 = vmatprep.subr.mxu0 0.0
        %6235 = vmatpush1.xpose.msra.mxu0 %v5575
        %6236 = vmatprep.subr.mxu0 0.0
        %6237 = vmatpush1.xpose.msra.mxu0 0.0
        %6238 = vmatprep.subr.mxu0 0.0
        %6239 = vmatpush1.xpose.msra.mxu0 0.0
        %6240 = vmatprep.subr.mxu0 0.0
        %6241 = vmatpush1.xpose.msra.mxu0 0.0
        %6242 = vmatprep.subr.mxu0 0.0
        %6243 = vmatpush1.xpose.msra.mxu0 0.0
        %6244 = vmatprep.subr.mxu0 0.0
        %6245 = vmatpush1.xpose.msra.mxu0 0.0
        %6246 = vmatprep.subr.mxu0 0.0
        %6247 = vmatpush1.xpose.msra.mxu0 0.0
        %6248 = vmatprep.subr.mxu0 0.0
        %6249 = vmatpush1.xpose.msra.mxu0 0.0
        %6250 = vmatprep.subr.mxu0 0.0
        %6251 = vmatpush1.xpose.msra.mxu0 0.0
        %6252 = vmatprep.subr.mxu0 0.0
        %6253 = vmatpush1.xpose.msra.mxu0 0.0
        %6254 = vmatprep.subr.mxu0 0.0
        %6255 = vmatpush1.xpose.msra.mxu0 0.0
        %6256 = vmatprep.subr.mxu0 0.0
        %6257 = vmatpush1.xpose.msra.mxu0 0.0
        %6258 = vmatprep.subr.mxu0 0.0
        %6259 = vmatpush1.xpose.msra.mxu0 0.0
        %6260 = vmatprep.subr.mxu0 0.0
        %6261 = vmatpush1.xpose.msra.mxu0 0.0
        %6262 = vmatprep.subr.mxu0 0.0
        %6263 = vmatpush1.xpose.msra.mxu0 0.0
        %6264 = vmatprep.subr.mxu0 0.0
        %6265 = vmatpush1.xpose.msra.mxu0 0.0
        %6266 = vmatprep.subr.mxu0 0.0
        %6267 = vmatpush1.xpose.msra.mxu0 0.0
        %6268 = vmatprep.subr.mxu0 0.0
        %6269 = vmatpush1.xpose.msra.mxu0 0.0
        %6270 = vmatprep.subr.mxu0 0.0
        %6271 = vmatpush1.xpose.msra.mxu0 0.0
        %6272 = vmatprep.subr.mxu0 0.0
        %6273 = vmatpush1.xpose.msra.mxu0 0.0
        %6274 = vmatprep.subr.mxu0 0.0
        %6275 = vmatpush1.xpose.msra.mxu0 0.0
        %6276 = vmatprep.subr.mxu0 0.0
        %6277 = vmatpush1.xpose.msra.mxu0 0.0
        %6278 = vmatprep.subr.mxu0 0.0
        %6279 = vmatpush1.xpose.msra.mxu0 0.0
        %6280 = vmatprep.subr.mxu0 0.0
        %6281 = vmatpush1.xpose.msra.mxu0 0.0
        %6282 = vmatprep.subr.mxu0 0.0
        %6283 = vmatpush1.xpose.msra.mxu0 0.0
        %6284 = vmatprep.subr.mxu0 0.0
        %6285 = vmatpush1.xpose.msra.mxu0 0.0
        %6286 = vmatprep.subr.mxu0 0.0
        %6287 = vmatpush1.xpose.msra.mxu0 0.0
        %6288 = vmatprep.subr.mxu0 0.0
        %6289 = vmatpush1.xpose.msra.mxu0 0.0
        %6290 = vmatprep.subr.mxu0 0.0
        %6291 = vmatpush1.xpose.msra.mxu0 0.0
        %6292 = vmatprep.subr.mxu0 0.0
        %6293 = vmatpush1.xpose.msra.mxu0 0.0
        %6294 = vmatprep.subr.mxu0 0.0
        %6295 = vmatpush1.xpose.msra.mxu0 0.0
        %6296 = vmatprep.mubr.f32.mxu0 0.0
        %6297 = vmatmul.mubr.f32.gmra.mrb[0].mxu0 %v6230
        %v6298 = vpop.f32.mrb[0].mxu0
        %v6299 = vadd.f32 0.0, %v6298
        %v6300 = vpop.f32.mrb[0].mxu0
        %6301 = vmatprep.mubr.f32.mxu0 0.0
        %6302 = vmatmul.mubr.f32.gmra.mrb[0].mxu0 %v6231
        %v6303 = vpop.f32.mrb[0].mxu0
        %v6304 = vadd.f32 0.0, %v6303
        %v6305 = vpop.f32.mrb[0].mxu0
        %6306 = vdwg.mxu0
        %v6307 = vmul.f32 %v6299, 0.17677669
        %v6308 = vmul.f32 %v6304, 0.17677669
        %v6309 = vsel %vm4254, %v6307, -inf
        %6310 = vmax.xlane.f32.xlu0 %v6309
        %v6311 = vpop.xlane.xlu0 %6310
        %v6312 = vsel %vm4254, %v6308, -inf
        %6313 = vmax.xlane.f32.xlu0 %v6312
        %v6314 = vpop.xlane.xlu0 %6313
        %v6315 = vsub.f32 %v6307, %v6311
        %v6316 = vsub.f32 %v6308, %v6314
        %v6317 = vmul.f32 %v6315, 1.442695
        %v6318 = vpow.pop %v6317
        %v6319 = vmul.f32 %v6316, 1.442695
        %v6320 = vpow.pop %v6319
        %v6321 = vsel %vm4254, %v6318, 0.0
        %6322 = vadd.xlane.f32.xlu0 %v6321
        %v6323 = vpop.xlane.xlu0 %6322
        %v6324 = vsel %vm4254, %v6320, 0.0
        %6325 = vadd.xlane.f32.xlu0 %v6324
        %v6326 = vpop.xlane.xlu0 %6325
        %v6327 = vrcp.pop %v6323
        %v6328 = vmul.f32 %v6318, %v6327
        %v6329 = vrcp.pop %v6326
        %v6330 = vmul.f32 %v6320, %v6329
        %v6331 = vmul.f32 %v5668, %v4741
        %v6332 = vmul.f32 %v5673, %v4741
        %v6334 = vsel %vm4254, %v6328, 0
        %v6337 = vsel %vm4254, %v6330, 0
        %6339 = vmatprep.subr.mxu0 0.0
        %6340 = vmatpush1.msra.mxu0 %v6331
        %6341 = vmatprep.subr.mxu0 0.0
        %6342 = vmatpush1.msra.mxu0 %v6332
        %6343 = vmatprep.subr.mxu0 0.0
        %6344 = vmatpush1.msra.mxu0 0.0
        %6345 = vmatprep.subr.mxu0 0.0
        %6346 = vmatpush1.msra.mxu0 0.0
        %6347 = vmatprep.subr.mxu0 0.0
        %6348 = vmatpush1.msra.mxu0 0.0
        %6349 = vmatprep.subr.mxu0 0.0
        %6350 = vmatpush1.msra.mxu0 0.0
        %6351 = vmatprep.subr.mxu0 0.0
        %6352 = vmatpush1.msra.mxu0 0.0
        %6353 = vmatprep.subr.mxu0 0.0
        %6354 = vmatpush1.msra.mxu0 0.0
        %6355 = vmatprep.subr.mxu0 0.0
        %6356 = vmatpush1.msra.mxu0 0.0
        %6357 = vmatprep.subr.mxu0 0.0
        %6358 = vmatpush1.msra.mxu0 0.0
        %6359 = vmatprep.subr.mxu0 0.0
        %6360 = vmatpush1.msra.mxu0 0.0
        %6361 = vmatprep.subr.mxu0 0.0
        %6362 = vmatpush1.msra.mxu0 0.0
        %6363 = vmatprep.subr.mxu0 0.0
        %6364 = vmatpush1.msra.mxu0 0.0
        %6365 = vmatprep.subr.mxu0 0.0
        %6366 = vmatpush1.msra.mxu0 0.0
        %6367 = vmatprep.subr.mxu0 0.0
        %6368 = vmatpush1.msra.mxu0 0.0
        %6369 = vmatprep.subr.mxu0 0.0
        %6370 = vmatpush1.msra.mxu0 0.0
        %6371 = vmatprep.subr.mxu0 0.0
        %6372 = vmatpush1.msra.mxu0 0.0
        %6373 = vmatprep.subr.mxu0 0.0
        %6374 = vmatpush1.msra.mxu0 0.0
        %6375 = vmatprep.subr.mxu0 0.0
        %6376 = vmatpush1.msra.mxu0 0.0
        %6377 = vmatprep.subr.mxu0 0.0
        %6378 = vmatpush1.msra.mxu0 0.0
        %6379 = vmatprep.subr.mxu0 0.0
        %6380 = vmatpush1.msra.mxu0 0.0
        %6381 = vmatprep.subr.mxu0 0.0
        %6382 = vmatpush1.msra.mxu0 0.0
        %6383 = vmatprep.subr.mxu0 0.0
        %6384 = vmatpush1.msra.mxu0 0.0
        %6385 = vmatprep.subr.mxu0 0.0
        %6386 = vmatpush1.msra.mxu0 0.0
        %6387 = vmatprep.subr.mxu0 0.0
        %6388 = vmatpush1.msra.mxu0 0.0
        %6389 = vmatprep.subr.mxu0 0.0
        %6390 = vmatpush1.msra.mxu0 0.0
        %6391 = vmatprep.subr.mxu0 0.0
        %6392 = vmatpush1.msra.mxu0 0.0
        %6393 = vmatprep.subr.mxu0 0.0
        %6394 = vmatpush1.msra.mxu0 0.0
        %6395 = vmatprep.subr.mxu0 0.0
        %6396 = vmatpush1.msra.mxu0 0.0
        %6397 = vmatprep.subr.mxu0 0.0
        %6398 = vmatpush1.msra.mxu0 0.0
        %6399 = vmatprep.subr.mxu0 0.0
        %6400 = vmatpush1.msra.mxu0 0.0
        %6401 = vmatprep.subr.mxu0 0.0
        %6402 = vmatpush1.msra.mxu0 0.0
        %6403 = vmatprep.mubr.f32.mxu0 0.0
        %6404 = vmatmul.mubr.f32.gmra.mrb[0].mxu0 %v6334
        %v6405 = vpop.f32.mrb[0].mxu0
        %v6406 = vadd.f32 0.0, %v6405
        %v6407 = vpop.f32.mrb[0].mxu0
        %6408 = vmatprep.mubr.f32.mxu0 0.0
        %6409 = vmatmul.mubr.f32.gmra.mrb[0].mxu0 %v6337
        %v6410 = vpop.f32.mrb[0].mxu0
        %v6411 = vadd.f32 0.0, %v6410
        %v6412 = vpop.f32.mrb[0].mxu0
        %6413 = vdwg.mxu0
        %v6414 = vadd.f32 %v6228, %v6406
        %v6415 = vadd.f32 %v6229, %v6411
        %v6416 = vld [vmem:[#allocation55] sm:$0xff]
        %v6417 = vld [vmem:[#allocation55 + $0x8] sm:$0xff]
        %v6418 = vld [vmem:[#allocation55 + $0x10] sm:$0xff]
        %v6419 = vld [vmem:[#allocation55 + $0x18] sm:$0xff]
        %v6420 = vld [vmem:[#allocation55 + $0x20] sm:$0xff]
        %v6421 = vld [vmem:[#allocation55 + $0x28] sm:$0xff]
        %v6422 = vld [vmem:[#allocation55 + $0x30] sm:$0xff]
        %v6423 = vld [vmem:[#allocation55 + $0x38] sm:$0xff]
        %v6424 = vld [vmem:[#allocation55 + $0x40] sm:$0xff]
        %v6425 = vld [vmem:[#allocation55 + $0x48] sm:$0xff]
        %v6426 = vld [vmem:[#allocation55 + $0x50] sm:$0xff]
        %v6427 = vld [vmem:[#allocation55 + $0x58] sm:$0xff]
        %v6428 = vld [vmem:[#allocation55 + $0x60] sm:$0xff]
        %v6429 = vld [vmem:[#allocation55 + $0x68] sm:$0xff]
        %v6430 = vld [vmem:[#allocation55 + $0x70] sm:$0xff]
        %v6431 = vld [vmem:[#allocation55 + $0x78] sm:$0xff]
        %v6432 = vld [vmem:[#allocation40] sm:$0x1]
        %v6434 = vlaneseq
        %v6435 = vshrl.u32 %v6434, 7
        %v6436 = vsub.s32 0, %v6435
        %v6437 = vrot.slane %v6432, %v6436
        %6439 = vmatprep.subr.mxu0 0.0
        %6440 = vmatpush1.msra.mxu0 %v6416
        %6441 = vmatprep.subr.mxu0 0.0
        %6442 = vmatpush1.msra.mxu0 %v6417
        %6443 = vmatprep.subr.mxu0 0.0
        %6444 = vmatpush1.msra.mxu0 %v6418
        %6445 = vmatprep.subr.mxu0 0.0
        %6446 = vmatpush1.msra.mxu0 %v6419
        %6447 = vmatprep.subr.mxu0 0.0
        %6448 = vmatpush1.msra.mxu0 %v6420
        %6449 = vmatprep.subr.mxu0 0.0
        %6450 = vmatpush1.msra.mxu0 %v6421
        %6451 = vmatprep.subr.mxu0 0.0
        %6452 = vmatpush1.msra.mxu0 %v6422
        %6453 = vmatprep.subr.mxu0 0.0
        %6454 = vmatpush1.msra.mxu0 %v6423
        %6455 = vmatprep.subr.mxu0 0.0
        %6456 = vmatpush1.msra.mxu0 %v6424
        %6457 = vmatprep.subr.mxu0 0.0
        %6458 = vmatpush1.msra.mxu0 %v6425
        %6459 = vmatprep.subr.mxu0 0.0
        %6460 = vmatpush1.msra.mxu0 %v6426
        %6461 = vmatprep.subr.mxu0 0.0
        %6462 = vmatpush1.msra.mxu0 %v6427
        %6463 = vmatprep.subr.mxu0 0.0
        %6464 = vmatpush1.msra.mxu0 %v6428
        %6465 = vmatprep.subr.mxu0 0.0
        %6466 = vmatpush1.msra.mxu0 %v6429
        %6467 = vmatprep.subr.mxu0 0.0
        %6468 = vmatpush1.msra.mxu0 %v6430
        %6469 = vmatprep.subr.mxu0 0.0
        %6470 = vmatpush1.msra.mxu0 %v6431
        %6471 = vmatprep.subr.mxu0 0.0
        %6472 = vmatpush1.msra.mxu0 0.0
        %6473 = vmatprep.subr.mxu0 0.0
        %6474 = vmatpush1.msra.mxu0 0.0
        %6475 = vmatprep.subr.mxu0 0.0
        %6476 = vmatpush1.msra.mxu0 0.0
        %6477 = vmatprep.subr.mxu0 0.0
        %6478 = vmatpush1.msra.mxu0 0.0
        %6479 = vmatprep.subr.mxu0 0.0
        %6480 = vmatpush1.msra.mxu0 0.0
        %6481 = vmatprep.subr.mxu0 0.0
        %6482 = vmatpush1.msra.mxu0 0.0
        %6483 = vmatprep.subr.mxu0 0.0
        %6484 = vmatpush1.msra.mxu0 0.0
        %6485 = vmatprep.subr.mxu0 0.0
        %6486 = vmatpush1.msra.mxu0 0.0
        %6487 = vmatprep.subr.mxu0 0.0
        %6488 = vmatpush1.msra.mxu0 0.0
        %6489 = vmatprep.subr.mxu0 0.0
        %6490 = vmatpush1.msra.mxu0 0.0
        %6491 = vmatprep.subr.mxu0 0.0
        %6492 = vmatpush1.msra.mxu0 0.0
        %6493 = vmatprep.subr.mxu0 0.0
        %6494 = vmatpush1.msra.mxu0 0.0
        %6495 = vmatprep.subr.mxu0 0.0
        %6496 = vmatpush1.msra.mxu0 0.0
        %6497 = vmatprep.subr.mxu0 0.0
        %6498 = vmatpush1.msra.mxu0 0.0
        %6499 = vmatprep.subr.mxu0 0.0
        %6500 = vmatpush1.msra.mxu0 0.0
        %6501 = vmatprep.subr.mxu0 0.0
        %6502 = vmatpush1.msra.mxu0 0.0
        %6503 = vmatprep.mubr.f32.mxu0 0.0
        %6504 = vmatmul.mubr.f32.gmra.mrb[0].mxu0 %v6414
        %v6505 = vpop.f32.mrb[0].mxu0
        %v6506 = vadd.f32 %v6437, %v6505
        %v6507 = vpop.f32.mrb[0].mxu0
        %6508 = vmatprep.mubr.f32.mxu0 0.0
        %6509 = vmatmul.mubr.f32.gmra.mrb[0].mxu0 %v6415
        %v6510 = vpop.f32.mrb[0].mxu0
        %v6511 = vadd.f32 %v6437, %v6510
        %v6512 = vpop.f32.mrb[0].mxu0
        %6513 = vdwg.mxu0
        %v6514 = vadd.f32 %v5380, %v6506
        %v6515 = vadd.f32 %v5381, %v6511
        %v6516 = vld [vmem:[#allocation46] sm:$0x1]
        %v6517 = vld [vmem:[#allocation44] sm:$0x1]
        %6518 = vadd.xlane.f32.xlu0 %v6514
        %v6519 = vpop.xlane.xlu0 %6518
        %6520 = vadd.xlane.f32.xlu0 %v6515
        %v6521 = vpop.xlane.xlu0 %6520
        %v6522 = vmul.f32 %v6519, %v5034
        %v6523 = vmul.f32 %v6521, %v5034
        %v6524 = vsub.f32 %v6514, %v6522
        %v6525 = vsub.f32 %v6515, %v6523
        %v6526 = vmul.f32 %v6524, %v6524
        %v6527 = vmul.f32 %v6525, %v6525
        %6528 = vadd.xlane.f32.xlu0 %v6526
        %v6529 = vpop.xlane.xlu0 %6528
        %6530 = vadd.xlane.f32.xlu0 %v6527
        %v6531 = vpop.xlane.xlu0 %6530
        %v6532 = vmul.f32 %v6529, %v5034
        %v6533 = vmul.f32 %v6531, %v5034
        %v6534 = vadd.f32 %v6532, 1e-05
        %v6535 = vadd.f32 %v6533, 1e-05
        %v6536 = vrsqrt.pop %v6534
        %v6537 = vrsqrt.pop %v6535
        %v6538 = vmul.f32 %v6524, %v6536
        %v6539 = vmul.f32 %v6525, %v6537
        %v6541 = vlaneseq
        %v6542 = vshrl.u32 %v6541, 7
        %v6543 = vsub.s32 0, %v6542
        %v6544 = vrot.slane %v6516, %v6543
        %v6546 = vmul.f32 %v6538, %v6544
        %v6547 = vmul.f32 %v6539, %v6544
        %v6549 = vlaneseq
        %v6550 = vshrl.u32 %v6549, 7
        %v6551 = vsub.s32 0, %v6550
        %v6552 = vrot.slane %v6517, %v6551
        %v6554 = vadd.f32 %v6546, %v6552
        %v6555 = vadd.f32 %v6547, %v6552
        %v6556 = vld [vmem:[#allocation50] sm:$0xff]
        %v6557 = vld [vmem:[#allocation50 + $0x8] sm:$0xff]
        %v6558 = vld [vmem:[#allocation50 + $0x10] sm:$0xff]
        %v6559 = vld [vmem:[#allocation50 + $0x18] sm:$0xff]
        %v6560 = vld [vmem:[#allocation50 + $0x20] sm:$0xff]
        %v6561 = vld [vmem:[#allocation50 + $0x28] sm:$0xff]
        %v6562 = vld [vmem:[#allocation50 + $0x30] sm:$0xff]
        %v6563 = vld [vmem:[#allocation50 + $0x38] sm:$0xff]
        %v6564 = vld [vmem:[#allocation50 + $0x40] sm:$0xff]
        %v6565 = vld [vmem:[#allocation50 + $0x48] sm:$0xff]
        %v6566 = vld [vmem:[#allocation50 + $0x50] sm:$0xff]
        %v6567 = vld [vmem:[#allocation50 + $0x58] sm:$0xff]
        %v6568 = vld [vmem:[#allocation50 + $0x60] sm:$0xff]
        %v6569 = vld [vmem:[#allocation50 + $0x68] sm:$0xff]
        %v6570 = vld [vmem:[#allocation50 + $0x70] sm:$0xff]
        %v6571 = vld [vmem:[#allocation50 + $0x78] sm:$0xff]
        %v6572 = vld [vmem:[#allocation50 + $0x80] sm:$0xff]
        %v6573 = vld [vmem:[#allocation50 + $0x88] sm:$0xff]
        %v6574 = vld [vmem:[#allocation50 + $0x90] sm:$0xff]
        %v6575 = vld [vmem:[#allocation50 + $0x98] sm:$0xff]
        %v6576 = vld [vmem:[#allocation50 + $0xa0] sm:$0xff]
        %v6577 = vld [vmem:[#allocation50 + $0xa8] sm:$0xff]
        %v6578 = vld [vmem:[#allocation50 + $0xb0] sm:$0xff]
        %v6579 = vld [vmem:[#allocation50 + $0xb8] sm:$0xff]
        %v6580 = vld [vmem:[#allocation50 + $0xc0] sm:$0xff]
        %v6581 = vld [vmem:[#allocation50 + $0xc8] sm:$0xff]
        %v6582 = vld [vmem:[#allocation50 + $0xd0] sm:$0xff]
        %v6583 = vld [vmem:[#allocation50 + $0xd8] sm:$0xff]
        %v6584 = vld [vmem:[#allocation50 + $0xe0] sm:$0xff]
        %v6585 = vld [vmem:[#allocation50 + $0xe8] sm:$0xff]
        %v6586 = vld [vmem:[#allocation50 + $0xf0] sm:$0xff]
        %v6587 = vld [vmem:[#allocation50 + $0xf8] sm:$0xff]
        %v6588 = vld [vmem:[#allocation35] sm:$0x3]
        %v6590 = vlaneseq
        %v6591 = vshrl.u32 %v6590, 7
        %v6592 = vsub.s32 0, %v6591
        %v6593 = vrot.slane %v6588, %v6592
        %v6594 = vlaneseq
        %v6595 = vshrl.u32 %v6594, 7
        %v6596 = vsub.s32 1, %v6595
        %v6597 = vrot.slane %v6588, %v6596
        %6600 = vmatprep.subr.mxu0 %v6557
        %6601 = vmatpush1.msra.mxu0 %v6556
        %6602 = vmatprep.subr.mxu0 %v6559
        %6603 = vmatpush1.msra.mxu0 %v6558
        %6604 = vmatprep.subr.mxu0 %v6561
        %6605 = vmatpush1.msra.mxu0 %v6560
        %6606 = vmatprep.subr.mxu0 %v6563
        %6607 = vmatpush1.msra.mxu0 %v6562
        %6608 = vmatprep.subr.mxu0 %v6565
        %6609 = vmatpush1.msra.mxu0 %v6564
        %6610 = vmatprep.subr.mxu0 %v6567
        %6611 = vmatpush1.msra.mxu0 %v6566
        %6612 = vmatprep.subr.mxu0 %v6569
        %6613 = vmatpush1.msra.mxu0 %v6568
        %6614 = vmatprep.subr.mxu0 %v6571
        %6615 = vmatpush1.msra.mxu0 %v6570
        %6616 = vmatprep.subr.mxu0 %v6573
        %6617 = vmatpush1.msra.mxu0 %v6572
        %6618 = vmatprep.subr.mxu0 %v6575
        %6619 = vmatpush1.msra.mxu0 %v6574
        %6620 = vmatprep.subr.mxu0 %v6577
        %6621 = vmatpush1.msra.mxu0 %v6576
        %6622 = vmatprep.subr.mxu0 %v6579
        %6623 = vmatpush1.msra.mxu0 %v6578
        %6624 = vmatprep.subr.mxu0 %v6581
        %6625 = vmatpush1.msra.mxu0 %v6580
        %6626 = vmatprep.subr.mxu0 %v6583
        %6627 = vmatpush1.msra.mxu0 %v6582
        %6628 = vmatprep.subr.mxu0 %v6585
        %6629 = vmatpush1.msra.mxu0 %v6584
        %6630 = vmatprep.subr.mxu0 %v6587
        %6631 = vmatpush1.msra.mxu0 %v6586
        %6632 = vmatprep.subr.mxu0 0.0
        %6633 = vmatpush1.msra.mxu0 0.0
        %6634 = vmatprep.subr.mxu0 0.0
        %6635 = vmatpush1.msra.mxu0 0.0
        %6636 = vmatprep.subr.mxu0 0.0
        %6637 = vmatpush1.msra.mxu0 0.0
        %6638 = vmatprep.subr.mxu0 0.0
        %6639 = vmatpush1.msra.mxu0 0.0
        %6640 = vmatprep.subr.mxu0 0.0
        %6641 = vmatpush1.msra.mxu0 0.0
        %6642 = vmatprep.subr.mxu0 0.0
        %6643 = vmatpush1.msra.mxu0 0.0
        %6644 = vmatprep.subr.mxu0 0.0
        %6645 = vmatpush1.msra.mxu0 0.0
        %6646 = vmatprep.subr.mxu0 0.0
        %6647 = vmatpush1.msra.mxu0 0.0
        %6648 = vmatprep.subr.mxu0 0.0
        %6649 = vmatpush1.msra.mxu0 0.0
        %6650 = vmatprep.subr.mxu0 0.0
        %6651 = vmatpush1.msra.mxu0 0.0
        %6652 = vmatprep.subr.mxu0 0.0
        %6653 = vmatpush1.msra.mxu0 0.0
        %6654 = vmatprep.subr.mxu0 0.0
        %6655 = vmatpush1.msra.mxu0 0.0
        %6656 = vmatprep.subr.mxu0 0.0
        %6657 = vmatpush1.msra.mxu0 0.0
        %6658 = vmatprep.subr.mxu0 0.0
        %6659 = vmatpush1.msra.mxu0 0.0
        %6660 = vmatprep.subr.mxu0 0.0
        %6661 = vmatpush1.msra.mxu0 0.0
        %6662 = vmatprep.subr.mxu0 0.0
        %6663 = vmatpush1.msra.mxu0 0.0
        %6664 = vmatprep.mubr.f32.mxu0 0.0
        %6665 = vmatmul.mubr.f32.gmra.mrb[0].mxu0 %v6554
        %v6666 = vpop.f32.mrb[0].mxu0
        %v6667 = vadd.f32 %v6593, %v6666
        %v6668 = vpop.f32.mrb[0].mxu0
        %v6669 = vadd.f32 %v6597, %v6668
        %6670 = vmatprep.mubr.f32.mxu0 0.0
        %6671 = vmatmul.mubr.f32.gmra.mrb[0].mxu0 %v6555
        %v6672 = vpop.f32.mrb[0].mxu0
        %v6673 = vadd.f32 %v6593, %v6672
        %v6674 = vpop.f32.mrb[0].mxu0
        %v6675 = vadd.f32 %v6597, %v6674
        %6676 = vdwg.mxu0
        %v6677 = vmul.f32 %v6667, 0.5
        %v6678 = vmul.f32 %v6669, 0.5
        %v6679 = vmul.f32 %v6673, 0.5
        %v6680 = vmul.f32 %v6675, 0.5
        %v6681 = vmul.f32 %v6667, 0.044715
        %v6682 = vmul.f32 %v6669, 0.044715
        %v6683 = vmul.f32 %v6673, 0.044715
        %v6684 = vmul.f32 %v6675, 0.044715
        %v6685 = vmul.f32 %v6681, %v6667
        %v6686 = vmul.f32 %v6682, %v6669
        %v6687 = vmul.f32 %v6683, %v6673
        %v6688 = vmul.f32 %v6684, %v6675
        %v6689 = vmul.f32 %v6685, %v6667
        %v6690 = vmul.f32 %v6686, %v6669
        %v6691 = vmul.f32 %v6687, %v6673
        %v6692 = vmul.f32 %v6688, %v6675
        %v6693 = vadd.f32 %v6667, %v6689
        %v6694 = vadd.f32 %v6669, %v6690
        %v6695 = vadd.f32 %v6673, %v6691
        %v6696 = vadd.f32 %v6675, %v6692
        %v6697 = vmul.f32 %v6693, 0.7978846
        %v6698 = vmul.f32 %v6694, 0.7978846
        %v6699 = vmul.f32 %v6695, 0.7978846
        %v6700 = vmul.f32 %v6696, 0.7978846
        %v6701 = vtanh.pop %v6697
        %v6702 = vtanh.pop %v6698
        %v6703 = vtanh.pop %v6699
        %v6704 = vtanh.pop %v6700
        %v6705 = vadd.f32 %v6701, 1.0
        %v6706 = vadd.f32 %v6702, 1.0
        %v6707 = vadd.f32 %v6703, 1.0
        %v6708 = vadd.f32 %v6704, 1.0
        %v6709 = vmul.f32 %v6677, %v6705
        %v6710 = vmul.f32 %v6678, %v6706
        %v6711 = vmul.f32 %v6679, %v6707
        %v6712 = vmul.f32 %v6680, %v6708
        %v6713 = vld [vmem:[#allocation52] sm:$0xff]
        %v6714 = vld [vmem:[#allocation52 + $0x8] sm:$0xff]
        %v6715 = vld [vmem:[#allocation52 + $0x10] sm:$0xff]
        %v6716 = vld [vmem:[#allocation52 + $0x18] sm:$0xff]
        %v6717 = vld [vmem:[#allocation52 + $0x20] sm:$0xff]
        %v6718 = vld [vmem:[#allocation52 + $0x28] sm:$0xff]
        %v6719 = vld [vmem:[#allocation52 + $0x30] sm:$0xff]
        %v6720 = vld [vmem:[#allocation52 + $0x38] sm:$0xff]
        %v6721 = vld [vmem:[#allocation52 + $0x40] sm:$0xff]
        %v6722 = vld [vmem:[#allocation52 + $0x48] sm:$0xff]
        %v6723 = vld [vmem:[#allocation52 + $0x50] sm:$0xff]
        %v6724 = vld [vmem:[#allocation52 + $0x58] sm:$0xff]
        %v6725 = vld [vmem:[#allocation52 + $0x60] sm:$0xff]
        %v6726 = vld [vmem:[#allocation52 + $0x68] sm:$0xff]
        %v6727 = vld [vmem:[#allocation52 + $0x70] sm:$0xff]
        %v6728 = vld [vmem:[#allocation52 + $0x78] sm:$0xff]
        %v6729 = vld [vmem:[#allocation52 + $0x80] sm:$0xff]
        %v6730 = vld [vmem:[#allocation52 + $0x88] sm:$0xff]
        %v6731 = vld [vmem:[#allocation52 + $0x90] sm:$0xff]
        %v6732 = vld [vmem:[#allocation52 + $0x98] sm:$0xff]
        %v6733 = vld [vmem:[#allocation52 + $0xa0] sm:$0xff]
        %v6734 = vld [vmem:[#allocation52 + $0xa8] sm:$0xff]
        %v6735 = vld [vmem:[#allocation52 + $0xb0] sm:$0xff]
        %v6736 = vld [vmem:[#allocation52 + $0xb8] sm:$0xff]
        %v6737 = vld [vmem:[#allocation52 + $0xc0] sm:$0xff]
        %v6738 = vld [vmem:[#allocation52 + $0xc8] sm:$0xff]
        %v6739 = vld [vmem:[#allocation52 + $0xd0] sm:$0xff]
        %v6740 = vld [vmem:[#allocation52 + $0xd8] sm:$0xff]
        %v6741 = vld [vmem:[#allocation52 + $0xe0] sm:$0xff]
        %v6742 = vld [vmem:[#allocation52 + $0xe8] sm:$0xff]
        %v6743 = vld [vmem:[#allocation52 + $0xf0] sm:$0xff]
        %v6744 = vld [vmem:[#allocation52 + $0xf8] sm:$0xff]
        %v6745 = vld [vmem:[#allocation37] sm:$0x1]
        %v6747 = vlaneseq
        %v6748 = vshrl.u32 %v6747, 7
        %v6749 = vsub.s32 0, %v6748
        %v6750 = vrot.slane %v6745, %v6749
        %6752 = vmatprep.subr.mxu0 0.0
        %6753 = vmatpush1.msra.mxu0 %v6713
        %6754 = vmatprep.subr.mxu0 0.0
        %6755 = vmatpush1.msra.mxu0 %v6714
        %6756 = vmatprep.subr.mxu0 0.0
        %6757 = vmatpush1.msra.mxu0 %v6715
        %6758 = vmatprep.subr.mxu0 0.0
        %6759 = vmatpush1.msra.mxu0 %v6716
        %6760 = vmatprep.subr.mxu0 0.0
        %6761 = vmatpush1.msra.mxu0 %v6717
        %6762 = vmatprep.subr.mxu0 0.0
        %6763 = vmatpush1.msra.mxu0 %v6718
        %6764 = vmatprep.subr.mxu0 0.0
        %6765 = vmatpush1.msra.mxu0 %v6719
        %6766 = vmatprep.subr.mxu0 0.0
        %6767 = vmatpush1.msra.mxu0 %v6720
        %6768 = vmatprep.subr.mxu0 0.0
        %6769 = vmatpush1.msra.mxu0 %v6721
        %6770 = vmatprep.subr.mxu0 0.0
        %6771 = vmatpush1.msra.mxu0 %v6722
        %6772 = vmatprep.subr.mxu0 0.0
        %6773 = vmatpush1.msra.mxu0 %v6723
        %6774 = vmatprep.subr.mxu0 0.0
        %6775 = vmatpush1.msra.mxu0 %v6724
        %6776 = vmatprep.subr.mxu0 0.0
        %6777 = vmatpush1.msra.mxu0 %v6725
        %6778 = vmatprep.subr.mxu0 0.0
        %6779 = vmatpush1.msra.mxu0 %v6726
        %6780 = vmatprep.subr.mxu0 0.0
        %6781 = vmatpush1.msra.mxu0 %v6727
        %6782 = vmatprep.subr.mxu0 0.0
        %6783 = vmatpush1.msra.mxu0 %v6728
        %6784 = vmatprep.subr.mxu0 0.0
        %6785 = vmatpush1.msra.mxu0 %v6729
        %6786 = vmatprep.subr.mxu0 0.0
        %6787 = vmatpush1.msra.mxu0 %v6730
        %6788 = vmatprep.subr.mxu0 0.0
        %6789 = vmatpush1.msra.mxu0 %v6731
        %6790 = vmatprep.subr.mxu0 0.0
        %6791 = vmatpush1.msra.mxu0 %v6732
        %6792 = vmatprep.subr.mxu0 0.0
        %6793 = vmatpush1.msra.mxu0 %v6733
        %6794 = vmatprep.subr.mxu0 0.0
        %6795 = vmatpush1.msra.mxu0 %v6734
        %6796 = vmatprep.subr.mxu0 0.0
        %6797 = vmatpush1.msra.mxu0 %v6735
        %6798 = vmatprep.subr.mxu0 0.0
        %6799 = vmatpush1.msra.mxu0 %v6736
        %6800 = vmatprep.subr.mxu0 0.0
        %6801 = vmatpush1.msra.mxu0 %v6737
        %6802 = vmatprep.subr.mxu0 0.0
        %6803 = vmatpush1.msra.mxu0 %v6738
        %6804 = vmatprep.subr.mxu0 0.0
        %6805 = vmatpush1.msra.mxu0 %v6739
        %6806 = vmatprep.subr.mxu0 0.0
        %6807 = vmatpush1.msra.mxu0 %v6740
        %6808 = vmatprep.subr.mxu0 0.0
        %6809 = vmatpush1.msra.mxu0 %v6741
        %6810 = vmatprep.subr.mxu0 0.0
        %6811 = vmatpush1.msra.mxu0 %v6742
        %6812 = vmatprep.subr.mxu0 0.0
        %6813 = vmatpush1.msra.mxu0 %v6743
        %6814 = vmatprep.subr.mxu0 0.0
        %6815 = vmatpush1.msra.mxu0 %v6744
        %6816 = vmatprep.mubr.f32.mxu0 %v6710
        %6817 = vmatmul.mubr.f32.gmra.mrb[0].mxu0 %v6709
        %v6818 = vpop.f32.mrb[0].mxu0
        %v6819 = vadd.f32 %v6750, %v6818
        %v6820 = vpop.f32.mrb[0].mxu0
        %6821 = vmatprep.mubr.f32.mxu0 %v6712
        %6822 = vmatmul.mubr.f32.gmra.mrb[0].mxu0 %v6711
        %v6823 = vpop.f32.mrb[0].mxu0
        %v6824 = vadd.f32 %v6750, %v6823
        %v6825 = vpop.f32.mrb[0].mxu0
        %6826 = vdwg.mxu0
        %v6827 = vadd.f32 %v6554, %v6819
        %v6828 = vadd.f32 %v6555, %v6824
        %v6829 = vld [vmem:[#allocation49] sm:$0x1]
        %v6830 = vld [vmem:[#allocation47] sm:$0x1]
        %6831 = vadd.xlane.f32.xlu0 %v6827
        %v6832 = vpop.xlane.xlu0 %6831
        %6833 = vadd.xlane.f32.xlu0 %v6828
        %v6834 = vpop.xlane.xlu0 %6833
        %v6835 = vmul.f32 %v6832, %v5034
        %v6836 = vmul.f32 %v6834, %v5034
        %v6837 = vsub.f32 %v6827, %v6835
        %v6838 = vsub.f32 %v6828, %v6836
        %v6839 = vmul.f32 %v6837, %v6837
        %v6840 = vmul.f32 %v6838, %v6838
        %6841 = vadd.xlane.f32.xlu0 %v6839
        %v6842 = vpop.xlane.xlu0 %6841
        %6843 = vadd.xlane.f32.xlu0 %v6840
        %v6844 = vpop.xlane.xlu0 %6843
        %v6845 = vmul.f32 %v6842, %v5034
        %v6846 = vmul.f32 %v6844, %v5034
        %v6847 = vadd.f32 %v6845, 1e-05
        %v6848 = vadd.f32 %v6846, 1e-05
        %v6849 = vrsqrt.pop %v6847
        %v6850 = vrsqrt.pop %v6848
        %v6851 = vmul.f32 %v6837, %v6849
        %v6852 = vmul.f32 %v6838, %v6850
        %v6854 = vlaneseq
        %v6855 = vshrl.u32 %v6854, 7
        %v6856 = vsub.s32 0, %v6855
        %v6857 = vrot.slane %v6829, %v6856
        %v6859 = vmul.f32 %v6851, %v6857
        %v6860 = vmul.f32 %v6852, %v6857
        %v6862 = vlaneseq
        %v6863 = vshrl.u32 %v6862, 7
        %v6864 = vsub.s32 0, %v6863
        %v6865 = vrot.slane %v6830, %v6864
        %v6867 = vadd.f32 %v6859, %v6865
        %v6868 = vadd.f32 %v6860, %v6865
        %v6869 = vld [vmem:[#allocation58] sm:$0xff]
        %v6870 = vld [vmem:[#allocation58 + $0x8] sm:$0xff]
        %v6871 = vld [vmem:[#allocation58 + $0x10] sm:$0xff]
        %v6872 = vld [vmem:[#allocation58 + $0x18] sm:$0xff]
        %v6873 = vld [vmem:[#allocation58 + $0x20] sm:$0xff]
        %v6874 = vld [vmem:[#allocation58 + $0x28] sm:$0xff]
        %v6875 = vld [vmem:[#allocation58 + $0x30] sm:$0xff]
        %v6876 = vld [vmem:[#allocation58 + $0x38] sm:$0xff]
        %v6877 = vld [vmem:[#allocation58 + $0x40] sm:$0xff]
        %v6878 = vld [vmem:[#allocation58 + $0x48] sm:$0xff]
        %v6879 = vld [vmem:[#allocation58 + $0x50] sm:$0xff]
        %v6880 = vld [vmem:[#allocation58 + $0x58] sm:$0xff]
        %v6881 = vld [vmem:[#allocation58 + $0x60] sm:$0xff]
        %v6882 = vld [vmem:[#allocation58 + $0x68] sm:$0xff]
        %v6883 = vld [vmem:[#allocation58 + $0x70] sm:$0xff]
        %v6884 = vld [vmem:[#allocation58 + $0x78] sm:$0xff]
        %v6885 = vld [vmem:[%s73] sm:$0x1]
        %v6887 = vlaneseq
        %v6888 = vshrl.u32 %v6887, 7
        %v6889 = vsub.s32 0, %v6888
        %v6890 = vrot.slane %v6885, %v6889
        %6892 = vmatprep.subr.mxu0 0.0
        %6893 = vmatpush1.msra.mxu0 %v6869
        %6894 = vmatprep.subr.mxu0 0.0
        %6895 = vmatpush1.msra.mxu0 %v6870
        %6896 = vmatprep.subr.mxu0 0.0
        %6897 = vmatpush1.msra.mxu0 %v6871
        %6898 = vmatprep.subr.mxu0 0.0
        %6899 = vmatpush1.msra.mxu0 %v6872
        %6900 = vmatprep.subr.mxu0 0.0
        %6901 = vmatpush1.msra.mxu0 %v6873
        %6902 = vmatprep.subr.mxu0 0.0
        %6903 = vmatpush1.msra.mxu0 %v6874
        %6904 = vmatprep.subr.mxu0 0.0
        %6905 = vmatpush1.msra.mxu0 %v6875
        %6906 = vmatprep.subr.mxu0 0.0
        %6907 = vmatpush1.msra.mxu0 %v6876
        %6908 = vmatprep.subr.mxu0 0.0
        %6909 = vmatpush1.msra.mxu0 %v6877
        %6910 = vmatprep.subr.mxu0 0.0
        %6911 = vmatpush1.msra.mxu0 %v6878
        %6912 = vmatprep.subr.mxu0 0.0
        %6913 = vmatpush1.msra.mxu0 %v6879
        %6914 = vmatprep.subr.mxu0 0.0
        %6915 = vmatpush1.msra.mxu0 %v6880
        %6916 = vmatprep.subr.mxu0 0.0
        %6917 = vmatpush1.msra.mxu0 %v6881
        %6918 = vmatprep.subr.mxu0 0.0
        %6919 = vmatpush1.msra.mxu0 %v6882
        %6920 = vmatprep.subr.mxu0 0.0
        %6921 = vmatpush1.msra.mxu0 %v6883
        %6922 = vmatprep.subr.mxu0 0.0
        %6923 = vmatpush1.msra.mxu0 %v6884
        %6924 = vmatprep.subr.mxu0 0.0
        %6925 = vmatpush1.msra.mxu0 0.0
        %6926 = vmatprep.subr.mxu0 0.0
        %6927 = vmatpush1.msra.mxu0 0.0
        %6928 = vmatprep.subr.mxu0 0.0
        %6929 = vmatpush1.msra.mxu0 0.0
        %6930 = vmatprep.subr.mxu0 0.0
        %6931 = vmatpush1.msra.mxu0 0.0
        %6932 = vmatprep.subr.mxu0 0.0
        %6933 = vmatpush1.msra.mxu0 0.0
        %6934 = vmatprep.subr.mxu0 0.0
        %6935 = vmatpush1.msra.mxu0 0.0
        %6936 = vmatprep.subr.mxu0 0.0
        %6937 = vmatpush1.msra.mxu0 0.0
        %6938 = vmatprep.subr.mxu0 0.0
        %6939 = vmatpush1.msra.mxu0 0.0
        %6940 = vmatprep.subr.mxu0 0.0
        %6941 = vmatpush1.msra.mxu0 0.0
        %6942 = vmatprep.subr.mxu0 0.0
        %6943 = vmatpush1.msra.mxu0 0.0
        %6944 = vmatprep.subr.mxu0 0.0
        %6945 = vmatpush1.msra.mxu0 0.0
        %6946 = vmatprep.subr.mxu0 0.0
        %6947 = vmatpush1.msra.mxu0 0.0
        %6948 = vmatprep.subr.mxu0 0.0
        %6949 = vmatpush1.msra.mxu0 0.0
        %6950 = vmatprep.subr.mxu0 0.0
        %6951 = vmatpush1.msra.mxu0 0.0
        %6952 = vmatprep.subr.mxu0 0.0
        %6953 = vmatpush1.msra.mxu0 0.0
        %6954 = vmatprep.subr.mxu0 0.0
        %6955 = vmatpush1.msra.mxu0 0.0
        %6956 = vmatprep.mubr.f32.mxu0 0.0
        %6957 = vmatmul.mubr.f32.gmra.mrb[0].mxu0 %v6867
        %v6958 = vpop.f32.mrb[0].mxu0
        %v6959 = vadd.f32 %v6890, %v6958
        %v6960 = vpop.f32.mrb[0].mxu0
        %6961 = vmatprep.mubr.f32.mxu0 0.0
        %6962 = vmatmul.mubr.f32.gmra.mrb[0].mxu0 %v6868
        %v6963 = vpop.f32.mrb[0].mxu0
        %v6964 = vadd.f32 %v6890, %v6963
        %v6965 = vpop.f32.mrb[0].mxu0
        %6966 = vdwg.mxu0
        %6967 = vst [vmem:[%s2115] sm:$0xff] %v6959
        %6968 = vst [vmem:[%s2115 + $0x8] sm:$0xff] %v6964
        %s6969 = sand.u32 %s1226, 1
        %s6970 = scalar_lea.sflag [#allocation7], %s6969
        %s6971 = sand.u32 %s1226, 1
        %s6972 = smul.addr %s6971, 16
        %s6973 = scalar_lea.vmem [#allocation73], %s6972
        // Predicated region
        $region401: #{tpu_custom_call.1} parent=223 // pred_check
          %p6974 = pneg %p1236
        $region402: #{tpu_custom_call.1} parent=223 // pred_check_branch
          %6976 = sbr.rel (%p6974) target = $region404
        $region403: #{tpu_custom_call.1} parent=223 // pred_region
          %s6978 = ssub.s32 256, 256
          %6979 = vsyncadd %s6970, %s6978
          %s6980 = smul.addr %s142, 2
          %s6981 = smul.addr %s6980, 128
          %s6982 = scalar_lea.hbm %s103, %s6981
          %s6983 = sshll.u32 %s6973, 4
          %s6984 = int_to_ptr.vmem [resolvable:$true] %s6983
          %6989 = dma.vmem_to_hbm [thread:$0]  %s6984, 256, %s6982, %s6970, 128, 128, 8
        $region404: #{tpu_custom_call.1} parent=223 // pred_fallthru
          _
      $region224: #{tpu_custom_call.1} parent=5 // pred_fallthru
        _
      %p6990 = scmp.le.s32.totalorder 2, %s137
      // Predicated region
      $region405: #{tpu_custom_call.1} parent=5 // pred_check
        %p6991 = pneg %p6990
      $region406: #{tpu_custom_call.1} parent=5 // pred_check_branch
        %6993 = sbr.rel (%p6991) target = $region408
      $region407: #{tpu_custom_call.1} parent=5 // pred_region
        %s6994 = ssub.s32 %s137, 2
        // Predicated region
        $region409: #{tpu_custom_call.1} parent=407 // pred_check
          %p6995 = pneg %p1242
        $region410: #{tpu_custom_call.1} parent=407 // pred_check_branch
          %6997 = sbr.rel (%p6995) target = $region412
        $region411: #{tpu_custom_call.1} parent=407 // pred_region
          %s6998 = sand.u32 %s1227, 1
          %s6999 = scalar_lea.sflag [#allocation7], %s6998
          %s7000 = sand.u32 %s1227, 1
          %s7001 = smul.addr %s7000, 16
          %s7002 = scalar_lea.vmem [#allocation73], %s7001
          %7003 = dma.done %s6999, 256
        $region412: #{tpu_custom_call.1} parent=407 // pred_fallthru
          _
      $region408: #{tpu_custom_call.1} parent=5 // pred_fallthru
        _
    $region6: #{tpu_custom_call.1} parent=1 // loop_footer
      %s141 = sadd.s32 1, %s137
    $region7: #{tpu_custom_call.1} parent=1 // loop_footer_branch
      %136 = sbr.rel target = $region3
    $region8: #{tpu_custom_call.1} parent=1 // loop_exit
      _
    %7004 = vsyncpa [#allocation6], 1
    %s7005 = scalar_lea.sflag [#allocation6], 1
    %7006 = vsyncpa %s7005, 1
    %7007 = vsyncpa [#allocation9], 1
    %7008 = vsyncpa [#allocation12], 1
    %7009 = vsyncpa [#allocation15], 1
    %7010 = vsyncpa [#allocation18], 1
    %7011 = vsyncpa [#allocation21], 1
    %7012 = vsyncpa [#allocation24], 1
    %7013 = vsyncpa [#allocation27], 1
    %7014 = vsyncpa [#allocation30], 1
    %7015 = vsyncpa [#allocation33], 1
    %7016 = vsyncpa [#allocation36], 1
    %7017 = vsyncpa [#allocation39], 1
    %7018 = vsyncpa [#allocation42], 1
    %7019 = vsyncpa [#allocation45], 1
    %7020 = vsyncpa [#allocation48], 1
    %7021 = vsyncpa [#allocation51], 1
    %7022 = vsyncpa [#allocation54], 1
    %7023 = vsyncpa [#allocation57], 1
    %7024 = vsyncpa [#allocation60], 1
    %7025 = vsyncpa [#allocation63], 1
    %7026 = vsyncpa [#allocation66], 1
    %7027 = vsyncpa [#allocation69], 1
    %7028 = vsyncpa [#allocation72], 1
    %7029 = vsyncpa [#allocation7], 1
    %s7030 = scalar_lea.sflag [#allocation7], 1
    %7031 = vsyncpa %s7030, 1

</llo_original>
